<compile_context>
chip_gen: v7x
topology: tpu7x:2x2x1
jax: 0.10.0
libtpu: 0.0.40
codegen_flags: <defaults>
</compile_context>

<pallas_src>
import functools

import jax
import jax.numpy as jnp
from jax.experimental import pallas as pl
from jax.experimental.pallas import tpu as pltpu


# ---------------------------------------------------------------------------
# Kernels
# ---------------------------------------------------------------------------
def _conv_stack_kernel(x_ref, w1_ref, b1_ref, w2_ref, b2_ref, o_ref, h1_ref,
                       *, H, W, N):
    """Fused conv3x3+ReLU -> conv3x3+ReLU, batch folded into the matmul M dim.

    x_ref : (N*Pin + 3*Wp, Cin)  stacked zero-padded image slabs (Wp = W+2,
                                 Pin = (H+3)*Wp), pixel (b,y,x) at row
                                 b*Pin + (y+1)*Wp + (x+1), borders zero.
    w1_ref: (9*Cin, 32)   conv1 weights, row = (dy*3+dx)*Cin + cin
    w2_ref: (9*32, 64)    conv2 weights, same layout
    o_ref : (N*Pin, 64)   conv2+ReLU output on the width-padded grid:
                          pixel (b,y,x) at row b*Pin + y*Wp + x (other rows junk)
    h1_ref: VMEM scratch (N*Pin + 3*Wp, 32) — conv1 activation as a padded slab.
    """
    Wp = W + 2
    L = H * Wp
    Pin = (H + 3) * Wp
    R = N * Pin                                   # matmul M dim (all batches)

    # ---- conv1: im2col (9 shifted slices, concat on K axis) -> one matmul ----
    p1 = jnp.concatenate(
        [x_ref[pl.ds(dy * Wp + dx, R), :] for dy in range(3) for dx in range(3)],
        axis=-1)                                               # (R, 9*Cin)
    h1 = jnp.dot(p1, w1_ref[...], preferred_element_type=jnp.float32)
    h1 = jnp.maximum(h1 + b1_ref[...], 0.0)                    # (R, 32)

    # Zero the junk rows (wrapped pad columns + inter-image pad rows) and drop the
    # result at its SAME-padded position (uniform shift of Wp+1) so conv2 sees a
    # correctly zero-bordered slab — all inside VMEM, no HBM round trip.
    row = jax.lax.broadcasted_iota(jnp.int32, (R, 1), 0)
    valid = ((row % Pin) < L) & ((row % Wp) < W)
    h1 = jnp.where(valid, h1, 0.0)
    h1_ref[...] = jnp.zeros_like(h1_ref)
    h1_ref[pl.ds(Wp + 1, R), :] = h1

    # ---- conv2: same im2col structure reading the VMEM-resident padded slab ----
    p2 = jnp.concatenate(
        [h1_ref[pl.ds(dy * Wp + dx, R), :] for dy in range(3) for dx in range(3)],
        axis=-1)                                               # (R, 9*32)
    h2 = jnp.dot(p2, w2_ref[...], preferred_element_type=jnp.float32)
    o_ref[...] = jnp.maximum(h2 + b2_ref[...], 0.0).astype(o_ref.dtype)


def _mlp_kernel(x_ref, w1_ref, b1_ref, w2_ref, b2_ref, o_ref):
    """Fused Linear -> ReLU -> Linear head (batch on M)."""
    h = jnp.dot(x_ref[...], w1_ref[...],
                preferred_element_type=jnp.float32) + b1_ref[...]
    h = jnp.maximum(h, 0.0)
    q = jnp.dot(h, w2_ref[...],
                preferred_element_type=jnp.float32) + b2_ref[...]
    o_ref[...] = q.astype(o_ref.dtype)


# ---------------------------------------------------------------------------
# Pallas wrappers
# ---------------------------------------------------------------------------
def conv_stack(xg, w1r, b1, w2r, b2, *, N, H, W):
    """xg: (N*Pin + 3*Wp, Cin) stacked padded slabs -> (N*Pin, 64)."""
    Wp = W + 2
    Pin = (H + 3) * Wp
    R = N * Pin
    Rin = R + 3 * Wp
    Cin = xg.shape[-1]
    return pl.pallas_call(
        functools.partial(_conv_stack_kernel, H=H, W=W, N=N),
        out_shape=jax.ShapeDtypeStruct((R, 64), jnp.float32),
        grid=(1,),
        in_specs=[
            pl.BlockSpec((Rin, Cin), lambda i: (0, 0)),
            pl.BlockSpec((9 * Cin, 32), lambda i: (0, 0)),
            pl.BlockSpec((1, 32), lambda i: (0, 0)),
            pl.BlockSpec((9 * 32, 64), lambda i: (0, 0)),
            pl.BlockSpec((1, 64), lambda i: (0, 0)),
        ],
        out_specs=pl.BlockSpec((R, 64), lambda i: (0, 0)),
        scratch_shapes=[pltpu.VMEM((Rin, 32), jnp.float32)],
        compiler_params=pltpu.CompilerParams(
            dimension_semantics=("arbitrary",)),
    )(xg, w1r, b1, w2r, b2)


def mlp_head(flat, w1, b1, w2, b2):
    """flat: (N, F); w1: (F, Hid); w2: (Hid, A) -> (N, A)."""
    N, F = flat.shape
    Hid = w1.shape[1]
    A = w2.shape[1]
    return pl.pallas_call(
        _mlp_kernel,
        out_shape=jax.ShapeDtypeStruct((N, A), jnp.float32),
        grid=(1,),
        in_specs=[
            pl.BlockSpec((N, F), lambda i: (0, 0)),
            pl.BlockSpec((F, Hid), lambda i: (0, 0)),
            pl.BlockSpec((1, Hid), lambda i: (0, 0)),
            pl.BlockSpec((Hid, A), lambda i: (0, 0)),
            pl.BlockSpec((1, A), lambda i: (0, 0)),
        ],
        out_specs=pl.BlockSpec((N, A), lambda i: (0, 0)),
        compiler_params=pltpu.CompilerParams(
            dimension_semantics=("arbitrary",)),
    )(flat, w1, b1, w2, b2)


# ---------------------------------------------------------------------------
# Parameters (PyTorch-convention) + one-time kernel-layout prep + forward
# ---------------------------------------------------------------------------
def init_params(key, input_channels, n_actions, grid_size):
    """Deterministic init mirroring PyTorch default uniform(-1/sqrt(fan_in), ...)."""
    H, W = grid_size
    ks = jax.random.split(key, 8)

    def u(k, shape, fan_in):
        bound = 1.0 / float(fan_in) ** 0.5
        return jax.random.uniform(k, shape, jnp.float32, -bound, bound)

    conv_out = 64 * H * W
    return dict(
        w1=u(ks[0], (32, input_channels, 3, 3), input_channels * 9),
        b1=u(ks[1], (32,), input_channels * 9),
        w2=u(ks[2], (64, 32, 3, 3), 32 * 9),
        b2=u(ks[3], (64,), 32 * 9),
        wf1=u(ks[4], (128, conv_out), conv_out),
        bf1=u(ks[5], (128,), conv_out),
        wf2=u(ks[6], (n_actions, 128), 128),
        bf2=u(ks[7], (n_actions,), 128),
    )


def prepare_params(params, grid_size):
    """One-time weight re-layout (call once, outside the per-step forward)."""
    H, W = grid_size
    w1, w2, wf1 = params["w1"], params["w2"], params["wf1"]
    cin = w1.shape[1]
    hid = wf1.shape[0]

    # Conv weights (Cout, Cin, 3, 3) -> (9*Cin, Cout), row = (dy*3+dx)*Cin + cin.
    w1r = jnp.transpose(w1, (2, 3, 1, 0)).reshape(9 * cin, 32)
    w2r = jnp.transpose(w2, (2, 3, 1, 0)).reshape(9 * 32, 64)

    # FC1 weight: transpose + permute its rows from PyTorch's NCHW-flatten order
    # f = c*H*W + y*W + x to the kernel's cropped NHWC order f = (y*W + x)*64 + c.
    # Compact (exactly 64*H*W rows) — no zero-padded rows, so the largest weight
    # the forward streams from HBM carries no dead traffic.
    wt = wf1.T.reshape(64, H, W, hid)                 # (c, y, x, o) PyTorch order
    wf1c = jnp.transpose(wt, (1, 2, 0, 3)).reshape(H * W * 64, hid)

    return dict(
        w1r=w1r, b1=params["b1"].reshape(1, -1),
        w2r=w2r, b2=params["b2"].reshape(1, -1),
        wf1c=wf1c, bf1=params["bf1"].reshape(1, -1),
        wf2t=params["wf2"].T, bf2=params["bf2"].reshape(1, -1),
    )


def dqn_forward(prepped, state_nchw):
    """Pallas forward. state_nchw: (N, C, H, W) like the PyTorch module."""
    N, C, H, W = state_nchw.shape
    Wp = W + 2
    Pin = (H + 3) * Wp

    # Tiny (KB-scale) input prep: NCHW -> NHWC, zero-pad each image to a
    # (H+3, W+2) slab and stack all batches into one global slab.
    x = jnp.transpose(state_nchw, (0, 2, 3, 1))
    xp = jnp.pad(x, ((0, 0), (1, 2), (1, 1), (0, 0)))
    xg = jnp.pad(xp.reshape(N * Pin, C), ((0, 3 * Wp), (0, 0)))

    # Fused conv1+conv2 (single pallas_call, batch folded into M).
    h2 = conv_stack(xg, prepped["w1r"], prepped["b1"],
                    prepped["w2r"], prepped["b2"], N=N, H=H, W=W)  # (N*Pin, 64)

    # Crop the padded slab back to the H*W valid pixels (one cheap XLA strided
    # slice of ~tens of KB) so FC1 contracts over exactly 64*H*W features and its
    # pre-permuted weight needs no zero rows.
    flat = h2.reshape(N, H + 3, Wp, 64)[:, :H, :W, :].reshape(N, H * W * 64)

    # Fused FC1+ReLU+FC2.
    return mlp_head(flat, prepped["wf1c"], prepped["bf1"],
                    prepped["wf2t"], prepped["bf2"])


def dqn_reference(params, state_nchw):
    """Pure-JAX reference reproducing the PyTorch module exactly (NCHW)."""
    dn = ("NCHW", "OIHW", "NCHW")
    prec = jax.lax.Precision.HIGHEST
    h = jax.lax.conv_general_dilated(state_nchw, params["w1"], (1, 1), "SAME",
                                     dimension_numbers=dn, precision=prec)
    h = jax.nn.relu(h + params["b1"][None, :, None, None])
    h = jax.lax.conv_general_dilated(h, params["w2"], (1, 1), "SAME",
                                     dimension_numbers=dn, precision=prec)
    h = jax.nn.relu(h + params["b2"][None, :, None, None])
    flat = h.reshape(h.shape[0], -1)
    f = jax.nn.relu(jnp.dot(flat, params["wf1"].T, precision=prec) + params["bf1"])
    return jnp.dot(f, params["wf2"].T, precision=prec) + params["bf2"]


# TODO(synk): optimizer (Adam), SmoothL1Loss and device placement in __init__ are
# training-side state with no forward-pass Pallas equivalent; only forward is implemented.
# TODO(synk): on v7x, batch could additionally be sharded across the 2 TensorCores
# via a parallel grid axis once replay batches are large; skipped at batch=2.

if __name__ == "__main__":
    key = jax.random.PRNGKey(0)
    k_param, k_x = jax.random.split(key)

    batch, input_channels, n_actions, grid_size = 2, 4, 4, (8, 8)
    params = init_params(k_param, input_channels, n_actions, grid_size)
    prepped = prepare_params(params, grid_size)   # one-time weight re-layout
    x = jax.random.normal(k_x, (batch, input_channels) + grid_size, jnp.float32)

    q = jax.jit(dqn_forward)(prepped, x)
    q = jax.block_until_ready(q)

    q_ref = dqn_reference(params, x)
    assert q.shape == (batch, n_actions), q.shape
    if not jnp.allclose(q, q_ref, rtol=2e-3, atol=2e-3):
        raise AssertionError(
            f"mismatch vs reference, max abs diff = {jnp.max(jnp.abs(q - q_ref))}")

    print("KERNEL_OK")
</pallas_src>

<mosaic_0001>
module attributes {stable_mosaic.version = 11 : i64} {
  func.func @_conv_stack_kernel(%arg0: i32, %arg1: memref<250x4xf32, #tpu.memory_space<vmem>>, %arg2: memref<36x32xf32, #tpu.memory_space<vmem>>, %arg3: memref<1x32xf32, #tpu.memory_space<vmem>>, %arg4: memref<288x64xf32, #tpu.memory_space<vmem>>, %arg5: memref<1x64xf32, #tpu.memory_space<vmem>>, %arg6: memref<220x64xf32, #tpu.memory_space<vmem>>, %arg7: memref<250x32xf32, #tpu.memory_space<vmem>>) attributes {dimension_semantics = [#tpu.dimension_semantics<arbitrary>], iteration_bounds = array<i64: 1>, scalar_prefetch = 0 : i64, scratch_operands = 1 : i64, tpu.core_type = #tpu.core_type<tc>, window_params = [{pipeline_mode = #tpu.pipeline_mode<synchronous>, transform_indices = @transform_0, window_bounds = array<i64: 250, 4>}, {pipeline_mode = #tpu.pipeline_mode<synchronous>, transform_indices = @transform_1, window_bounds = array<i64: 36, 32>}, {pipeline_mode = #tpu.pipeline_mode<synchronous>, transform_indices = @transform_2, window_bounds = array<i64: 1, 32>}, {pipeline_mode = #tpu.pipeline_mode<synchronous>, transform_indices = @transform_3, window_bounds = array<i64: 288, 64>}, {pipeline_mode = #tpu.pipeline_mode<synchronous>, transform_indices = @transform_4, window_bounds = array<i64: 1, 64>}, {pipeline_mode = #tpu.pipeline_mode<synchronous>, transform_indices = @transform_5, window_bounds = array<i64: 220, 64>}]} {
    %c0 = arith.constant 0 : index
    %c0_0 = arith.constant 0 : index
    %0 = vector.load %arg1[%c0, %c0_0] : memref<250x4xf32, #tpu.memory_space<vmem>>, vector<220x4xf32>
    %c1 = arith.constant 1 : index
    %c0_1 = arith.constant 0 : index
    %1 = vector.load %arg1[%c1, %c0_1] : memref<250x4xf32, #tpu.memory_space<vmem>>, vector<220x4xf32>
    %c2 = arith.constant 2 : index
    %c0_2 = arith.constant 0 : index
    %2 = vector.load %arg1[%c2, %c0_2] : memref<250x4xf32, #tpu.memory_space<vmem>>, vector<220x4xf32>
    %c10 = arith.constant 10 : index
    %c0_3 = arith.constant 0 : index
    %3 = vector.load %arg1[%c10, %c0_3] : memref<250x4xf32, #tpu.memory_space<vmem>>, vector<220x4xf32>
    %c11 = arith.constant 11 : index
    %c0_4 = arith.constant 0 : index
    %4 = vector.load %arg1[%c11, %c0_4] : memref<250x4xf32, #tpu.memory_space<vmem>>, vector<220x4xf32>
    %c12 = arith.constant 12 : index
    %c0_5 = arith.constant 0 : index
    %5 = vector.load %arg1[%c12, %c0_5] : memref<250x4xf32, #tpu.memory_space<vmem>>, vector<220x4xf32>
    %c20 = arith.constant 20 : index
    %c0_6 = arith.constant 0 : index
    %6 = vector.load %arg1[%c20, %c0_6] : memref<250x4xf32, #tpu.memory_space<vmem>>, vector<220x4xf32>
    %c21 = arith.constant 21 : index
    %c0_7 = arith.constant 0 : index
    %7 = vector.load %arg1[%c21, %c0_7] : memref<250x4xf32, #tpu.memory_space<vmem>>, vector<220x4xf32>
    %c22 = arith.constant 22 : index
    %c0_8 = arith.constant 0 : index
    %8 = vector.load %arg1[%c22, %c0_8] : memref<250x4xf32, #tpu.memory_space<vmem>>, vector<220x4xf32>
    %9 = tpu.concatenate %0, %1, %2, %3, %4, %5, %6, %7, %8 in 1 : vector<220x4xf32>, vector<220x4xf32>, vector<220x4xf32>, vector<220x4xf32>, vector<220x4xf32>, vector<220x4xf32>, vector<220x4xf32>, vector<220x4xf32>, vector<220x4xf32> -> vector<220x36xf32>
    %c0_9 = arith.constant 0 : index
    %c0_10 = arith.constant 0 : index
    %10 = vector.load %arg2[%c0_9, %c0_10] : memref<36x32xf32, #tpu.memory_space<vmem>>, vector<36x32xf32>
    %cst = arith.constant dense<0.000000e+00> : vector<220x32xf32>
    %11 = tpu.matmul %9, %10, %cst {dimension_numbers = #tpu.dot_dimension_numbers<[1], [0], [0], [1], [0, 0, 1, 1], [], []>} : vector<220x36xf32>, vector<36x32xf32>, vector<220x32xf32> -> vector<220x32xf32>
    %c0_11 = arith.constant 0 : index
    %c0_12 = arith.constant 0 : index
    %12 = vector.load %arg3[%c0_11, %c0_12] : memref<1x32xf32, #tpu.memory_space<vmem>>, vector<1x32xf32>
    %13 = vector.broadcast %12 : vector<1x32xf32> to vector<220x32xf32>
    %14 = arith.addf %11, %13 : vector<220x32xf32>
    %cst_13 = arith.constant 0.000000e+00 : f32
    %15 = vector.broadcast %cst_13 : f32 to vector<220x32xf32>
    %16 = arith.maximumf %14, %15 : vector<220x32xf32>
    %17 = tpu.iota {dimensions = array<i32: 0>} : vector<220x1xi32>
    %c110_i32 = arith.constant 110 : i32
    %c0_i32 = arith.constant 0 : i32
    %18 = arith.cmpi eq, %c110_i32, %c0_i32 : i32
    %c1_i32 = arith.constant 1 : i32
    %19 = arith.select %18, %c1_i32, %c110_i32 : i32
    %20 = vector.broadcast %19 : i32 to vector<220x1xi32>
    %21 = arith.remsi %17, %20 : vector<220x1xi32>
    %c0_i32_14 = arith.constant 0 : i32
    %22 = vector.broadcast %c0_i32_14 : i32 to vector<220x1xi32>
    %23 = arith.cmpi ne, %21, %22 : vector<220x1xi32>
    %c0_i32_15 = arith.constant 0 : i32
    %24 = vector.broadcast %c0_i32_15 : i32 to vector<220x1xi32>
    %25 = arith.cmpi slt, %21, %24 : vector<220x1xi32>
    %c0_i32_16 = arith.constant 0 : i32
    %26 = arith.cmpi slt, %19, %c0_i32_16 : i32
    %27 = vector.broadcast %26 : i1 to vector<220x1xi1>
    %28 = vector.broadcast %27 : vector<220x1xi1> to vector<220x1xi1>
    %29 = arith.xori %25, %28 : vector<220x1xi1>
    %30 = arith.andi %29, %23 : vector<220x1xi1>
    %31 = vector.broadcast %19 : i32 to vector<220x1xi32>
    %32 = arith.addi %21, %31 : vector<220x1xi32>
    %33 = arith.select %30, %32, %21 : vector<220x1xi1>, vector<220x1xi32>
    %c80_i32 = arith.constant 80 : i32
    %34 = vector.broadcast %c80_i32 : i32 to vector<220x1xi32>
    %35 = arith.cmpi slt, %33, %34 : vector<220x1xi32>
    %c10_i32 = arith.constant 10 : i32
    %c0_i32_17 = arith.constant 0 : i32
    %36 = arith.cmpi eq, %c10_i32, %c0_i32_17 : i32
    %c1_i32_18 = arith.constant 1 : i32
    %37 = arith.select %36, %c1_i32_18, %c10_i32 : i32
    %38 = vector.broadcast %37 : i32 to vector<220x1xi32>
    %39 = arith.remsi %17, %38 : vector<220x1xi32>
    %c0_i32_19 = arith.constant 0 : i32
    %40 = vector.broadcast %c0_i32_19 : i32 to vector<220x1xi32>
    %41 = arith.cmpi ne, %39, %40 : vector<220x1xi32>
    %c0_i32_20 = arith.constant 0 : i32
    %42 = vector.broadcast %c0_i32_20 : i32 to vector<220x1xi32>
    %43 = arith.cmpi slt, %39, %42 : vector<220x1xi32>
    %c0_i32_21 = arith.constant 0 : i32
    %44 = arith.cmpi slt, %37, %c0_i32_21 : i32
    %45 = vector.broadcast %44 : i1 to vector<220x1xi1>
    %46 = vector.broadcast %45 : vector<220x1xi1> to vector<220x1xi1>
    %47 = arith.xori %43, %46 : vector<220x1xi1>
    %48 = arith.andi %47, %41 : vector<220x1xi1>
    %49 = vector.broadcast %37 : i32 to vector<220x1xi32>
    %50 = arith.addi %39, %49 : vector<220x1xi32>
    %51 = arith.select %48, %50, %39 : vector<220x1xi1>, vector<220x1xi32>
    %c8_i32 = arith.constant 8 : i32
    %52 = vector.broadcast %c8_i32 : i32 to vector<220x1xi32>
    %53 = arith.cmpi slt, %51, %52 : vector<220x1xi32>
    %54 = arith.andi %35, %53 : vector<220x1xi1>
    %cst_22 = arith.constant 0.000000e+00 : f32
    %55 = vector.shape_cast %54 : vector<220x1xi1> to vector<220x1xi1>
    %56 = vector.broadcast %55 : vector<220x1xi1> to vector<220x32xi1>
    %57 = vector.broadcast %cst_22 : f32 to vector<220x32xf32>
    %58 = arith.select %56, %16, %57 : vector<220x32xi1>, vector<220x32xf32>
    %cst_23 = arith.constant 0.000000e+00 : f32
    %59 = vector.broadcast %cst_23 : f32 to vector<250x32xf32>
    %c0_24 = arith.constant 0 : index
    %c0_25 = arith.constant 0 : index
    %60 = vector.load %arg7[%c0_24, %c0_25] : memref<250x32xf32, #tpu.memory_space<vmem>>, vector<250x32xf32>
    tpu.vector_store %arg7[%c0_24, %c0_25], %59 {strides = array<i32>} : memref<250x32xf32, #tpu.memory_space<vmem>>, vector<250x32xf32>,
    %c11_26 = arith.constant 11 : index
    %c0_27 = arith.constant 0 : index
    %61 = vector.load %arg7[%c11_26, %c0_27] : memref<250x32xf32, #tpu.memory_space<vmem>>, vector<220x32xf32>
    tpu.vector_store %arg7[%c11_26, %c0_27], %58 {strides = array<i32>} : memref<250x32xf32, #tpu.memory_space<vmem>>, vector<220x32xf32>,
    %c0_28 = arith.constant 0 : index
    %c0_29 = arith.constant 0 : index
    %62 = vector.load %arg7[%c0_28, %c0_29] : memref<250x32xf32, #tpu.memory_space<vmem>>, vector<220x32xf32>
    %c1_30 = arith.constant 1 : index
    %c0_31 = arith.constant 0 : index
    %63 = vector.load %arg7[%c1_30, %c0_31] : memref<250x32xf32, #tpu.memory_space<vmem>>, vector<220x32xf32>
    %c2_32 = arith.constant 2 : index
    %c0_33 = arith.constant 0 : index
    %64 = vector.load %arg7[%c2_32, %c0_33] : memref<250x32xf32, #tpu.memory_space<vmem>>, vector<220x32xf32>
    %c10_34 = arith.constant 10 : index
    %c0_35 = arith.constant 0 : index
    %65 = vector.load %arg7[%c10_34, %c0_35] : memref<250x32xf32, #tpu.memory_space<vmem>>, vector<220x32xf32>
    %c11_36 = arith.constant 11 : index
    %c0_37 = arith.constant 0 : index
    %66 = vector.load %arg7[%c11_36, %c0_37] : memref<250x32xf32, #tpu.memory_space<vmem>>, vector<220x32xf32>
    %c12_38 = arith.constant 12 : index
    %c0_39 = arith.constant 0 : index
    %67 = vector.load %arg7[%c12_38, %c0_39] : memref<250x32xf32, #tpu.memory_space<vmem>>, vector<220x32xf32>
    %c20_40 = arith.constant 20 : index
    %c0_41 = arith.constant 0 : index
    %68 = vector.load %arg7[%c20_40, %c0_41] : memref<250x32xf32, #tpu.memory_space<vmem>>, vector<220x32xf32>
    %c21_42 = arith.constant 21 : index
    %c0_43 = arith.constant 0 : index
    %69 = vector.load %arg7[%c21_42, %c0_43] : memref<250x32xf32, #tpu.memory_space<vmem>>, vector<220x32xf32>
    %c22_44 = arith.constant 22 : index
    %c0_45 = arith.constant 0 : index
    %70 = vector.load %arg7[%c22_44, %c0_45] : memref<250x32xf32, #tpu.memory_space<vmem>>, vector<220x32xf32>
    %71 = tpu.concatenate %62, %63, %64, %65, %66, %67, %68, %69, %70 in 1 : vector<220x32xf32>, vector<220x32xf32>, vector<220x32xf32>, vector<220x32xf32>, vector<220x32xf32>, vector<220x32xf32>, vector<220x32xf32>, vector<220x32xf32>, vector<220x32xf32> -> vector<220x288xf32>
    %c0_46 = arith.constant 0 : index
    %c0_47 = arith.constant 0 : index
    %72 = vector.load %arg4[%c0_46, %c0_47] : memref<288x64xf32, #tpu.memory_space<vmem>>, vector<288x64xf32>
    %cst_48 = arith.constant dense<0.000000e+00> : vector<220x64xf32>
    %73 = tpu.matmul %71, %72, %cst_48 {dimension_numbers = #tpu.dot_dimension_numbers<[1], [0], [0], [1], [0, 0, 1, 1], [], []>} : vector<220x288xf32>, vector<288x64xf32>, vector<220x64xf32> -> vector<220x64xf32>
    %c0_49 = arith.constant 0 : index
    %c0_50 = arith.constant 0 : index
    %74 = vector.load %arg5[%c0_49, %c0_50] : memref<1x64xf32, #tpu.memory_space<vmem>>, vector<1x64xf32>
    %75 = vector.broadcast %74 : vector<1x64xf32> to vector<220x64xf32>
    %76 = arith.addf %73, %75 : vector<220x64xf32>
    %cst_51 = arith.constant 0.000000e+00 : f32
    %77 = vector.broadcast %cst_51 : f32 to vector<220x64xf32>
    %78 = arith.maximumf %76, %77 : vector<220x64xf32>
    %c0_52 = arith.constant 0 : index
    %c0_53 = arith.constant 0 : index
    %79 = vector.load %arg6[%c0_52, %c0_53] : memref<220x64xf32, #tpu.memory_space<vmem>>, vector<220x64xf32>
    tpu.vector_store %arg6[%c0_52, %c0_53], %78 {strides = array<i32>} : memref<220x64xf32, #tpu.memory_space<vmem>>, vector<220x64xf32>,
    return
  }
  func.func @transform_0(%arg0: i32) -> (i32, i32) {
    %c0_i32 = arith.constant 0 : i32
    %c0_i32_0 = arith.constant 0 : i32
    %c0_i32_1 = arith.constant 0 : i32
    return %c0_i32, %c0_i32_0 : i32, i32
  }
  func.func @transform_1(%arg0: i32) -> (i32, i32) {
    %c0_i32 = arith.constant 0 : i32
    %c0_i32_0 = arith.constant 0 : i32
    %c0_i32_1 = arith.constant 0 : i32
    return %c0_i32, %c0_i32_0 : i32, i32
  }
  func.func @transform_2(%arg0: i32) -> (i32, i32) {
    %c0_i32 = arith.constant 0 : i32
    %c0_i32_0 = arith.constant 0 : i32
    %c0_i32_1 = arith.constant 0 : i32
    return %c0_i32, %c0_i32_0 : i32, i32
  }
  func.func @transform_3(%arg0: i32) -> (i32, i32) {
    %c0_i32 = arith.constant 0 : i32
    %c0_i32_0 = arith.constant 0 : i32
    %c0_i32_1 = arith.constant 0 : i32
    return %c0_i32, %c0_i32_0 : i32, i32
  }
  func.func @transform_4(%arg0: i32) -> (i32, i32) {
    %c0_i32 = arith.constant 0 : i32
    %c0_i32_0 = arith.constant 0 : i32
    %c0_i32_1 = arith.constant 0 : i32
    return %c0_i32, %c0_i32_0 : i32, i32
  }
  func.func @transform_5(%arg0: i32) -> (i32, i32) {
    %c0_i32 = arith.constant 0 : i32
    %c0_i32_0 = arith.constant 0 : i32
    %c0_i32_1 = arith.constant 0 : i32
    return %c0_i32, %c0_i32_0 : i32, i32
  }
}

module attributes {stable_mosaic.version = 11 : i64} {
  func.func @_mlp_kernel(%arg0: i32, %arg1: memref<2x4096xf32, #tpu.memory_space<vmem>>, %arg2: memref<4096x128xf32, #tpu.memory_space<vmem>>, %arg3: memref<1x128xf32, #tpu.memory_space<vmem>>, %arg4: memref<128x4xf32, #tpu.memory_space<vmem>>, %arg5: memref<1x4xf32, #tpu.memory_space<vmem>>, %arg6: memref<2x4xf32, #tpu.memory_space<vmem>>) attributes {dimension_semantics = [#tpu.dimension_semantics<arbitrary>], iteration_bounds = array<i64: 1>, scalar_prefetch = 0 : i64, scratch_operands = 0 : i64, tpu.core_type = #tpu.core_type<tc>, window_params = [{pipeline_mode = #tpu.pipeline_mode<synchronous>, transform_indices = @transform_0, window_bounds = array<i64: 2, 4096>}, {pipeline_mode = #tpu.pipeline_mode<synchronous>, transform_indices = @transform_1, window_bounds = array<i64: 4096, 128>}, {pipeline_mode = #tpu.pipeline_mode<synchronous>, transform_indices = @transform_2, window_bounds = array<i64: 1, 128>}, {pipeline_mode = #tpu.pipeline_mode<synchronous>, transform_indices = @transform_3, window_bounds = array<i64: 128, 4>}, {pipeline_mode = #tpu.pipeline_mode<synchronous>, transform_indices = @transform_4, window_bounds = array<i64: 1, 4>}, {pipeline_mode = #tpu.pipeline_mode<synchronous>, transform_indices = @transform_5, window_bounds = array<i64: 2, 4>}]} {
    %c0 = arith.constant 0 : index
    %c0_0 = arith.constant 0 : index
    %0 = vector.load %arg1[%c0, %c0_0] : memref<2x4096xf32, #tpu.memory_space<vmem>>, vector<2x4096xf32>
    %c0_1 = arith.constant 0 : index
    %c0_2 = arith.constant 0 : index
    %1 = vector.load %arg2[%c0_1, %c0_2] : memref<4096x128xf32, #tpu.memory_space<vmem>>, vector<4096x128xf32>
    %cst = arith.constant dense<0.000000e+00> : vector<2x128xf32>
    %2 = tpu.matmul %0, %1, %cst {dimension_numbers = #tpu.dot_dimension_numbers<[1], [0], [0], [1], [0, 0, 1, 1], [], []>} : vector<2x4096xf32>, vector<4096x128xf32>, vector<2x128xf32> -> vector<2x128xf32>
    %c0_3 = arith.constant 0 : index
    %c0_4 = arith.constant 0 : index
    %3 = vector.load %arg3[%c0_3, %c0_4] : memref<1x128xf32, #tpu.memory_space<vmem>>, vector<1x128xf32>
    %4 = vector.broadcast %3 : vector<1x128xf32> to vector<2x128xf32>
    %5 = arith.addf %2, %4 : vector<2x128xf32>
    %cst_5 = arith.constant 0.000000e+00 : f32
    %6 = vector.broadcast %cst_5 : f32 to vector<2x128xf32>
    %7 = arith.maximumf %5, %6 : vector<2x128xf32>
    %c0_6 = arith.constant 0 : index
    %c0_7 = arith.constant 0 : index
    %8 = vector.load %arg4[%c0_6, %c0_7] : memref<128x4xf32, #tpu.memory_space<vmem>>, vector<128x4xf32>
    %cst_8 = arith.constant dense<0.000000e+00> : vector<2x4xf32>
    %9 = tpu.matmul %7, %8, %cst_8 {dimension_numbers = #tpu.dot_dimension_numbers<[1], [0], [0], [1], [0, 0, 1, 1], [], []>} : vector<2x128xf32>, vector<128x4xf32>, vector<2x4xf32> -> vector<2x4xf32>
    %c0_9 = arith.constant 0 : index
    %c0_10 = arith.constant 0 : index
    %10 = vector.load %arg5[%c0_9, %c0_10] : memref<1x4xf32, #tpu.memory_space<vmem>>, vector<1x4xf32>
    %11 = vector.broadcast %10 : vector<1x4xf32> to vector<2x4xf32>
    %12 = arith.addf %9, %11 : vector<2x4xf32>
    %c0_11 = arith.constant 0 : index
    %c0_12 = arith.constant 0 : index
    %13 = vector.load %arg6[%c0_11, %c0_12] : memref<2x4xf32, #tpu.memory_space<vmem>>, vector<2x4xf32>
    tpu.vector_store %arg6[%c0_11, %c0_12], %12 {strides = array<i32>} : memref<2x4xf32, #tpu.memory_space<vmem>>, vector<2x4xf32>,
    return
  }
  func.func @transform_0(%arg0: i32) -> (i32, i32) {
    %c0_i32 = arith.constant 0 : i32
    %c0_i32_0 = arith.constant 0 : i32
    %c0_i32_1 = arith.constant 0 : i32
    return %c0_i32, %c0_i32_0 : i32, i32
  }
  func.func @transform_1(%arg0: i32) -> (i32, i32) {
    %c0_i32 = arith.constant 0 : i32
    %c0_i32_0 = arith.constant 0 : i32
    %c0_i32_1 = arith.constant 0 : i32
    return %c0_i32, %c0_i32_0 : i32, i32
  }
  func.func @transform_2(%arg0: i32) -> (i32, i32) {
    %c0_i32 = arith.constant 0 : i32
    %c0_i32_0 = arith.constant 0 : i32
    %c0_i32_1 = arith.constant 0 : i32
    return %c0_i32, %c0_i32_0 : i32, i32
  }
  func.func @transform_3(%arg0: i32) -> (i32, i32) {
    %c0_i32 = arith.constant 0 : i32
    %c0_i32_0 = arith.constant 0 : i32
    %c0_i32_1 = arith.constant 0 : i32
    return %c0_i32, %c0_i32_0 : i32, i32
  }
  func.func @transform_4(%arg0: i32) -> (i32, i32) {
    %c0_i32 = arith.constant 0 : i32
    %c0_i32_0 = arith.constant 0 : i32
    %c0_i32_1 = arith.constant 0 : i32
    return %c0_i32, %c0_i32_0 : i32, i32
  }
  func.func @transform_5(%arg0: i32) -> (i32, i32) {
    %c0_i32 = arith.constant 0 : i32
    %c0_i32_0 = arith.constant 0 : i32
    %c0_i32_1 = arith.constant 0 : i32
    return %c0_i32, %c0_i32_0 : i32, i32
  }
}

</mosaic_0001>

<llo_original>
// kernel: dqn_forward.3
$region0: #{dqn_forward.3}
  #allocation0 [shape = 'u32[]', space=smem, size = 0x4, offset = 0x4, fixed_abs, tag = 'smem constant byte address 0x4 - core index']
  #allocation1 [shape = 'u32[144,128]{1,0:T(1,128)}', space=vmem, size = 0x12000, scoped, tag = 'internal scratch']
  %s0 = inlined_call_operand.vmem [shape: f32[2,4096], index: 0, kind: input, shape index: {}]
  %s1 = inlined_call_operand.hbm [shape: f32[4096,128], index: 1, kind: input, shape index: {}]
  %s2 = inlined_call_operand.hbm [shape: f32[1,128], index: 2, kind: input, shape index: {}]
  %s3 = inlined_call_operand.vmem [shape: f32[128,4], index: 3, kind: input, shape index: {}]
  %s4 = inlined_call_operand.hbm [shape: f32[1,4], index: 4, kind: input, shape index: {}]
  %s5 = inlined_call_operand.hbm [shape: f32[2,4], index: 5, kind: output, shape index: {}]
  %s6 = sld [smem:[#allocation0]]
  $region42: #{dqn_forward.3} parent=0
    _
  %s8 = ssub.s32 1, %s6
  %s9 = scalar_select 0, %s8, %s6
  $region1: #{dqn_forward.3} parent=0
    #allocation2 [shape = 'u8[2097152]{0}', space=vmem, size = 0x200000, scoped, tag = 'input window, operand 1, single buffered']
    #allocation3 [shape = 's32[1]{0}', space=sflag, size = 0x4, scoped, tag = 'scoped memory for dqn_forward.3']
    #allocation4 [shape = 's32[1]{0}', space=sflag, size = 0x4, scoped, tag = 'scoped memory for dqn_forward.3']
    #allocation5 [shape = 'u8[512]{0}', space=vmem, size = 0x400, scoped, tag = 'input window, operand 2, single buffered']
    #allocation6 [shape = 's32[1]{0}', space=sflag, size = 0x4, scoped, tag = 'scoped memory for dqn_forward.3']
    #allocation7 [shape = 'u8[512]{0}', space=vmem, size = 0x400, scoped, tag = 'input window, operand 4, single buffered']
    #allocation8 [shape = 'u8[1024]{0}', space=vmem, size = 0x400, scoped, tag = 'output window, operand 0, single buffered']
    %10 = vsyncpa [#allocation3], 0
    %11 = vsyncpa [#allocation6], 0
    %12 = vsyncpa [#allocation4], 0
    // Predicated region
    $region2: #{dqn_forward.3} parent=1 // pred_check
      _
    $region3: #{dqn_forward.3} parent=1 // pred_check_branch
      %14 = sbr.rel (0) target = $region5
    $region4: #{dqn_forward.3} parent=1 // pred_region
      _
    $region5: #{dqn_forward.3} parent=1 // pred_fallthru
      _
    // Predicated region
    $region6: #{dqn_forward.3} parent=1 // pred_check
      _
    $region7: #{dqn_forward.3} parent=1 // pred_check_branch
      %16 = sbr.rel (0) target = $region9
    $region8: #{dqn_forward.3} parent=1 // pred_region
      %s18 = ssub.s32 65536, 65536
      %19 = vsyncadd [#allocation3], %s18
      %s20 = sshll.u32 [#allocation2], 4
      %s21 = int_to_ptr.vmem [resolvable:$true] %s20
      %26 = dma.hbm_to_vmem [thread:$0]  %s1, 65536, %s21, [#allocation3], 128, 128, 8
    $region9: #{dqn_forward.3} parent=1 // pred_fallthru
      _
    // Predicated region
    $region10: #{dqn_forward.3} parent=1 // pred_check
      _
    $region11: #{dqn_forward.3} parent=1 // pred_check_branch
      %28 = sbr.rel (0) target = $region13
    $region12: #{dqn_forward.3} parent=1 // pred_region
      %s30 = ssub.s32 16, 16
      %31 = vsyncadd [#allocation6], %s30
      %s33 = sshll.u32 [#allocation5], 4
      %s34 = int_to_ptr.vmem [resolvable:$true] %s33
      %36 = dma.hbm_to_vmem [thread:$0]  %s2, 16, %s34, [#allocation6]
    $region13: #{dqn_forward.3} parent=1 // pred_fallthru
      _
    // Predicated region
    $region14: #{dqn_forward.3} parent=1 // pred_check
      _
    $region15: #{dqn_forward.3} parent=1 // pred_check_branch
      %38 = sbr.rel (0) target = $region17
    $region16: #{dqn_forward.3} parent=1 // pred_region
      _
    $region17: #{dqn_forward.3} parent=1 // pred_fallthru
      _
    // Predicated region
    $region18: #{dqn_forward.3} parent=1 // pred_check
      _
    $region19: #{dqn_forward.3} parent=1 // pred_check_branch
      %40 = sbr.rel (0) target = $region21
    $region20: #{dqn_forward.3} parent=1 // pred_region
      %s42 = ssub.s32 16, 16
      %43 = vsyncadd [#allocation6], %s42
      %s45 = sshll.u32 [#allocation7], 4
      %s46 = int_to_ptr.vmem [resolvable:$true] %s45
      %48 = dma.hbm_to_vmem [thread:$0]  %s4, 16, %s46, [#allocation6]
    $region21: #{dqn_forward.3} parent=1 // pred_fallthru
      _
    // Predicated region
    $region22: #{dqn_forward.3} parent=1 // pred_check
      _
    $region23: #{dqn_forward.3} parent=1 // pred_check_branch
      %50 = sbr.rel (0) target = $region25
    $region24: #{dqn_forward.3} parent=1 // pred_region
      %51 = dma.done [#allocation3], 65536
    $region25: #{dqn_forward.3} parent=1 // pred_fallthru
      _
    // Predicated region
    $region26: #{dqn_forward.3} parent=1 // pred_check
      _
    $region27: #{dqn_forward.3} parent=1 // pred_check_branch
      %53 = sbr.rel (0) target = $region29
    $region28: #{dqn_forward.3} parent=1 // pred_region
      %54 = dma.done [#allocation6], 16
    $region29: #{dqn_forward.3} parent=1 // pred_fallthru
      _
    // Predicated region
    $region30: #{dqn_forward.3} parent=1 // pred_check
      _
    $region31: #{dqn_forward.3} parent=1 // pred_check_branch
      %56 = sbr.rel (0) target = $region33
    $region32: #{dqn_forward.3} parent=1 // pred_region
      %57 = dma.done [#allocation6], 16
    $region33: #{dqn_forward.3} parent=1 // pred_fallthru
      _
    %v58 = vld [vmem:[%s0] sm:$0xff]
    %v59 = vld [vmem:[%s0 + $0x8] sm:$0xff]
    %v60 = vld [vmem:[%s0 + $0x10] sm:$0xff]
    %v61 = vld [vmem:[%s0 + $0x18] sm:$0xff]
    %v62 = vld [vmem:[%s0 + $0x20] sm:$0xff]
    %v63 = vld [vmem:[%s0 + $0x28] sm:$0xff]
    %v64 = vld [vmem:[%s0 + $0x30] sm:$0xff]
    %v65 = vld [vmem:[%s0 + $0x38] sm:$0xff]
    %v66 = vld [vmem:[#allocation2] sm:$0xff]
    %v67 = vld [vmem:[#allocation2 + $0x8] sm:$0xff]
    %v68 = vld [vmem:[#allocation2 + $0x10] sm:$0xff]
    %v69 = vld [vmem:[#allocation2 + $0x18] sm:$0xff]
    %v70 = vld [vmem:[#allocation2 + $0x20] sm:$0xff]
    %v71 = vld [vmem:[#allocation2 + $0x28] sm:$0xff]
    %v72 = vld [vmem:[#allocation2 + $0x30] sm:$0xff]
    %v73 = vld [vmem:[#allocation2 + $0x38] sm:$0xff]
    %v74 = vld [vmem:[#allocation2 + $0x40] sm:$0xff]
    %v75 = vld [vmem:[#allocation2 + $0x48] sm:$0xff]
    %v76 = vld [vmem:[#allocation2 + $0x50] sm:$0xff]
    %v77 = vld [vmem:[#allocation2 + $0x58] sm:$0xff]
    %v78 = vld [vmem:[#allocation2 + $0x60] sm:$0xff]
    %v79 = vld [vmem:[#allocation2 + $0x68] sm:$0xff]
    %v80 = vld [vmem:[#allocation2 + $0x70] sm:$0xff]
    %v81 = vld [vmem:[#allocation2 + $0x78] sm:$0xff]
    %v82 = vld [vmem:[#allocation2 + $0x80] sm:$0xff]
    %v83 = vld [vmem:[#allocation2 + $0x88] sm:$0xff]
    %v84 = vld [vmem:[#allocation2 + $0x90] sm:$0xff]
    %v85 = vld [vmem:[#allocation2 + $0x98] sm:$0xff]
    %v86 = vld [vmem:[#allocation2 + $0xa0] sm:$0xff]
    %v87 = vld [vmem:[#allocation2 + $0xa8] sm:$0xff]
    %v88 = vld [vmem:[#allocation2 + $0xb0] sm:$0xff]
    %v89 = vld [vmem:[#allocation2 + $0xb8] sm:$0xff]
    %v90 = vld [vmem:[#allocation2 + $0xc0] sm:$0xff]
    %v91 = vld [vmem:[#allocation2 + $0xc8] sm:$0xff]
    %v92 = vld [vmem:[#allocation2 + $0xd0] sm:$0xff]
    %v93 = vld [vmem:[#allocation2 + $0xd8] sm:$0xff]
    %v94 = vld [vmem:[#allocation2 + $0xe0] sm:$0xff]
    %v95 = vld [vmem:[#allocation2 + $0xe8] sm:$0xff]
    %v96 = vld [vmem:[#allocation2 + $0xf0] sm:$0xff]
    %v97 = vld [vmem:[#allocation2 + $0xf8] sm:$0xff]
    %v98 = vld [vmem:[#allocation2 + $0x100] sm:$0xff]
    %v99 = vld [vmem:[#allocation2 + $0x108] sm:$0xff]
    %v100 = vld [vmem:[#allocation2 + $0x110] sm:$0xff]
    %v101 = vld [vmem:[#allocation2 + $0x118] sm:$0xff]
    %v102 = vld [vmem:[#allocation2 + $0x120] sm:$0xff]
    %v103 = vld [vmem:[#allocation2 + $0x128] sm:$0xff]
    %v104 = vld [vmem:[#allocation2 + $0x130] sm:$0xff]
    %v105 = vld [vmem:[#allocation2 + $0x138] sm:$0xff]
    %v106 = vld [vmem:[#allocation2 + $0x140] sm:$0xff]
    %v107 = vld [vmem:[#allocation2 + $0x148] sm:$0xff]
    %v108 = vld [vmem:[#allocation2 + $0x150] sm:$0xff]
    %v109 = vld [vmem:[#allocation2 + $0x158] sm:$0xff]
    %v110 = vld [vmem:[#allocation2 + $0x160] sm:$0xff]
    %v111 = vld [vmem:[#allocation2 + $0x168] sm:$0xff]
    %v112 = vld [vmem:[#allocation2 + $0x170] sm:$0xff]
    %v113 = vld [vmem:[#allocation2 + $0x178] sm:$0xff]
    %v114 = vld [vmem:[#allocation2 + $0x180] sm:$0xff]
    %v115 = vld [vmem:[#allocation2 + $0x188] sm:$0xff]
    %v116 = vld [vmem:[#allocation2 + $0x190] sm:$0xff]
    %v117 = vld [vmem:[#allocation2 + $0x198] sm:$0xff]
    %v118 = vld [vmem:[#allocation2 + $0x1a0] sm:$0xff]
    %v119 = vld [vmem:[#allocation2 + $0x1a8] sm:$0xff]
    %v120 = vld [vmem:[#allocation2 + $0x1b0] sm:$0xff]
    %v121 = vld [vmem:[#allocation2 + $0x1b8] sm:$0xff]
    %v122 = vld [vmem:[#allocation2 + $0x1c0] sm:$0xff]
    %v123 = vld [vmem:[#allocation2 + $0x1c8] sm:$0xff]
    %v124 = vld [vmem:[#allocation2 + $0x1d0] sm:$0xff]
    %v125 = vld [vmem:[#allocation2 + $0x1d8] sm:$0xff]
    %v126 = vld [vmem:[#allocation2 + $0x1e0] sm:$0xff]
    %v127 = vld [vmem:[#allocation2 + $0x1e8] sm:$0xff]
    %v128 = vld [vmem:[#allocation2 + $0x1f0] sm:$0xff]
    %v129 = vld [vmem:[#allocation2 + $0x1f8] sm:$0xff]
    %v130 = vld [vmem:[#allocation2 + $0x200] sm:$0xff]
    %v131 = vld [vmem:[#allocation2 + $0x208] sm:$0xff]
    %v132 = vld [vmem:[#allocation2 + $0x210] sm:$0xff]
    %v133 = vld [vmem:[#allocation2 + $0x218] sm:$0xff]
    %v134 = vld [vmem:[#allocation2 + $0x220] sm:$0xff]
    %v135 = vld [vmem:[#allocation2 + $0x228] sm:$0xff]
    %v136 = vld [vmem:[#allocation2 + $0x230] sm:$0xff]
    %v137 = vld [vmem:[#allocation2 + $0x238] sm:$0xff]
    %v138 = vld [vmem:[#allocation2 + $0x240] sm:$0xff]
    %v139 = vld [vmem:[#allocation2 + $0x248] sm:$0xff]
    %v140 = vld [vmem:[#allocation2 + $0x250] sm:$0xff]
    %v141 = vld [vmem:[#allocation2 + $0x258] sm:$0xff]
    %v142 = vld [vmem:[#allocation2 + $0x260] sm:$0xff]
    %v143 = vld [vmem:[#allocation2 + $0x268] sm:$0xff]
    %v144 = vld [vmem:[#allocation2 + $0x270] sm:$0xff]
    %v145 = vld [vmem:[#allocation2 + $0x278] sm:$0xff]
    %v146 = vld [vmem:[#allocation2 + $0x280] sm:$0xff]
    %v147 = vld [vmem:[#allocation2 + $0x288] sm:$0xff]
    %v148 = vld [vmem:[#allocation2 + $0x290] sm:$0xff]
    %v149 = vld [vmem:[#allocation2 + $0x298] sm:$0xff]
    %v150 = vld [vmem:[#allocation2 + $0x2a0] sm:$0xff]
    %v151 = vld [vmem:[#allocation2 + $0x2a8] sm:$0xff]
    %v152 = vld [vmem:[#allocation2 + $0x2b0] sm:$0xff]
    %v153 = vld [vmem:[#allocation2 + $0x2b8] sm:$0xff]
    %v154 = vld [vmem:[#allocation2 + $0x2c0] sm:$0xff]
    %v155 = vld [vmem:[#allocation2 + $0x2c8] sm:$0xff]
    %v156 = vld [vmem:[#allocation2 + $0x2d0] sm:$0xff]
    %v157 = vld [vmem:[#allocation2 + $0x2d8] sm:$0xff]
    %v158 = vld [vmem:[#allocation2 + $0x2e0] sm:$0xff]
    %v159 = vld [vmem:[#allocation2 + $0x2e8] sm:$0xff]
    %v160 = vld [vmem:[#allocation2 + $0x2f0] sm:$0xff]
    %v161 = vld [vmem:[#allocation2 + $0x2f8] sm:$0xff]
    %v162 = vld [vmem:[#allocation2 + $0x300] sm:$0xff]
    %v163 = vld [vmem:[#allocation2 + $0x308] sm:$0xff]
    %v164 = vld [vmem:[#allocation2 + $0x310] sm:$0xff]
    %v165 = vld [vmem:[#allocation2 + $0x318] sm:$0xff]
    %v166 = vld [vmem:[#allocation2 + $0x320] sm:$0xff]
    %v167 = vld [vmem:[#allocation2 + $0x328] sm:$0xff]
    %v168 = vld [vmem:[#allocation2 + $0x330] sm:$0xff]
    %v169 = vld [vmem:[#allocation2 + $0x338] sm:$0xff]
    %v170 = vld [vmem:[#allocation2 + $0x340] sm:$0xff]
    %v171 = vld [vmem:[#allocation2 + $0x348] sm:$0xff]
    %v172 = vld [vmem:[#allocation2 + $0x350] sm:$0xff]
    %v173 = vld [vmem:[#allocation2 + $0x358] sm:$0xff]
    %v174 = vld [vmem:[#allocation2 + $0x360] sm:$0xff]
    %v175 = vld [vmem:[#allocation2 + $0x368] sm:$0xff]
    %v176 = vld [vmem:[#allocation2 + $0x370] sm:$0xff]
    %v177 = vld [vmem:[#allocation2 + $0x378] sm:$0xff]
    %v178 = vld [vmem:[#allocation2 + $0x380] sm:$0xff]
    %v179 = vld [vmem:[#allocation2 + $0x388] sm:$0xff]
    %v180 = vld [vmem:[#allocation2 + $0x390] sm:$0xff]
    %v181 = vld [vmem:[#allocation2 + $0x398] sm:$0xff]
    %v182 = vld [vmem:[#allocation2 + $0x3a0] sm:$0xff]
    %v183 = vld [vmem:[#allocation2 + $0x3a8] sm:$0xff]
    %v184 = vld [vmem:[#allocation2 + $0x3b0] sm:$0xff]
    %v185 = vld [vmem:[#allocation2 + $0x3b8] sm:$0xff]
    %v186 = vld [vmem:[#allocation2 + $0x3c0] sm:$0xff]
    %v187 = vld [vmem:[#allocation2 + $0x3c8] sm:$0xff]
    %v188 = vld [vmem:[#allocation2 + $0x3d0] sm:$0xff]
    %v189 = vld [vmem:[#allocation2 + $0x3d8] sm:$0xff]
    %v190 = vld [vmem:[#allocation2 + $0x3e0] sm:$0xff]
    %v191 = vld [vmem:[#allocation2 + $0x3e8] sm:$0xff]
    %v192 = vld [vmem:[#allocation2 + $0x3f0] sm:$0xff]
    %v193 = vld [vmem:[#allocation2 + $0x3f8] sm:$0xff]
    %v194 = vld [vmem:[#allocation2 + $0x400] sm:$0xff]
    %v195 = vld [vmem:[#allocation2 + $0x408] sm:$0xff]
    %v196 = vld [vmem:[#allocation2 + $0x410] sm:$0xff]
    %v197 = vld [vmem:[#allocation2 + $0x418] sm:$0xff]
    %v198 = vld [vmem:[#allocation2 + $0x420] sm:$0xff]
    %v199 = vld [vmem:[#allocation2 + $0x428] sm:$0xff]
    %v200 = vld [vmem:[#allocation2 + $0x430] sm:$0xff]
    %v201 = vld [vmem:[#allocation2 + $0x438] sm:$0xff]
    %v202 = vld [vmem:[#allocation2 + $0x440] sm:$0xff]
    %v203 = vld [vmem:[#allocation2 + $0x448] sm:$0xff]
    %v204 = vld [vmem:[#allocation2 + $0x450] sm:$0xff]
    %v205 = vld [vmem:[#allocation2 + $0x458] sm:$0xff]
    %v206 = vld [vmem:[#allocation2 + $0x460] sm:$0xff]
    %v207 = vld [vmem:[#allocation2 + $0x468] sm:$0xff]
    %v208 = vld [vmem:[#allocation2 + $0x470] sm:$0xff]
    %v209 = vld [vmem:[#allocation2 + $0x478] sm:$0xff]
    %v210 = vld [vmem:[#allocation2 + $0x480] sm:$0xff]
    %v211 = vld [vmem:[#allocation2 + $0x488] sm:$0xff]
    %v212 = vld [vmem:[#allocation2 + $0x490] sm:$0xff]
    %v213 = vld [vmem:[#allocation2 + $0x498] sm:$0xff]
    %v214 = vld [vmem:[#allocation2 + $0x4a0] sm:$0xff]
    %v215 = vld [vmem:[#allocation2 + $0x4a8] sm:$0xff]
    %v216 = vld [vmem:[#allocation2 + $0x4b0] sm:$0xff]
    %v217 = vld [vmem:[#allocation2 + $0x4b8] sm:$0xff]
    %v218 = vld [vmem:[#allocation2 + $0x4c0] sm:$0xff]
    %v219 = vld [vmem:[#allocation2 + $0x4c8] sm:$0xff]
    %v220 = vld [vmem:[#allocation2 + $0x4d0] sm:$0xff]
    %v221 = vld [vmem:[#allocation2 + $0x4d8] sm:$0xff]
    %v222 = vld [vmem:[#allocation2 + $0x4e0] sm:$0xff]
    %v223 = vld [vmem:[#allocation2 + $0x4e8] sm:$0xff]
    %v224 = vld [vmem:[#allocation2 + $0x4f0] sm:$0xff]
    %v225 = vld [vmem:[#allocation2 + $0x4f8] sm:$0xff]
    %v226 = vld [vmem:[#allocation2 + $0x500] sm:$0xff]
    %v227 = vld [vmem:[#allocation2 + $0x508] sm:$0xff]
    %v228 = vld [vmem:[#allocation2 + $0x510] sm:$0xff]
    %v229 = vld [vmem:[#allocation2 + $0x518] sm:$0xff]
    %v230 = vld [vmem:[#allocation2 + $0x520] sm:$0xff]
    %v231 = vld [vmem:[#allocation2 + $0x528] sm:$0xff]
    %v232 = vld [vmem:[#allocation2 + $0x530] sm:$0xff]
    %v233 = vld [vmem:[#allocation2 + $0x538] sm:$0xff]
    %v234 = vld [vmem:[#allocation2 + $0x540] sm:$0xff]
    %v235 = vld [vmem:[#allocation2 + $0x548] sm:$0xff]
    %v236 = vld [vmem:[#allocation2 + $0x550] sm:$0xff]
    %v237 = vld [vmem:[#allocation2 + $0x558] sm:$0xff]
    %v238 = vld [vmem:[#allocation2 + $0x560] sm:$0xff]
    %v239 = vld [vmem:[#allocation2 + $0x568] sm:$0xff]
    %v240 = vld [vmem:[#allocation2 + $0x570] sm:$0xff]
    %v241 = vld [vmem:[#allocation2 + $0x578] sm:$0xff]
    %v242 = vld [vmem:[#allocation2 + $0x580] sm:$0xff]
    %v243 = vld [vmem:[#allocation2 + $0x588] sm:$0xff]
    %v244 = vld [vmem:[#allocation2 + $0x590] sm:$0xff]
    %v245 = vld [vmem:[#allocation2 + $0x598] sm:$0xff]
    %v246 = vld [vmem:[#allocation2 + $0x5a0] sm:$0xff]
    %v247 = vld [vmem:[#allocation2 + $0x5a8] sm:$0xff]
    %v248 = vld [vmem:[#allocation2 + $0x5b0] sm:$0xff]
    %v249 = vld [vmem:[#allocation2 + $0x5b8] sm:$0xff]
    %v250 = vld [vmem:[#allocation2 + $0x5c0] sm:$0xff]
    %v251 = vld [vmem:[#allocation2 + $0x5c8] sm:$0xff]
    %v252 = vld [vmem:[#allocation2 + $0x5d0] sm:$0xff]
    %v253 = vld [vmem:[#allocation2 + $0x5d8] sm:$0xff]
    %v254 = vld [vmem:[#allocation2 + $0x5e0] sm:$0xff]
    %v255 = vld [vmem:[#allocation2 + $0x5e8] sm:$0xff]
    %v256 = vld [vmem:[#allocation2 + $0x5f0] sm:$0xff]
    %v257 = vld [vmem:[#allocation2 + $0x5f8] sm:$0xff]
    %v258 = vld [vmem:[#allocation2 + $0x600] sm:$0xff]
    %v259 = vld [vmem:[#allocation2 + $0x608] sm:$0xff]
    %v260 = vld [vmem:[#allocation2 + $0x610] sm:$0xff]
    %v261 = vld [vmem:[#allocation2 + $0x618] sm:$0xff]
    %v262 = vld [vmem:[#allocation2 + $0x620] sm:$0xff]
    %v263 = vld [vmem:[#allocation2 + $0x628] sm:$0xff]
    %v264 = vld [vmem:[#allocation2 + $0x630] sm:$0xff]
    %v265 = vld [vmem:[#allocation2 + $0x638] sm:$0xff]
    %v266 = vld [vmem:[#allocation2 + $0x640] sm:$0xff]
    %v267 = vld [vmem:[#allocation2 + $0x648] sm:$0xff]
    %v268 = vld [vmem:[#allocation2 + $0x650] sm:$0xff]
    %v269 = vld [vmem:[#allocation2 + $0x658] sm:$0xff]
    %v270 = vld [vmem:[#allocation2 + $0x660] sm:$0xff]
    %v271 = vld [vmem:[#allocation2 + $0x668] sm:$0xff]
    %v272 = vld [vmem:[#allocation2 + $0x670] sm:$0xff]
    %v273 = vld [vmem:[#allocation2 + $0x678] sm:$0xff]
    %v274 = vld [vmem:[#allocation2 + $0x680] sm:$0xff]
    %v275 = vld [vmem:[#allocation2 + $0x688] sm:$0xff]
    %v276 = vld [vmem:[#allocation2 + $0x690] sm:$0xff]
    %v277 = vld [vmem:[#allocation2 + $0x698] sm:$0xff]
    %v278 = vld [vmem:[#allocation2 + $0x6a0] sm:$0xff]
    %v279 = vld [vmem:[#allocation2 + $0x6a8] sm:$0xff]
    %v280 = vld [vmem:[#allocation2 + $0x6b0] sm:$0xff]
    %v281 = vld [vmem:[#allocation2 + $0x6b8] sm:$0xff]
    %v282 = vld [vmem:[#allocation2 + $0x6c0] sm:$0xff]
    %v283 = vld [vmem:[#allocation2 + $0x6c8] sm:$0xff]
    %v284 = vld [vmem:[#allocation2 + $0x6d0] sm:$0xff]
    %v285 = vld [vmem:[#allocation2 + $0x6d8] sm:$0xff]
    %v286 = vld [vmem:[#allocation2 + $0x6e0] sm:$0xff]
    %v287 = vld [vmem:[#allocation2 + $0x6e8] sm:$0xff]
    %v288 = vld [vmem:[#allocation2 + $0x6f0] sm:$0xff]
    %v289 = vld [vmem:[#allocation2 + $0x6f8] sm:$0xff]
    %v290 = vld [vmem:[#allocation2 + $0x700] sm:$0xff]
    %v291 = vld [vmem:[#allocation2 + $0x708] sm:$0xff]
    %v292 = vld [vmem:[#allocation2 + $0x710] sm:$0xff]
    %v293 = vld [vmem:[#allocation2 + $0x718] sm:$0xff]
    %v294 = vld [vmem:[#allocation2 + $0x720] sm:$0xff]
    %v295 = vld [vmem:[#allocation2 + $0x728] sm:$0xff]
    %v296 = vld [vmem:[#allocation2 + $0x730] sm:$0xff]
    %v297 = vld [vmem:[#allocation2 + $0x738] sm:$0xff]
    %v298 = vld [vmem:[#allocation2 + $0x740] sm:$0xff]
    %v299 = vld [vmem:[#allocation2 + $0x748] sm:$0xff]
    %v300 = vld [vmem:[#allocation2 + $0x750] sm:$0xff]
    %v301 = vld [vmem:[#allocation2 + $0x758] sm:$0xff]
    %v302 = vld [vmem:[#allocation2 + $0x760] sm:$0xff]
    %v303 = vld [vmem:[#allocation2 + $0x768] sm:$0xff]
    %v304 = vld [vmem:[#allocation2 + $0x770] sm:$0xff]
    %v305 = vld [vmem:[#allocation2 + $0x778] sm:$0xff]
    %v306 = vld [vmem:[#allocation2 + $0x780] sm:$0xff]
    %v307 = vld [vmem:[#allocation2 + $0x788] sm:$0xff]
    %v308 = vld [vmem:[#allocation2 + $0x790] sm:$0xff]
    %v309 = vld [vmem:[#allocation2 + $0x798] sm:$0xff]
    %v310 = vld [vmem:[#allocation2 + $0x7a0] sm:$0xff]
    %v311 = vld [vmem:[#allocation2 + $0x7a8] sm:$0xff]
    %v312 = vld [vmem:[#allocation2 + $0x7b0] sm:$0xff]
    %v313 = vld [vmem:[#allocation2 + $0x7b8] sm:$0xff]
    %v314 = vld [vmem:[#allocation2 + $0x7c0] sm:$0xff]
    %v315 = vld [vmem:[#allocation2 + $0x7c8] sm:$0xff]
    %v316 = vld [vmem:[#allocation2 + $0x7d0] sm:$0xff]
    %v317 = vld [vmem:[#allocation2 + $0x7d8] sm:$0xff]
    %v318 = vld [vmem:[#allocation2 + $0x7e0] sm:$0xff]
    %v319 = vld [vmem:[#allocation2 + $0x7e8] sm:$0xff]
    %v320 = vld [vmem:[#allocation2 + $0x7f0] sm:$0xff]
    %v321 = vld [vmem:[#allocation2 + $0x7f8] sm:$0xff]
    %v322 = vld [vmem:[#allocation2 + $0x800] sm:$0xff]
    %v323 = vld [vmem:[#allocation2 + $0x808] sm:$0xff]
    %v324 = vld [vmem:[#allocation2 + $0x810] sm:$0xff]
    %v325 = vld [vmem:[#allocation2 + $0x818] sm:$0xff]
    %v326 = vld [vmem:[#allocation2 + $0x820] sm:$0xff]
    %v327 = vld [vmem:[#allocation2 + $0x828] sm:$0xff]
    %v328 = vld [vmem:[#allocation2 + $0x830] sm:$0xff]
    %v329 = vld [vmem:[#allocation2 + $0x838] sm:$0xff]
    %v330 = vld [vmem:[#allocation2 + $0x840] sm:$0xff]
    %v331 = vld [vmem:[#allocation2 + $0x848] sm:$0xff]
    %v332 = vld [vmem:[#allocation2 + $0x850] sm:$0xff]
    %v333 = vld [vmem:[#allocation2 + $0x858] sm:$0xff]
    %v334 = vld [vmem:[#allocation2 + $0x860] sm:$0xff]
    %v335 = vld [vmem:[#allocation2 + $0x868] sm:$0xff]
    %v336 = vld [vmem:[#allocation2 + $0x870] sm:$0xff]
    %v337 = vld [vmem:[#allocation2 + $0x878] sm:$0xff]
    %v338 = vld [vmem:[#allocation2 + $0x880] sm:$0xff]
    %v339 = vld [vmem:[#allocation2 + $0x888] sm:$0xff]
    %v340 = vld [vmem:[#allocation2 + $0x890] sm:$0xff]
    %v341 = vld [vmem:[#allocation2 + $0x898] sm:$0xff]
    %v342 = vld [vmem:[#allocation2 + $0x8a0] sm:$0xff]
    %v343 = vld [vmem:[#allocation2 + $0x8a8] sm:$0xff]
    %v344 = vld [vmem:[#allocation2 + $0x8b0] sm:$0xff]
    %v345 = vld [vmem:[#allocation2 + $0x8b8] sm:$0xff]
    %v346 = vld [vmem:[#allocation2 + $0x8c0] sm:$0xff]
    %v347 = vld [vmem:[#allocation2 + $0x8c8] sm:$0xff]
    %v348 = vld [vmem:[#allocation2 + $0x8d0] sm:$0xff]
    %v349 = vld [vmem:[#allocation2 + $0x8d8] sm:$0xff]
    %v350 = vld [vmem:[#allocation2 + $0x8e0] sm:$0xff]
    %v351 = vld [vmem:[#allocation2 + $0x8e8] sm:$0xff]
    %v352 = vld [vmem:[#allocation2 + $0x8f0] sm:$0xff]
    %v353 = vld [vmem:[#allocation2 + $0x8f8] sm:$0xff]
    %v354 = vld [vmem:[#allocation2 + $0x900] sm:$0xff]
    %v355 = vld [vmem:[#allocation2 + $0x908] sm:$0xff]
    %v356 = vld [vmem:[#allocation2 + $0x910] sm:$0xff]
    %v357 = vld [vmem:[#allocation2 + $0x918] sm:$0xff]
    %v358 = vld [vmem:[#allocation2 + $0x920] sm:$0xff]
    %v359 = vld [vmem:[#allocation2 + $0x928] sm:$0xff]
    %v360 = vld [vmem:[#allocation2 + $0x930] sm:$0xff]
    %v361 = vld [vmem:[#allocation2 + $0x938] sm:$0xff]
    %v362 = vld [vmem:[#allocation2 + $0x940] sm:$0xff]
    %v363 = vld [vmem:[#allocation2 + $0x948] sm:$0xff]
    %v364 = vld [vmem:[#allocation2 + $0x950] sm:$0xff]
    %v365 = vld [vmem:[#allocation2 + $0x958] sm:$0xff]
    %v366 = vld [vmem:[#allocation2 + $0x960] sm:$0xff]
    %v367 = vld [vmem:[#allocation2 + $0x968] sm:$0xff]
    %v368 = vld [vmem:[#allocation2 + $0x970] sm:$0xff]
    %v369 = vld [vmem:[#allocation2 + $0x978] sm:$0xff]
    %v370 = vld [vmem:[#allocation2 + $0x980] sm:$0xff]
    %v371 = vld [vmem:[#allocation2 + $0x988] sm:$0xff]
    %v372 = vld [vmem:[#allocation2 + $0x990] sm:$0xff]
    %v373 = vld [vmem:[#allocation2 + $0x998] sm:$0xff]
    %v374 = vld [vmem:[#allocation2 + $0x9a0] sm:$0xff]
    %v375 = vld [vmem:[#allocation2 + $0x9a8] sm:$0xff]
    %v376 = vld [vmem:[#allocation2 + $0x9b0] sm:$0xff]
    %v377 = vld [vmem:[#allocation2 + $0x9b8] sm:$0xff]
    %v378 = vld [vmem:[#allocation2 + $0x9c0] sm:$0xff]
    %v379 = vld [vmem:[#allocation2 + $0x9c8] sm:$0xff]
    %v380 = vld [vmem:[#allocation2 + $0x9d0] sm:$0xff]
    %v381 = vld [vmem:[#allocation2 + $0x9d8] sm:$0xff]
    %v382 = vld [vmem:[#allocation2 + $0x9e0] sm:$0xff]
    %v383 = vld [vmem:[#allocation2 + $0x9e8] sm:$0xff]
    %v384 = vld [vmem:[#allocation2 + $0x9f0] sm:$0xff]
    %v385 = vld [vmem:[#allocation2 + $0x9f8] sm:$0xff]
    %v386 = vld [vmem:[#allocation2 + $0xa00] sm:$0xff]
    %v387 = vld [vmem:[#allocation2 + $0xa08] sm:$0xff]
    %v388 = vld [vmem:[#allocation2 + $0xa10] sm:$0xff]
    %v389 = vld [vmem:[#allocation2 + $0xa18] sm:$0xff]
    %v390 = vld [vmem:[#allocation2 + $0xa20] sm:$0xff]
    %v391 = vld [vmem:[#allocation2 + $0xa28] sm:$0xff]
    %v392 = vld [vmem:[#allocation2 + $0xa30] sm:$0xff]
    %v393 = vld [vmem:[#allocation2 + $0xa38] sm:$0xff]
    %v394 = vld [vmem:[#allocation2 + $0xa40] sm:$0xff]
    %v395 = vld [vmem:[#allocation2 + $0xa48] sm:$0xff]
    %v396 = vld [vmem:[#allocation2 + $0xa50] sm:$0xff]
    %v397 = vld [vmem:[#allocation2 + $0xa58] sm:$0xff]
    %v398 = vld [vmem:[#allocation2 + $0xa60] sm:$0xff]
    %v399 = vld [vmem:[#allocation2 + $0xa68] sm:$0xff]
    %v400 = vld [vmem:[#allocation2 + $0xa70] sm:$0xff]
    %v401 = vld [vmem:[#allocation2 + $0xa78] sm:$0xff]
    %v402 = vld [vmem:[#allocation2 + $0xa80] sm:$0xff]
    %v403 = vld [vmem:[#allocation2 + $0xa88] sm:$0xff]
    %v404 = vld [vmem:[#allocation2 + $0xa90] sm:$0xff]
    %v405 = vld [vmem:[#allocation2 + $0xa98] sm:$0xff]
    %v406 = vld [vmem:[#allocation2 + $0xaa0] sm:$0xff]
    %v407 = vld [vmem:[#allocation2 + $0xaa8] sm:$0xff]
    %v408 = vld [vmem:[#allocation2 + $0xab0] sm:$0xff]
    %v409 = vld [vmem:[#allocation2 + $0xab8] sm:$0xff]
    %v410 = vld [vmem:[#allocation2 + $0xac0] sm:$0xff]
    %v411 = vld [vmem:[#allocation2 + $0xac8] sm:$0xff]
    %v412 = vld [vmem:[#allocation2 + $0xad0] sm:$0xff]
    %v413 = vld [vmem:[#allocation2 + $0xad8] sm:$0xff]
    %v414 = vld [vmem:[#allocation2 + $0xae0] sm:$0xff]
    %v415 = vld [vmem:[#allocation2 + $0xae8] sm:$0xff]
    %v416 = vld [vmem:[#allocation2 + $0xaf0] sm:$0xff]
    %v417 = vld [vmem:[#allocation2 + $0xaf8] sm:$0xff]
    %v418 = vld [vmem:[#allocation2 + $0xb00] sm:$0xff]
    %v419 = vld [vmem:[#allocation2 + $0xb08] sm:$0xff]
    %v420 = vld [vmem:[#allocation2 + $0xb10] sm:$0xff]
    %v421 = vld [vmem:[#allocation2 + $0xb18] sm:$0xff]
    %v422 = vld [vmem:[#allocation2 + $0xb20] sm:$0xff]
    %v423 = vld [vmem:[#allocation2 + $0xb28] sm:$0xff]
    %v424 = vld [vmem:[#allocation2 + $0xb30] sm:$0xff]
    %v425 = vld [vmem:[#allocation2 + $0xb38] sm:$0xff]
    %v426 = vld [vmem:[#allocation2 + $0xb40] sm:$0xff]
    %v427 = vld [vmem:[#allocation2 + $0xb48] sm:$0xff]
    %v428 = vld [vmem:[#allocation2 + $0xb50] sm:$0xff]
    %v429 = vld [vmem:[#allocation2 + $0xb58] sm:$0xff]
    %v430 = vld [vmem:[#allocation2 + $0xb60] sm:$0xff]
    %v431 = vld [vmem:[#allocation2 + $0xb68] sm:$0xff]
    %v432 = vld [vmem:[#allocation2 + $0xb70] sm:$0xff]
    %v433 = vld [vmem:[#allocation2 + $0xb78] sm:$0xff]
    %v434 = vld [vmem:[#allocation2 + $0xb80] sm:$0xff]
    %v435 = vld [vmem:[#allocation2 + $0xb88] sm:$0xff]
    %v436 = vld [vmem:[#allocation2 + $0xb90] sm:$0xff]
    %v437 = vld [vmem:[#allocation2 + $0xb98] sm:$0xff]
    %v438 = vld [vmem:[#allocation2 + $0xba0] sm:$0xff]
    %v439 = vld [vmem:[#allocation2 + $0xba8] sm:$0xff]
    %v440 = vld [vmem:[#allocation2 + $0xbb0] sm:$0xff]
    %v441 = vld [vmem:[#allocation2 + $0xbb8] sm:$0xff]
    %v442 = vld [vmem:[#allocation2 + $0xbc0] sm:$0xff]
    %v443 = vld [vmem:[#allocation2 + $0xbc8] sm:$0xff]
    %v444 = vld [vmem:[#allocation2 + $0xbd0] sm:$0xff]
    %v445 = vld [vmem:[#allocation2 + $0xbd8] sm:$0xff]
    %v446 = vld [vmem:[#allocation2 + $0xbe0] sm:$0xff]
    %v447 = vld [vmem:[#allocation2 + $0xbe8] sm:$0xff]
    %v448 = vld [vmem:[#allocation2 + $0xbf0] sm:$0xff]
    %v449 = vld [vmem:[#allocation2 + $0xbf8] sm:$0xff]
    %v450 = vld [vmem:[#allocation2 + $0xc00] sm:$0xff]
    %v451 = vld [vmem:[#allocation2 + $0xc08] sm:$0xff]
    %v452 = vld [vmem:[#allocation2 + $0xc10] sm:$0xff]
    %v453 = vld [vmem:[#allocation2 + $0xc18] sm:$0xff]
    %v454 = vld [vmem:[#allocation2 + $0xc20] sm:$0xff]
    %v455 = vld [vmem:[#allocation2 + $0xc28] sm:$0xff]
    %v456 = vld [vmem:[#allocation2 + $0xc30] sm:$0xff]
    %v457 = vld [vmem:[#allocation2 + $0xc38] sm:$0xff]
    %v458 = vld [vmem:[#allocation2 + $0xc40] sm:$0xff]
    %v459 = vld [vmem:[#allocation2 + $0xc48] sm:$0xff]
    %v460 = vld [vmem:[#allocation2 + $0xc50] sm:$0xff]
    %v461 = vld [vmem:[#allocation2 + $0xc58] sm:$0xff]
    %v462 = vld [vmem:[#allocation2 + $0xc60] sm:$0xff]
    %v463 = vld [vmem:[#allocation2 + $0xc68] sm:$0xff]
    %v464 = vld [vmem:[#allocation2 + $0xc70] sm:$0xff]
    %v465 = vld [vmem:[#allocation2 + $0xc78] sm:$0xff]
    %v466 = vld [vmem:[#allocation2 + $0xc80] sm:$0xff]
    %v467 = vld [vmem:[#allocation2 + $0xc88] sm:$0xff]
    %v468 = vld [vmem:[#allocation2 + $0xc90] sm:$0xff]
    %v469 = vld [vmem:[#allocation2 + $0xc98] sm:$0xff]
    %v470 = vld [vmem:[#allocation2 + $0xca0] sm:$0xff]
    %v471 = vld [vmem:[#allocation2 + $0xca8] sm:$0xff]
    %v472 = vld [vmem:[#allocation2 + $0xcb0] sm:$0xff]
    %v473 = vld [vmem:[#allocation2 + $0xcb8] sm:$0xff]
    %v474 = vld [vmem:[#allocation2 + $0xcc0] sm:$0xff]
    %v475 = vld [vmem:[#allocation2 + $0xcc8] sm:$0xff]
    %v476 = vld [vmem:[#allocation2 + $0xcd0] sm:$0xff]
    %v477 = vld [vmem:[#allocation2 + $0xcd8] sm:$0xff]
    %v478 = vld [vmem:[#allocation2 + $0xce0] sm:$0xff]
    %v479 = vld [vmem:[#allocation2 + $0xce8] sm:$0xff]
    %v480 = vld [vmem:[#allocation2 + $0xcf0] sm:$0xff]
    %v481 = vld [vmem:[#allocation2 + $0xcf8] sm:$0xff]
    %v482 = vld [vmem:[#allocation2 + $0xd00] sm:$0xff]
    %v483 = vld [vmem:[#allocation2 + $0xd08] sm:$0xff]
    %v484 = vld [vmem:[#allocation2 + $0xd10] sm:$0xff]
    %v485 = vld [vmem:[#allocation2 + $0xd18] sm:$0xff]
    %v486 = vld [vmem:[#allocation2 + $0xd20] sm:$0xff]
    %v487 = vld [vmem:[#allocation2 + $0xd28] sm:$0xff]
    %v488 = vld [vmem:[#allocation2 + $0xd30] sm:$0xff]
    %v489 = vld [vmem:[#allocation2 + $0xd38] sm:$0xff]
    %v490 = vld [vmem:[#allocation2 + $0xd40] sm:$0xff]
    %v491 = vld [vmem:[#allocation2 + $0xd48] sm:$0xff]
    %v492 = vld [vmem:[#allocation2 + $0xd50] sm:$0xff]
    %v493 = vld [vmem:[#allocation2 + $0xd58] sm:$0xff]
    %v494 = vld [vmem:[#allocation2 + $0xd60] sm:$0xff]
    %v495 = vld [vmem:[#allocation2 + $0xd68] sm:$0xff]
    %v496 = vld [vmem:[#allocation2 + $0xd70] sm:$0xff]
    %v497 = vld [vmem:[#allocation2 + $0xd78] sm:$0xff]
    %v498 = vld [vmem:[#allocation2 + $0xd80] sm:$0xff]
    %v499 = vld [vmem:[#allocation2 + $0xd88] sm:$0xff]
    %v500 = vld [vmem:[#allocation2 + $0xd90] sm:$0xff]
    %v501 = vld [vmem:[#allocation2 + $0xd98] sm:$0xff]
    %v502 = vld [vmem:[#allocation2 + $0xda0] sm:$0xff]
    %v503 = vld [vmem:[#allocation2 + $0xda8] sm:$0xff]
    %v504 = vld [vmem:[#allocation2 + $0xdb0] sm:$0xff]
    %v505 = vld [vmem:[#allocation2 + $0xdb8] sm:$0xff]
    %v506 = vld [vmem:[#allocation2 + $0xdc0] sm:$0xff]
    %v507 = vld [vmem:[#allocation2 + $0xdc8] sm:$0xff]
    %v508 = vld [vmem:[#allocation2 + $0xdd0] sm:$0xff]
    %v509 = vld [vmem:[#allocation2 + $0xdd8] sm:$0xff]
    %v510 = vld [vmem:[#allocation2 + $0xde0] sm:$0xff]
    %v511 = vld [vmem:[#allocation2 + $0xde8] sm:$0xff]
    %v512 = vld [vmem:[#allocation2 + $0xdf0] sm:$0xff]
    %v513 = vld [vmem:[#allocation2 + $0xdf8] sm:$0xff]
    %v514 = vld [vmem:[#allocation2 + $0xe00] sm:$0xff]
    %v515 = vld [vmem:[#allocation2 + $0xe08] sm:$0xff]
    %v516 = vld [vmem:[#allocation2 + $0xe10] sm:$0xff]
    %v517 = vld [vmem:[#allocation2 + $0xe18] sm:$0xff]
    %v518 = vld [vmem:[#allocation2 + $0xe20] sm:$0xff]
    %v519 = vld [vmem:[#allocation2 + $0xe28] sm:$0xff]
    %v520 = vld [vmem:[#allocation2 + $0xe30] sm:$0xff]
    %v521 = vld [vmem:[#allocation2 + $0xe38] sm:$0xff]
    %v522 = vld [vmem:[#allocation2 + $0xe40] sm:$0xff]
    %v523 = vld [vmem:[#allocation2 + $0xe48] sm:$0xff]
    %v524 = vld [vmem:[#allocation2 + $0xe50] sm:$0xff]
    %v525 = vld [vmem:[#allocation2 + $0xe58] sm:$0xff]
    %v526 = vld [vmem:[#allocation2 + $0xe60] sm:$0xff]
    %v527 = vld [vmem:[#allocation2 + $0xe68] sm:$0xff]
    %v528 = vld [vmem:[#allocation2 + $0xe70] sm:$0xff]
    %v529 = vld [vmem:[#allocation2 + $0xe78] sm:$0xff]
    %v530 = vld [vmem:[#allocation2 + $0xe80] sm:$0xff]
    %v531 = vld [vmem:[#allocation2 + $0xe88] sm:$0xff]
    %v532 = vld [vmem:[#allocation2 + $0xe90] sm:$0xff]
    %v533 = vld [vmem:[#allocation2 + $0xe98] sm:$0xff]
    %v534 = vld [vmem:[#allocation2 + $0xea0] sm:$0xff]
    %v535 = vld [vmem:[#allocation2 + $0xea8] sm:$0xff]
    %v536 = vld [vmem:[#allocation2 + $0xeb0] sm:$0xff]
    %v537 = vld [vmem:[#allocation2 + $0xeb8] sm:$0xff]
    %v538 = vld [vmem:[#allocation2 + $0xec0] sm:$0xff]
    %v539 = vld [vmem:[#allocation2 + $0xec8] sm:$0xff]
    %v540 = vld [vmem:[#allocation2 + $0xed0] sm:$0xff]
    %v541 = vld [vmem:[#allocation2 + $0xed8] sm:$0xff]
    %v542 = vld [vmem:[#allocation2 + $0xee0] sm:$0xff]
    %v543 = vld [vmem:[#allocation2 + $0xee8] sm:$0xff]
    %v544 = vld [vmem:[#allocation2 + $0xef0] sm:$0xff]
    %v545 = vld [vmem:[#allocation2 + $0xef8] sm:$0xff]
    %v546 = vld [vmem:[#allocation2 + $0xf00] sm:$0xff]
    %v547 = vld [vmem:[#allocation2 + $0xf08] sm:$0xff]
    %v548 = vld [vmem:[#allocation2 + $0xf10] sm:$0xff]
    %v549 = vld [vmem:[#allocation2 + $0xf18] sm:$0xff]
    %v550 = vld [vmem:[#allocation2 + $0xf20] sm:$0xff]
    %v551 = vld [vmem:[#allocation2 + $0xf28] sm:$0xff]
    %v552 = vld [vmem:[#allocation2 + $0xf30] sm:$0xff]
    %v553 = vld [vmem:[#allocation2 + $0xf38] sm:$0xff]
    %v554 = vld [vmem:[#allocation2 + $0xf40] sm:$0xff]
    %v555 = vld [vmem:[#allocation2 + $0xf48] sm:$0xff]
    %v556 = vld [vmem:[#allocation2 + $0xf50] sm:$0xff]
    %v557 = vld [vmem:[#allocation2 + $0xf58] sm:$0xff]
    %v558 = vld [vmem:[#allocation2 + $0xf60] sm:$0xff]
    %v559 = vld [vmem:[#allocation2 + $0xf68] sm:$0xff]
    %v560 = vld [vmem:[#allocation2 + $0xf70] sm:$0xff]
    %v561 = vld [vmem:[#allocation2 + $0xf78] sm:$0xff]
    %v562 = vld [vmem:[#allocation2 + $0xf80] sm:$0xff]
    %v563 = vld [vmem:[#allocation2 + $0xf88] sm:$0xff]
    %v564 = vld [vmem:[#allocation2 + $0xf90] sm:$0xff]
    %v565 = vld [vmem:[#allocation2 + $0xf98] sm:$0xff]
    %v566 = vld [vmem:[#allocation2 + $0xfa0] sm:$0xff]
    %v567 = vld [vmem:[#allocation2 + $0xfa8] sm:$0xff]
    %v568 = vld [vmem:[#allocation2 + $0xfb0] sm:$0xff]
    %v569 = vld [vmem:[#allocation2 + $0xfb8] sm:$0xff]
    %v570 = vld [vmem:[#allocation2 + $0xfc0] sm:$0xff]
    %v571 = vld [vmem:[#allocation2 + $0xfc8] sm:$0xff]
    %v572 = vld [vmem:[#allocation2 + $0xfd0] sm:$0xff]
    %v573 = vld [vmem:[#allocation2 + $0xfd8] sm:$0xff]
    %v574 = vld [vmem:[#allocation2 + $0xfe0] sm:$0xff]
    %v575 = vld [vmem:[#allocation2 + $0xfe8] sm:$0xff]
    %v576 = vld [vmem:[#allocation2 + $0xff0] sm:$0xff]
    %v577 = vld [vmem:[#allocation2 + $0xff8] sm:$0xff]
    %v578 = vld [vmem:[#allocation5] sm:$0x1]
    %v580 = vlaneseq
    %v581 = vshrl.u32 %v580, 7
    %v582 = vsub.s32 0, %v581
    %v583 = vrot.slane %v578, %v582
    %v593 = vcombine.high %v58, %v58
    %v595 = vunpack.c.l.s4 1983009808
    %v596 = vunpack.c.0.s8 %v595
    %v597 = vlaneseq
    %v598 = vshrl.u32 %v597, 7
    %v599 = vsub.s32 %v596, %v598
    %v600 = vrot.slane %v58, %v599
    %v602 = vunpack.c.l.s4 1983009808
    %v603 = vunpack.c.0.s8 %v602
    %v604 = vlaneseq
    %v605 = vshrl.u32 %v604, 7
    %v606 = vsub.s32 %v603, %v605
    %v607 = vrot.slane %v593, %v606
    %v608 = vcombine.high %v600, %v600
    %v609 = vcombine.high %v607, %v607
    %v610 = vcombine.high %v59, %v59
    %v612 = vunpack.c.l.s4 1983009808
    %v613 = vunpack.c.0.s8 %v612
    %v614 = vlaneseq
    %v615 = vshrl.u32 %v614, 7
    %v616 = vsub.s32 %v613, %v615
    %v617 = vrot.slane %v59, %v616
    %v619 = vunpack.c.l.s4 1983009808
    %v620 = vunpack.c.0.s8 %v619
    %v621 = vlaneseq
    %v622 = vshrl.u32 %v621, 7
    %v623 = vsub.s32 %v620, %v622
    %v624 = vrot.slane %v610, %v623
    %v625 = vcombine.high %v617, %v617
    %v626 = vcombine.high %v624, %v624
    %v627 = vcombine.high %v60, %v60
    %v629 = vunpack.c.l.s4 1983009808
    %v630 = vunpack.c.0.s8 %v629
    %v631 = vlaneseq
    %v632 = vshrl.u32 %v631, 7
    %v633 = vsub.s32 %v630, %v632
    %v634 = vrot.slane %v60, %v633
    %v636 = vunpack.c.l.s4 1983009808
    %v637 = vunpack.c.0.s8 %v636
    %v638 = vlaneseq
    %v639 = vshrl.u32 %v638, 7
    %v640 = vsub.s32 %v637, %v639
    %v641 = vrot.slane %v627, %v640
    %v642 = vcombine.high %v634, %v634
    %v643 = vcombine.high %v641, %v641
    %v644 = vcombine.high %v61, %v61
    %v646 = vunpack.c.l.s4 1983009808
    %v647 = vunpack.c.0.s8 %v646
    %v648 = vlaneseq
    %v649 = vshrl.u32 %v648, 7
    %v650 = vsub.s32 %v647, %v649
    %v651 = vrot.slane %v61, %v650
    %v653 = vunpack.c.l.s4 1983009808
    %v654 = vunpack.c.0.s8 %v653
    %v655 = vlaneseq
    %v656 = vshrl.u32 %v655, 7
    %v657 = vsub.s32 %v654, %v656
    %v658 = vrot.slane %v644, %v657
    %v659 = vcombine.high %v651, %v651
    %v660 = vcombine.high %v658, %v658
    %v661 = vcombine.high %v62, %v62
    %v663 = vunpack.c.l.s4 1983009808
    %v664 = vunpack.c.0.s8 %v663
    %v665 = vlaneseq
    %v666 = vshrl.u32 %v665, 7
    %v667 = vsub.s32 %v664, %v666
    %v668 = vrot.slane %v62, %v667
    %v670 = vunpack.c.l.s4 1983009808
    %v671 = vunpack.c.0.s8 %v670
    %v672 = vlaneseq
    %v673 = vshrl.u32 %v672, 7
    %v674 = vsub.s32 %v671, %v673
    %v675 = vrot.slane %v661, %v674
    %v676 = vcombine.high %v668, %v668
    %v677 = vcombine.high %v675, %v675
    %v678 = vcombine.high %v63, %v63
    %v680 = vunpack.c.l.s4 1983009808
    %v681 = vunpack.c.0.s8 %v680
    %v682 = vlaneseq
    %v683 = vshrl.u32 %v682, 7
    %v684 = vsub.s32 %v681, %v683
    %v685 = vrot.slane %v63, %v684
    %v687 = vunpack.c.l.s4 1983009808
    %v688 = vunpack.c.0.s8 %v687
    %v689 = vlaneseq
    %v690 = vshrl.u32 %v689, 7
    %v691 = vsub.s32 %v688, %v690
    %v692 = vrot.slane %v678, %v691
    %v693 = vcombine.high %v685, %v685
    %v694 = vcombine.high %v692, %v692
    %v695 = vcombine.high %v64, %v64
    %v697 = vunpack.c.l.s4 1983009808
    %v698 = vunpack.c.0.s8 %v697
    %v699 = vlaneseq
    %v700 = vshrl.u32 %v699, 7
    %v701 = vsub.s32 %v698, %v700
    %v702 = vrot.slane %v64, %v701
    %v704 = vunpack.c.l.s4 1983009808
    %v705 = vunpack.c.0.s8 %v704
    %v706 = vlaneseq
    %v707 = vshrl.u32 %v706, 7
    %v708 = vsub.s32 %v705, %v707
    %v709 = vrot.slane %v695, %v708
    %v710 = vcombine.high %v702, %v702
    %v711 = vcombine.high %v709, %v709
    %v712 = vcombine.high %v65, %v65
    %v714 = vunpack.c.l.s4 1983009808
    %v715 = vunpack.c.0.s8 %v714
    %v716 = vlaneseq
    %v717 = vshrl.u32 %v716, 7
    %v718 = vsub.s32 %v715, %v717
    %v719 = vrot.slane %v65, %v718
    %v721 = vunpack.c.l.s4 1983009808
    %v722 = vunpack.c.0.s8 %v721
    %v723 = vlaneseq
    %v724 = vshrl.u32 %v723, 7
    %v725 = vsub.s32 %v722, %v724
    %v726 = vrot.slane %v712, %v725
    %v727 = vcombine.high %v719, %v719
    %v728 = vcombine.high %v726, %v726
    %761 = vmatprep.subr.mxu0 0.0
    %762 = vmatpush1.msra.mxu0 %v66
    %763 = vmatprep.subr.mxu0 0.0
    %764 = vmatpush1.msra.mxu0 %v67
    %765 = vmatprep.subr.mxu0 0.0
    %766 = vmatpush1.msra.mxu0 %v68
    %767 = vmatprep.subr.mxu0 0.0
    %768 = vmatpush1.msra.mxu0 %v69
    %769 = vmatprep.subr.mxu0 0.0
    %770 = vmatpush1.msra.mxu0 %v70
    %771 = vmatprep.subr.mxu0 0.0
    %772 = vmatpush1.msra.mxu0 %v71
    %773 = vmatprep.subr.mxu0 0.0
    %774 = vmatpush1.msra.mxu0 %v72
    %775 = vmatprep.subr.mxu0 0.0
    %776 = vmatpush1.msra.mxu0 %v73
    %777 = vmatprep.subr.mxu0 0.0
    %778 = vmatpush1.msra.mxu0 %v74
    %779 = vmatprep.subr.mxu0 0.0
    %780 = vmatpush1.msra.mxu0 %v75
    %781 = vmatprep.subr.mxu0 0.0
    %782 = vmatpush1.msra.mxu0 %v76
    %783 = vmatprep.subr.mxu0 0.0
    %784 = vmatpush1.msra.mxu0 %v77
    %785 = vmatprep.subr.mxu0 0.0
    %786 = vmatpush1.msra.mxu0 %v78
    %787 = vmatprep.subr.mxu0 0.0
    %788 = vmatpush1.msra.mxu0 %v79
    %789 = vmatprep.subr.mxu0 0.0
    %790 = vmatpush1.msra.mxu0 %v80
    %791 = vmatprep.subr.mxu0 0.0
    %792 = vmatpush1.msra.mxu0 %v81
    %793 = vmatprep.subr.mxu0 0.0
    %794 = vmatpush1.msra.mxu0 %v82
    %795 = vmatprep.subr.mxu0 0.0
    %796 = vmatpush1.msra.mxu0 %v83
    %797 = vmatprep.subr.mxu0 0.0
    %798 = vmatpush1.msra.mxu0 %v84
    %799 = vmatprep.subr.mxu0 0.0
    %800 = vmatpush1.msra.mxu0 %v85
    %801 = vmatprep.subr.mxu0 0.0
    %802 = vmatpush1.msra.mxu0 %v86
    %803 = vmatprep.subr.mxu0 0.0
    %804 = vmatpush1.msra.mxu0 %v87
    %805 = vmatprep.subr.mxu0 0.0
    %806 = vmatpush1.msra.mxu0 %v88
    %807 = vmatprep.subr.mxu0 0.0
    %808 = vmatpush1.msra.mxu0 %v89
    %809 = vmatprep.subr.mxu0 0.0
    %810 = vmatpush1.msra.mxu0 %v90
    %811 = vmatprep.subr.mxu0 0.0
    %812 = vmatpush1.msra.mxu0 %v91
    %813 = vmatprep.subr.mxu0 0.0
    %814 = vmatpush1.msra.mxu0 %v92
    %815 = vmatprep.subr.mxu0 0.0
    %816 = vmatpush1.msra.mxu0 %v93
    %817 = vmatprep.subr.mxu0 0.0
    %818 = vmatpush1.msra.mxu0 %v94
    %819 = vmatprep.subr.mxu0 0.0
    %820 = vmatpush1.msra.mxu0 %v95
    %821 = vmatprep.subr.mxu0 0.0
    %822 = vmatpush1.msra.mxu0 %v96
    %823 = vmatprep.subr.mxu0 0.0
    %824 = vmatpush1.msra.mxu0 %v97
    %825 = vmatprep.mubr.f32.mxu0 %v608
    %826 = vmatmul.mubr.f32.gmra.mrb[0].mxu0 %v600
    %v827 = vpop.f32.mrb[0].mxu0
    %v828 = vadd.f32 %v583, %v827
    %v829 = vpop.f32.mrb[0].mxu0
    %830 = vdwg.mxu0
    %831 = vmatprep.subr.mxu0 0.0
    %832 = vmatpush1.msra.mxu0 %v98
    %833 = vmatprep.subr.mxu0 0.0
    %834 = vmatpush1.msra.mxu0 %v99
    %835 = vmatprep.subr.mxu0 0.0
    %836 = vmatpush1.msra.mxu0 %v100
    %837 = vmatprep.subr.mxu0 0.0
    %838 = vmatpush1.msra.mxu0 %v101
    %839 = vmatprep.subr.mxu0 0.0
    %840 = vmatpush1.msra.mxu0 %v102
    %841 = vmatprep.subr.mxu0 0.0
    %842 = vmatpush1.msra.mxu0 %v103
    %843 = vmatprep.subr.mxu0 0.0
    %844 = vmatpush1.msra.mxu0 %v104
    %845 = vmatprep.subr.mxu0 0.0
    %846 = vmatpush1.msra.mxu0 %v105
    %847 = vmatprep.subr.mxu0 0.0
    %848 = vmatpush1.msra.mxu0 %v106
    %849 = vmatprep.subr.mxu0 0.0
    %850 = vmatpush1.msra.mxu0 %v107
    %851 = vmatprep.subr.mxu0 0.0
    %852 = vmatpush1.msra.mxu0 %v108
    %853 = vmatprep.subr.mxu0 0.0
    %854 = vmatpush1.msra.mxu0 %v109
    %855 = vmatprep.subr.mxu0 0.0
    %856 = vmatpush1.msra.mxu0 %v110
    %857 = vmatprep.subr.mxu0 0.0
    %858 = vmatpush1.msra.mxu0 %v111
    %859 = vmatprep.subr.mxu0 0.0
    %860 = vmatpush1.msra.mxu0 %v112
    %861 = vmatprep.subr.mxu0 0.0
    %862 = vmatpush1.msra.mxu0 %v113
    %863 = vmatprep.subr.mxu0 0.0
    %864 = vmatpush1.msra.mxu0 %v114
    %865 = vmatprep.subr.mxu0 0.0
    %866 = vmatpush1.msra.mxu0 %v115
    %867 = vmatprep.subr.mxu0 0.0
    %868 = vmatpush1.msra.mxu0 %v116
    %869 = vmatprep.subr.mxu0 0.0
    %870 = vmatpush1.msra.mxu0 %v117
    %871 = vmatprep.subr.mxu0 0.0
    %872 = vmatpush1.msra.mxu0 %v118
    %873 = vmatprep.subr.mxu0 0.0
    %874 = vmatpush1.msra.mxu0 %v119
    %875 = vmatprep.subr.mxu0 0.0
    %876 = vmatpush1.msra.mxu0 %v120
    %877 = vmatprep.subr.mxu0 0.0
    %878 = vmatpush1.msra.mxu0 %v121
    %879 = vmatprep.subr.mxu0 0.0
    %880 = vmatpush1.msra.mxu0 %v122
    %881 = vmatprep.subr.mxu0 0.0
    %882 = vmatpush1.msra.mxu0 %v123
    %883 = vmatprep.subr.mxu0 0.0
    %884 = vmatpush1.msra.mxu0 %v124
    %885 = vmatprep.subr.mxu0 0.0
    %886 = vmatpush1.msra.mxu0 %v125
    %887 = vmatprep.subr.mxu0 0.0
    %888 = vmatpush1.msra.mxu0 %v126
    %889 = vmatprep.subr.mxu0 0.0
    %890 = vmatpush1.msra.mxu0 %v127
    %891 = vmatprep.subr.mxu0 0.0
    %892 = vmatpush1.msra.mxu0 %v128
    %893 = vmatprep.subr.mxu0 0.0
    %894 = vmatpush1.msra.mxu0 %v129
    %895 = vmatprep.mubr.f32.mxu0 %v609
    %896 = vmatmul.mubr.f32.gmra.mrb[0].mxu0 %v607
    %v897 = vpop.f32.mrb[0].mxu0
    %v898 = vadd.f32 %v828, %v897
    %v899 = vpop.f32.mrb[0].mxu0
    %900 = vdwg.mxu0
    %901 = vmatprep.subr.mxu0 0.0
    %902 = vmatpush1.msra.mxu0 %v130
    %903 = vmatprep.subr.mxu0 0.0
    %904 = vmatpush1.msra.mxu0 %v131
    %905 = vmatprep.subr.mxu0 0.0
    %906 = vmatpush1.msra.mxu0 %v132
    %907 = vmatprep.subr.mxu0 0.0
    %908 = vmatpush1.msra.mxu0 %v133
    %909 = vmatprep.subr.mxu0 0.0
    %910 = vmatpush1.msra.mxu0 %v134
    %911 = vmatprep.subr.mxu0 0.0
    %912 = vmatpush1.msra.mxu0 %v135
    %913 = vmatprep.subr.mxu0 0.0
    %914 = vmatpush1.msra.mxu0 %v136
    %915 = vmatprep.subr.mxu0 0.0
    %916 = vmatpush1.msra.mxu0 %v137
    %917 = vmatprep.subr.mxu0 0.0
    %918 = vmatpush1.msra.mxu0 %v138
    %919 = vmatprep.subr.mxu0 0.0
    %920 = vmatpush1.msra.mxu0 %v139
    %921 = vmatprep.subr.mxu0 0.0
    %922 = vmatpush1.msra.mxu0 %v140
    %923 = vmatprep.subr.mxu0 0.0
    %924 = vmatpush1.msra.mxu0 %v141
    %925 = vmatprep.subr.mxu0 0.0
    %926 = vmatpush1.msra.mxu0 %v142
    %927 = vmatprep.subr.mxu0 0.0
    %928 = vmatpush1.msra.mxu0 %v143
    %929 = vmatprep.subr.mxu0 0.0
    %930 = vmatpush1.msra.mxu0 %v144
    %931 = vmatprep.subr.mxu0 0.0
    %932 = vmatpush1.msra.mxu0 %v145
    %933 = vmatprep.subr.mxu0 0.0
    %934 = vmatpush1.msra.mxu0 %v146
    %935 = vmatprep.subr.mxu0 0.0
    %936 = vmatpush1.msra.mxu0 %v147
    %937 = vmatprep.subr.mxu0 0.0
    %938 = vmatpush1.msra.mxu0 %v148
    %939 = vmatprep.subr.mxu0 0.0
    %940 = vmatpush1.msra.mxu0 %v149
    %941 = vmatprep.subr.mxu0 0.0
    %942 = vmatpush1.msra.mxu0 %v150
    %943 = vmatprep.subr.mxu0 0.0
    %944 = vmatpush1.msra.mxu0 %v151
    %945 = vmatprep.subr.mxu0 0.0
    %946 = vmatpush1.msra.mxu0 %v152
    %947 = vmatprep.subr.mxu0 0.0
    %948 = vmatpush1.msra.mxu0 %v153
    %949 = vmatprep.subr.mxu0 0.0
    %950 = vmatpush1.msra.mxu0 %v154
    %951 = vmatprep.subr.mxu0 0.0
    %952 = vmatpush1.msra.mxu0 %v155
    %953 = vmatprep.subr.mxu0 0.0
    %954 = vmatpush1.msra.mxu0 %v156
    %955 = vmatprep.subr.mxu0 0.0
    %956 = vmatpush1.msra.mxu0 %v157
    %957 = vmatprep.subr.mxu0 0.0
    %958 = vmatpush1.msra.mxu0 %v158
    %959 = vmatprep.subr.mxu0 0.0
    %960 = vmatpush1.msra.mxu0 %v159
    %961 = vmatprep.subr.mxu0 0.0
    %962 = vmatpush1.msra.mxu0 %v160
    %963 = vmatprep.subr.mxu0 0.0
    %964 = vmatpush1.msra.mxu0 %v161
    %965 = vmatprep.mubr.f32.mxu0 %v625
    %966 = vmatmul.mubr.f32.gmra.mrb[0].mxu0 %v617
    %v967 = vpop.f32.mrb[0].mxu0
    %v968 = vadd.f32 %v898, %v967
    %v969 = vpop.f32.mrb[0].mxu0
    %970 = vdwg.mxu0
    %971 = vmatprep.subr.mxu0 0.0
    %972 = vmatpush1.msra.mxu0 %v162
    %973 = vmatprep.subr.mxu0 0.0
    %974 = vmatpush1.msra.mxu0 %v163
    %975 = vmatprep.subr.mxu0 0.0
    %976 = vmatpush1.msra.mxu0 %v164
    %977 = vmatprep.subr.mxu0 0.0
    %978 = vmatpush1.msra.mxu0 %v165
    %979 = vmatprep.subr.mxu0 0.0
    %980 = vmatpush1.msra.mxu0 %v166
    %981 = vmatprep.subr.mxu0 0.0
    %982 = vmatpush1.msra.mxu0 %v167
    %983 = vmatprep.subr.mxu0 0.0
    %984 = vmatpush1.msra.mxu0 %v168
    %985 = vmatprep.subr.mxu0 0.0
    %986 = vmatpush1.msra.mxu0 %v169
    %987 = vmatprep.subr.mxu0 0.0
    %988 = vmatpush1.msra.mxu0 %v170
    %989 = vmatprep.subr.mxu0 0.0
    %990 = vmatpush1.msra.mxu0 %v171
    %991 = vmatprep.subr.mxu0 0.0
    %992 = vmatpush1.msra.mxu0 %v172
    %993 = vmatprep.subr.mxu0 0.0
    %994 = vmatpush1.msra.mxu0 %v173
    %995 = vmatprep.subr.mxu0 0.0
    %996 = vmatpush1.msra.mxu0 %v174
    %997 = vmatprep.subr.mxu0 0.0
    %998 = vmatpush1.msra.mxu0 %v175
    %999 = vmatprep.subr.mxu0 0.0
    %1000 = vmatpush1.msra.mxu0 %v176
    %1001 = vmatprep.subr.mxu0 0.0
    %1002 = vmatpush1.msra.mxu0 %v177
    %1003 = vmatprep.subr.mxu0 0.0
    %1004 = vmatpush1.msra.mxu0 %v178
    %1005 = vmatprep.subr.mxu0 0.0
    %1006 = vmatpush1.msra.mxu0 %v179
    %1007 = vmatprep.subr.mxu0 0.0
    %1008 = vmatpush1.msra.mxu0 %v180
    %1009 = vmatprep.subr.mxu0 0.0
    %1010 = vmatpush1.msra.mxu0 %v181
    %1011 = vmatprep.subr.mxu0 0.0
    %1012 = vmatpush1.msra.mxu0 %v182
    %1013 = vmatprep.subr.mxu0 0.0
    %1014 = vmatpush1.msra.mxu0 %v183
    %1015 = vmatprep.subr.mxu0 0.0
    %1016 = vmatpush1.msra.mxu0 %v184
    %1017 = vmatprep.subr.mxu0 0.0
    %1018 = vmatpush1.msra.mxu0 %v185
    %1019 = vmatprep.subr.mxu0 0.0
    %1020 = vmatpush1.msra.mxu0 %v186
    %1021 = vmatprep.subr.mxu0 0.0
    %1022 = vmatpush1.msra.mxu0 %v187
    %1023 = vmatprep.subr.mxu0 0.0
    %1024 = vmatpush1.msra.mxu0 %v188
    %1025 = vmatprep.subr.mxu0 0.0
    %1026 = vmatpush1.msra.mxu0 %v189
    %1027 = vmatprep.subr.mxu0 0.0
    %1028 = vmatpush1.msra.mxu0 %v190
    %1029 = vmatprep.subr.mxu0 0.0
    %1030 = vmatpush1.msra.mxu0 %v191
    %1031 = vmatprep.subr.mxu0 0.0
    %1032 = vmatpush1.msra.mxu0 %v192
    %1033 = vmatprep.subr.mxu0 0.0
    %1034 = vmatpush1.msra.mxu0 %v193
    %1035 = vmatprep.mubr.f32.mxu0 %v626
    %1036 = vmatmul.mubr.f32.gmra.mrb[0].mxu0 %v624
    %v1037 = vpop.f32.mrb[0].mxu0
    %v1038 = vadd.f32 %v968, %v1037
    %v1039 = vpop.f32.mrb[0].mxu0
    %1040 = vdwg.mxu0
    %1041 = vmatprep.subr.mxu0 0.0
    %1042 = vmatpush1.msra.mxu0 %v194
    %1043 = vmatprep.subr.mxu0 0.0
    %1044 = vmatpush1.msra.mxu0 %v195
    %1045 = vmatprep.subr.mxu0 0.0
    %1046 = vmatpush1.msra.mxu0 %v196
    %1047 = vmatprep.subr.mxu0 0.0
    %1048 = vmatpush1.msra.mxu0 %v197
    %1049 = vmatprep.subr.mxu0 0.0
    %1050 = vmatpush1.msra.mxu0 %v198
    %1051 = vmatprep.subr.mxu0 0.0
    %1052 = vmatpush1.msra.mxu0 %v199
    %1053 = vmatprep.subr.mxu0 0.0
    %1054 = vmatpush1.msra.mxu0 %v200
    %1055 = vmatprep.subr.mxu0 0.0
    %1056 = vmatpush1.msra.mxu0 %v201
    %1057 = vmatprep.subr.mxu0 0.0
    %1058 = vmatpush1.msra.mxu0 %v202
    %1059 = vmatprep.subr.mxu0 0.0
    %1060 = vmatpush1.msra.mxu0 %v203
    %1061 = vmatprep.subr.mxu0 0.0
    %1062 = vmatpush1.msra.mxu0 %v204
    %1063 = vmatprep.subr.mxu0 0.0
    %1064 = vmatpush1.msra.mxu0 %v205
    %1065 = vmatprep.subr.mxu0 0.0
    %1066 = vmatpush1.msra.mxu0 %v206
    %1067 = vmatprep.subr.mxu0 0.0
    %1068 = vmatpush1.msra.mxu0 %v207
    %1069 = vmatprep.subr.mxu0 0.0
    %1070 = vmatpush1.msra.mxu0 %v208
    %1071 = vmatprep.subr.mxu0 0.0
    %1072 = vmatpush1.msra.mxu0 %v209
    %1073 = vmatprep.subr.mxu0 0.0
    %1074 = vmatpush1.msra.mxu0 %v210
    %1075 = vmatprep.subr.mxu0 0.0
    %1076 = vmatpush1.msra.mxu0 %v211
    %1077 = vmatprep.subr.mxu0 0.0
    %1078 = vmatpush1.msra.mxu0 %v212
    %1079 = vmatprep.subr.mxu0 0.0
    %1080 = vmatpush1.msra.mxu0 %v213
    %1081 = vmatprep.subr.mxu0 0.0
    %1082 = vmatpush1.msra.mxu0 %v214
    %1083 = vmatprep.subr.mxu0 0.0
    %1084 = vmatpush1.msra.mxu0 %v215
    %1085 = vmatprep.subr.mxu0 0.0
    %1086 = vmatpush1.msra.mxu0 %v216
    %1087 = vmatprep.subr.mxu0 0.0
    %1088 = vmatpush1.msra.mxu0 %v217
    %1089 = vmatprep.subr.mxu0 0.0
    %1090 = vmatpush1.msra.mxu0 %v218
    %1091 = vmatprep.subr.mxu0 0.0
    %1092 = vmatpush1.msra.mxu0 %v219
    %1093 = vmatprep.subr.mxu0 0.0
    %1094 = vmatpush1.msra.mxu0 %v220
    %1095 = vmatprep.subr.mxu0 0.0
    %1096 = vmatpush1.msra.mxu0 %v221
    %1097 = vmatprep.subr.mxu0 0.0
    %1098 = vmatpush1.msra.mxu0 %v222
    %1099 = vmatprep.subr.mxu0 0.0
    %1100 = vmatpush1.msra.mxu0 %v223
    %1101 = vmatprep.subr.mxu0 0.0
    %1102 = vmatpush1.msra.mxu0 %v224
    %1103 = vmatprep.subr.mxu0 0.0
    %1104 = vmatpush1.msra.mxu0 %v225
    %1105 = vmatprep.mubr.f32.mxu0 %v642
    %1106 = vmatmul.mubr.f32.gmra.mrb[0].mxu0 %v634
    %v1107 = vpop.f32.mrb[0].mxu0
    %v1108 = vadd.f32 %v1038, %v1107
    %v1109 = vpop.f32.mrb[0].mxu0
    %1110 = vdwg.mxu0
    %1111 = vmatprep.subr.mxu0 0.0
    %1112 = vmatpush1.msra.mxu0 %v226
    %1113 = vmatprep.subr.mxu0 0.0
    %1114 = vmatpush1.msra.mxu0 %v227
    %1115 = vmatprep.subr.mxu0 0.0
    %1116 = vmatpush1.msra.mxu0 %v228
    %1117 = vmatprep.subr.mxu0 0.0
    %1118 = vmatpush1.msra.mxu0 %v229
    %1119 = vmatprep.subr.mxu0 0.0
    %1120 = vmatpush1.msra.mxu0 %v230
    %1121 = vmatprep.subr.mxu0 0.0
    %1122 = vmatpush1.msra.mxu0 %v231
    %1123 = vmatprep.subr.mxu0 0.0
    %1124 = vmatpush1.msra.mxu0 %v232
    %1125 = vmatprep.subr.mxu0 0.0
    %1126 = vmatpush1.msra.mxu0 %v233
    %1127 = vmatprep.subr.mxu0 0.0
    %1128 = vmatpush1.msra.mxu0 %v234
    %1129 = vmatprep.subr.mxu0 0.0
    %1130 = vmatpush1.msra.mxu0 %v235
    %1131 = vmatprep.subr.mxu0 0.0
    %1132 = vmatpush1.msra.mxu0 %v236
    %1133 = vmatprep.subr.mxu0 0.0
    %1134 = vmatpush1.msra.mxu0 %v237
    %1135 = vmatprep.subr.mxu0 0.0
    %1136 = vmatpush1.msra.mxu0 %v238
    %1137 = vmatprep.subr.mxu0 0.0
    %1138 = vmatpush1.msra.mxu0 %v239
    %1139 = vmatprep.subr.mxu0 0.0
    %1140 = vmatpush1.msra.mxu0 %v240
    %1141 = vmatprep.subr.mxu0 0.0
    %1142 = vmatpush1.msra.mxu0 %v241
    %1143 = vmatprep.subr.mxu0 0.0
    %1144 = vmatpush1.msra.mxu0 %v242
    %1145 = vmatprep.subr.mxu0 0.0
    %1146 = vmatpush1.msra.mxu0 %v243
    %1147 = vmatprep.subr.mxu0 0.0
    %1148 = vmatpush1.msra.mxu0 %v244
    %1149 = vmatprep.subr.mxu0 0.0
    %1150 = vmatpush1.msra.mxu0 %v245
    %1151 = vmatprep.subr.mxu0 0.0
    %1152 = vmatpush1.msra.mxu0 %v246
    %1153 = vmatprep.subr.mxu0 0.0
    %1154 = vmatpush1.msra.mxu0 %v247
    %1155 = vmatprep.subr.mxu0 0.0
    %1156 = vmatpush1.msra.mxu0 %v248
    %1157 = vmatprep.subr.mxu0 0.0
    %1158 = vmatpush1.msra.mxu0 %v249
    %1159 = vmatprep.subr.mxu0 0.0
    %1160 = vmatpush1.msra.mxu0 %v250
    %1161 = vmatprep.subr.mxu0 0.0
    %1162 = vmatpush1.msra.mxu0 %v251
    %1163 = vmatprep.subr.mxu0 0.0
    %1164 = vmatpush1.msra.mxu0 %v252
    %1165 = vmatprep.subr.mxu0 0.0
    %1166 = vmatpush1.msra.mxu0 %v253
    %1167 = vmatprep.subr.mxu0 0.0
    %1168 = vmatpush1.msra.mxu0 %v254
    %1169 = vmatprep.subr.mxu0 0.0
    %1170 = vmatpush1.msra.mxu0 %v255
    %1171 = vmatprep.subr.mxu0 0.0
    %1172 = vmatpush1.msra.mxu0 %v256
    %1173 = vmatprep.subr.mxu0 0.0
    %1174 = vmatpush1.msra.mxu0 %v257
    %1175 = vmatprep.mubr.f32.mxu0 %v643
    %1176 = vmatmul.mubr.f32.gmra.mrb[0].mxu0 %v641
    %v1177 = vpop.f32.mrb[0].mxu0
    %v1178 = vadd.f32 %v1108, %v1177
    %v1179 = vpop.f32.mrb[0].mxu0
    %1180 = vdwg.mxu0
    %1181 = vmatprep.subr.mxu0 0.0
    %1182 = vmatpush1.msra.mxu0 %v258
    %1183 = vmatprep.subr.mxu0 0.0
    %1184 = vmatpush1.msra.mxu0 %v259
    %1185 = vmatprep.subr.mxu0 0.0
    %1186 = vmatpush1.msra.mxu0 %v260
    %1187 = vmatprep.subr.mxu0 0.0
    %1188 = vmatpush1.msra.mxu0 %v261
    %1189 = vmatprep.subr.mxu0 0.0
    %1190 = vmatpush1.msra.mxu0 %v262
    %1191 = vmatprep.subr.mxu0 0.0
    %1192 = vmatpush1.msra.mxu0 %v263
    %1193 = vmatprep.subr.mxu0 0.0
    %1194 = vmatpush1.msra.mxu0 %v264
    %1195 = vmatprep.subr.mxu0 0.0
    %1196 = vmatpush1.msra.mxu0 %v265
    %1197 = vmatprep.subr.mxu0 0.0
    %1198 = vmatpush1.msra.mxu0 %v266
    %1199 = vmatprep.subr.mxu0 0.0
    %1200 = vmatpush1.msra.mxu0 %v267
    %1201 = vmatprep.subr.mxu0 0.0
    %1202 = vmatpush1.msra.mxu0 %v268
    %1203 = vmatprep.subr.mxu0 0.0
    %1204 = vmatpush1.msra.mxu0 %v269
    %1205 = vmatprep.subr.mxu0 0.0
    %1206 = vmatpush1.msra.mxu0 %v270
    %1207 = vmatprep.subr.mxu0 0.0
    %1208 = vmatpush1.msra.mxu0 %v271
    %1209 = vmatprep.subr.mxu0 0.0
    %1210 = vmatpush1.msra.mxu0 %v272
    %1211 = vmatprep.subr.mxu0 0.0
    %1212 = vmatpush1.msra.mxu0 %v273
    %1213 = vmatprep.subr.mxu0 0.0
    %1214 = vmatpush1.msra.mxu0 %v274
    %1215 = vmatprep.subr.mxu0 0.0
    %1216 = vmatpush1.msra.mxu0 %v275
    %1217 = vmatprep.subr.mxu0 0.0
    %1218 = vmatpush1.msra.mxu0 %v276
    %1219 = vmatprep.subr.mxu0 0.0
    %1220 = vmatpush1.msra.mxu0 %v277
    %1221 = vmatprep.subr.mxu0 0.0
    %1222 = vmatpush1.msra.mxu0 %v278
    %1223 = vmatprep.subr.mxu0 0.0
    %1224 = vmatpush1.msra.mxu0 %v279
    %1225 = vmatprep.subr.mxu0 0.0
    %1226 = vmatpush1.msra.mxu0 %v280
    %1227 = vmatprep.subr.mxu0 0.0
    %1228 = vmatpush1.msra.mxu0 %v281
    %1229 = vmatprep.subr.mxu0 0.0
    %1230 = vmatpush1.msra.mxu0 %v282
    %1231 = vmatprep.subr.mxu0 0.0
    %1232 = vmatpush1.msra.mxu0 %v283
    %1233 = vmatprep.subr.mxu0 0.0
    %1234 = vmatpush1.msra.mxu0 %v284
    %1235 = vmatprep.subr.mxu0 0.0
    %1236 = vmatpush1.msra.mxu0 %v285
    %1237 = vmatprep.subr.mxu0 0.0
    %1238 = vmatpush1.msra.mxu0 %v286
    %1239 = vmatprep.subr.mxu0 0.0
    %1240 = vmatpush1.msra.mxu0 %v287
    %1241 = vmatprep.subr.mxu0 0.0
    %1242 = vmatpush1.msra.mxu0 %v288
    %1243 = vmatprep.subr.mxu0 0.0
    %1244 = vmatpush1.msra.mxu0 %v289
    %1245 = vmatprep.mubr.f32.mxu0 %v659
    %1246 = vmatmul.mubr.f32.gmra.mrb[0].mxu0 %v651
    %v1247 = vpop.f32.mrb[0].mxu0
    %v1248 = vadd.f32 %v1178, %v1247
    %v1249 = vpop.f32.mrb[0].mxu0
    %1250 = vdwg.mxu0
    %1251 = vmatprep.subr.mxu0 0.0
    %1252 = vmatpush1.msra.mxu0 %v290
    %1253 = vmatprep.subr.mxu0 0.0
    %1254 = vmatpush1.msra.mxu0 %v291
    %1255 = vmatprep.subr.mxu0 0.0
    %1256 = vmatpush1.msra.mxu0 %v292
    %1257 = vmatprep.subr.mxu0 0.0
    %1258 = vmatpush1.msra.mxu0 %v293
    %1259 = vmatprep.subr.mxu0 0.0
    %1260 = vmatpush1.msra.mxu0 %v294
    %1261 = vmatprep.subr.mxu0 0.0
    %1262 = vmatpush1.msra.mxu0 %v295
    %1263 = vmatprep.subr.mxu0 0.0
    %1264 = vmatpush1.msra.mxu0 %v296
    %1265 = vmatprep.subr.mxu0 0.0
    %1266 = vmatpush1.msra.mxu0 %v297
    %1267 = vmatprep.subr.mxu0 0.0
    %1268 = vmatpush1.msra.mxu0 %v298
    %1269 = vmatprep.subr.mxu0 0.0
    %1270 = vmatpush1.msra.mxu0 %v299
    %1271 = vmatprep.subr.mxu0 0.0
    %1272 = vmatpush1.msra.mxu0 %v300
    %1273 = vmatprep.subr.mxu0 0.0
    %1274 = vmatpush1.msra.mxu0 %v301
    %1275 = vmatprep.subr.mxu0 0.0
    %1276 = vmatpush1.msra.mxu0 %v302
    %1277 = vmatprep.subr.mxu0 0.0
    %1278 = vmatpush1.msra.mxu0 %v303
    %1279 = vmatprep.subr.mxu0 0.0
    %1280 = vmatpush1.msra.mxu0 %v304
    %1281 = vmatprep.subr.mxu0 0.0
    %1282 = vmatpush1.msra.mxu0 %v305
    %1283 = vmatprep.subr.mxu0 0.0
    %1284 = vmatpush1.msra.mxu0 %v306
    %1285 = vmatprep.subr.mxu0 0.0
    %1286 = vmatpush1.msra.mxu0 %v307
    %1287 = vmatprep.subr.mxu0 0.0
    %1288 = vmatpush1.msra.mxu0 %v308
    %1289 = vmatprep.subr.mxu0 0.0
    %1290 = vmatpush1.msra.mxu0 %v309
    %1291 = vmatprep.subr.mxu0 0.0
    %1292 = vmatpush1.msra.mxu0 %v310
    %1293 = vmatprep.subr.mxu0 0.0
    %1294 = vmatpush1.msra.mxu0 %v311
    %1295 = vmatprep.subr.mxu0 0.0
    %1296 = vmatpush1.msra.mxu0 %v312
    %1297 = vmatprep.subr.mxu0 0.0
    %1298 = vmatpush1.msra.mxu0 %v313
    %1299 = vmatprep.subr.mxu0 0.0
    %1300 = vmatpush1.msra.mxu0 %v314
    %1301 = vmatprep.subr.mxu0 0.0
    %1302 = vmatpush1.msra.mxu0 %v315
    %1303 = vmatprep.subr.mxu0 0.0
    %1304 = vmatpush1.msra.mxu0 %v316
    %1305 = vmatprep.subr.mxu0 0.0
    %1306 = vmatpush1.msra.mxu0 %v317
    %1307 = vmatprep.subr.mxu0 0.0
    %1308 = vmatpush1.msra.mxu0 %v318
    %1309 = vmatprep.subr.mxu0 0.0
    %1310 = vmatpush1.msra.mxu0 %v319
    %1311 = vmatprep.subr.mxu0 0.0
    %1312 = vmatpush1.msra.mxu0 %v320
    %1313 = vmatprep.subr.mxu0 0.0
    %1314 = vmatpush1.msra.mxu0 %v321
    %1315 = vmatprep.mubr.f32.mxu0 %v660
    %1316 = vmatmul.mubr.f32.gmra.mrb[0].mxu0 %v658
    %v1317 = vpop.f32.mrb[0].mxu0
    %v1318 = vadd.f32 %v1248, %v1317
    %v1319 = vpop.f32.mrb[0].mxu0
    %1320 = vdwg.mxu0
    %1321 = vmatprep.subr.mxu0 0.0
    %1322 = vmatpush1.msra.mxu0 %v322
    %1323 = vmatprep.subr.mxu0 0.0
    %1324 = vmatpush1.msra.mxu0 %v323
    %1325 = vmatprep.subr.mxu0 0.0
    %1326 = vmatpush1.msra.mxu0 %v324
    %1327 = vmatprep.subr.mxu0 0.0
    %1328 = vmatpush1.msra.mxu0 %v325
    %1329 = vmatprep.subr.mxu0 0.0
    %1330 = vmatpush1.msra.mxu0 %v326
    %1331 = vmatprep.subr.mxu0 0.0
    %1332 = vmatpush1.msra.mxu0 %v327
    %1333 = vmatprep.subr.mxu0 0.0
    %1334 = vmatpush1.msra.mxu0 %v328
    %1335 = vmatprep.subr.mxu0 0.0
    %1336 = vmatpush1.msra.mxu0 %v329
    %1337 = vmatprep.subr.mxu0 0.0
    %1338 = vmatpush1.msra.mxu0 %v330
    %1339 = vmatprep.subr.mxu0 0.0
    %1340 = vmatpush1.msra.mxu0 %v331
    %1341 = vmatprep.subr.mxu0 0.0
    %1342 = vmatpush1.msra.mxu0 %v332
    %1343 = vmatprep.subr.mxu0 0.0
    %1344 = vmatpush1.msra.mxu0 %v333
    %1345 = vmatprep.subr.mxu0 0.0
    %1346 = vmatpush1.msra.mxu0 %v334
    %1347 = vmatprep.subr.mxu0 0.0
    %1348 = vmatpush1.msra.mxu0 %v335
    %1349 = vmatprep.subr.mxu0 0.0
    %1350 = vmatpush1.msra.mxu0 %v336
    %1351 = vmatprep.subr.mxu0 0.0
    %1352 = vmatpush1.msra.mxu0 %v337
    %1353 = vmatprep.subr.mxu0 0.0
    %1354 = vmatpush1.msra.mxu0 %v338
    %1355 = vmatprep.subr.mxu0 0.0
    %1356 = vmatpush1.msra.mxu0 %v339
    %1357 = vmatprep.subr.mxu0 0.0
    %1358 = vmatpush1.msra.mxu0 %v340
    %1359 = vmatprep.subr.mxu0 0.0
    %1360 = vmatpush1.msra.mxu0 %v341
    %1361 = vmatprep.subr.mxu0 0.0
    %1362 = vmatpush1.msra.mxu0 %v342
    %1363 = vmatprep.subr.mxu0 0.0
    %1364 = vmatpush1.msra.mxu0 %v343
    %1365 = vmatprep.subr.mxu0 0.0
    %1366 = vmatpush1.msra.mxu0 %v344
    %1367 = vmatprep.subr.mxu0 0.0
    %1368 = vmatpush1.msra.mxu0 %v345
    %1369 = vmatprep.subr.mxu0 0.0
    %1370 = vmatpush1.msra.mxu0 %v346
    %1371 = vmatprep.subr.mxu0 0.0
    %1372 = vmatpush1.msra.mxu0 %v347
    %1373 = vmatprep.subr.mxu0 0.0
    %1374 = vmatpush1.msra.mxu0 %v348
    %1375 = vmatprep.subr.mxu0 0.0
    %1376 = vmatpush1.msra.mxu0 %v349
    %1377 = vmatprep.subr.mxu0 0.0
    %1378 = vmatpush1.msra.mxu0 %v350
    %1379 = vmatprep.subr.mxu0 0.0
    %1380 = vmatpush1.msra.mxu0 %v351
    %1381 = vmatprep.subr.mxu0 0.0
    %1382 = vmatpush1.msra.mxu0 %v352
    %1383 = vmatprep.subr.mxu0 0.0
    %1384 = vmatpush1.msra.mxu0 %v353
    %1385 = vmatprep.mubr.f32.mxu0 %v676
    %1386 = vmatmul.mubr.f32.gmra.mrb[0].mxu0 %v668
    %v1387 = vpop.f32.mrb[0].mxu0
    %v1388 = vadd.f32 %v1318, %v1387
    %v1389 = vpop.f32.mrb[0].mxu0
    %1390 = vdwg.mxu0
    %1391 = vmatprep.subr.mxu0 0.0
    %1392 = vmatpush1.msra.mxu0 %v354
    %1393 = vmatprep.subr.mxu0 0.0
    %1394 = vmatpush1.msra.mxu0 %v355
    %1395 = vmatprep.subr.mxu0 0.0
    %1396 = vmatpush1.msra.mxu0 %v356
    %1397 = vmatprep.subr.mxu0 0.0
    %1398 = vmatpush1.msra.mxu0 %v357
    %1399 = vmatprep.subr.mxu0 0.0
    %1400 = vmatpush1.msra.mxu0 %v358
    %1401 = vmatprep.subr.mxu0 0.0
    %1402 = vmatpush1.msra.mxu0 %v359
    %1403 = vmatprep.subr.mxu0 0.0
    %1404 = vmatpush1.msra.mxu0 %v360
    %1405 = vmatprep.subr.mxu0 0.0
    %1406 = vmatpush1.msra.mxu0 %v361
    %1407 = vmatprep.subr.mxu0 0.0
    %1408 = vmatpush1.msra.mxu0 %v362
    %1409 = vmatprep.subr.mxu0 0.0
    %1410 = vmatpush1.msra.mxu0 %v363
    %1411 = vmatprep.subr.mxu0 0.0
    %1412 = vmatpush1.msra.mxu0 %v364
    %1413 = vmatprep.subr.mxu0 0.0
    %1414 = vmatpush1.msra.mxu0 %v365
    %1415 = vmatprep.subr.mxu0 0.0
    %1416 = vmatpush1.msra.mxu0 %v366
    %1417 = vmatprep.subr.mxu0 0.0
    %1418 = vmatpush1.msra.mxu0 %v367
    %1419 = vmatprep.subr.mxu0 0.0
    %1420 = vmatpush1.msra.mxu0 %v368
    %1421 = vmatprep.subr.mxu0 0.0
    %1422 = vmatpush1.msra.mxu0 %v369
    %1423 = vmatprep.subr.mxu0 0.0
    %1424 = vmatpush1.msra.mxu0 %v370
    %1425 = vmatprep.subr.mxu0 0.0
    %1426 = vmatpush1.msra.mxu0 %v371
    %1427 = vmatprep.subr.mxu0 0.0
    %1428 = vmatpush1.msra.mxu0 %v372
    %1429 = vmatprep.subr.mxu0 0.0
    %1430 = vmatpush1.msra.mxu0 %v373
    %1431 = vmatprep.subr.mxu0 0.0
    %1432 = vmatpush1.msra.mxu0 %v374
    %1433 = vmatprep.subr.mxu0 0.0
    %1434 = vmatpush1.msra.mxu0 %v375
    %1435 = vmatprep.subr.mxu0 0.0
    %1436 = vmatpush1.msra.mxu0 %v376
    %1437 = vmatprep.subr.mxu0 0.0
    %1438 = vmatpush1.msra.mxu0 %v377
    %1439 = vmatprep.subr.mxu0 0.0
    %1440 = vmatpush1.msra.mxu0 %v378
    %1441 = vmatprep.subr.mxu0 0.0
    %1442 = vmatpush1.msra.mxu0 %v379
    %1443 = vmatprep.subr.mxu0 0.0
    %1444 = vmatpush1.msra.mxu0 %v380
    %1445 = vmatprep.subr.mxu0 0.0
    %1446 = vmatpush1.msra.mxu0 %v381
    %1447 = vmatprep.subr.mxu0 0.0
    %1448 = vmatpush1.msra.mxu0 %v382
    %1449 = vmatprep.subr.mxu0 0.0
    %1450 = vmatpush1.msra.mxu0 %v383
    %1451 = vmatprep.subr.mxu0 0.0
    %1452 = vmatpush1.msra.mxu0 %v384
    %1453 = vmatprep.subr.mxu0 0.0
    %1454 = vmatpush1.msra.mxu0 %v385
    %1455 = vmatprep.mubr.f32.mxu0 %v677
    %1456 = vmatmul.mubr.f32.gmra.mrb[0].mxu0 %v675
    %v1457 = vpop.f32.mrb[0].mxu0
    %v1458 = vadd.f32 %v1388, %v1457
    %v1459 = vpop.f32.mrb[0].mxu0
    %1460 = vdwg.mxu0
    %1461 = vmatprep.subr.mxu0 0.0
    %1462 = vmatpush1.msra.mxu0 %v386
    %1463 = vmatprep.subr.mxu0 0.0
    %1464 = vmatpush1.msra.mxu0 %v387
    %1465 = vmatprep.subr.mxu0 0.0
    %1466 = vmatpush1.msra.mxu0 %v388
    %1467 = vmatprep.subr.mxu0 0.0
    %1468 = vmatpush1.msra.mxu0 %v389
    %1469 = vmatprep.subr.mxu0 0.0
    %1470 = vmatpush1.msra.mxu0 %v390
    %1471 = vmatprep.subr.mxu0 0.0
    %1472 = vmatpush1.msra.mxu0 %v391
    %1473 = vmatprep.subr.mxu0 0.0
    %1474 = vmatpush1.msra.mxu0 %v392
    %1475 = vmatprep.subr.mxu0 0.0
    %1476 = vmatpush1.msra.mxu0 %v393
    %1477 = vmatprep.subr.mxu0 0.0
    %1478 = vmatpush1.msra.mxu0 %v394
    %1479 = vmatprep.subr.mxu0 0.0
    %1480 = vmatpush1.msra.mxu0 %v395
    %1481 = vmatprep.subr.mxu0 0.0
    %1482 = vmatpush1.msra.mxu0 %v396
    %1483 = vmatprep.subr.mxu0 0.0
    %1484 = vmatpush1.msra.mxu0 %v397
    %1485 = vmatprep.subr.mxu0 0.0
    %1486 = vmatpush1.msra.mxu0 %v398
    %1487 = vmatprep.subr.mxu0 0.0
    %1488 = vmatpush1.msra.mxu0 %v399
    %1489 = vmatprep.subr.mxu0 0.0
    %1490 = vmatpush1.msra.mxu0 %v400
    %1491 = vmatprep.subr.mxu0 0.0
    %1492 = vmatpush1.msra.mxu0 %v401
    %1493 = vmatprep.subr.mxu0 0.0
    %1494 = vmatpush1.msra.mxu0 %v402
    %1495 = vmatprep.subr.mxu0 0.0
    %1496 = vmatpush1.msra.mxu0 %v403
    %1497 = vmatprep.subr.mxu0 0.0
    %1498 = vmatpush1.msra.mxu0 %v404
    %1499 = vmatprep.subr.mxu0 0.0
    %1500 = vmatpush1.msra.mxu0 %v405
    %1501 = vmatprep.subr.mxu0 0.0
    %1502 = vmatpush1.msra.mxu0 %v406
    %1503 = vmatprep.subr.mxu0 0.0
    %1504 = vmatpush1.msra.mxu0 %v407
    %1505 = vmatprep.subr.mxu0 0.0
    %1506 = vmatpush1.msra.mxu0 %v408
    %1507 = vmatprep.subr.mxu0 0.0
    %1508 = vmatpush1.msra.mxu0 %v409
    %1509 = vmatprep.subr.mxu0 0.0
    %1510 = vmatpush1.msra.mxu0 %v410
    %1511 = vmatprep.subr.mxu0 0.0
    %1512 = vmatpush1.msra.mxu0 %v411
    %1513 = vmatprep.subr.mxu0 0.0
    %1514 = vmatpush1.msra.mxu0 %v412
    %1515 = vmatprep.subr.mxu0 0.0
    %1516 = vmatpush1.msra.mxu0 %v413
    %1517 = vmatprep.subr.mxu0 0.0
    %1518 = vmatpush1.msra.mxu0 %v414
    %1519 = vmatprep.subr.mxu0 0.0
    %1520 = vmatpush1.msra.mxu0 %v415
    %1521 = vmatprep.subr.mxu0 0.0
    %1522 = vmatpush1.msra.mxu0 %v416
    %1523 = vmatprep.subr.mxu0 0.0
    %1524 = vmatpush1.msra.mxu0 %v417
    %1525 = vmatprep.mubr.f32.mxu0 %v693
    %1526 = vmatmul.mubr.f32.gmra.mrb[0].mxu0 %v685
    %v1527 = vpop.f32.mrb[0].mxu0
    %v1528 = vadd.f32 %v1458, %v1527
    %v1529 = vpop.f32.mrb[0].mxu0
    %1530 = vdwg.mxu0
    %1531 = vmatprep.subr.mxu0 0.0
    %1532 = vmatpush1.msra.mxu0 %v418
    %1533 = vmatprep.subr.mxu0 0.0
    %1534 = vmatpush1.msra.mxu0 %v419
    %1535 = vmatprep.subr.mxu0 0.0
    %1536 = vmatpush1.msra.mxu0 %v420
    %1537 = vmatprep.subr.mxu0 0.0
    %1538 = vmatpush1.msra.mxu0 %v421
    %1539 = vmatprep.subr.mxu0 0.0
    %1540 = vmatpush1.msra.mxu0 %v422
    %1541 = vmatprep.subr.mxu0 0.0
    %1542 = vmatpush1.msra.mxu0 %v423
    %1543 = vmatprep.subr.mxu0 0.0
    %1544 = vmatpush1.msra.mxu0 %v424
    %1545 = vmatprep.subr.mxu0 0.0
    %1546 = vmatpush1.msra.mxu0 %v425
    %1547 = vmatprep.subr.mxu0 0.0
    %1548 = vmatpush1.msra.mxu0 %v426
    %1549 = vmatprep.subr.mxu0 0.0
    %1550 = vmatpush1.msra.mxu0 %v427
    %1551 = vmatprep.subr.mxu0 0.0
    %1552 = vmatpush1.msra.mxu0 %v428
    %1553 = vmatprep.subr.mxu0 0.0
    %1554 = vmatpush1.msra.mxu0 %v429
    %1555 = vmatprep.subr.mxu0 0.0
    %1556 = vmatpush1.msra.mxu0 %v430
    %1557 = vmatprep.subr.mxu0 0.0
    %1558 = vmatpush1.msra.mxu0 %v431
    %1559 = vmatprep.subr.mxu0 0.0
    %1560 = vmatpush1.msra.mxu0 %v432
    %1561 = vmatprep.subr.mxu0 0.0
    %1562 = vmatpush1.msra.mxu0 %v433
    %1563 = vmatprep.subr.mxu0 0.0
    %1564 = vmatpush1.msra.mxu0 %v434
    %1565 = vmatprep.subr.mxu0 0.0
    %1566 = vmatpush1.msra.mxu0 %v435
    %1567 = vmatprep.subr.mxu0 0.0
    %1568 = vmatpush1.msra.mxu0 %v436
    %1569 = vmatprep.subr.mxu0 0.0
    %1570 = vmatpush1.msra.mxu0 %v437
    %1571 = vmatprep.subr.mxu0 0.0
    %1572 = vmatpush1.msra.mxu0 %v438
    %1573 = vmatprep.subr.mxu0 0.0
    %1574 = vmatpush1.msra.mxu0 %v439
    %1575 = vmatprep.subr.mxu0 0.0
    %1576 = vmatpush1.msra.mxu0 %v440
    %1577 = vmatprep.subr.mxu0 0.0
    %1578 = vmatpush1.msra.mxu0 %v441
    %1579 = vmatprep.subr.mxu0 0.0
    %1580 = vmatpush1.msra.mxu0 %v442
    %1581 = vmatprep.subr.mxu0 0.0
    %1582 = vmatpush1.msra.mxu0 %v443
    %1583 = vmatprep.subr.mxu0 0.0
    %1584 = vmatpush1.msra.mxu0 %v444
    %1585 = vmatprep.subr.mxu0 0.0
    %1586 = vmatpush1.msra.mxu0 %v445
    %1587 = vmatprep.subr.mxu0 0.0
    %1588 = vmatpush1.msra.mxu0 %v446
    %1589 = vmatprep.subr.mxu0 0.0
    %1590 = vmatpush1.msra.mxu0 %v447
    %1591 = vmatprep.subr.mxu0 0.0
    %1592 = vmatpush1.msra.mxu0 %v448
    %1593 = vmatprep.subr.mxu0 0.0
    %1594 = vmatpush1.msra.mxu0 %v449
    %1595 = vmatprep.mubr.f32.mxu0 %v694
    %1596 = vmatmul.mubr.f32.gmra.mrb[0].mxu0 %v692
    %v1597 = vpop.f32.mrb[0].mxu0
    %v1598 = vadd.f32 %v1528, %v1597
    %v1599 = vpop.f32.mrb[0].mxu0
    %1600 = vdwg.mxu0
    %1601 = vmatprep.subr.mxu0 0.0
    %1602 = vmatpush1.msra.mxu0 %v450
    %1603 = vmatprep.subr.mxu0 0.0
    %1604 = vmatpush1.msra.mxu0 %v451
    %1605 = vmatprep.subr.mxu0 0.0
    %1606 = vmatpush1.msra.mxu0 %v452
    %1607 = vmatprep.subr.mxu0 0.0
    %1608 = vmatpush1.msra.mxu0 %v453
    %1609 = vmatprep.subr.mxu0 0.0
    %1610 = vmatpush1.msra.mxu0 %v454
    %1611 = vmatprep.subr.mxu0 0.0
    %1612 = vmatpush1.msra.mxu0 %v455
    %1613 = vmatprep.subr.mxu0 0.0
    %1614 = vmatpush1.msra.mxu0 %v456
    %1615 = vmatprep.subr.mxu0 0.0
    %1616 = vmatpush1.msra.mxu0 %v457
    %1617 = vmatprep.subr.mxu0 0.0
    %1618 = vmatpush1.msra.mxu0 %v458
    %1619 = vmatprep.subr.mxu0 0.0
    %1620 = vmatpush1.msra.mxu0 %v459
    %1621 = vmatprep.subr.mxu0 0.0
    %1622 = vmatpush1.msra.mxu0 %v460
    %1623 = vmatprep.subr.mxu0 0.0
    %1624 = vmatpush1.msra.mxu0 %v461
    %1625 = vmatprep.subr.mxu0 0.0
    %1626 = vmatpush1.msra.mxu0 %v462
    %1627 = vmatprep.subr.mxu0 0.0
    %1628 = vmatpush1.msra.mxu0 %v463
    %1629 = vmatprep.subr.mxu0 0.0
    %1630 = vmatpush1.msra.mxu0 %v464
    %1631 = vmatprep.subr.mxu0 0.0
    %1632 = vmatpush1.msra.mxu0 %v465
    %1633 = vmatprep.subr.mxu0 0.0
    %1634 = vmatpush1.msra.mxu0 %v466
    %1635 = vmatprep.subr.mxu0 0.0
    %1636 = vmatpush1.msra.mxu0 %v467
    %1637 = vmatprep.subr.mxu0 0.0
    %1638 = vmatpush1.msra.mxu0 %v468
    %1639 = vmatprep.subr.mxu0 0.0
    %1640 = vmatpush1.msra.mxu0 %v469
    %1641 = vmatprep.subr.mxu0 0.0
    %1642 = vmatpush1.msra.mxu0 %v470
    %1643 = vmatprep.subr.mxu0 0.0
    %1644 = vmatpush1.msra.mxu0 %v471
    %1645 = vmatprep.subr.mxu0 0.0
    %1646 = vmatpush1.msra.mxu0 %v472
    %1647 = vmatprep.subr.mxu0 0.0
    %1648 = vmatpush1.msra.mxu0 %v473
    %1649 = vmatprep.subr.mxu0 0.0
    %1650 = vmatpush1.msra.mxu0 %v474
    %1651 = vmatprep.subr.mxu0 0.0
    %1652 = vmatpush1.msra.mxu0 %v475
    %1653 = vmatprep.subr.mxu0 0.0
    %1654 = vmatpush1.msra.mxu0 %v476
    %1655 = vmatprep.subr.mxu0 0.0
    %1656 = vmatpush1.msra.mxu0 %v477
    %1657 = vmatprep.subr.mxu0 0.0
    %1658 = vmatpush1.msra.mxu0 %v478
    %1659 = vmatprep.subr.mxu0 0.0
    %1660 = vmatpush1.msra.mxu0 %v479
    %1661 = vmatprep.subr.mxu0 0.0
    %1662 = vmatpush1.msra.mxu0 %v480
    %1663 = vmatprep.subr.mxu0 0.0
    %1664 = vmatpush1.msra.mxu0 %v481
    %1665 = vmatprep.mubr.f32.mxu0 %v710
    %1666 = vmatmul.mubr.f32.gmra.mrb[0].mxu0 %v702
    %v1667 = vpop.f32.mrb[0].mxu0
    %v1668 = vadd.f32 %v1598, %v1667
    %v1669 = vpop.f32.mrb[0].mxu0
    %1670 = vdwg.mxu0
    %1671 = vmatprep.subr.mxu0 0.0
    %1672 = vmatpush1.msra.mxu0 %v482
    %1673 = vmatprep.subr.mxu0 0.0
    %1674 = vmatpush1.msra.mxu0 %v483
    %1675 = vmatprep.subr.mxu0 0.0
    %1676 = vmatpush1.msra.mxu0 %v484
    %1677 = vmatprep.subr.mxu0 0.0
    %1678 = vmatpush1.msra.mxu0 %v485
    %1679 = vmatprep.subr.mxu0 0.0
    %1680 = vmatpush1.msra.mxu0 %v486
    %1681 = vmatprep.subr.mxu0 0.0
    %1682 = vmatpush1.msra.mxu0 %v487
    %1683 = vmatprep.subr.mxu0 0.0
    %1684 = vmatpush1.msra.mxu0 %v488
    %1685 = vmatprep.subr.mxu0 0.0
    %1686 = vmatpush1.msra.mxu0 %v489
    %1687 = vmatprep.subr.mxu0 0.0
    %1688 = vmatpush1.msra.mxu0 %v490
    %1689 = vmatprep.subr.mxu0 0.0
    %1690 = vmatpush1.msra.mxu0 %v491
    %1691 = vmatprep.subr.mxu0 0.0
    %1692 = vmatpush1.msra.mxu0 %v492
    %1693 = vmatprep.subr.mxu0 0.0
    %1694 = vmatpush1.msra.mxu0 %v493
    %1695 = vmatprep.subr.mxu0 0.0
    %1696 = vmatpush1.msra.mxu0 %v494
    %1697 = vmatprep.subr.mxu0 0.0
    %1698 = vmatpush1.msra.mxu0 %v495
    %1699 = vmatprep.subr.mxu0 0.0
    %1700 = vmatpush1.msra.mxu0 %v496
    %1701 = vmatprep.subr.mxu0 0.0
    %1702 = vmatpush1.msra.mxu0 %v497
    %1703 = vmatprep.subr.mxu0 0.0
    %1704 = vmatpush1.msra.mxu0 %v498
    %1705 = vmatprep.subr.mxu0 0.0
    %1706 = vmatpush1.msra.mxu0 %v499
    %1707 = vmatprep.subr.mxu0 0.0
    %1708 = vmatpush1.msra.mxu0 %v500
    %1709 = vmatprep.subr.mxu0 0.0
    %1710 = vmatpush1.msra.mxu0 %v501
    %1711 = vmatprep.subr.mxu0 0.0
    %1712 = vmatpush1.msra.mxu0 %v502
    %1713 = vmatprep.subr.mxu0 0.0
    %1714 = vmatpush1.msra.mxu0 %v503
    %1715 = vmatprep.subr.mxu0 0.0
    %1716 = vmatpush1.msra.mxu0 %v504
    %1717 = vmatprep.subr.mxu0 0.0
    %1718 = vmatpush1.msra.mxu0 %v505
    %1719 = vmatprep.subr.mxu0 0.0
    %1720 = vmatpush1.msra.mxu0 %v506
    %1721 = vmatprep.subr.mxu0 0.0
    %1722 = vmatpush1.msra.mxu0 %v507
    %1723 = vmatprep.subr.mxu0 0.0
    %1724 = vmatpush1.msra.mxu0 %v508
    %1725 = vmatprep.subr.mxu0 0.0
    %1726 = vmatpush1.msra.mxu0 %v509
    %1727 = vmatprep.subr.mxu0 0.0
    %1728 = vmatpush1.msra.mxu0 %v510
    %1729 = vmatprep.subr.mxu0 0.0
    %1730 = vmatpush1.msra.mxu0 %v511
    %1731 = vmatprep.subr.mxu0 0.0
    %1732 = vmatpush1.msra.mxu0 %v512
    %1733 = vmatprep.subr.mxu0 0.0
    %1734 = vmatpush1.msra.mxu0 %v513
    %1735 = vmatprep.mubr.f32.mxu0 %v711
    %1736 = vmatmul.mubr.f32.gmra.mrb[0].mxu0 %v709
    %v1737 = vpop.f32.mrb[0].mxu0
    %v1738 = vadd.f32 %v1668, %v1737
    %v1739 = vpop.f32.mrb[0].mxu0
    %1740 = vdwg.mxu0
    %1741 = vmatprep.subr.mxu0 0.0
    %1742 = vmatpush1.msra.mxu0 %v514
    %1743 = vmatprep.subr.mxu0 0.0
    %1744 = vmatpush1.msra.mxu0 %v515
    %1745 = vmatprep.subr.mxu0 0.0
    %1746 = vmatpush1.msra.mxu0 %v516
    %1747 = vmatprep.subr.mxu0 0.0
    %1748 = vmatpush1.msra.mxu0 %v517
    %1749 = vmatprep.subr.mxu0 0.0
    %1750 = vmatpush1.msra.mxu0 %v518
    %1751 = vmatprep.subr.mxu0 0.0
    %1752 = vmatpush1.msra.mxu0 %v519
    %1753 = vmatprep.subr.mxu0 0.0
    %1754 = vmatpush1.msra.mxu0 %v520
    %1755 = vmatprep.subr.mxu0 0.0
    %1756 = vmatpush1.msra.mxu0 %v521
    %1757 = vmatprep.subr.mxu0 0.0
    %1758 = vmatpush1.msra.mxu0 %v522
    %1759 = vmatprep.subr.mxu0 0.0
    %1760 = vmatpush1.msra.mxu0 %v523
    %1761 = vmatprep.subr.mxu0 0.0
    %1762 = vmatpush1.msra.mxu0 %v524
    %1763 = vmatprep.subr.mxu0 0.0
    %1764 = vmatpush1.msra.mxu0 %v525
    %1765 = vmatprep.subr.mxu0 0.0
    %1766 = vmatpush1.msra.mxu0 %v526
    %1767 = vmatprep.subr.mxu0 0.0
    %1768 = vmatpush1.msra.mxu0 %v527
    %1769 = vmatprep.subr.mxu0 0.0
    %1770 = vmatpush1.msra.mxu0 %v528
    %1771 = vmatprep.subr.mxu0 0.0
    %1772 = vmatpush1.msra.mxu0 %v529
    %1773 = vmatprep.subr.mxu0 0.0
    %1774 = vmatpush1.msra.mxu0 %v530
    %1775 = vmatprep.subr.mxu0 0.0
    %1776 = vmatpush1.msra.mxu0 %v531
    %1777 = vmatprep.subr.mxu0 0.0
    %1778 = vmatpush1.msra.mxu0 %v532
    %1779 = vmatprep.subr.mxu0 0.0
    %1780 = vmatpush1.msra.mxu0 %v533
    %1781 = vmatprep.subr.mxu0 0.0
    %1782 = vmatpush1.msra.mxu0 %v534
    %1783 = vmatprep.subr.mxu0 0.0
    %1784 = vmatpush1.msra.mxu0 %v535
    %1785 = vmatprep.subr.mxu0 0.0
    %1786 = vmatpush1.msra.mxu0 %v536
    %1787 = vmatprep.subr.mxu0 0.0
    %1788 = vmatpush1.msra.mxu0 %v537
    %1789 = vmatprep.subr.mxu0 0.0
    %1790 = vmatpush1.msra.mxu0 %v538
    %1791 = vmatprep.subr.mxu0 0.0
    %1792 = vmatpush1.msra.mxu0 %v539
    %1793 = vmatprep.subr.mxu0 0.0
    %1794 = vmatpush1.msra.mxu0 %v540
    %1795 = vmatprep.subr.mxu0 0.0
    %1796 = vmatpush1.msra.mxu0 %v541
    %1797 = vmatprep.subr.mxu0 0.0
    %1798 = vmatpush1.msra.mxu0 %v542
    %1799 = vmatprep.subr.mxu0 0.0
    %1800 = vmatpush1.msra.mxu0 %v543
    %1801 = vmatprep.subr.mxu0 0.0
    %1802 = vmatpush1.msra.mxu0 %v544
    %1803 = vmatprep.subr.mxu0 0.0
    %1804 = vmatpush1.msra.mxu0 %v545
    %1805 = vmatprep.mubr.f32.mxu0 %v727
    %1806 = vmatmul.mubr.f32.gmra.mrb[0].mxu0 %v719
    %v1807 = vpop.f32.mrb[0].mxu0
    %v1808 = vadd.f32 %v1738, %v1807
    %v1809 = vpop.f32.mrb[0].mxu0
    %1810 = vdwg.mxu0
    %1811 = vmatprep.subr.mxu0 0.0
    %1812 = vmatpush1.msra.mxu0 %v546
    %1813 = vmatprep.subr.mxu0 0.0
    %1814 = vmatpush1.msra.mxu0 %v547
    %1815 = vmatprep.subr.mxu0 0.0
    %1816 = vmatpush1.msra.mxu0 %v548
    %1817 = vmatprep.subr.mxu0 0.0
    %1818 = vmatpush1.msra.mxu0 %v549
    %1819 = vmatprep.subr.mxu0 0.0
    %1820 = vmatpush1.msra.mxu0 %v550
    %1821 = vmatprep.subr.mxu0 0.0
    %1822 = vmatpush1.msra.mxu0 %v551
    %1823 = vmatprep.subr.mxu0 0.0
    %1824 = vmatpush1.msra.mxu0 %v552
    %1825 = vmatprep.subr.mxu0 0.0
    %1826 = vmatpush1.msra.mxu0 %v553
    %1827 = vmatprep.subr.mxu0 0.0
    %1828 = vmatpush1.msra.mxu0 %v554
    %1829 = vmatprep.subr.mxu0 0.0
    %1830 = vmatpush1.msra.mxu0 %v555
    %1831 = vmatprep.subr.mxu0 0.0
    %1832 = vmatpush1.msra.mxu0 %v556
    %1833 = vmatprep.subr.mxu0 0.0
    %1834 = vmatpush1.msra.mxu0 %v557
    %1835 = vmatprep.subr.mxu0 0.0
    %1836 = vmatpush1.msra.mxu0 %v558
    %1837 = vmatprep.subr.mxu0 0.0
    %1838 = vmatpush1.msra.mxu0 %v559
    %1839 = vmatprep.subr.mxu0 0.0
    %1840 = vmatpush1.msra.mxu0 %v560
    %1841 = vmatprep.subr.mxu0 0.0
    %1842 = vmatpush1.msra.mxu0 %v561
    %1843 = vmatprep.subr.mxu0 0.0
    %1844 = vmatpush1.msra.mxu0 %v562
    %1845 = vmatprep.subr.mxu0 0.0
    %1846 = vmatpush1.msra.mxu0 %v563
    %1847 = vmatprep.subr.mxu0 0.0
    %1848 = vmatpush1.msra.mxu0 %v564
    %1849 = vmatprep.subr.mxu0 0.0
    %1850 = vmatpush1.msra.mxu0 %v565
    %1851 = vmatprep.subr.mxu0 0.0
    %1852 = vmatpush1.msra.mxu0 %v566
    %1853 = vmatprep.subr.mxu0 0.0
    %1854 = vmatpush1.msra.mxu0 %v567
    %1855 = vmatprep.subr.mxu0 0.0
    %1856 = vmatpush1.msra.mxu0 %v568
    %1857 = vmatprep.subr.mxu0 0.0
    %1858 = vmatpush1.msra.mxu0 %v569
    %1859 = vmatprep.subr.mxu0 0.0
    %1860 = vmatpush1.msra.mxu0 %v570
    %1861 = vmatprep.subr.mxu0 0.0
    %1862 = vmatpush1.msra.mxu0 %v571
    %1863 = vmatprep.subr.mxu0 0.0
    %1864 = vmatpush1.msra.mxu0 %v572
    %1865 = vmatprep.subr.mxu0 0.0
    %1866 = vmatpush1.msra.mxu0 %v573
    %1867 = vmatprep.subr.mxu0 0.0
    %1868 = vmatpush1.msra.mxu0 %v574
    %1869 = vmatprep.subr.mxu0 0.0
    %1870 = vmatpush1.msra.mxu0 %v575
    %1871 = vmatprep.subr.mxu0 0.0
    %1872 = vmatpush1.msra.mxu0 %v576
    %1873 = vmatprep.subr.mxu0 0.0
    %1874 = vmatpush1.msra.mxu0 %v577
    %1875 = vmatprep.mubr.f32.mxu0 %v728
    %1876 = vmatmul.mubr.f32.gmra.mrb[0].mxu0 %v726
    %v1877 = vpop.f32.mrb[0].mxu0
    %v1878 = vadd.f32 %v1808, %v1877
    %v1879 = vpop.f32.mrb[0].mxu0
    %1880 = vdwg.mxu0
    %v1881 = vmax.f32 %v1878, 0.0
    %v1882 = vld [vmem:[%s3] sm:$0xff]
    %v1883 = vld [vmem:[%s3 + $0x8] sm:$0xff]
    %v1884 = vld [vmem:[%s3 + $0x10] sm:$0xff]
    %v1885 = vld [vmem:[%s3 + $0x18] sm:$0xff]
    %v1886 = vld [vmem:[%s3 + $0x20] sm:$0xff]
    %v1887 = vld [vmem:[%s3 + $0x28] sm:$0xff]
    %v1888 = vld [vmem:[%s3 + $0x30] sm:$0xff]
    %v1889 = vld [vmem:[%s3 + $0x38] sm:$0xff]
    %v1890 = vld [vmem:[%s3 + $0x40] sm:$0xff]
    %v1891 = vld [vmem:[%s3 + $0x48] sm:$0xff]
    %v1892 = vld [vmem:[%s3 + $0x50] sm:$0xff]
    %v1893 = vld [vmem:[%s3 + $0x58] sm:$0xff]
    %v1894 = vld [vmem:[%s3 + $0x60] sm:$0xff]
    %v1895 = vld [vmem:[%s3 + $0x68] sm:$0xff]
    %v1896 = vld [vmem:[%s3 + $0x70] sm:$0xff]
    %v1897 = vld [vmem:[%s3 + $0x78] sm:$0xff]
    %v1898 = vld [vmem:[#allocation7] sm:$0x1]
    %v1900 = vlaneseq
    %v1901 = vshrl.u32 %v1900, 7
    %v1902 = vsub.s32 0, %v1901
    %v1903 = vrot.slane %v1898, %v1902
    %1905 = vmatprep.subr.mxu0 0.0
    %1906 = vmatpush1.msra.mxu0 %v1882
    %1907 = vmatprep.subr.mxu0 0.0
    %1908 = vmatpush1.msra.mxu0 %v1883
    %1909 = vmatprep.subr.mxu0 0.0
    %1910 = vmatpush1.msra.mxu0 %v1884
    %1911 = vmatprep.subr.mxu0 0.0
    %1912 = vmatpush1.msra.mxu0 %v1885
    %1913 = vmatprep.subr.mxu0 0.0
    %1914 = vmatpush1.msra.mxu0 %v1886
    %1915 = vmatprep.subr.mxu0 0.0
    %1916 = vmatpush1.msra.mxu0 %v1887
    %1917 = vmatprep.subr.mxu0 0.0
    %1918 = vmatpush1.msra.mxu0 %v1888
    %1919 = vmatprep.subr.mxu0 0.0
    %1920 = vmatpush1.msra.mxu0 %v1889
    %1921 = vmatprep.subr.mxu0 0.0
    %1922 = vmatpush1.msra.mxu0 %v1890
    %1923 = vmatprep.subr.mxu0 0.0
    %1924 = vmatpush1.msra.mxu0 %v1891
    %1925 = vmatprep.subr.mxu0 0.0
    %1926 = vmatpush1.msra.mxu0 %v1892
    %1927 = vmatprep.subr.mxu0 0.0
    %1928 = vmatpush1.msra.mxu0 %v1893
    %1929 = vmatprep.subr.mxu0 0.0
    %1930 = vmatpush1.msra.mxu0 %v1894
    %1931 = vmatprep.subr.mxu0 0.0
    %1932 = vmatpush1.msra.mxu0 %v1895
    %1933 = vmatprep.subr.mxu0 0.0
    %1934 = vmatpush1.msra.mxu0 %v1896
    %1935 = vmatprep.subr.mxu0 0.0
    %1936 = vmatpush1.msra.mxu0 %v1897
    %1937 = vmatprep.subr.mxu0 0.0
    %1938 = vmatpush1.msra.mxu0 0.0
    %1939 = vmatprep.subr.mxu0 0.0
    %1940 = vmatpush1.msra.mxu0 0.0
    %1941 = vmatprep.subr.mxu0 0.0
    %1942 = vmatpush1.msra.mxu0 0.0
    %1943 = vmatprep.subr.mxu0 0.0
    %1944 = vmatpush1.msra.mxu0 0.0
    %1945 = vmatprep.subr.mxu0 0.0
    %1946 = vmatpush1.msra.mxu0 0.0
    %1947 = vmatprep.subr.mxu0 0.0
    %1948 = vmatpush1.msra.mxu0 0.0
    %1949 = vmatprep.subr.mxu0 0.0
    %1950 = vmatpush1.msra.mxu0 0.0
    %1951 = vmatprep.subr.mxu0 0.0
    %1952 = vmatpush1.msra.mxu0 0.0
    %1953 = vmatprep.subr.mxu0 0.0
    %1954 = vmatpush1.msra.mxu0 0.0
    %1955 = vmatprep.subr.mxu0 0.0
    %1956 = vmatpush1.msra.mxu0 0.0
    %1957 = vmatprep.subr.mxu0 0.0
    %1958 = vmatpush1.msra.mxu0 0.0
    %1959 = vmatprep.subr.mxu0 0.0
    %1960 = vmatpush1.msra.mxu0 0.0
    %1961 = vmatprep.subr.mxu0 0.0
    %1962 = vmatpush1.msra.mxu0 0.0
    %1963 = vmatprep.subr.mxu0 0.0
    %1964 = vmatpush1.msra.mxu0 0.0
    %1965 = vmatprep.subr.mxu0 0.0
    %1966 = vmatpush1.msra.mxu0 0.0
    %1967 = vmatprep.subr.mxu0 0.0
    %1968 = vmatpush1.msra.mxu0 0.0
    %1969 = vmatprep.mubr.f32.mxu0 0.0
    %1970 = vmatmul.mubr.f32.gmra.mrb[0].mxu0 %v1881
    %v1971 = vpop.f32.mrb[0].mxu0
    %v1972 = vadd.f32 %v1903, %v1971
    %v1973 = vpop.f32.mrb[0].mxu0
    %1974 = vdwg.mxu0
    %vm1975 = vcmask 25600
    %1976 = vst.msk [vmem:[#allocation8] sm:$0x3] %vm1975, %v1972
    // Predicated region
    $region34: #{dqn_forward.3} parent=1 // pred_check
      _
    $region35: #{dqn_forward.3} parent=1 // pred_check_branch
      %1978 = sbr.rel (0) target = $region37
    $region36: #{dqn_forward.3} parent=1 // pred_region
      %s1980 = ssub.s32 32, 32
      %1981 = vsyncadd [#allocation4], %s1980
      %s1983 = sshll.u32 [#allocation8], 4
      %s1984 = int_to_ptr.vmem [resolvable:$true] %s1983
      %1986 = dma.vmem_to_hbm [thread:$0]  %s1984, 32, %s5, [#allocation4]
    $region37: #{dqn_forward.3} parent=1 // pred_fallthru
      _
    // Predicated region
    $region38: #{dqn_forward.3} parent=1 // pred_check
      _
    $region39: #{dqn_forward.3} parent=1 // pred_check_branch
      %1988 = sbr.rel (0) target = $region41
    $region40: #{dqn_forward.3} parent=1 // pred_region
      %1989 = dma.done [#allocation4], 32
    $region41: #{dqn_forward.3} parent=1 // pred_fallthru
      _
    %1990 = vsyncpa [#allocation3], 1
    %1991 = vsyncpa [#allocation6], 1
    %1992 = vsyncpa [#allocation4], 1

// kernel: dqn_forward.2
$region0: #{dqn_forward.2}
  #allocation0 [shape = 'u32[]', space=smem, size = 0x4, offset = 0x4, fixed_abs, tag = 'smem constant byte address 0x4 - core index']
  #allocation1 [shape = 'u32[144,128]{1,0:T(1,128)}', space=vmem, size = 0x12000, scoped, tag = 'internal scratch']
  #allocation2 [shape = 'f32[250,32]{1,0:T(8,128)}', space=vmem, size = 0x20000, scoped, tag = 'scratch operand']
  %s0 = inlined_call_operand.vmem [shape: f32[250,4], index: 0, kind: input, shape index: {}]
  %s1 = inlined_call_operand.vmem [shape: f32[36,32], index: 1, kind: input, shape index: {}]
  %s2 = inlined_call_operand.hbm [shape: f32[1,32], index: 2, kind: input, shape index: {}]
  %s3 = inlined_call_operand.vmem [shape: f32[288,64], index: 3, kind: input, shape index: {}]
  %s4 = inlined_call_operand.hbm [shape: f32[1,64], index: 4, kind: input, shape index: {}]
  %s5 = inlined_call_operand.vmem [shape: f32[220,64], index: 5, kind: output, shape index: {}]
  %s6 = sld [smem:[#allocation0]]
  $region38: #{dqn_forward.2} parent=0
    _
  %s8 = ssub.s32 1, %s6
  %s9 = scalar_select 0, %s8, %s6
  $region1: #{dqn_forward.2} parent=0
    #allocation3 [shape = 'u8[512]{0}', space=vmem, size = 0x400, scoped, tag = 'input window, operand 2, single buffered']
    #allocation4 [shape = 's32[1]{0}', space=sflag, size = 0x4, scoped, tag = 'scoped memory for dqn_forward.2']
    #allocation5 [shape = 'u8[512]{0}', space=vmem, size = 0x400, scoped, tag = 'input window, operand 4, single buffered']
    #allocation6 [shape = 's32[1]{0}', space=sflag, size = 0x4, scoped, tag = 'scoped memory for dqn_forward.2']
    %10 = vsyncpa [#allocation4], 0
    %11 = vsyncpa [#allocation6], 0
    // Predicated region
    $region2: #{dqn_forward.2} parent=1 // pred_check
      _
    $region3: #{dqn_forward.2} parent=1 // pred_check_branch
      %13 = sbr.rel (0) target = $region5
    $region4: #{dqn_forward.2} parent=1 // pred_region
      _
    $region5: #{dqn_forward.2} parent=1 // pred_fallthru
      _
    // Predicated region
    $region6: #{dqn_forward.2} parent=1 // pred_check
      _
    $region7: #{dqn_forward.2} parent=1 // pred_check_branch
      %15 = sbr.rel (0) target = $region9
    $region8: #{dqn_forward.2} parent=1 // pred_region
      _
    $region9: #{dqn_forward.2} parent=1 // pred_fallthru
      _
    // Predicated region
    $region10: #{dqn_forward.2} parent=1 // pred_check
      _
    $region11: #{dqn_forward.2} parent=1 // pred_check_branch
      %17 = sbr.rel (0) target = $region13
    $region12: #{dqn_forward.2} parent=1 // pred_region
      %s19 = ssub.s32 16, 16
      %20 = vsyncadd [#allocation4], %s19
      %s22 = sshll.u32 [#allocation3], 4
      %s23 = int_to_ptr.vmem [resolvable:$true] %s22
      %25 = dma.hbm_to_vmem [thread:$0]  %s2, 16, %s23, [#allocation4]
    $region13: #{dqn_forward.2} parent=1 // pred_fallthru
      _
    // Predicated region
    $region14: #{dqn_forward.2} parent=1 // pred_check
      _
    $region15: #{dqn_forward.2} parent=1 // pred_check_branch
      %27 = sbr.rel (0) target = $region17
    $region16: #{dqn_forward.2} parent=1 // pred_region
      _
    $region17: #{dqn_forward.2} parent=1 // pred_fallthru
      _
    // Predicated region
    $region18: #{dqn_forward.2} parent=1 // pred_check
      _
    $region19: #{dqn_forward.2} parent=1 // pred_check_branch
      %29 = sbr.rel (0) target = $region21
    $region20: #{dqn_forward.2} parent=1 // pred_region
      %s31 = ssub.s32 16, 16
      %32 = vsyncadd [#allocation6], %s31
      %s34 = sshll.u32 [#allocation5], 4
      %s35 = int_to_ptr.vmem [resolvable:$true] %s34
      %37 = dma.hbm_to_vmem [thread:$0]  %s4, 16, %s35, [#allocation6]
    $region21: #{dqn_forward.2} parent=1 // pred_fallthru
      _
    // Predicated region
    $region22: #{dqn_forward.2} parent=1 // pred_check
      _
    $region23: #{dqn_forward.2} parent=1 // pred_check_branch
      %39 = sbr.rel (0) target = $region25
    $region24: #{dqn_forward.2} parent=1 // pred_region
      %40 = dma.done [#allocation4], 16
    $region25: #{dqn_forward.2} parent=1 // pred_fallthru
      _
    // Predicated region
    $region26: #{dqn_forward.2} parent=1 // pred_check
      _
    $region27: #{dqn_forward.2} parent=1 // pred_check_branch
      %42 = sbr.rel (0) target = $region29
    $region28: #{dqn_forward.2} parent=1 // pred_region
      %43 = dma.done [#allocation6], 16
    $region29: #{dqn_forward.2} parent=1 // pred_fallthru
      _
    %v44 = vld [vmem:[%s0] sm:$0xff]
    %v45 = vld [vmem:[%s0 + $0x8] sm:$0xff]
    %v46 = vld [vmem:[%s0 + $0x10] sm:$0xff]
    %v47 = vld [vmem:[%s0 + $0x18] sm:$0xff]
    %v48 = vld [vmem:[%s0 + $0x20] sm:$0xff]
    %v49 = vld [vmem:[%s0 + $0x28] sm:$0xff]
    %v50 = vld [vmem:[%s0 + $0x30] sm:$0xff]
    %v51 = vld [vmem:[%s0 + $0x38] sm:$0xff]
    %v52 = vld [vmem:[%s0 + $0x40] sm:$0xff]
    %v53 = vld [vmem:[%s0 + $0x48] sm:$0xff]
    %v54 = vld [vmem:[%s0 + $0x50] sm:$0xff]
    %v55 = vld [vmem:[%s0 + $0x58] sm:$0xff]
    %v56 = vld [vmem:[%s0 + $0x60] sm:$0xff]
    %v57 = vld [vmem:[%s0 + $0x68] sm:$0xff]
    %v58 = vld [vmem:[%s0 + $0x70] sm:$0xff]
    %v59 = vld [vmem:[%s0 + $0x78] sm:$0xff]
    %v60 = vld [vmem:[%s0 + $0x80] sm:$0xff]
    %v61 = vld [vmem:[%s0 + $0x88] sm:$0xff]
    %v62 = vld [vmem:[%s0 + $0x90] sm:$0xff]
    %v63 = vld [vmem:[%s0 + $0x98] sm:$0xff]
    %v64 = vld [vmem:[%s0 + $0xa0] sm:$0xff]
    %v65 = vld [vmem:[%s0 + $0xa8] sm:$0xff]
    %v66 = vld [vmem:[%s0 + $0xb0] sm:$0xff]
    %v67 = vld [vmem:[%s0 + $0xb8] sm:$0xff]
    %v68 = vld [vmem:[%s0 + $0xc0] sm:$0xff]
    %v69 = vld [vmem:[%s0 + $0xc8] sm:$0xff]
    %v70 = vld [vmem:[%s0 + $0xd0] sm:$0xff]
    %v71 = vld [vmem:[%s0 + $0xd8] sm:$0xf]
    %v72 = vld [vmem:[%s0 + $0x1] sm:$0xff]
    %v73 = vld [vmem:[%s0 + $0x9] sm:$0xff]
    %v74 = vld [vmem:[%s0 + $0x11] sm:$0xff]
    %v75 = vld [vmem:[%s0 + $0x19] sm:$0xff]
    %v76 = vld [vmem:[%s0 + $0x21] sm:$0xff]
    %v77 = vld [vmem:[%s0 + $0x29] sm:$0xff]
    %v78 = vld [vmem:[%s0 + $0x31] sm:$0xff]
    %v79 = vld [vmem:[%s0 + $0x39] sm:$0xff]
    %v80 = vld [vmem:[%s0 + $0x41] sm:$0xff]
    %v81 = vld [vmem:[%s0 + $0x49] sm:$0xff]
    %v82 = vld [vmem:[%s0 + $0x51] sm:$0xff]
    %v83 = vld [vmem:[%s0 + $0x59] sm:$0xff]
    %v84 = vld [vmem:[%s0 + $0x61] sm:$0xff]
    %v85 = vld [vmem:[%s0 + $0x69] sm:$0xff]
    %v86 = vld [vmem:[%s0 + $0x71] sm:$0xff]
    %v87 = vld [vmem:[%s0 + $0x79] sm:$0xff]
    %v88 = vld [vmem:[%s0 + $0x81] sm:$0xff]
    %v89 = vld [vmem:[%s0 + $0x89] sm:$0xff]
    %v90 = vld [vmem:[%s0 + $0x91] sm:$0xff]
    %v91 = vld [vmem:[%s0 + $0x99] sm:$0xff]
    %v92 = vld [vmem:[%s0 + $0xa1] sm:$0xff]
    %v93 = vld [vmem:[%s0 + $0xa9] sm:$0xff]
    %v94 = vld [vmem:[%s0 + $0xb1] sm:$0xff]
    %v95 = vld [vmem:[%s0 + $0xb9] sm:$0xff]
    %v96 = vld [vmem:[%s0 + $0xc1] sm:$0xff]
    %v97 = vld [vmem:[%s0 + $0xc9] sm:$0xff]
    %v98 = vld [vmem:[%s0 + $0xd1] sm:$0xff]
    %v99 = vld [vmem:[%s0 + $0xd9] sm:$0xf]
    %v100 = vld [vmem:[%s0 + $0x2] sm:$0xff]
    %v101 = vld [vmem:[%s0 + $0xa] sm:$0xff]
    %v102 = vld [vmem:[%s0 + $0x12] sm:$0xff]
    %v103 = vld [vmem:[%s0 + $0x1a] sm:$0xff]
    %v104 = vld [vmem:[%s0 + $0x22] sm:$0xff]
    %v105 = vld [vmem:[%s0 + $0x2a] sm:$0xff]
    %v106 = vld [vmem:[%s0 + $0x32] sm:$0xff]
    %v107 = vld [vmem:[%s0 + $0x3a] sm:$0xff]
    %v108 = vld [vmem:[%s0 + $0x42] sm:$0xff]
    %v109 = vld [vmem:[%s0 + $0x4a] sm:$0xff]
    %v110 = vld [vmem:[%s0 + $0x52] sm:$0xff]
    %v111 = vld [vmem:[%s0 + $0x5a] sm:$0xff]
    %v112 = vld [vmem:[%s0 + $0x62] sm:$0xff]
    %v113 = vld [vmem:[%s0 + $0x6a] sm:$0xff]
    %v114 = vld [vmem:[%s0 + $0x72] sm:$0xff]
    %v115 = vld [vmem:[%s0 + $0x7a] sm:$0xff]
    %v116 = vld [vmem:[%s0 + $0x82] sm:$0xff]
    %v117 = vld [vmem:[%s0 + $0x8a] sm:$0xff]
    %v118 = vld [vmem:[%s0 + $0x92] sm:$0xff]
    %v119 = vld [vmem:[%s0 + $0x9a] sm:$0xff]
    %v120 = vld [vmem:[%s0 + $0xa2] sm:$0xff]
    %v121 = vld [vmem:[%s0 + $0xaa] sm:$0xff]
    %v122 = vld [vmem:[%s0 + $0xb2] sm:$0xff]
    %v123 = vld [vmem:[%s0 + $0xba] sm:$0xff]
    %v124 = vld [vmem:[%s0 + $0xc2] sm:$0xff]
    %v125 = vld [vmem:[%s0 + $0xca] sm:$0xff]
    %v126 = vld [vmem:[%s0 + $0xd2] sm:$0xff]
    %v127 = vld [vmem:[%s0 + $0xda] sm:$0xf]
    %v128 = vld [vmem:[%s0 + $0xda] sm:$0xff]
    %v129 = vld [vmem:[%s0 + $0xe2] sm:$0xf]
    %v130 = vld [vmem:[%s0 + $0xb] sm:$0xff]
    %v131 = vld [vmem:[%s0 + $0x13] sm:$0xff]
    %v132 = vld [vmem:[%s0 + $0x1b] sm:$0xff]
    %v133 = vld [vmem:[%s0 + $0x23] sm:$0xff]
    %v134 = vld [vmem:[%s0 + $0x2b] sm:$0xff]
    %v135 = vld [vmem:[%s0 + $0x33] sm:$0xff]
    %v136 = vld [vmem:[%s0 + $0x3b] sm:$0xff]
    %v137 = vld [vmem:[%s0 + $0x43] sm:$0xff]
    %v138 = vld [vmem:[%s0 + $0x4b] sm:$0xff]
    %v139 = vld [vmem:[%s0 + $0x53] sm:$0xff]
    %v140 = vld [vmem:[%s0 + $0x5b] sm:$0xff]
    %v141 = vld [vmem:[%s0 + $0x63] sm:$0xff]
    %v142 = vld [vmem:[%s0 + $0x6b] sm:$0xff]
    %v143 = vld [vmem:[%s0 + $0x73] sm:$0xff]
    %v144 = vld [vmem:[%s0 + $0x7b] sm:$0xff]
    %v145 = vld [vmem:[%s0 + $0x83] sm:$0xff]
    %v146 = vld [vmem:[%s0 + $0x8b] sm:$0xff]
    %v147 = vld [vmem:[%s0 + $0x93] sm:$0xff]
    %v148 = vld [vmem:[%s0 + $0x9b] sm:$0xff]
    %v149 = vld [vmem:[%s0 + $0xa3] sm:$0xff]
    %v150 = vld [vmem:[%s0 + $0xab] sm:$0xff]
    %v151 = vld [vmem:[%s0 + $0xb3] sm:$0xff]
    %v152 = vld [vmem:[%s0 + $0xbb] sm:$0xff]
    %v153 = vld [vmem:[%s0 + $0xc3] sm:$0xff]
    %v154 = vld [vmem:[%s0 + $0xcb] sm:$0xff]
    %v155 = vld [vmem:[%s0 + $0xd3] sm:$0xff]
    %v156 = vld [vmem:[%s0 + $0xdb] sm:$0xff]
    %v157 = vld [vmem:[%s0 + $0xe3] sm:$0xf]
    %v158 = vld [vmem:[%s0 + $0xc] sm:$0xff]
    %v159 = vld [vmem:[%s0 + $0x14] sm:$0xff]
    %v160 = vld [vmem:[%s0 + $0x1c] sm:$0xff]
    %v161 = vld [vmem:[%s0 + $0x24] sm:$0xff]
    %v162 = vld [vmem:[%s0 + $0x2c] sm:$0xff]
    %v163 = vld [vmem:[%s0 + $0x34] sm:$0xff]
    %v164 = vld [vmem:[%s0 + $0x3c] sm:$0xff]
    %v165 = vld [vmem:[%s0 + $0x44] sm:$0xff]
    %v166 = vld [vmem:[%s0 + $0x4c] sm:$0xff]
    %v167 = vld [vmem:[%s0 + $0x54] sm:$0xff]
    %v168 = vld [vmem:[%s0 + $0x5c] sm:$0xff]
    %v169 = vld [vmem:[%s0 + $0x64] sm:$0xff]
    %v170 = vld [vmem:[%s0 + $0x6c] sm:$0xff]
    %v171 = vld [vmem:[%s0 + $0x74] sm:$0xff]
    %v172 = vld [vmem:[%s0 + $0x7c] sm:$0xff]
    %v173 = vld [vmem:[%s0 + $0x84] sm:$0xff]
    %v174 = vld [vmem:[%s0 + $0x8c] sm:$0xff]
    %v175 = vld [vmem:[%s0 + $0x94] sm:$0xff]
    %v176 = vld [vmem:[%s0 + $0x9c] sm:$0xff]
    %v177 = vld [vmem:[%s0 + $0xa4] sm:$0xff]
    %v178 = vld [vmem:[%s0 + $0xac] sm:$0xff]
    %v179 = vld [vmem:[%s0 + $0xb4] sm:$0xff]
    %v180 = vld [vmem:[%s0 + $0xbc] sm:$0xff]
    %v181 = vld [vmem:[%s0 + $0xc4] sm:$0xff]
    %v182 = vld [vmem:[%s0 + $0xcc] sm:$0xff]
    %v183 = vld [vmem:[%s0 + $0xd4] sm:$0xff]
    %v184 = vld [vmem:[%s0 + $0xdc] sm:$0xff]
    %v185 = vld [vmem:[%s0 + $0xe4] sm:$0xf]
    %v186 = vld [vmem:[%s0 + $0xe4] sm:$0xff]
    %v187 = vld [vmem:[%s0 + $0xec] sm:$0xf]
    %v188 = vld [vmem:[%s0 + $0x15] sm:$0xff]
    %v189 = vld [vmem:[%s0 + $0x1d] sm:$0xff]
    %v190 = vld [vmem:[%s0 + $0x25] sm:$0xff]
    %v191 = vld [vmem:[%s0 + $0x2d] sm:$0xff]
    %v192 = vld [vmem:[%s0 + $0x35] sm:$0xff]
    %v193 = vld [vmem:[%s0 + $0x3d] sm:$0xff]
    %v194 = vld [vmem:[%s0 + $0x45] sm:$0xff]
    %v195 = vld [vmem:[%s0 + $0x4d] sm:$0xff]
    %v196 = vld [vmem:[%s0 + $0x55] sm:$0xff]
    %v197 = vld [vmem:[%s0 + $0x5d] sm:$0xff]
    %v198 = vld [vmem:[%s0 + $0x65] sm:$0xff]
    %v199 = vld [vmem:[%s0 + $0x6d] sm:$0xff]
    %v200 = vld [vmem:[%s0 + $0x75] sm:$0xff]
    %v201 = vld [vmem:[%s0 + $0x7d] sm:$0xff]
    %v202 = vld [vmem:[%s0 + $0x85] sm:$0xff]
    %v203 = vld [vmem:[%s0 + $0x8d] sm:$0xff]
    %v204 = vld [vmem:[%s0 + $0x95] sm:$0xff]
    %v205 = vld [vmem:[%s0 + $0x9d] sm:$0xff]
    %v206 = vld [vmem:[%s0 + $0xa5] sm:$0xff]
    %v207 = vld [vmem:[%s0 + $0xad] sm:$0xff]
    %v208 = vld [vmem:[%s0 + $0xb5] sm:$0xff]
    %v209 = vld [vmem:[%s0 + $0xbd] sm:$0xff]
    %v210 = vld [vmem:[%s0 + $0xc5] sm:$0xff]
    %v211 = vld [vmem:[%s0 + $0xcd] sm:$0xff]
    %v212 = vld [vmem:[%s0 + $0xd5] sm:$0xff]
    %v213 = vld [vmem:[%s0 + $0xdd] sm:$0xff]
    %v214 = vld [vmem:[%s0 + $0xe5] sm:$0xff]
    %v215 = vld [vmem:[%s0 + $0xed] sm:$0xf]
    %v216 = vld [vmem:[%s0 + $0x16] sm:$0xff]
    %v217 = vld [vmem:[%s0 + $0x1e] sm:$0xff]
    %v218 = vld [vmem:[%s0 + $0x26] sm:$0xff]
    %v219 = vld [vmem:[%s0 + $0x2e] sm:$0xff]
    %v220 = vld [vmem:[%s0 + $0x36] sm:$0xff]
    %v221 = vld [vmem:[%s0 + $0x3e] sm:$0xff]
    %v222 = vld [vmem:[%s0 + $0x46] sm:$0xff]
    %v223 = vld [vmem:[%s0 + $0x4e] sm:$0xff]
    %v224 = vld [vmem:[%s0 + $0x56] sm:$0xff]
    %v225 = vld [vmem:[%s0 + $0x5e] sm:$0xff]
    %v226 = vld [vmem:[%s0 + $0x66] sm:$0xff]
    %v227 = vld [vmem:[%s0 + $0x6e] sm:$0xff]
    %v228 = vld [vmem:[%s0 + $0x76] sm:$0xff]
    %v229 = vld [vmem:[%s0 + $0x7e] sm:$0xff]
    %v230 = vld [vmem:[%s0 + $0x86] sm:$0xff]
    %v231 = vld [vmem:[%s0 + $0x8e] sm:$0xff]
    %v232 = vld [vmem:[%s0 + $0x96] sm:$0xff]
    %v233 = vld [vmem:[%s0 + $0x9e] sm:$0xff]
    %v234 = vld [vmem:[%s0 + $0xa6] sm:$0xff]
    %v235 = vld [vmem:[%s0 + $0xae] sm:$0xff]
    %v236 = vld [vmem:[%s0 + $0xb6] sm:$0xff]
    %v237 = vld [vmem:[%s0 + $0xbe] sm:$0xff]
    %v238 = vld [vmem:[%s0 + $0xc6] sm:$0xff]
    %v239 = vld [vmem:[%s0 + $0xce] sm:$0xff]
    %v240 = vld [vmem:[%s0 + $0xd6] sm:$0xff]
    %v241 = vld [vmem:[%s0 + $0xde] sm:$0xff]
    %v242 = vld [vmem:[%s0 + $0xe6] sm:$0xff]
    %v243 = vld [vmem:[%s0 + $0xee] sm:$0xf]
    %272 = vrot.lane.b32.xlu0 %v72, 4
    %v273 = vpop.permute.xlu0 %272
    %274 = vrot.lane.b32.xlu0 %v73, 4
    %v275 = vpop.permute.xlu0 %274
    %276 = vrot.lane.b32.xlu0 %v74, 4
    %v277 = vpop.permute.xlu0 %276
    %278 = vrot.lane.b32.xlu0 %v75, 4
    %v279 = vpop.permute.xlu0 %278
    %280 = vrot.lane.b32.xlu0 %v76, 4
    %v281 = vpop.permute.xlu0 %280
    %282 = vrot.lane.b32.xlu0 %v77, 4
    %v283 = vpop.permute.xlu0 %282
    %284 = vrot.lane.b32.xlu0 %v78, 4
    %v285 = vpop.permute.xlu0 %284
    %286 = vrot.lane.b32.xlu0 %v79, 4
    %v287 = vpop.permute.xlu0 %286
    %288 = vrot.lane.b32.xlu0 %v80, 4
    %v289 = vpop.permute.xlu0 %288
    %290 = vrot.lane.b32.xlu0 %v81, 4
    %v291 = vpop.permute.xlu0 %290
    %292 = vrot.lane.b32.xlu0 %v82, 4
    %v293 = vpop.permute.xlu0 %292
    %294 = vrot.lane.b32.xlu0 %v83, 4
    %v295 = vpop.permute.xlu0 %294
    %296 = vrot.lane.b32.xlu0 %v84, 4
    %v297 = vpop.permute.xlu0 %296
    %298 = vrot.lane.b32.xlu0 %v85, 4
    %v299 = vpop.permute.xlu0 %298
    %300 = vrot.lane.b32.xlu0 %v86, 4
    %v301 = vpop.permute.xlu0 %300
    %302 = vrot.lane.b32.xlu0 %v87, 4
    %v303 = vpop.permute.xlu0 %302
    %304 = vrot.lane.b32.xlu0 %v88, 4
    %v305 = vpop.permute.xlu0 %304
    %306 = vrot.lane.b32.xlu0 %v89, 4
    %v307 = vpop.permute.xlu0 %306
    %308 = vrot.lane.b32.xlu0 %v90, 4
    %v309 = vpop.permute.xlu0 %308
    %310 = vrot.lane.b32.xlu0 %v91, 4
    %v311 = vpop.permute.xlu0 %310
    %312 = vrot.lane.b32.xlu0 %v92, 4
    %v313 = vpop.permute.xlu0 %312
    %314 = vrot.lane.b32.xlu0 %v93, 4
    %v315 = vpop.permute.xlu0 %314
    %316 = vrot.lane.b32.xlu0 %v94, 4
    %v317 = vpop.permute.xlu0 %316
    %318 = vrot.lane.b32.xlu0 %v95, 4
    %v319 = vpop.permute.xlu0 %318
    %320 = vrot.lane.b32.xlu0 %v96, 4
    %v321 = vpop.permute.xlu0 %320
    %322 = vrot.lane.b32.xlu0 %v97, 4
    %v323 = vpop.permute.xlu0 %322
    %324 = vrot.lane.b32.xlu0 %v98, 4
    %v325 = vpop.permute.xlu0 %324
    %326 = vrot.lane.b32.xlu0 %v99, 4
    %v327 = vpop.permute.xlu0 %326
    %384 = vrot.lane.b32.xlu0 %v100, 8
    %v385 = vpop.permute.xlu0 %384
    %386 = vrot.lane.b32.xlu0 %v101, 8
    %v387 = vpop.permute.xlu0 %386
    %388 = vrot.lane.b32.xlu0 %v102, 8
    %v389 = vpop.permute.xlu0 %388
    %390 = vrot.lane.b32.xlu0 %v103, 8
    %v391 = vpop.permute.xlu0 %390
    %392 = vrot.lane.b32.xlu0 %v104, 8
    %v393 = vpop.permute.xlu0 %392
    %394 = vrot.lane.b32.xlu0 %v105, 8
    %v395 = vpop.permute.xlu0 %394
    %396 = vrot.lane.b32.xlu0 %v106, 8
    %v397 = vpop.permute.xlu0 %396
    %398 = vrot.lane.b32.xlu0 %v107, 8
    %v399 = vpop.permute.xlu0 %398
    %400 = vrot.lane.b32.xlu0 %v108, 8
    %v401 = vpop.permute.xlu0 %400
    %402 = vrot.lane.b32.xlu0 %v109, 8
    %v403 = vpop.permute.xlu0 %402
    %404 = vrot.lane.b32.xlu0 %v110, 8
    %v405 = vpop.permute.xlu0 %404
    %406 = vrot.lane.b32.xlu0 %v111, 8
    %v407 = vpop.permute.xlu0 %406
    %408 = vrot.lane.b32.xlu0 %v112, 8
    %v409 = vpop.permute.xlu0 %408
    %410 = vrot.lane.b32.xlu0 %v113, 8
    %v411 = vpop.permute.xlu0 %410
    %412 = vrot.lane.b32.xlu0 %v114, 8
    %v413 = vpop.permute.xlu0 %412
    %414 = vrot.lane.b32.xlu0 %v115, 8
    %v415 = vpop.permute.xlu0 %414
    %416 = vrot.lane.b32.xlu0 %v116, 8
    %v417 = vpop.permute.xlu0 %416
    %418 = vrot.lane.b32.xlu0 %v117, 8
    %v419 = vpop.permute.xlu0 %418
    %420 = vrot.lane.b32.xlu0 %v118, 8
    %v421 = vpop.permute.xlu0 %420
    %422 = vrot.lane.b32.xlu0 %v119, 8
    %v423 = vpop.permute.xlu0 %422
    %424 = vrot.lane.b32.xlu0 %v120, 8
    %v425 = vpop.permute.xlu0 %424
    %426 = vrot.lane.b32.xlu0 %v121, 8
    %v427 = vpop.permute.xlu0 %426
    %428 = vrot.lane.b32.xlu0 %v122, 8
    %v429 = vpop.permute.xlu0 %428
    %430 = vrot.lane.b32.xlu0 %v123, 8
    %v431 = vpop.permute.xlu0 %430
    %432 = vrot.lane.b32.xlu0 %v124, 8
    %v433 = vpop.permute.xlu0 %432
    %434 = vrot.lane.b32.xlu0 %v125, 8
    %v435 = vpop.permute.xlu0 %434
    %436 = vrot.lane.b32.xlu0 %v126, 8
    %v437 = vpop.permute.xlu0 %436
    %438 = vrot.lane.b32.xlu0 %v127, 8
    %v439 = vpop.permute.xlu0 %438
    %470 = vrot.lane.b32.xlu0 %v101, 12
    %v471 = vpop.permute.xlu0 %470
    %472 = vrot.lane.b32.xlu0 %v102, 12
    %v473 = vpop.permute.xlu0 %472
    %474 = vrot.lane.b32.xlu0 %v103, 12
    %v475 = vpop.permute.xlu0 %474
    %476 = vrot.lane.b32.xlu0 %v104, 12
    %v477 = vpop.permute.xlu0 %476
    %478 = vrot.lane.b32.xlu0 %v105, 12
    %v479 = vpop.permute.xlu0 %478
    %480 = vrot.lane.b32.xlu0 %v106, 12
    %v481 = vpop.permute.xlu0 %480
    %482 = vrot.lane.b32.xlu0 %v107, 12
    %v483 = vpop.permute.xlu0 %482
    %484 = vrot.lane.b32.xlu0 %v108, 12
    %v485 = vpop.permute.xlu0 %484
    %486 = vrot.lane.b32.xlu0 %v109, 12
    %v487 = vpop.permute.xlu0 %486
    %488 = vrot.lane.b32.xlu0 %v110, 12
    %v489 = vpop.permute.xlu0 %488
    %490 = vrot.lane.b32.xlu0 %v111, 12
    %v491 = vpop.permute.xlu0 %490
    %492 = vrot.lane.b32.xlu0 %v112, 12
    %v493 = vpop.permute.xlu0 %492
    %494 = vrot.lane.b32.xlu0 %v113, 12
    %v495 = vpop.permute.xlu0 %494
    %496 = vrot.lane.b32.xlu0 %v114, 12
    %v497 = vpop.permute.xlu0 %496
    %498 = vrot.lane.b32.xlu0 %v115, 12
    %v499 = vpop.permute.xlu0 %498
    %500 = vrot.lane.b32.xlu0 %v116, 12
    %v501 = vpop.permute.xlu0 %500
    %502 = vrot.lane.b32.xlu0 %v117, 12
    %v503 = vpop.permute.xlu0 %502
    %504 = vrot.lane.b32.xlu0 %v118, 12
    %v505 = vpop.permute.xlu0 %504
    %506 = vrot.lane.b32.xlu0 %v119, 12
    %v507 = vpop.permute.xlu0 %506
    %508 = vrot.lane.b32.xlu0 %v120, 12
    %v509 = vpop.permute.xlu0 %508
    %510 = vrot.lane.b32.xlu0 %v121, 12
    %v511 = vpop.permute.xlu0 %510
    %512 = vrot.lane.b32.xlu0 %v122, 12
    %v513 = vpop.permute.xlu0 %512
    %514 = vrot.lane.b32.xlu0 %v123, 12
    %v515 = vpop.permute.xlu0 %514
    %516 = vrot.lane.b32.xlu0 %v124, 12
    %v517 = vpop.permute.xlu0 %516
    %518 = vrot.lane.b32.xlu0 %v125, 12
    %v519 = vpop.permute.xlu0 %518
    %520 = vrot.lane.b32.xlu0 %v126, 12
    %v521 = vpop.permute.xlu0 %520
    %522 = vrot.lane.b32.xlu0 %v128, 12
    %v523 = vpop.permute.xlu0 %522
    %524 = vrot.lane.b32.xlu0 %v129, 12
    %v525 = vpop.permute.xlu0 %524
    %582 = vrot.lane.b32.xlu0 %v130, 16
    %v583 = vpop.permute.xlu0 %582
    %584 = vrot.lane.b32.xlu0 %v131, 16
    %v585 = vpop.permute.xlu0 %584
    %586 = vrot.lane.b32.xlu0 %v132, 16
    %v587 = vpop.permute.xlu0 %586
    %588 = vrot.lane.b32.xlu0 %v133, 16
    %v589 = vpop.permute.xlu0 %588
    %590 = vrot.lane.b32.xlu0 %v134, 16
    %v591 = vpop.permute.xlu0 %590
    %592 = vrot.lane.b32.xlu0 %v135, 16
    %v593 = vpop.permute.xlu0 %592
    %594 = vrot.lane.b32.xlu0 %v136, 16
    %v595 = vpop.permute.xlu0 %594
    %596 = vrot.lane.b32.xlu0 %v137, 16
    %v597 = vpop.permute.xlu0 %596
    %598 = vrot.lane.b32.xlu0 %v138, 16
    %v599 = vpop.permute.xlu0 %598
    %600 = vrot.lane.b32.xlu0 %v139, 16
    %v601 = vpop.permute.xlu0 %600
    %602 = vrot.lane.b32.xlu0 %v140, 16
    %v603 = vpop.permute.xlu0 %602
    %604 = vrot.lane.b32.xlu0 %v141, 16
    %v605 = vpop.permute.xlu0 %604
    %606 = vrot.lane.b32.xlu0 %v142, 16
    %v607 = vpop.permute.xlu0 %606
    %608 = vrot.lane.b32.xlu0 %v143, 16
    %v609 = vpop.permute.xlu0 %608
    %610 = vrot.lane.b32.xlu0 %v144, 16
    %v611 = vpop.permute.xlu0 %610
    %612 = vrot.lane.b32.xlu0 %v145, 16
    %v613 = vpop.permute.xlu0 %612
    %614 = vrot.lane.b32.xlu0 %v146, 16
    %v615 = vpop.permute.xlu0 %614
    %616 = vrot.lane.b32.xlu0 %v147, 16
    %v617 = vpop.permute.xlu0 %616
    %618 = vrot.lane.b32.xlu0 %v148, 16
    %v619 = vpop.permute.xlu0 %618
    %620 = vrot.lane.b32.xlu0 %v149, 16
    %v621 = vpop.permute.xlu0 %620
    %622 = vrot.lane.b32.xlu0 %v150, 16
    %v623 = vpop.permute.xlu0 %622
    %624 = vrot.lane.b32.xlu0 %v151, 16
    %v625 = vpop.permute.xlu0 %624
    %626 = vrot.lane.b32.xlu0 %v152, 16
    %v627 = vpop.permute.xlu0 %626
    %628 = vrot.lane.b32.xlu0 %v153, 16
    %v629 = vpop.permute.xlu0 %628
    %630 = vrot.lane.b32.xlu0 %v154, 16
    %v631 = vpop.permute.xlu0 %630
    %632 = vrot.lane.b32.xlu0 %v155, 16
    %v633 = vpop.permute.xlu0 %632
    %634 = vrot.lane.b32.xlu0 %v156, 16
    %v635 = vpop.permute.xlu0 %634
    %636 = vrot.lane.b32.xlu0 %v157, 16
    %v637 = vpop.permute.xlu0 %636
    %694 = vrot.lane.b32.xlu0 %v158, 20
    %v695 = vpop.permute.xlu0 %694
    %696 = vrot.lane.b32.xlu0 %v159, 20
    %v697 = vpop.permute.xlu0 %696
    %698 = vrot.lane.b32.xlu0 %v160, 20
    %v699 = vpop.permute.xlu0 %698
    %700 = vrot.lane.b32.xlu0 %v161, 20
    %v701 = vpop.permute.xlu0 %700
    %702 = vrot.lane.b32.xlu0 %v162, 20
    %v703 = vpop.permute.xlu0 %702
    %704 = vrot.lane.b32.xlu0 %v163, 20
    %v705 = vpop.permute.xlu0 %704
    %706 = vrot.lane.b32.xlu0 %v164, 20
    %v707 = vpop.permute.xlu0 %706
    %708 = vrot.lane.b32.xlu0 %v165, 20
    %v709 = vpop.permute.xlu0 %708
    %710 = vrot.lane.b32.xlu0 %v166, 20
    %v711 = vpop.permute.xlu0 %710
    %712 = vrot.lane.b32.xlu0 %v167, 20
    %v713 = vpop.permute.xlu0 %712
    %714 = vrot.lane.b32.xlu0 %v168, 20
    %v715 = vpop.permute.xlu0 %714
    %716 = vrot.lane.b32.xlu0 %v169, 20
    %v717 = vpop.permute.xlu0 %716
    %718 = vrot.lane.b32.xlu0 %v170, 20
    %v719 = vpop.permute.xlu0 %718
    %720 = vrot.lane.b32.xlu0 %v171, 20
    %v721 = vpop.permute.xlu0 %720
    %722 = vrot.lane.b32.xlu0 %v172, 20
    %v723 = vpop.permute.xlu0 %722
    %724 = vrot.lane.b32.xlu0 %v173, 20
    %v725 = vpop.permute.xlu0 %724
    %726 = vrot.lane.b32.xlu0 %v174, 20
    %v727 = vpop.permute.xlu0 %726
    %728 = vrot.lane.b32.xlu0 %v175, 20
    %v729 = vpop.permute.xlu0 %728
    %730 = vrot.lane.b32.xlu0 %v176, 20
    %v731 = vpop.permute.xlu0 %730
    %732 = vrot.lane.b32.xlu0 %v177, 20
    %v733 = vpop.permute.xlu0 %732
    %734 = vrot.lane.b32.xlu0 %v178, 20
    %v735 = vpop.permute.xlu0 %734
    %736 = vrot.lane.b32.xlu0 %v179, 20
    %v737 = vpop.permute.xlu0 %736
    %738 = vrot.lane.b32.xlu0 %v180, 20
    %v739 = vpop.permute.xlu0 %738
    %740 = vrot.lane.b32.xlu0 %v181, 20
    %v741 = vpop.permute.xlu0 %740
    %742 = vrot.lane.b32.xlu0 %v182, 20
    %v743 = vpop.permute.xlu0 %742
    %744 = vrot.lane.b32.xlu0 %v183, 20
    %v745 = vpop.permute.xlu0 %744
    %746 = vrot.lane.b32.xlu0 %v184, 20
    %v747 = vpop.permute.xlu0 %746
    %748 = vrot.lane.b32.xlu0 %v185, 20
    %v749 = vpop.permute.xlu0 %748
    %780 = vrot.lane.b32.xlu0 %v159, 24
    %v781 = vpop.permute.xlu0 %780
    %782 = vrot.lane.b32.xlu0 %v160, 24
    %v783 = vpop.permute.xlu0 %782
    %784 = vrot.lane.b32.xlu0 %v161, 24
    %v785 = vpop.permute.xlu0 %784
    %786 = vrot.lane.b32.xlu0 %v162, 24
    %v787 = vpop.permute.xlu0 %786
    %788 = vrot.lane.b32.xlu0 %v163, 24
    %v789 = vpop.permute.xlu0 %788
    %790 = vrot.lane.b32.xlu0 %v164, 24
    %v791 = vpop.permute.xlu0 %790
    %792 = vrot.lane.b32.xlu0 %v165, 24
    %v793 = vpop.permute.xlu0 %792
    %794 = vrot.lane.b32.xlu0 %v166, 24
    %v795 = vpop.permute.xlu0 %794
    %796 = vrot.lane.b32.xlu0 %v167, 24
    %v797 = vpop.permute.xlu0 %796
    %798 = vrot.lane.b32.xlu0 %v168, 24
    %v799 = vpop.permute.xlu0 %798
    %800 = vrot.lane.b32.xlu0 %v169, 24
    %v801 = vpop.permute.xlu0 %800
    %802 = vrot.lane.b32.xlu0 %v170, 24
    %v803 = vpop.permute.xlu0 %802
    %804 = vrot.lane.b32.xlu0 %v171, 24
    %v805 = vpop.permute.xlu0 %804
    %806 = vrot.lane.b32.xlu0 %v172, 24
    %v807 = vpop.permute.xlu0 %806
    %808 = vrot.lane.b32.xlu0 %v173, 24
    %v809 = vpop.permute.xlu0 %808
    %810 = vrot.lane.b32.xlu0 %v174, 24
    %v811 = vpop.permute.xlu0 %810
    %812 = vrot.lane.b32.xlu0 %v175, 24
    %v813 = vpop.permute.xlu0 %812
    %814 = vrot.lane.b32.xlu0 %v176, 24
    %v815 = vpop.permute.xlu0 %814
    %816 = vrot.lane.b32.xlu0 %v177, 24
    %v817 = vpop.permute.xlu0 %816
    %818 = vrot.lane.b32.xlu0 %v178, 24
    %v819 = vpop.permute.xlu0 %818
    %820 = vrot.lane.b32.xlu0 %v179, 24
    %v821 = vpop.permute.xlu0 %820
    %822 = vrot.lane.b32.xlu0 %v180, 24
    %v823 = vpop.permute.xlu0 %822
    %824 = vrot.lane.b32.xlu0 %v181, 24
    %v825 = vpop.permute.xlu0 %824
    %826 = vrot.lane.b32.xlu0 %v182, 24
    %v827 = vpop.permute.xlu0 %826
    %828 = vrot.lane.b32.xlu0 %v183, 24
    %v829 = vpop.permute.xlu0 %828
    %830 = vrot.lane.b32.xlu0 %v184, 24
    %v831 = vpop.permute.xlu0 %830
    %832 = vrot.lane.b32.xlu0 %v186, 24
    %v833 = vpop.permute.xlu0 %832
    %834 = vrot.lane.b32.xlu0 %v187, 24
    %v835 = vpop.permute.xlu0 %834
    %892 = vrot.lane.b32.xlu0 %v188, 28
    %v893 = vpop.permute.xlu0 %892
    %894 = vrot.lane.b32.xlu0 %v189, 28
    %v895 = vpop.permute.xlu0 %894
    %896 = vrot.lane.b32.xlu0 %v190, 28
    %v897 = vpop.permute.xlu0 %896
    %898 = vrot.lane.b32.xlu0 %v191, 28
    %v899 = vpop.permute.xlu0 %898
    %900 = vrot.lane.b32.xlu0 %v192, 28
    %v901 = vpop.permute.xlu0 %900
    %902 = vrot.lane.b32.xlu0 %v193, 28
    %v903 = vpop.permute.xlu0 %902
    %904 = vrot.lane.b32.xlu0 %v194, 28
    %v905 = vpop.permute.xlu0 %904
    %906 = vrot.lane.b32.xlu0 %v195, 28
    %v907 = vpop.permute.xlu0 %906
    %908 = vrot.lane.b32.xlu0 %v196, 28
    %v909 = vpop.permute.xlu0 %908
    %910 = vrot.lane.b32.xlu0 %v197, 28
    %v911 = vpop.permute.xlu0 %910
    %912 = vrot.lane.b32.xlu0 %v198, 28
    %v913 = vpop.permute.xlu0 %912
    %914 = vrot.lane.b32.xlu0 %v199, 28
    %v915 = vpop.permute.xlu0 %914
    %916 = vrot.lane.b32.xlu0 %v200, 28
    %v917 = vpop.permute.xlu0 %916
    %918 = vrot.lane.b32.xlu0 %v201, 28
    %v919 = vpop.permute.xlu0 %918
    %920 = vrot.lane.b32.xlu0 %v202, 28
    %v921 = vpop.permute.xlu0 %920
    %922 = vrot.lane.b32.xlu0 %v203, 28
    %v923 = vpop.permute.xlu0 %922
    %924 = vrot.lane.b32.xlu0 %v204, 28
    %v925 = vpop.permute.xlu0 %924
    %926 = vrot.lane.b32.xlu0 %v205, 28
    %v927 = vpop.permute.xlu0 %926
    %928 = vrot.lane.b32.xlu0 %v206, 28
    %v929 = vpop.permute.xlu0 %928
    %930 = vrot.lane.b32.xlu0 %v207, 28
    %v931 = vpop.permute.xlu0 %930
    %932 = vrot.lane.b32.xlu0 %v208, 28
    %v933 = vpop.permute.xlu0 %932
    %934 = vrot.lane.b32.xlu0 %v209, 28
    %v935 = vpop.permute.xlu0 %934
    %936 = vrot.lane.b32.xlu0 %v210, 28
    %v937 = vpop.permute.xlu0 %936
    %938 = vrot.lane.b32.xlu0 %v211, 28
    %v939 = vpop.permute.xlu0 %938
    %940 = vrot.lane.b32.xlu0 %v212, 28
    %v941 = vpop.permute.xlu0 %940
    %942 = vrot.lane.b32.xlu0 %v213, 28
    %v943 = vpop.permute.xlu0 %942
    %944 = vrot.lane.b32.xlu0 %v214, 28
    %v945 = vpop.permute.xlu0 %944
    %946 = vrot.lane.b32.xlu0 %v215, 28
    %v947 = vpop.permute.xlu0 %946
    %1004 = vrot.lane.b32.xlu0 %v216, 32
    %v1005 = vpop.permute.xlu0 %1004
    %1006 = vrot.lane.b32.xlu0 %v217, 32
    %v1007 = vpop.permute.xlu0 %1006
    %1008 = vrot.lane.b32.xlu0 %v218, 32
    %v1009 = vpop.permute.xlu0 %1008
    %1010 = vrot.lane.b32.xlu0 %v219, 32
    %v1011 = vpop.permute.xlu0 %1010
    %1012 = vrot.lane.b32.xlu0 %v220, 32
    %v1013 = vpop.permute.xlu0 %1012
    %1014 = vrot.lane.b32.xlu0 %v221, 32
    %v1015 = vpop.permute.xlu0 %1014
    %1016 = vrot.lane.b32.xlu0 %v222, 32
    %v1017 = vpop.permute.xlu0 %1016
    %1018 = vrot.lane.b32.xlu0 %v223, 32
    %v1019 = vpop.permute.xlu0 %1018
    %1020 = vrot.lane.b32.xlu0 %v224, 32
    %v1021 = vpop.permute.xlu0 %1020
    %1022 = vrot.lane.b32.xlu0 %v225, 32
    %v1023 = vpop.permute.xlu0 %1022
    %1024 = vrot.lane.b32.xlu0 %v226, 32
    %v1025 = vpop.permute.xlu0 %1024
    %1026 = vrot.lane.b32.xlu0 %v227, 32
    %v1027 = vpop.permute.xlu0 %1026
    %1028 = vrot.lane.b32.xlu0 %v228, 32
    %v1029 = vpop.permute.xlu0 %1028
    %1030 = vrot.lane.b32.xlu0 %v229, 32
    %v1031 = vpop.permute.xlu0 %1030
    %1032 = vrot.lane.b32.xlu0 %v230, 32
    %v1033 = vpop.permute.xlu0 %1032
    %1034 = vrot.lane.b32.xlu0 %v231, 32
    %v1035 = vpop.permute.xlu0 %1034
    %1036 = vrot.lane.b32.xlu0 %v232, 32
    %v1037 = vpop.permute.xlu0 %1036
    %1038 = vrot.lane.b32.xlu0 %v233, 32
    %v1039 = vpop.permute.xlu0 %1038
    %1040 = vrot.lane.b32.xlu0 %v234, 32
    %v1041 = vpop.permute.xlu0 %1040
    %1042 = vrot.lane.b32.xlu0 %v235, 32
    %v1043 = vpop.permute.xlu0 %1042
    %1044 = vrot.lane.b32.xlu0 %v236, 32
    %v1045 = vpop.permute.xlu0 %1044
    %1046 = vrot.lane.b32.xlu0 %v237, 32
    %v1047 = vpop.permute.xlu0 %1046
    %1048 = vrot.lane.b32.xlu0 %v238, 32
    %v1049 = vpop.permute.xlu0 %1048
    %1050 = vrot.lane.b32.xlu0 %v239, 32
    %v1051 = vpop.permute.xlu0 %1050
    %1052 = vrot.lane.b32.xlu0 %v240, 32
    %v1053 = vpop.permute.xlu0 %1052
    %1054 = vrot.lane.b32.xlu0 %v241, 32
    %v1055 = vpop.permute.xlu0 %1054
    %1056 = vrot.lane.b32.xlu0 %v242, 32
    %v1057 = vpop.permute.xlu0 %1056
    %1058 = vrot.lane.b32.xlu0 %v243, 32
    %v1059 = vpop.permute.xlu0 %1058
    %vm1088 = vcmask 31744
    %v1089 = vsel %vm1088, %v44, %v273
    %v1090 = vsel %vm1088, %v45, %v275
    %v1091 = vsel %vm1088, %v46, %v277
    %v1092 = vsel %vm1088, %v47, %v279
    %v1093 = vsel %vm1088, %v48, %v281
    %v1094 = vsel %vm1088, %v49, %v283
    %v1095 = vsel %vm1088, %v50, %v285
    %v1096 = vsel %vm1088, %v51, %v287
    %v1097 = vsel %vm1088, %v52, %v289
    %v1098 = vsel %vm1088, %v53, %v291
    %v1099 = vsel %vm1088, %v54, %v293
    %v1100 = vsel %vm1088, %v55, %v295
    %v1101 = vsel %vm1088, %v56, %v297
    %v1102 = vsel %vm1088, %v57, %v299
    %v1103 = vsel %vm1088, %v58, %v301
    %v1104 = vsel %vm1088, %v59, %v303
    %v1105 = vsel %vm1088, %v60, %v305
    %v1106 = vsel %vm1088, %v61, %v307
    %v1107 = vsel %vm1088, %v62, %v309
    %v1108 = vsel %vm1088, %v63, %v311
    %v1109 = vsel %vm1088, %v64, %v313
    %v1110 = vsel %vm1088, %v65, %v315
    %v1111 = vsel %vm1088, %v66, %v317
    %v1112 = vsel %vm1088, %v67, %v319
    %v1113 = vsel %vm1088, %v68, %v321
    %v1114 = vsel %vm1088, %v69, %v323
    %v1115 = vsel %vm1088, %v70, %v325
    %v1116 = vsel %vm1088, %v71, %v327
    %vm1117 = vcmask 64512
    %v1118 = vsel %vm1117, %v1089, %v385
    %v1119 = vsel %vm1117, %v1090, %v387
    %v1120 = vsel %vm1117, %v1091, %v389
    %v1121 = vsel %vm1117, %v1092, %v391
    %v1122 = vsel %vm1117, %v1093, %v393
    %v1123 = vsel %vm1117, %v1094, %v395
    %v1124 = vsel %vm1117, %v1095, %v397
    %v1125 = vsel %vm1117, %v1096, %v399
    %v1126 = vsel %vm1117, %v1097, %v401
    %v1127 = vsel %vm1117, %v1098, %v403
    %v1128 = vsel %vm1117, %v1099, %v405
    %v1129 = vsel %vm1117, %v1100, %v407
    %v1130 = vsel %vm1117, %v1101, %v409
    %v1131 = vsel %vm1117, %v1102, %v411
    %v1132 = vsel %vm1117, %v1103, %v413
    %v1133 = vsel %vm1117, %v1104, %v415
    %v1134 = vsel %vm1117, %v1105, %v417
    %v1135 = vsel %vm1117, %v1106, %v419
    %v1136 = vsel %vm1117, %v1107, %v421
    %v1137 = vsel %vm1117, %v1108, %v423
    %v1138 = vsel %vm1117, %v1109, %v425
    %v1139 = vsel %vm1117, %v1110, %v427
    %v1140 = vsel %vm1117, %v1111, %v429
    %v1141 = vsel %vm1117, %v1112, %v431
    %v1142 = vsel %vm1117, %v1113, %v433
    %v1143 = vsel %vm1117, %v1114, %v435
    %v1144 = vsel %vm1117, %v1115, %v437
    %v1145 = vsel %vm1117, %v1116, %v439
    %vm1146 = vcmask 97280
    %v1147 = vsel %vm1146, %v1118, %v471
    %v1148 = vsel %vm1146, %v1119, %v473
    %v1149 = vsel %vm1146, %v1120, %v475
    %v1150 = vsel %vm1146, %v1121, %v477
    %v1151 = vsel %vm1146, %v1122, %v479
    %v1152 = vsel %vm1146, %v1123, %v481
    %v1153 = vsel %vm1146, %v1124, %v483
    %v1154 = vsel %vm1146, %v1125, %v485
    %v1155 = vsel %vm1146, %v1126, %v487
    %v1156 = vsel %vm1146, %v1127, %v489
    %v1157 = vsel %vm1146, %v1128, %v491
    %v1158 = vsel %vm1146, %v1129, %v493
    %v1159 = vsel %vm1146, %v1130, %v495
    %v1160 = vsel %vm1146, %v1131, %v497
    %v1161 = vsel %vm1146, %v1132, %v499
    %v1162 = vsel %vm1146, %v1133, %v501
    %v1163 = vsel %vm1146, %v1134, %v503
    %v1164 = vsel %vm1146, %v1135, %v505
    %v1165 = vsel %vm1146, %v1136, %v507
    %v1166 = vsel %vm1146, %v1137, %v509
    %v1167 = vsel %vm1146, %v1138, %v511
    %v1168 = vsel %vm1146, %v1139, %v513
    %v1169 = vsel %vm1146, %v1140, %v515
    %v1170 = vsel %vm1146, %v1141, %v517
    %v1171 = vsel %vm1146, %v1142, %v519
    %v1172 = vsel %vm1146, %v1143, %v521
    %v1173 = vsel %vm1146, %v1144, %v523
    %v1174 = vsel %vm1146, %v1145, %v525
    %vm1175 = vcmask 130048
    %v1176 = vsel %vm1175, %v1147, %v583
    %v1177 = vsel %vm1175, %v1148, %v585
    %v1178 = vsel %vm1175, %v1149, %v587
    %v1179 = vsel %vm1175, %v1150, %v589
    %v1180 = vsel %vm1175, %v1151, %v591
    %v1181 = vsel %vm1175, %v1152, %v593
    %v1182 = vsel %vm1175, %v1153, %v595
    %v1183 = vsel %vm1175, %v1154, %v597
    %v1184 = vsel %vm1175, %v1155, %v599
    %v1185 = vsel %vm1175, %v1156, %v601
    %v1186 = vsel %vm1175, %v1157, %v603
    %v1187 = vsel %vm1175, %v1158, %v605
    %v1188 = vsel %vm1175, %v1159, %v607
    %v1189 = vsel %vm1175, %v1160, %v609
    %v1190 = vsel %vm1175, %v1161, %v611
    %v1191 = vsel %vm1175, %v1162, %v613
    %v1192 = vsel %vm1175, %v1163, %v615
    %v1193 = vsel %vm1175, %v1164, %v617
    %v1194 = vsel %vm1175, %v1165, %v619
    %v1195 = vsel %vm1175, %v1166, %v621
    %v1196 = vsel %vm1175, %v1167, %v623
    %v1197 = vsel %vm1175, %v1168, %v625
    %v1198 = vsel %vm1175, %v1169, %v627
    %v1199 = vsel %vm1175, %v1170, %v629
    %v1200 = vsel %vm1175, %v1171, %v631
    %v1201 = vsel %vm1175, %v1172, %v633
    %v1202 = vsel %vm1175, %v1173, %v635
    %v1203 = vsel %vm1175, %v1174, %v637
    %vm1204 = vcmask 162816
    %v1205 = vsel %vm1204, %v1176, %v695
    %v1206 = vsel %vm1204, %v1177, %v697
    %v1207 = vsel %vm1204, %v1178, %v699
    %v1208 = vsel %vm1204, %v1179, %v701
    %v1209 = vsel %vm1204, %v1180, %v703
    %v1210 = vsel %vm1204, %v1181, %v705
    %v1211 = vsel %vm1204, %v1182, %v707
    %v1212 = vsel %vm1204, %v1183, %v709
    %v1213 = vsel %vm1204, %v1184, %v711
    %v1214 = vsel %vm1204, %v1185, %v713
    %v1215 = vsel %vm1204, %v1186, %v715
    %v1216 = vsel %vm1204, %v1187, %v717
    %v1217 = vsel %vm1204, %v1188, %v719
    %v1218 = vsel %vm1204, %v1189, %v721
    %v1219 = vsel %vm1204, %v1190, %v723
    %v1220 = vsel %vm1204, %v1191, %v725
    %v1221 = vsel %vm1204, %v1192, %v727
    %v1222 = vsel %vm1204, %v1193, %v729
    %v1223 = vsel %vm1204, %v1194, %v731
    %v1224 = vsel %vm1204, %v1195, %v733
    %v1225 = vsel %vm1204, %v1196, %v735
    %v1226 = vsel %vm1204, %v1197, %v737
    %v1227 = vsel %vm1204, %v1198, %v739
    %v1228 = vsel %vm1204, %v1199, %v741
    %v1229 = vsel %vm1204, %v1200, %v743
    %v1230 = vsel %vm1204, %v1201, %v745
    %v1231 = vsel %vm1204, %v1202, %v747
    %v1232 = vsel %vm1204, %v1203, %v749
    %vm1233 = vcmask 195584
    %v1234 = vsel %vm1233, %v1205, %v781
    %v1235 = vsel %vm1233, %v1206, %v783
    %v1236 = vsel %vm1233, %v1207, %v785
    %v1237 = vsel %vm1233, %v1208, %v787
    %v1238 = vsel %vm1233, %v1209, %v789
    %v1239 = vsel %vm1233, %v1210, %v791
    %v1240 = vsel %vm1233, %v1211, %v793
    %v1241 = vsel %vm1233, %v1212, %v795
    %v1242 = vsel %vm1233, %v1213, %v797
    %v1243 = vsel %vm1233, %v1214, %v799
    %v1244 = vsel %vm1233, %v1215, %v801
    %v1245 = vsel %vm1233, %v1216, %v803
    %v1246 = vsel %vm1233, %v1217, %v805
    %v1247 = vsel %vm1233, %v1218, %v807
    %v1248 = vsel %vm1233, %v1219, %v809
    %v1249 = vsel %vm1233, %v1220, %v811
    %v1250 = vsel %vm1233, %v1221, %v813
    %v1251 = vsel %vm1233, %v1222, %v815
    %v1252 = vsel %vm1233, %v1223, %v817
    %v1253 = vsel %vm1233, %v1224, %v819
    %v1254 = vsel %vm1233, %v1225, %v821
    %v1255 = vsel %vm1233, %v1226, %v823
    %v1256 = vsel %vm1233, %v1227, %v825
    %v1257 = vsel %vm1233, %v1228, %v827
    %v1258 = vsel %vm1233, %v1229, %v829
    %v1259 = vsel %vm1233, %v1230, %v831
    %v1260 = vsel %vm1233, %v1231, %v833
    %v1261 = vsel %vm1233, %v1232, %v835
    %vm1262 = vcmask 228352
    %v1263 = vsel %vm1262, %v1234, %v893
    %v1264 = vsel %vm1262, %v1235, %v895
    %v1265 = vsel %vm1262, %v1236, %v897
    %v1266 = vsel %vm1262, %v1237, %v899
    %v1267 = vsel %vm1262, %v1238, %v901
    %v1268 = vsel %vm1262, %v1239, %v903
    %v1269 = vsel %vm1262, %v1240, %v905
    %v1270 = vsel %vm1262, %v1241, %v907
    %v1271 = vsel %vm1262, %v1242, %v909
    %v1272 = vsel %vm1262, %v1243, %v911
    %v1273 = vsel %vm1262, %v1244, %v913
    %v1274 = vsel %vm1262, %v1245, %v915
    %v1275 = vsel %vm1262, %v1246, %v917
    %v1276 = vsel %vm1262, %v1247, %v919
    %v1277 = vsel %vm1262, %v1248, %v921
    %v1278 = vsel %vm1262, %v1249, %v923
    %v1279 = vsel %vm1262, %v1250, %v925
    %v1280 = vsel %vm1262, %v1251, %v927
    %v1281 = vsel %vm1262, %v1252, %v929
    %v1282 = vsel %vm1262, %v1253, %v931
    %v1283 = vsel %vm1262, %v1254, %v933
    %v1284 = vsel %vm1262, %v1255, %v935
    %v1285 = vsel %vm1262, %v1256, %v937
    %v1286 = vsel %vm1262, %v1257, %v939
    %v1287 = vsel %vm1262, %v1258, %v941
    %v1288 = vsel %vm1262, %v1259, %v943
    %v1289 = vsel %vm1262, %v1260, %v945
    %v1290 = vsel %vm1262, %v1261, %v947
    %vm1291 = vcmask 261120
    %v1292 = vsel %vm1291, %v1263, %v1005
    %v1293 = vsel %vm1291, %v1264, %v1007
    %v1294 = vsel %vm1291, %v1265, %v1009
    %v1295 = vsel %vm1291, %v1266, %v1011
    %v1296 = vsel %vm1291, %v1267, %v1013
    %v1297 = vsel %vm1291, %v1268, %v1015
    %v1298 = vsel %vm1291, %v1269, %v1017
    %v1299 = vsel %vm1291, %v1270, %v1019
    %v1300 = vsel %vm1291, %v1271, %v1021
    %v1301 = vsel %vm1291, %v1272, %v1023
    %v1302 = vsel %vm1291, %v1273, %v1025
    %v1303 = vsel %vm1291, %v1274, %v1027
    %v1304 = vsel %vm1291, %v1275, %v1029
    %v1305 = vsel %vm1291, %v1276, %v1031
    %v1306 = vsel %vm1291, %v1277, %v1033
    %v1307 = vsel %vm1291, %v1278, %v1035
    %v1308 = vsel %vm1291, %v1279, %v1037
    %v1309 = vsel %vm1291, %v1280, %v1039
    %v1310 = vsel %vm1291, %v1281, %v1041
    %v1311 = vsel %vm1291, %v1282, %v1043
    %v1312 = vsel %vm1291, %v1283, %v1045
    %v1313 = vsel %vm1291, %v1284, %v1047
    %v1314 = vsel %vm1291, %v1285, %v1049
    %v1315 = vsel %vm1291, %v1286, %v1051
    %v1316 = vsel %vm1291, %v1287, %v1053
    %v1317 = vsel %vm1291, %v1288, %v1055
    %v1318 = vsel %vm1291, %v1289, %v1057
    %v1319 = vsel %vm1291, %v1290, %v1059
    %v1320 = vld [vmem:[%s1] sm:$0xff]
    %v1321 = vld [vmem:[%s1 + $0x8] sm:$0xff]
    %v1322 = vld [vmem:[%s1 + $0x10] sm:$0xff]
    %v1323 = vld [vmem:[%s1 + $0x18] sm:$0xff]
    %v1324 = vld [vmem:[%s1 + $0x20] sm:$0xf]
    %v1325 = vld [vmem:[#allocation3] sm:$0x1]
    %v1327 = vlaneseq
    %v1328 = vshrl.u32 %v1327, 7
    %v1329 = vsub.s32 0, %v1328
    %v1330 = vrot.slane %v1325, %v1329
    %vm1332 = vcmask 293888
    %v1334 = vsel %vm1332, %v1292, 0
    %v1337 = vsel %vm1332, %v1293, 0
    %v1340 = vsel %vm1332, %v1294, 0
    %v1343 = vsel %vm1332, %v1295, 0
    %v1346 = vsel %vm1332, %v1296, 0
    %v1349 = vsel %vm1332, %v1297, 0
    %v1352 = vsel %vm1332, %v1298, 0
    %v1355 = vsel %vm1332, %v1299, 0
    %v1358 = vsel %vm1332, %v1300, 0
    %v1361 = vsel %vm1332, %v1301, 0
    %v1364 = vsel %vm1332, %v1302, 0
    %v1367 = vsel %vm1332, %v1303, 0
    %v1370 = vsel %vm1332, %v1304, 0
    %v1373 = vsel %vm1332, %v1305, 0
    %v1376 = vsel %vm1332, %v1306, 0
    %v1379 = vsel %vm1332, %v1307, 0
    %v1382 = vsel %vm1332, %v1308, 0
    %v1385 = vsel %vm1332, %v1309, 0
    %v1388 = vsel %vm1332, %v1310, 0
    %v1391 = vsel %vm1332, %v1311, 0
    %v1394 = vsel %vm1332, %v1312, 0
    %v1397 = vsel %vm1332, %v1313, 0
    %v1400 = vsel %vm1332, %v1314, 0
    %v1403 = vsel %vm1332, %v1315, 0
    %v1406 = vsel %vm1332, %v1316, 0
    %v1409 = vsel %vm1332, %v1317, 0
    %v1412 = vsel %vm1332, %v1318, 0
    %v1415 = vsel %vm1332, %v1319, 0
    %vm1417 = vcmask 1043456
    %v1419 = vsel %vm1417, %v1324, 0
    %1421 = vmatprep.subr.mxu0 0.0
    %1422 = vmatpush1.msra.mxu0 %v1320
    %1423 = vmatprep.subr.mxu0 0.0
    %1424 = vmatpush1.msra.mxu0 %v1321
    %1425 = vmatprep.subr.mxu0 0.0
    %1426 = vmatpush1.msra.mxu0 %v1322
    %1427 = vmatprep.subr.mxu0 0.0
    %1428 = vmatpush1.msra.mxu0 %v1323
    %1429 = vmatprep.subr.mxu0 0.0
    %1430 = vmatpush1.msra.mxu0 %v1419
    %1431 = vmatprep.subr.mxu0 0.0
    %1432 = vmatpush1.msra.mxu0 0.0
    %1433 = vmatprep.subr.mxu0 0.0
    %1434 = vmatpush1.msra.mxu0 0.0
    %1435 = vmatprep.subr.mxu0 0.0
    %1436 = vmatpush1.msra.mxu0 0.0
    %1437 = vmatprep.subr.mxu0 0.0
    %1438 = vmatpush1.msra.mxu0 0.0
    %1439 = vmatprep.subr.mxu0 0.0
    %1440 = vmatpush1.msra.mxu0 0.0
    %1441 = vmatprep.subr.mxu0 0.0
    %1442 = vmatpush1.msra.mxu0 0.0
    %1443 = vmatprep.subr.mxu0 0.0
    %1444 = vmatpush1.msra.mxu0 0.0
    %1445 = vmatprep.subr.mxu0 0.0
    %1446 = vmatpush1.msra.mxu0 0.0
    %1447 = vmatprep.subr.mxu0 0.0
    %1448 = vmatpush1.msra.mxu0 0.0
    %1449 = vmatprep.subr.mxu0 0.0
    %1450 = vmatpush1.msra.mxu0 0.0
    %1451 = vmatprep.subr.mxu0 0.0
    %1452 = vmatpush1.msra.mxu0 0.0
    %1453 = vmatprep.subr.mxu0 0.0
    %1454 = vmatpush1.msra.mxu0 0.0
    %1455 = vmatprep.subr.mxu0 0.0
    %1456 = vmatpush1.msra.mxu0 0.0
    %1457 = vmatprep.subr.mxu0 0.0
    %1458 = vmatpush1.msra.mxu0 0.0
    %1459 = vmatprep.subr.mxu0 0.0
    %1460 = vmatpush1.msra.mxu0 0.0
    %1461 = vmatprep.subr.mxu0 0.0
    %1462 = vmatpush1.msra.mxu0 0.0
    %1463 = vmatprep.subr.mxu0 0.0
    %1464 = vmatpush1.msra.mxu0 0.0
    %1465 = vmatprep.subr.mxu0 0.0
    %1466 = vmatpush1.msra.mxu0 0.0
    %1467 = vmatprep.subr.mxu0 0.0
    %1468 = vmatpush1.msra.mxu0 0.0
    %1469 = vmatprep.subr.mxu0 0.0
    %1470 = vmatpush1.msra.mxu0 0.0
    %1471 = vmatprep.subr.mxu0 0.0
    %1472 = vmatpush1.msra.mxu0 0.0
    %1473 = vmatprep.subr.mxu0 0.0
    %1474 = vmatpush1.msra.mxu0 0.0
    %1475 = vmatprep.subr.mxu0 0.0
    %1476 = vmatpush1.msra.mxu0 0.0
    %1477 = vmatprep.subr.mxu0 0.0
    %1478 = vmatpush1.msra.mxu0 0.0
    %1479 = vmatprep.subr.mxu0 0.0
    %1480 = vmatpush1.msra.mxu0 0.0
    %1481 = vmatprep.subr.mxu0 0.0
    %1482 = vmatpush1.msra.mxu0 0.0
    %1483 = vmatprep.subr.mxu0 0.0
    %1484 = vmatpush1.msra.mxu0 0.0
    %1485 = vmatprep.mubr.f32.mxu0 0.0
    %1486 = vmatmul.mubr.f32.gmra.mrb[0].mxu0 %v1334
    %v1487 = vpop.f32.mrb[0].mxu0
    %v1488 = vadd.f32 %v1330, %v1487
    %v1489 = vpop.f32.mrb[0].mxu0
    %1490 = vmatprep.mubr.f32.mxu0 0.0
    %1491 = vmatmul.mubr.f32.gmra.mrb[0].mxu0 %v1337
    %v1492 = vpop.f32.mrb[0].mxu0
    %v1493 = vadd.f32 %v1330, %v1492
    %v1494 = vpop.f32.mrb[0].mxu0
    %1495 = vmatprep.mubr.f32.mxu0 0.0
    %1496 = vmatmul.mubr.f32.gmra.mrb[0].mxu0 %v1340
    %v1497 = vpop.f32.mrb[0].mxu0
    %v1498 = vadd.f32 %v1330, %v1497
    %v1499 = vpop.f32.mrb[0].mxu0
    %1500 = vmatprep.mubr.f32.mxu0 0.0
    %1501 = vmatmul.mubr.f32.gmra.mrb[0].mxu0 %v1343
    %v1502 = vpop.f32.mrb[0].mxu0
    %v1503 = vadd.f32 %v1330, %v1502
    %v1504 = vpop.f32.mrb[0].mxu0
    %1505 = vmatprep.mubr.f32.mxu0 0.0
    %1506 = vmatmul.mubr.f32.gmra.mrb[0].mxu0 %v1346
    %v1507 = vpop.f32.mrb[0].mxu0
    %v1508 = vadd.f32 %v1330, %v1507
    %v1509 = vpop.f32.mrb[0].mxu0
    %1510 = vmatprep.mubr.f32.mxu0 0.0
    %1511 = vmatmul.mubr.f32.gmra.mrb[0].mxu0 %v1349
    %v1512 = vpop.f32.mrb[0].mxu0
    %v1513 = vadd.f32 %v1330, %v1512
    %v1514 = vpop.f32.mrb[0].mxu0
    %1515 = vmatprep.mubr.f32.mxu0 0.0
    %1516 = vmatmul.mubr.f32.gmra.mrb[0].mxu0 %v1352
    %v1517 = vpop.f32.mrb[0].mxu0
    %v1518 = vadd.f32 %v1330, %v1517
    %v1519 = vpop.f32.mrb[0].mxu0
    %1520 = vmatprep.mubr.f32.mxu0 0.0
    %1521 = vmatmul.mubr.f32.gmra.mrb[0].mxu0 %v1355
    %v1522 = vpop.f32.mrb[0].mxu0
    %v1523 = vadd.f32 %v1330, %v1522
    %v1524 = vpop.f32.mrb[0].mxu0
    %1525 = vmatprep.mubr.f32.mxu0 0.0
    %1526 = vmatmul.mubr.f32.gmra.mrb[0].mxu0 %v1358
    %v1527 = vpop.f32.mrb[0].mxu0
    %v1528 = vadd.f32 %v1330, %v1527
    %v1529 = vpop.f32.mrb[0].mxu0
    %1530 = vmatprep.mubr.f32.mxu0 0.0
    %1531 = vmatmul.mubr.f32.gmra.mrb[0].mxu0 %v1361
    %v1532 = vpop.f32.mrb[0].mxu0
    %v1533 = vadd.f32 %v1330, %v1532
    %v1534 = vpop.f32.mrb[0].mxu0
    %1535 = vmatprep.mubr.f32.mxu0 0.0
    %1536 = vmatmul.mubr.f32.gmra.mrb[0].mxu0 %v1364
    %v1537 = vpop.f32.mrb[0].mxu0
    %v1538 = vadd.f32 %v1330, %v1537
    %v1539 = vpop.f32.mrb[0].mxu0
    %1540 = vmatprep.mubr.f32.mxu0 0.0
    %1541 = vmatmul.mubr.f32.gmra.mrb[0].mxu0 %v1367
    %v1542 = vpop.f32.mrb[0].mxu0
    %v1543 = vadd.f32 %v1330, %v1542
    %v1544 = vpop.f32.mrb[0].mxu0
    %1545 = vmatprep.mubr.f32.mxu0 0.0
    %1546 = vmatmul.mubr.f32.gmra.mrb[0].mxu0 %v1370
    %v1547 = vpop.f32.mrb[0].mxu0
    %v1548 = vadd.f32 %v1330, %v1547
    %v1549 = vpop.f32.mrb[0].mxu0
    %1550 = vmatprep.mubr.f32.mxu0 0.0
    %1551 = vmatmul.mubr.f32.gmra.mrb[0].mxu0 %v1373
    %v1552 = vpop.f32.mrb[0].mxu0
    %v1553 = vadd.f32 %v1330, %v1552
    %v1554 = vpop.f32.mrb[0].mxu0
    %1555 = vmatprep.mubr.f32.mxu0 0.0
    %1556 = vmatmul.mubr.f32.gmra.mrb[0].mxu0 %v1376
    %v1557 = vpop.f32.mrb[0].mxu0
    %v1558 = vadd.f32 %v1330, %v1557
    %v1559 = vpop.f32.mrb[0].mxu0
    %1560 = vmatprep.mubr.f32.mxu0 0.0
    %1561 = vmatmul.mubr.f32.gmra.mrb[0].mxu0 %v1379
    %v1562 = vpop.f32.mrb[0].mxu0
    %v1563 = vadd.f32 %v1330, %v1562
    %v1564 = vpop.f32.mrb[0].mxu0
    %1565 = vmatprep.mubr.f32.mxu0 0.0
    %1566 = vmatmul.mubr.f32.gmra.mrb[0].mxu0 %v1382
    %v1567 = vpop.f32.mrb[0].mxu0
    %v1568 = vadd.f32 %v1330, %v1567
    %v1569 = vpop.f32.mrb[0].mxu0
    %1570 = vmatprep.mubr.f32.mxu0 0.0
    %1571 = vmatmul.mubr.f32.gmra.mrb[0].mxu0 %v1385
    %v1572 = vpop.f32.mrb[0].mxu0
    %v1573 = vadd.f32 %v1330, %v1572
    %v1574 = vpop.f32.mrb[0].mxu0
    %1575 = vmatprep.mubr.f32.mxu0 0.0
    %1576 = vmatmul.mubr.f32.gmra.mrb[0].mxu0 %v1388
    %v1577 = vpop.f32.mrb[0].mxu0
    %v1578 = vadd.f32 %v1330, %v1577
    %v1579 = vpop.f32.mrb[0].mxu0
    %1580 = vmatprep.mubr.f32.mxu0 0.0
    %1581 = vmatmul.mubr.f32.gmra.mrb[0].mxu0 %v1391
    %v1582 = vpop.f32.mrb[0].mxu0
    %v1583 = vadd.f32 %v1330, %v1582
    %v1584 = vpop.f32.mrb[0].mxu0
    %1585 = vmatprep.mubr.f32.mxu0 0.0
    %1586 = vmatmul.mubr.f32.gmra.mrb[0].mxu0 %v1394
    %v1587 = vpop.f32.mrb[0].mxu0
    %v1588 = vadd.f32 %v1330, %v1587
    %v1589 = vpop.f32.mrb[0].mxu0
    %1590 = vmatprep.mubr.f32.mxu0 0.0
    %1591 = vmatmul.mubr.f32.gmra.mrb[0].mxu0 %v1397
    %v1592 = vpop.f32.mrb[0].mxu0
    %v1593 = vadd.f32 %v1330, %v1592
    %v1594 = vpop.f32.mrb[0].mxu0
    %1595 = vmatprep.mubr.f32.mxu0 0.0
    %1596 = vmatmul.mubr.f32.gmra.mrb[0].mxu0 %v1400
    %v1597 = vpop.f32.mrb[0].mxu0
    %v1598 = vadd.f32 %v1330, %v1597
    %v1599 = vpop.f32.mrb[0].mxu0
    %1600 = vmatprep.mubr.f32.mxu0 0.0
    %1601 = vmatmul.mubr.f32.gmra.mrb[0].mxu0 %v1403
    %v1602 = vpop.f32.mrb[0].mxu0
    %v1603 = vadd.f32 %v1330, %v1602
    %v1604 = vpop.f32.mrb[0].mxu0
    %1605 = vmatprep.mubr.f32.mxu0 0.0
    %1606 = vmatmul.mubr.f32.gmra.mrb[0].mxu0 %v1406
    %v1607 = vpop.f32.mrb[0].mxu0
    %v1608 = vadd.f32 %v1330, %v1607
    %v1609 = vpop.f32.mrb[0].mxu0
    %1610 = vmatprep.mubr.f32.mxu0 0.0
    %1611 = vmatmul.mubr.f32.gmra.mrb[0].mxu0 %v1409
    %v1612 = vpop.f32.mrb[0].mxu0
    %v1613 = vadd.f32 %v1330, %v1612
    %v1614 = vpop.f32.mrb[0].mxu0
    %1615 = vmatprep.mubr.f32.mxu0 0.0
    %1616 = vmatmul.mubr.f32.gmra.mrb[0].mxu0 %v1412
    %v1617 = vpop.f32.mrb[0].mxu0
    %v1618 = vadd.f32 %v1330, %v1617
    %v1619 = vpop.f32.mrb[0].mxu0
    %1620 = vmatprep.mubr.f32.mxu0 0.0
    %1621 = vmatmul.mubr.f32.gmra.mrb[0].mxu0 %v1415
    %v1622 = vpop.f32.mrb[0].mxu0
    %v1623 = vadd.f32 %v1330, %v1622
    %v1624 = vpop.f32.mrb[0].mxu0
    %1625 = vdwg.mxu0
    %v1626 = vmax.f32 %v1488, 0.0
    %v1627 = vmax.f32 %v1493, 0.0
    %v1628 = vmax.f32 %v1498, 0.0
    %v1629 = vmax.f32 %v1503, 0.0
    %v1630 = vmax.f32 %v1508, 0.0
    %v1631 = vmax.f32 %v1513, 0.0
    %v1632 = vmax.f32 %v1518, 0.0
    %v1633 = vmax.f32 %v1523, 0.0
    %v1634 = vmax.f32 %v1528, 0.0
    %v1635 = vmax.f32 %v1533, 0.0
    %v1636 = vmax.f32 %v1538, 0.0
    %v1637 = vmax.f32 %v1543, 0.0
    %v1638 = vmax.f32 %v1548, 0.0
    %v1639 = vmax.f32 %v1553, 0.0
    %v1640 = vmax.f32 %v1558, 0.0
    %v1641 = vmax.f32 %v1563, 0.0
    %v1642 = vmax.f32 %v1568, 0.0
    %v1643 = vmax.f32 %v1573, 0.0
    %v1644 = vmax.f32 %v1578, 0.0
    %v1645 = vmax.f32 %v1583, 0.0
    %v1646 = vmax.f32 %v1588, 0.0
    %v1647 = vmax.f32 %v1593, 0.0
    %v1648 = vmax.f32 %v1598, 0.0
    %v1649 = vmax.f32 %v1603, 0.0
    %v1650 = vmax.f32 %v1608, 0.0
    %v1651 = vmax.f32 %v1613, 0.0
    %v1652 = vmax.f32 %v1618, 0.0
    %v1653 = vmax.f32 %v1623, 0.0
    %v1654 = vlaneseq
    %v1655 = vshrl.u32 %v1654, 7
    %v1656 = vadd.s32 %v1655, 8
    %v1657 = vadd.s32 %v1655, 16
    %v1658 = vadd.s32 %v1655, 24
    %v1659 = vadd.s32 %v1655, 32
    %v1660 = vadd.s32 %v1655, 40
    %v1661 = vadd.s32 %v1655, 48
    %v1662 = vadd.s32 %v1655, 56
    %v1663 = vadd.s32 %v1655, 64
    %v1664 = vadd.s32 %v1655, 72
    %v1665 = vadd.s32 %v1655, 80
    %v1666 = vadd.s32 %v1655, 88
    %v1667 = vadd.s32 %v1655, 96
    %v1668 = vadd.s32 %v1655, 104
    %v1669 = vadd.s32 %v1655, 112
    %v1670 = vadd.s32 %v1655, 120
    %v1671 = vadd.s32 %v1655, 128
    %v1672 = vadd.s32 %v1655, 136
    %v1673 = vadd.s32 %v1655, 144
    %v1674 = vadd.s32 %v1655, 152
    %v1675 = vadd.s32 %v1655, 160
    %v1676 = vadd.s32 %v1655, 168
    %v1677 = vadd.s32 %v1655, 176
    %v1678 = vadd.s32 %v1655, 184
    %v1679 = vadd.s32 %v1655, 192
    %v1680 = vadd.s32 %v1655, 200
    %v1681 = vadd.s32 %v1655, 208
    %v1682 = vadd.s32 %v1655, 216
    %vm1683 = vcmp.lt.s32.totalorder %v1655, 0
    %v1684 = vsub.s32 0, %v1655
    %v1685 = vsel %vm1683, %v1684, %v1655
    %v1686 = vmul.u32.u64.compose %v1685, 2498890063
    %v1687 = vextract.low.u32 %v1686
    %v1688 = vextract.high.u32 %v1686
    %vm1689 = vc.u32 %v1687, 2498890063
    %v1690 = vsel %vm1689, 1, 0
    %v1691 = vadd.s32 %v1688, %v1690
    %v1692 = vshrl.u32 %v1691, 6
    %v1693 = vmul.u32 %v1692, 110
    %v1694 = vsub.s32 %v1685, %v1693
    %v1695 = vsub.s32 0, %v1694
    %v1696 = vsel %vm1683, %v1695, %v1694
    %vm1697 = vcmp.lt.s32.totalorder %v1656, 0
    %v1698 = vsub.s32 0, %v1656
    %v1699 = vsel %vm1697, %v1698, %v1656
    %v1700 = vmul.u32.u64.compose %v1699, 2498890063
    %v1701 = vextract.low.u32 %v1700
    %v1702 = vextract.high.u32 %v1700
    %vm1703 = vc.u32 %v1701, 2498890063
    %v1704 = vsel %vm1703, 1, 0
    %v1705 = vadd.s32 %v1702, %v1704
    %v1706 = vshrl.u32 %v1705, 6
    %v1707 = vmul.u32 %v1706, 110
    %v1708 = vsub.s32 %v1699, %v1707
    %v1709 = vsub.s32 0, %v1708
    %v1710 = vsel %vm1697, %v1709, %v1708
    %vm1711 = vcmp.lt.s32.totalorder %v1657, 0
    %v1712 = vsub.s32 0, %v1657
    %v1713 = vsel %vm1711, %v1712, %v1657
    %v1714 = vmul.u32.u64.compose %v1713, 2498890063
    %v1715 = vextract.low.u32 %v1714
    %v1716 = vextract.high.u32 %v1714
    %vm1717 = vc.u32 %v1715, 2498890063
    %v1718 = vsel %vm1717, 1, 0
    %v1719 = vadd.s32 %v1716, %v1718
    %v1720 = vshrl.u32 %v1719, 6
    %v1721 = vmul.u32 %v1720, 110
    %v1722 = vsub.s32 %v1713, %v1721
    %v1723 = vsub.s32 0, %v1722
    %v1724 = vsel %vm1711, %v1723, %v1722
    %vm1725 = vcmp.lt.s32.totalorder %v1658, 0
    %v1726 = vsub.s32 0, %v1658
    %v1727 = vsel %vm1725, %v1726, %v1658
    %v1728 = vmul.u32.u64.compose %v1727, 2498890063
    %v1729 = vextract.low.u32 %v1728
    %v1730 = vextract.high.u32 %v1728
    %vm1731 = vc.u32 %v1729, 2498890063
    %v1732 = vsel %vm1731, 1, 0
    %v1733 = vadd.s32 %v1730, %v1732
    %v1734 = vshrl.u32 %v1733, 6
    %v1735 = vmul.u32 %v1734, 110
    %v1736 = vsub.s32 %v1727, %v1735
    %v1737 = vsub.s32 0, %v1736
    %v1738 = vsel %vm1725, %v1737, %v1736
    %vm1739 = vcmp.lt.s32.totalorder %v1659, 0
    %v1740 = vsub.s32 0, %v1659
    %v1741 = vsel %vm1739, %v1740, %v1659
    %v1742 = vmul.u32.u64.compose %v1741, 2498890063
    %v1743 = vextract.low.u32 %v1742
    %v1744 = vextract.high.u32 %v1742
    %vm1745 = vc.u32 %v1743, 2498890063
    %v1746 = vsel %vm1745, 1, 0
    %v1747 = vadd.s32 %v1744, %v1746
    %v1748 = vshrl.u32 %v1747, 6
    %v1749 = vmul.u32 %v1748, 110
    %v1750 = vsub.s32 %v1741, %v1749
    %v1751 = vsub.s32 0, %v1750
    %v1752 = vsel %vm1739, %v1751, %v1750
    %vm1753 = vcmp.lt.s32.totalorder %v1660, 0
    %v1754 = vsub.s32 0, %v1660
    %v1755 = vsel %vm1753, %v1754, %v1660
    %v1756 = vmul.u32.u64.compose %v1755, 2498890063
    %v1757 = vextract.low.u32 %v1756
    %v1758 = vextract.high.u32 %v1756
    %vm1759 = vc.u32 %v1757, 2498890063
    %v1760 = vsel %vm1759, 1, 0
    %v1761 = vadd.s32 %v1758, %v1760
    %v1762 = vshrl.u32 %v1761, 6
    %v1763 = vmul.u32 %v1762, 110
    %v1764 = vsub.s32 %v1755, %v1763
    %v1765 = vsub.s32 0, %v1764
    %v1766 = vsel %vm1753, %v1765, %v1764
    %vm1767 = vcmp.lt.s32.totalorder %v1661, 0
    %v1768 = vsub.s32 0, %v1661
    %v1769 = vsel %vm1767, %v1768, %v1661
    %v1770 = vmul.u32.u64.compose %v1769, 2498890063
    %v1771 = vextract.low.u32 %v1770
    %v1772 = vextract.high.u32 %v1770
    %vm1773 = vc.u32 %v1771, 2498890063
    %v1774 = vsel %vm1773, 1, 0
    %v1775 = vadd.s32 %v1772, %v1774
    %v1776 = vshrl.u32 %v1775, 6
    %v1777 = vmul.u32 %v1776, 110
    %v1778 = vsub.s32 %v1769, %v1777
    %v1779 = vsub.s32 0, %v1778
    %v1780 = vsel %vm1767, %v1779, %v1778
    %vm1781 = vcmp.lt.s32.totalorder %v1662, 0
    %v1782 = vsub.s32 0, %v1662
    %v1783 = vsel %vm1781, %v1782, %v1662
    %v1784 = vmul.u32.u64.compose %v1783, 2498890063
    %v1785 = vextract.low.u32 %v1784
    %v1786 = vextract.high.u32 %v1784
    %vm1787 = vc.u32 %v1785, 2498890063
    %v1788 = vsel %vm1787, 1, 0
    %v1789 = vadd.s32 %v1786, %v1788
    %v1790 = vshrl.u32 %v1789, 6
    %v1791 = vmul.u32 %v1790, 110
    %v1792 = vsub.s32 %v1783, %v1791
    %v1793 = vsub.s32 0, %v1792
    %v1794 = vsel %vm1781, %v1793, %v1792
    %vm1795 = vcmp.lt.s32.totalorder %v1663, 0
    %v1796 = vsub.s32 0, %v1663
    %v1797 = vsel %vm1795, %v1796, %v1663
    %v1798 = vmul.u32.u64.compose %v1797, 2498890063
    %v1799 = vextract.low.u32 %v1798
    %v1800 = vextract.high.u32 %v1798
    %vm1801 = vc.u32 %v1799, 2498890063
    %v1802 = vsel %vm1801, 1, 0
    %v1803 = vadd.s32 %v1800, %v1802
    %v1804 = vshrl.u32 %v1803, 6
    %v1805 = vmul.u32 %v1804, 110
    %v1806 = vsub.s32 %v1797, %v1805
    %v1807 = vsub.s32 0, %v1806
    %v1808 = vsel %vm1795, %v1807, %v1806
    %vm1809 = vcmp.lt.s32.totalorder %v1664, 0
    %v1810 = vsub.s32 0, %v1664
    %v1811 = vsel %vm1809, %v1810, %v1664
    %v1812 = vmul.u32.u64.compose %v1811, 2498890063
    %v1813 = vextract.low.u32 %v1812
    %v1814 = vextract.high.u32 %v1812
    %vm1815 = vc.u32 %v1813, 2498890063
    %v1816 = vsel %vm1815, 1, 0
    %v1817 = vadd.s32 %v1814, %v1816
    %v1818 = vshrl.u32 %v1817, 6
    %v1819 = vmul.u32 %v1818, 110
    %v1820 = vsub.s32 %v1811, %v1819
    %v1821 = vsub.s32 0, %v1820
    %v1822 = vsel %vm1809, %v1821, %v1820
    %vm1823 = vcmp.lt.s32.totalorder %v1665, 0
    %v1824 = vsub.s32 0, %v1665
    %v1825 = vsel %vm1823, %v1824, %v1665
    %v1826 = vmul.u32.u64.compose %v1825, 2498890063
    %v1827 = vextract.low.u32 %v1826
    %v1828 = vextract.high.u32 %v1826
    %vm1829 = vc.u32 %v1827, 2498890063
    %v1830 = vsel %vm1829, 1, 0
    %v1831 = vadd.s32 %v1828, %v1830
    %v1832 = vshrl.u32 %v1831, 6
    %v1833 = vmul.u32 %v1832, 110
    %v1834 = vsub.s32 %v1825, %v1833
    %v1835 = vsub.s32 0, %v1834
    %v1836 = vsel %vm1823, %v1835, %v1834
    %vm1837 = vcmp.lt.s32.totalorder %v1666, 0
    %v1838 = vsub.s32 0, %v1666
    %v1839 = vsel %vm1837, %v1838, %v1666
    %v1840 = vmul.u32.u64.compose %v1839, 2498890063
    %v1841 = vextract.low.u32 %v1840
    %v1842 = vextract.high.u32 %v1840
    %vm1843 = vc.u32 %v1841, 2498890063
    %v1844 = vsel %vm1843, 1, 0
    %v1845 = vadd.s32 %v1842, %v1844
    %v1846 = vshrl.u32 %v1845, 6
    %v1847 = vmul.u32 %v1846, 110
    %v1848 = vsub.s32 %v1839, %v1847
    %v1849 = vsub.s32 0, %v1848
    %v1850 = vsel %vm1837, %v1849, %v1848
    %vm1851 = vcmp.lt.s32.totalorder %v1667, 0
    %v1852 = vsub.s32 0, %v1667
    %v1853 = vsel %vm1851, %v1852, %v1667
    %v1854 = vmul.u32.u64.compose %v1853, 2498890063
    %v1855 = vextract.low.u32 %v1854
    %v1856 = vextract.high.u32 %v1854
    %vm1857 = vc.u32 %v1855, 2498890063
    %v1858 = vsel %vm1857, 1, 0
    %v1859 = vadd.s32 %v1856, %v1858
    %v1860 = vshrl.u32 %v1859, 6
    %v1861 = vmul.u32 %v1860, 110
    %v1862 = vsub.s32 %v1853, %v1861
    %v1863 = vsub.s32 0, %v1862
    %v1864 = vsel %vm1851, %v1863, %v1862
    %vm1865 = vcmp.lt.s32.totalorder %v1668, 0
    %v1866 = vsub.s32 0, %v1668
    %v1867 = vsel %vm1865, %v1866, %v1668
    %v1868 = vmul.u32.u64.compose %v1867, 2498890063
    %v1869 = vextract.low.u32 %v1868
    %v1870 = vextract.high.u32 %v1868
    %vm1871 = vc.u32 %v1869, 2498890063
    %v1872 = vsel %vm1871, 1, 0
    %v1873 = vadd.s32 %v1870, %v1872
    %v1874 = vshrl.u32 %v1873, 6
    %v1875 = vmul.u32 %v1874, 110
    %v1876 = vsub.s32 %v1867, %v1875
    %v1877 = vsub.s32 0, %v1876
    %v1878 = vsel %vm1865, %v1877, %v1876
    %vm1879 = vcmp.lt.s32.totalorder %v1669, 0
    %v1880 = vsub.s32 0, %v1669
    %v1881 = vsel %vm1879, %v1880, %v1669
    %v1882 = vmul.u32.u64.compose %v1881, 2498890063
    %v1883 = vextract.low.u32 %v1882
    %v1884 = vextract.high.u32 %v1882
    %vm1885 = vc.u32 %v1883, 2498890063
    %v1886 = vsel %vm1885, 1, 0
    %v1887 = vadd.s32 %v1884, %v1886
    %v1888 = vshrl.u32 %v1887, 6
    %v1889 = vmul.u32 %v1888, 110
    %v1890 = vsub.s32 %v1881, %v1889
    %v1891 = vsub.s32 0, %v1890
    %v1892 = vsel %vm1879, %v1891, %v1890
    %vm1893 = vcmp.lt.s32.totalorder %v1670, 0
    %v1894 = vsub.s32 0, %v1670
    %v1895 = vsel %vm1893, %v1894, %v1670
    %v1896 = vmul.u32.u64.compose %v1895, 2498890063
    %v1897 = vextract.low.u32 %v1896
    %v1898 = vextract.high.u32 %v1896
    %vm1899 = vc.u32 %v1897, 2498890063
    %v1900 = vsel %vm1899, 1, 0
    %v1901 = vadd.s32 %v1898, %v1900
    %v1902 = vshrl.u32 %v1901, 6
    %v1903 = vmul.u32 %v1902, 110
    %v1904 = vsub.s32 %v1895, %v1903
    %v1905 = vsub.s32 0, %v1904
    %v1906 = vsel %vm1893, %v1905, %v1904
    %vm1907 = vcmp.lt.s32.totalorder %v1671, 0
    %v1908 = vsub.s32 0, %v1671
    %v1909 = vsel %vm1907, %v1908, %v1671
    %v1910 = vmul.u32.u64.compose %v1909, 2498890063
    %v1911 = vextract.low.u32 %v1910
    %v1912 = vextract.high.u32 %v1910
    %vm1913 = vc.u32 %v1911, 2498890063
    %v1914 = vsel %vm1913, 1, 0
    %v1915 = vadd.s32 %v1912, %v1914
    %v1916 = vshrl.u32 %v1915, 6
    %v1917 = vmul.u32 %v1916, 110
    %v1918 = vsub.s32 %v1909, %v1917
    %v1919 = vsub.s32 0, %v1918
    %v1920 = vsel %vm1907, %v1919, %v1918
    %vm1921 = vcmp.lt.s32.totalorder %v1672, 0
    %v1922 = vsub.s32 0, %v1672
    %v1923 = vsel %vm1921, %v1922, %v1672
    %v1924 = vmul.u32.u64.compose %v1923, 2498890063
    %v1925 = vextract.low.u32 %v1924
    %v1926 = vextract.high.u32 %v1924
    %vm1927 = vc.u32 %v1925, 2498890063
    %v1928 = vsel %vm1927, 1, 0
    %v1929 = vadd.s32 %v1926, %v1928
    %v1930 = vshrl.u32 %v1929, 6
    %v1931 = vmul.u32 %v1930, 110
    %v1932 = vsub.s32 %v1923, %v1931
    %v1933 = vsub.s32 0, %v1932
    %v1934 = vsel %vm1921, %v1933, %v1932
    %vm1935 = vcmp.lt.s32.totalorder %v1673, 0
    %v1936 = vsub.s32 0, %v1673
    %v1937 = vsel %vm1935, %v1936, %v1673
    %v1938 = vmul.u32.u64.compose %v1937, 2498890063
    %v1939 = vextract.low.u32 %v1938
    %v1940 = vextract.high.u32 %v1938
    %vm1941 = vc.u32 %v1939, 2498890063
    %v1942 = vsel %vm1941, 1, 0
    %v1943 = vadd.s32 %v1940, %v1942
    %v1944 = vshrl.u32 %v1943, 6
    %v1945 = vmul.u32 %v1944, 110
    %v1946 = vsub.s32 %v1937, %v1945
    %v1947 = vsub.s32 0, %v1946
    %v1948 = vsel %vm1935, %v1947, %v1946
    %vm1949 = vcmp.lt.s32.totalorder %v1674, 0
    %v1950 = vsub.s32 0, %v1674
    %v1951 = vsel %vm1949, %v1950, %v1674
    %v1952 = vmul.u32.u64.compose %v1951, 2498890063
    %v1953 = vextract.low.u32 %v1952
    %v1954 = vextract.high.u32 %v1952
    %vm1955 = vc.u32 %v1953, 2498890063
    %v1956 = vsel %vm1955, 1, 0
    %v1957 = vadd.s32 %v1954, %v1956
    %v1958 = vshrl.u32 %v1957, 6
    %v1959 = vmul.u32 %v1958, 110
    %v1960 = vsub.s32 %v1951, %v1959
    %v1961 = vsub.s32 0, %v1960
    %v1962 = vsel %vm1949, %v1961, %v1960
    %vm1963 = vcmp.lt.s32.totalorder %v1675, 0
    %v1964 = vsub.s32 0, %v1675
    %v1965 = vsel %vm1963, %v1964, %v1675
    %v1966 = vmul.u32.u64.compose %v1965, 2498890063
    %v1967 = vextract.low.u32 %v1966
    %v1968 = vextract.high.u32 %v1966
    %vm1969 = vc.u32 %v1967, 2498890063
    %v1970 = vsel %vm1969, 1, 0
    %v1971 = vadd.s32 %v1968, %v1970
    %v1972 = vshrl.u32 %v1971, 6
    %v1973 = vmul.u32 %v1972, 110
    %v1974 = vsub.s32 %v1965, %v1973
    %v1975 = vsub.s32 0, %v1974
    %v1976 = vsel %vm1963, %v1975, %v1974
    %vm1977 = vcmp.lt.s32.totalorder %v1676, 0
    %v1978 = vsub.s32 0, %v1676
    %v1979 = vsel %vm1977, %v1978, %v1676
    %v1980 = vmul.u32.u64.compose %v1979, 2498890063
    %v1981 = vextract.low.u32 %v1980
    %v1982 = vextract.high.u32 %v1980
    %vm1983 = vc.u32 %v1981, 2498890063
    %v1984 = vsel %vm1983, 1, 0
    %v1985 = vadd.s32 %v1982, %v1984
    %v1986 = vshrl.u32 %v1985, 6
    %v1987 = vmul.u32 %v1986, 110
    %v1988 = vsub.s32 %v1979, %v1987
    %v1989 = vsub.s32 0, %v1988
    %v1990 = vsel %vm1977, %v1989, %v1988
    %vm1991 = vcmp.lt.s32.totalorder %v1677, 0
    %v1992 = vsub.s32 0, %v1677
    %v1993 = vsel %vm1991, %v1992, %v1677
    %v1994 = vmul.u32.u64.compose %v1993, 2498890063
    %v1995 = vextract.low.u32 %v1994
    %v1996 = vextract.high.u32 %v1994
    %vm1997 = vc.u32 %v1995, 2498890063
    %v1998 = vsel %vm1997, 1, 0
    %v1999 = vadd.s32 %v1996, %v1998
    %v2000 = vshrl.u32 %v1999, 6
    %v2001 = vmul.u32 %v2000, 110
    %v2002 = vsub.s32 %v1993, %v2001
    %v2003 = vsub.s32 0, %v2002
    %v2004 = vsel %vm1991, %v2003, %v2002
    %vm2005 = vcmp.lt.s32.totalorder %v1678, 0
    %v2006 = vsub.s32 0, %v1678
    %v2007 = vsel %vm2005, %v2006, %v1678
    %v2008 = vmul.u32.u64.compose %v2007, 2498890063
    %v2009 = vextract.low.u32 %v2008
    %v2010 = vextract.high.u32 %v2008
    %vm2011 = vc.u32 %v2009, 2498890063
    %v2012 = vsel %vm2011, 1, 0
    %v2013 = vadd.s32 %v2010, %v2012
    %v2014 = vshrl.u32 %v2013, 6
    %v2015 = vmul.u32 %v2014, 110
    %v2016 = vsub.s32 %v2007, %v2015
    %v2017 = vsub.s32 0, %v2016
    %v2018 = vsel %vm2005, %v2017, %v2016
    %vm2019 = vcmp.lt.s32.totalorder %v1679, 0
    %v2020 = vsub.s32 0, %v1679
    %v2021 = vsel %vm2019, %v2020, %v1679
    %v2022 = vmul.u32.u64.compose %v2021, 2498890063
    %v2023 = vextract.low.u32 %v2022
    %v2024 = vextract.high.u32 %v2022
    %vm2025 = vc.u32 %v2023, 2498890063
    %v2026 = vsel %vm2025, 1, 0
    %v2027 = vadd.s32 %v2024, %v2026
    %v2028 = vshrl.u32 %v2027, 6
    %v2029 = vmul.u32 %v2028, 110
    %v2030 = vsub.s32 %v2021, %v2029
    %v2031 = vsub.s32 0, %v2030
    %v2032 = vsel %vm2019, %v2031, %v2030
    %vm2033 = vcmp.lt.s32.totalorder %v1680, 0
    %v2034 = vsub.s32 0, %v1680
    %v2035 = vsel %vm2033, %v2034, %v1680
    %v2036 = vmul.u32.u64.compose %v2035, 2498890063
    %v2037 = vextract.low.u32 %v2036
    %v2038 = vextract.high.u32 %v2036
    %vm2039 = vc.u32 %v2037, 2498890063
    %v2040 = vsel %vm2039, 1, 0
    %v2041 = vadd.s32 %v2038, %v2040
    %v2042 = vshrl.u32 %v2041, 6
    %v2043 = vmul.u32 %v2042, 110
    %v2044 = vsub.s32 %v2035, %v2043
    %v2045 = vsub.s32 0, %v2044
    %v2046 = vsel %vm2033, %v2045, %v2044
    %vm2047 = vcmp.lt.s32.totalorder %v1681, 0
    %v2048 = vsub.s32 0, %v1681
    %v2049 = vsel %vm2047, %v2048, %v1681
    %v2050 = vmul.u32.u64.compose %v2049, 2498890063
    %v2051 = vextract.low.u32 %v2050
    %v2052 = vextract.high.u32 %v2050
    %vm2053 = vc.u32 %v2051, 2498890063
    %v2054 = vsel %vm2053, 1, 0
    %v2055 = vadd.s32 %v2052, %v2054
    %v2056 = vshrl.u32 %v2055, 6
    %v2057 = vmul.u32 %v2056, 110
    %v2058 = vsub.s32 %v2049, %v2057
    %v2059 = vsub.s32 0, %v2058
    %v2060 = vsel %vm2047, %v2059, %v2058
    %vm2061 = vcmp.lt.s32.totalorder %v1682, 0
    %v2062 = vsub.s32 0, %v1682
    %v2063 = vsel %vm2061, %v2062, %v1682
    %v2064 = vmul.u32.u64.compose %v2063, 2498890063
    %v2065 = vextract.low.u32 %v2064
    %v2066 = vextract.high.u32 %v2064
    %vm2067 = vc.u32 %v2065, 2498890063
    %v2068 = vsel %vm2067, 1, 0
    %v2069 = vadd.s32 %v2066, %v2068
    %v2070 = vshrl.u32 %v2069, 6
    %v2071 = vmul.u32 %v2070, 110
    %v2072 = vsub.s32 %v2063, %v2071
    %v2073 = vsub.s32 0, %v2072
    %v2074 = vsel %vm2061, %v2073, %v2072
    %vm2075 = vcmp.ne.s32.totalorder %v1696, 0
    %vm2076 = vcmp.ne.s32.totalorder %v1710, 0
    %vm2077 = vcmp.ne.s32.totalorder %v1724, 0
    %vm2078 = vcmp.ne.s32.totalorder %v1738, 0
    %vm2079 = vcmp.ne.s32.totalorder %v1752, 0
    %vm2080 = vcmp.ne.s32.totalorder %v1766, 0
    %vm2081 = vcmp.ne.s32.totalorder %v1780, 0
    %vm2082 = vcmp.ne.s32.totalorder %v1794, 0
    %vm2083 = vcmp.ne.s32.totalorder %v1808, 0
    %vm2084 = vcmp.ne.s32.totalorder %v1822, 0
    %vm2085 = vcmp.ne.s32.totalorder %v1836, 0
    %vm2086 = vcmp.ne.s32.totalorder %v1850, 0
    %vm2087 = vcmp.ne.s32.totalorder %v1864, 0
    %vm2088 = vcmp.ne.s32.totalorder %v1878, 0
    %vm2089 = vcmp.ne.s32.totalorder %v1892, 0
    %vm2090 = vcmp.ne.s32.totalorder %v1906, 0
    %vm2091 = vcmp.ne.s32.totalorder %v1920, 0
    %vm2092 = vcmp.ne.s32.totalorder %v1934, 0
    %vm2093 = vcmp.ne.s32.totalorder %v1948, 0
    %vm2094 = vcmp.ne.s32.totalorder %v1962, 0
    %vm2095 = vcmp.ne.s32.totalorder %v1976, 0
    %vm2096 = vcmp.ne.s32.totalorder %v1990, 0
    %vm2097 = vcmp.ne.s32.totalorder %v2004, 0
    %vm2098 = vcmp.ne.s32.totalorder %v2018, 0
    %vm2099 = vcmp.ne.s32.totalorder %v2032, 0
    %vm2100 = vcmp.ne.s32.totalorder %v2046, 0
    %vm2101 = vcmp.ne.s32.totalorder %v2060, 0
    %vm2102 = vcmp.ne.s32.totalorder %v2074, 0
    %vm2103 = vcmp.lt.s32.totalorder %v1696, 0
    %vm2104 = vcmp.lt.s32.totalorder %v1710, 0
    %vm2105 = vcmp.lt.s32.totalorder %v1724, 0
    %vm2106 = vcmp.lt.s32.totalorder %v1738, 0
    %vm2107 = vcmp.lt.s32.totalorder %v1752, 0
    %vm2108 = vcmp.lt.s32.totalorder %v1766, 0
    %vm2109 = vcmp.lt.s32.totalorder %v1780, 0
    %vm2110 = vcmp.lt.s32.totalorder %v1794, 0
    %vm2111 = vcmp.lt.s32.totalorder %v1808, 0
    %vm2112 = vcmp.lt.s32.totalorder %v1822, 0
    %vm2113 = vcmp.lt.s32.totalorder %v1836, 0
    %vm2114 = vcmp.lt.s32.totalorder %v1850, 0
    %vm2115 = vcmp.lt.s32.totalorder %v1864, 0
    %vm2116 = vcmp.lt.s32.totalorder %v1878, 0
    %vm2117 = vcmp.lt.s32.totalorder %v1892, 0
    %vm2118 = vcmp.lt.s32.totalorder %v1906, 0
    %vm2119 = vcmp.lt.s32.totalorder %v1920, 0
    %vm2120 = vcmp.lt.s32.totalorder %v1934, 0
    %vm2121 = vcmp.lt.s32.totalorder %v1948, 0
    %vm2122 = vcmp.lt.s32.totalorder %v1962, 0
    %vm2123 = vcmp.lt.s32.totalorder %v1976, 0
    %vm2124 = vcmp.lt.s32.totalorder %v1990, 0
    %vm2125 = vcmp.lt.s32.totalorder %v2004, 0
    %vm2126 = vcmp.lt.s32.totalorder %v2018, 0
    %vm2127 = vcmp.lt.s32.totalorder %v2032, 0
    %vm2128 = vcmp.lt.s32.totalorder %v2046, 0
    %vm2129 = vcmp.lt.s32.totalorder %v2060, 0
    %vm2130 = vcmp.lt.s32.totalorder %v2074, 0
    %vm2131 = vmand %vm2103, %vm2075
    %vm2132 = vmand %vm2104, %vm2076
    %vm2133 = vmand %vm2105, %vm2077
    %vm2134 = vmand %vm2106, %vm2078
    %vm2135 = vmand %vm2107, %vm2079
    %vm2136 = vmand %vm2108, %vm2080
    %vm2137 = vmand %vm2109, %vm2081
    %vm2138 = vmand %vm2110, %vm2082
    %vm2139 = vmand %vm2111, %vm2083
    %vm2140 = vmand %vm2112, %vm2084
    %vm2141 = vmand %vm2113, %vm2085
    %vm2142 = vmand %vm2114, %vm2086
    %vm2143 = vmand %vm2115, %vm2087
    %vm2144 = vmand %vm2116, %vm2088
    %vm2145 = vmand %vm2117, %vm2089
    %vm2146 = vmand %vm2118, %vm2090
    %vm2147 = vmand %vm2119, %vm2091
    %vm2148 = vmand %vm2120, %vm2092
    %vm2149 = vmand %vm2121, %vm2093
    %vm2150 = vmand %vm2122, %vm2094
    %vm2151 = vmand %vm2123, %vm2095
    %vm2152 = vmand %vm2124, %vm2096
    %vm2153 = vmand %vm2125, %vm2097
    %vm2154 = vmand %vm2126, %vm2098
    %vm2155 = vmand %vm2127, %vm2099
    %vm2156 = vmand %vm2128, %vm2100
    %vm2157 = vmand %vm2129, %vm2101
    %vm2158 = vmand %vm2130, %vm2102
    %v2159 = vadd.s32 %v1696, 110
    %v2160 = vadd.s32 %v1710, 110
    %v2161 = vadd.s32 %v1724, 110
    %v2162 = vadd.s32 %v1738, 110
    %v2163 = vadd.s32 %v1752, 110
    %v2164 = vadd.s32 %v1766, 110
    %v2165 = vadd.s32 %v1780, 110
    %v2166 = vadd.s32 %v1794, 110
    %v2167 = vadd.s32 %v1808, 110
    %v2168 = vadd.s32 %v1822, 110
    %v2169 = vadd.s32 %v1836, 110
    %v2170 = vadd.s32 %v1850, 110
    %v2171 = vadd.s32 %v1864, 110
    %v2172 = vadd.s32 %v1878, 110
    %v2173 = vadd.s32 %v1892, 110
    %v2174 = vadd.s32 %v1906, 110
    %v2175 = vadd.s32 %v1920, 110
    %v2176 = vadd.s32 %v1934, 110
    %v2177 = vadd.s32 %v1948, 110
    %v2178 = vadd.s32 %v1962, 110
    %v2179 = vadd.s32 %v1976, 110
    %v2180 = vadd.s32 %v1990, 110
    %v2181 = vadd.s32 %v2004, 110
    %v2182 = vadd.s32 %v2018, 110
    %v2183 = vadd.s32 %v2032, 110
    %v2184 = vadd.s32 %v2046, 110
    %v2185 = vadd.s32 %v2060, 110
    %v2186 = vadd.s32 %v2074, 110
    %v2187 = vsel %vm2131, %v2159, %v1696
    %v2188 = vsel %vm2132, %v2160, %v1710
    %v2189 = vsel %vm2133, %v2161, %v1724
    %v2190 = vsel %vm2134, %v2162, %v1738
    %v2191 = vsel %vm2135, %v2163, %v1752
    %v2192 = vsel %vm2136, %v2164, %v1766
    %v2193 = vsel %vm2137, %v2165, %v1780
    %v2194 = vsel %vm2138, %v2166, %v1794
    %v2195 = vsel %vm2139, %v2167, %v1808
    %v2196 = vsel %vm2140, %v2168, %v1822
    %v2197 = vsel %vm2141, %v2169, %v1836
    %v2198 = vsel %vm2142, %v2170, %v1850
    %v2199 = vsel %vm2143, %v2171, %v1864
    %v2200 = vsel %vm2144, %v2172, %v1878
    %v2201 = vsel %vm2145, %v2173, %v1892
    %v2202 = vsel %vm2146, %v2174, %v1906
    %v2203 = vsel %vm2147, %v2175, %v1920
    %v2204 = vsel %vm2148, %v2176, %v1934
    %v2205 = vsel %vm2149, %v2177, %v1948
    %v2206 = vsel %vm2150, %v2178, %v1962
    %v2207 = vsel %vm2151, %v2179, %v1976
    %v2208 = vsel %vm2152, %v2180, %v1990
    %v2209 = vsel %vm2153, %v2181, %v2004
    %v2210 = vsel %vm2154, %v2182, %v2018
    %v2211 = vsel %vm2155, %v2183, %v2032
    %v2212 = vsel %vm2156, %v2184, %v2046
    %v2213 = vsel %vm2157, %v2185, %v2060
    %v2214 = vsel %vm2158, %v2186, %v2074
    %vm2215 = vcmp.lt.s32.totalorder %v2187, 80
    %vm2216 = vcmp.lt.s32.totalorder %v2188, 80
    %vm2217 = vcmp.lt.s32.totalorder %v2189, 80
    %vm2218 = vcmp.lt.s32.totalorder %v2190, 80
    %vm2219 = vcmp.lt.s32.totalorder %v2191, 80
    %vm2220 = vcmp.lt.s32.totalorder %v2192, 80
    %vm2221 = vcmp.lt.s32.totalorder %v2193, 80
    %vm2222 = vcmp.lt.s32.totalorder %v2194, 80
    %vm2223 = vcmp.lt.s32.totalorder %v2195, 80
    %vm2224 = vcmp.lt.s32.totalorder %v2196, 80
    %vm2225 = vcmp.lt.s32.totalorder %v2197, 80
    %vm2226 = vcmp.lt.s32.totalorder %v2198, 80
    %vm2227 = vcmp.lt.s32.totalorder %v2199, 80
    %vm2228 = vcmp.lt.s32.totalorder %v2200, 80
    %vm2229 = vcmp.lt.s32.totalorder %v2201, 80
    %vm2230 = vcmp.lt.s32.totalorder %v2202, 80
    %vm2231 = vcmp.lt.s32.totalorder %v2203, 80
    %vm2232 = vcmp.lt.s32.totalorder %v2204, 80
    %vm2233 = vcmp.lt.s32.totalorder %v2205, 80
    %vm2234 = vcmp.lt.s32.totalorder %v2206, 80
    %vm2235 = vcmp.lt.s32.totalorder %v2207, 80
    %vm2236 = vcmp.lt.s32.totalorder %v2208, 80
    %vm2237 = vcmp.lt.s32.totalorder %v2209, 80
    %vm2238 = vcmp.lt.s32.totalorder %v2210, 80
    %vm2239 = vcmp.lt.s32.totalorder %v2211, 80
    %vm2240 = vcmp.lt.s32.totalorder %v2212, 80
    %vm2241 = vcmp.lt.s32.totalorder %v2213, 80
    %vm2242 = vcmp.lt.s32.totalorder %v2214, 80
    %vm2243 = vcmp.lt.s32.totalorder %v1655, 0
    %v2244 = vsub.s32 0, %v1655
    %v2245 = vsel %vm2243, %v2244, %v1655
    %v2246 = vmul.u32.u64.compose %v2245, 3435973837
    %v2247 = vextract.low.u32 %v2246
    %v2248 = vextract.high.u32 %v2246
    %v2249 = vshrl.u32 %v2248, 3
    %v2250 = vmul.u32 %v2249, 10
    %v2251 = vsub.s32 %v2245, %v2250
    %v2252 = vsub.s32 0, %v2251
    %v2253 = vsel %vm2243, %v2252, %v2251
    %vm2254 = vcmp.lt.s32.totalorder %v1656, 0
    %v2255 = vsub.s32 0, %v1656
    %v2256 = vsel %vm2254, %v2255, %v1656
    %v2257 = vmul.u32.u64.compose %v2256, 3435973837
    %v2258 = vextract.low.u32 %v2257
    %v2259 = vextract.high.u32 %v2257
    %v2260 = vshrl.u32 %v2259, 3
    %v2261 = vmul.u32 %v2260, 10
    %v2262 = vsub.s32 %v2256, %v2261
    %v2263 = vsub.s32 0, %v2262
    %v2264 = vsel %vm2254, %v2263, %v2262
    %vm2265 = vcmp.lt.s32.totalorder %v1657, 0
    %v2266 = vsub.s32 0, %v1657
    %v2267 = vsel %vm2265, %v2266, %v1657
    %v2268 = vmul.u32.u64.compose %v2267, 3435973837
    %v2269 = vextract.low.u32 %v2268
    %v2270 = vextract.high.u32 %v2268
    %v2271 = vshrl.u32 %v2270, 3
    %v2272 = vmul.u32 %v2271, 10
    %v2273 = vsub.s32 %v2267, %v2272
    %v2274 = vsub.s32 0, %v2273
    %v2275 = vsel %vm2265, %v2274, %v2273
    %vm2276 = vcmp.lt.s32.totalorder %v1658, 0
    %v2277 = vsub.s32 0, %v1658
    %v2278 = vsel %vm2276, %v2277, %v1658
    %v2279 = vmul.u32.u64.compose %v2278, 3435973837
    %v2280 = vextract.low.u32 %v2279
    %v2281 = vextract.high.u32 %v2279
    %v2282 = vshrl.u32 %v2281, 3
    %v2283 = vmul.u32 %v2282, 10
    %v2284 = vsub.s32 %v2278, %v2283
    %v2285 = vsub.s32 0, %v2284
    %v2286 = vsel %vm2276, %v2285, %v2284
    %vm2287 = vcmp.lt.s32.totalorder %v1659, 0
    %v2288 = vsub.s32 0, %v1659
    %v2289 = vsel %vm2287, %v2288, %v1659
    %v2290 = vmul.u32.u64.compose %v2289, 3435973837
    %v2291 = vextract.low.u32 %v2290
    %v2292 = vextract.high.u32 %v2290
    %v2293 = vshrl.u32 %v2292, 3
    %v2294 = vmul.u32 %v2293, 10
    %v2295 = vsub.s32 %v2289, %v2294
    %v2296 = vsub.s32 0, %v2295
    %v2297 = vsel %vm2287, %v2296, %v2295
    %vm2298 = vcmp.lt.s32.totalorder %v1660, 0
    %v2299 = vsub.s32 0, %v1660
    %v2300 = vsel %vm2298, %v2299, %v1660
    %v2301 = vmul.u32.u64.compose %v2300, 3435973837
    %v2302 = vextract.low.u32 %v2301
    %v2303 = vextract.high.u32 %v2301
    %v2304 = vshrl.u32 %v2303, 3
    %v2305 = vmul.u32 %v2304, 10
    %v2306 = vsub.s32 %v2300, %v2305
    %v2307 = vsub.s32 0, %v2306
    %v2308 = vsel %vm2298, %v2307, %v2306
    %vm2309 = vcmp.lt.s32.totalorder %v1661, 0
    %v2310 = vsub.s32 0, %v1661
    %v2311 = vsel %vm2309, %v2310, %v1661
    %v2312 = vmul.u32.u64.compose %v2311, 3435973837
    %v2313 = vextract.low.u32 %v2312
    %v2314 = vextract.high.u32 %v2312
    %v2315 = vshrl.u32 %v2314, 3
    %v2316 = vmul.u32 %v2315, 10
    %v2317 = vsub.s32 %v2311, %v2316
    %v2318 = vsub.s32 0, %v2317
    %v2319 = vsel %vm2309, %v2318, %v2317
    %vm2320 = vcmp.lt.s32.totalorder %v1662, 0
    %v2321 = vsub.s32 0, %v1662
    %v2322 = vsel %vm2320, %v2321, %v1662
    %v2323 = vmul.u32.u64.compose %v2322, 3435973837
    %v2324 = vextract.low.u32 %v2323
    %v2325 = vextract.high.u32 %v2323
    %v2326 = vshrl.u32 %v2325, 3
    %v2327 = vmul.u32 %v2326, 10
    %v2328 = vsub.s32 %v2322, %v2327
    %v2329 = vsub.s32 0, %v2328
    %v2330 = vsel %vm2320, %v2329, %v2328
    %vm2331 = vcmp.lt.s32.totalorder %v1663, 0
    %v2332 = vsub.s32 0, %v1663
    %v2333 = vsel %vm2331, %v2332, %v1663
    %v2334 = vmul.u32.u64.compose %v2333, 3435973837
    %v2335 = vextract.low.u32 %v2334
    %v2336 = vextract.high.u32 %v2334
    %v2337 = vshrl.u32 %v2336, 3
    %v2338 = vmul.u32 %v2337, 10
    %v2339 = vsub.s32 %v2333, %v2338
    %v2340 = vsub.s32 0, %v2339
    %v2341 = vsel %vm2331, %v2340, %v2339
    %vm2342 = vcmp.lt.s32.totalorder %v1664, 0
    %v2343 = vsub.s32 0, %v1664
    %v2344 = vsel %vm2342, %v2343, %v1664
    %v2345 = vmul.u32.u64.compose %v2344, 3435973837
    %v2346 = vextract.low.u32 %v2345
    %v2347 = vextract.high.u32 %v2345
    %v2348 = vshrl.u32 %v2347, 3
    %v2349 = vmul.u32 %v2348, 10
    %v2350 = vsub.s32 %v2344, %v2349
    %v2351 = vsub.s32 0, %v2350
    %v2352 = vsel %vm2342, %v2351, %v2350
    %vm2353 = vcmp.lt.s32.totalorder %v1665, 0
    %v2354 = vsub.s32 0, %v1665
    %v2355 = vsel %vm2353, %v2354, %v1665
    %v2356 = vmul.u32.u64.compose %v2355, 3435973837
    %v2357 = vextract.low.u32 %v2356
    %v2358 = vextract.high.u32 %v2356
    %v2359 = vshrl.u32 %v2358, 3
    %v2360 = vmul.u32 %v2359, 10
    %v2361 = vsub.s32 %v2355, %v2360
    %v2362 = vsub.s32 0, %v2361
    %v2363 = vsel %vm2353, %v2362, %v2361
    %vm2364 = vcmp.lt.s32.totalorder %v1666, 0
    %v2365 = vsub.s32 0, %v1666
    %v2366 = vsel %vm2364, %v2365, %v1666
    %v2367 = vmul.u32.u64.compose %v2366, 3435973837
    %v2368 = vextract.low.u32 %v2367
    %v2369 = vextract.high.u32 %v2367
    %v2370 = vshrl.u32 %v2369, 3
    %v2371 = vmul.u32 %v2370, 10
    %v2372 = vsub.s32 %v2366, %v2371
    %v2373 = vsub.s32 0, %v2372
    %v2374 = vsel %vm2364, %v2373, %v2372
    %vm2375 = vcmp.lt.s32.totalorder %v1667, 0
    %v2376 = vsub.s32 0, %v1667
    %v2377 = vsel %vm2375, %v2376, %v1667
    %v2378 = vmul.u32.u64.compose %v2377, 3435973837
    %v2379 = vextract.low.u32 %v2378
    %v2380 = vextract.high.u32 %v2378
    %v2381 = vshrl.u32 %v2380, 3
    %v2382 = vmul.u32 %v2381, 10
    %v2383 = vsub.s32 %v2377, %v2382
    %v2384 = vsub.s32 0, %v2383
    %v2385 = vsel %vm2375, %v2384, %v2383
    %vm2386 = vcmp.lt.s32.totalorder %v1668, 0
    %v2387 = vsub.s32 0, %v1668
    %v2388 = vsel %vm2386, %v2387, %v1668
    %v2389 = vmul.u32.u64.compose %v2388, 3435973837
    %v2390 = vextract.low.u32 %v2389
    %v2391 = vextract.high.u32 %v2389
    %v2392 = vshrl.u32 %v2391, 3
    %v2393 = vmul.u32 %v2392, 10
    %v2394 = vsub.s32 %v2388, %v2393
    %v2395 = vsub.s32 0, %v2394
    %v2396 = vsel %vm2386, %v2395, %v2394
    %vm2397 = vcmp.lt.s32.totalorder %v1669, 0
    %v2398 = vsub.s32 0, %v1669
    %v2399 = vsel %vm2397, %v2398, %v1669
    %v2400 = vmul.u32.u64.compose %v2399, 3435973837
    %v2401 = vextract.low.u32 %v2400
    %v2402 = vextract.high.u32 %v2400
    %v2403 = vshrl.u32 %v2402, 3
    %v2404 = vmul.u32 %v2403, 10
    %v2405 = vsub.s32 %v2399, %v2404
    %v2406 = vsub.s32 0, %v2405
    %v2407 = vsel %vm2397, %v2406, %v2405
    %vm2408 = vcmp.lt.s32.totalorder %v1670, 0
    %v2409 = vsub.s32 0, %v1670
    %v2410 = vsel %vm2408, %v2409, %v1670
    %v2411 = vmul.u32.u64.compose %v2410, 3435973837
    %v2412 = vextract.low.u32 %v2411
    %v2413 = vextract.high.u32 %v2411
    %v2414 = vshrl.u32 %v2413, 3
    %v2415 = vmul.u32 %v2414, 10
    %v2416 = vsub.s32 %v2410, %v2415
    %v2417 = vsub.s32 0, %v2416
    %v2418 = vsel %vm2408, %v2417, %v2416
    %vm2419 = vcmp.lt.s32.totalorder %v1671, 0
    %v2420 = vsub.s32 0, %v1671
    %v2421 = vsel %vm2419, %v2420, %v1671
    %v2422 = vmul.u32.u64.compose %v2421, 3435973837
    %v2423 = vextract.low.u32 %v2422
    %v2424 = vextract.high.u32 %v2422
    %v2425 = vshrl.u32 %v2424, 3
    %v2426 = vmul.u32 %v2425, 10
    %v2427 = vsub.s32 %v2421, %v2426
    %v2428 = vsub.s32 0, %v2427
    %v2429 = vsel %vm2419, %v2428, %v2427
    %vm2430 = vcmp.lt.s32.totalorder %v1672, 0
    %v2431 = vsub.s32 0, %v1672
    %v2432 = vsel %vm2430, %v2431, %v1672
    %v2433 = vmul.u32.u64.compose %v2432, 3435973837
    %v2434 = vextract.low.u32 %v2433
    %v2435 = vextract.high.u32 %v2433
    %v2436 = vshrl.u32 %v2435, 3
    %v2437 = vmul.u32 %v2436, 10
    %v2438 = vsub.s32 %v2432, %v2437
    %v2439 = vsub.s32 0, %v2438
    %v2440 = vsel %vm2430, %v2439, %v2438
    %vm2441 = vcmp.lt.s32.totalorder %v1673, 0
    %v2442 = vsub.s32 0, %v1673
    %v2443 = vsel %vm2441, %v2442, %v1673
    %v2444 = vmul.u32.u64.compose %v2443, 3435973837
    %v2445 = vextract.low.u32 %v2444
    %v2446 = vextract.high.u32 %v2444
    %v2447 = vshrl.u32 %v2446, 3
    %v2448 = vmul.u32 %v2447, 10
    %v2449 = vsub.s32 %v2443, %v2448
    %v2450 = vsub.s32 0, %v2449
    %v2451 = vsel %vm2441, %v2450, %v2449
    %vm2452 = vcmp.lt.s32.totalorder %v1674, 0
    %v2453 = vsub.s32 0, %v1674
    %v2454 = vsel %vm2452, %v2453, %v1674
    %v2455 = vmul.u32.u64.compose %v2454, 3435973837
    %v2456 = vextract.low.u32 %v2455
    %v2457 = vextract.high.u32 %v2455
    %v2458 = vshrl.u32 %v2457, 3
    %v2459 = vmul.u32 %v2458, 10
    %v2460 = vsub.s32 %v2454, %v2459
    %v2461 = vsub.s32 0, %v2460
    %v2462 = vsel %vm2452, %v2461, %v2460
    %vm2463 = vcmp.lt.s32.totalorder %v1675, 0
    %v2464 = vsub.s32 0, %v1675
    %v2465 = vsel %vm2463, %v2464, %v1675
    %v2466 = vmul.u32.u64.compose %v2465, 3435973837
    %v2467 = vextract.low.u32 %v2466
    %v2468 = vextract.high.u32 %v2466
    %v2469 = vshrl.u32 %v2468, 3
    %v2470 = vmul.u32 %v2469, 10
    %v2471 = vsub.s32 %v2465, %v2470
    %v2472 = vsub.s32 0, %v2471
    %v2473 = vsel %vm2463, %v2472, %v2471
    %vm2474 = vcmp.lt.s32.totalorder %v1676, 0
    %v2475 = vsub.s32 0, %v1676
    %v2476 = vsel %vm2474, %v2475, %v1676
    %v2477 = vmul.u32.u64.compose %v2476, 3435973837
    %v2478 = vextract.low.u32 %v2477
    %v2479 = vextract.high.u32 %v2477
    %v2480 = vshrl.u32 %v2479, 3
    %v2481 = vmul.u32 %v2480, 10
    %v2482 = vsub.s32 %v2476, %v2481
    %v2483 = vsub.s32 0, %v2482
    %v2484 = vsel %vm2474, %v2483, %v2482
    %vm2485 = vcmp.lt.s32.totalorder %v1677, 0
    %v2486 = vsub.s32 0, %v1677
    %v2487 = vsel %vm2485, %v2486, %v1677
    %v2488 = vmul.u32.u64.compose %v2487, 3435973837
    %v2489 = vextract.low.u32 %v2488
    %v2490 = vextract.high.u32 %v2488
    %v2491 = vshrl.u32 %v2490, 3
    %v2492 = vmul.u32 %v2491, 10
    %v2493 = vsub.s32 %v2487, %v2492
    %v2494 = vsub.s32 0, %v2493
    %v2495 = vsel %vm2485, %v2494, %v2493
    %vm2496 = vcmp.lt.s32.totalorder %v1678, 0
    %v2497 = vsub.s32 0, %v1678
    %v2498 = vsel %vm2496, %v2497, %v1678
    %v2499 = vmul.u32.u64.compose %v2498, 3435973837
    %v2500 = vextract.low.u32 %v2499
    %v2501 = vextract.high.u32 %v2499
    %v2502 = vshrl.u32 %v2501, 3
    %v2503 = vmul.u32 %v2502, 10
    %v2504 = vsub.s32 %v2498, %v2503
    %v2505 = vsub.s32 0, %v2504
    %v2506 = vsel %vm2496, %v2505, %v2504
    %vm2507 = vcmp.lt.s32.totalorder %v1679, 0
    %v2508 = vsub.s32 0, %v1679
    %v2509 = vsel %vm2507, %v2508, %v1679
    %v2510 = vmul.u32.u64.compose %v2509, 3435973837
    %v2511 = vextract.low.u32 %v2510
    %v2512 = vextract.high.u32 %v2510
    %v2513 = vshrl.u32 %v2512, 3
    %v2514 = vmul.u32 %v2513, 10
    %v2515 = vsub.s32 %v2509, %v2514
    %v2516 = vsub.s32 0, %v2515
    %v2517 = vsel %vm2507, %v2516, %v2515
    %vm2518 = vcmp.lt.s32.totalorder %v1680, 0
    %v2519 = vsub.s32 0, %v1680
    %v2520 = vsel %vm2518, %v2519, %v1680
    %v2521 = vmul.u32.u64.compose %v2520, 3435973837
    %v2522 = vextract.low.u32 %v2521
    %v2523 = vextract.high.u32 %v2521
    %v2524 = vshrl.u32 %v2523, 3
    %v2525 = vmul.u32 %v2524, 10
    %v2526 = vsub.s32 %v2520, %v2525
    %v2527 = vsub.s32 0, %v2526
    %v2528 = vsel %vm2518, %v2527, %v2526
    %vm2529 = vcmp.lt.s32.totalorder %v1681, 0
    %v2530 = vsub.s32 0, %v1681
    %v2531 = vsel %vm2529, %v2530, %v1681
    %v2532 = vmul.u32.u64.compose %v2531, 3435973837
    %v2533 = vextract.low.u32 %v2532
    %v2534 = vextract.high.u32 %v2532
    %v2535 = vshrl.u32 %v2534, 3
    %v2536 = vmul.u32 %v2535, 10
    %v2537 = vsub.s32 %v2531, %v2536
    %v2538 = vsub.s32 0, %v2537
    %v2539 = vsel %vm2529, %v2538, %v2537
    %vm2540 = vcmp.lt.s32.totalorder %v1682, 0
    %v2541 = vsub.s32 0, %v1682
    %v2542 = vsel %vm2540, %v2541, %v1682
    %v2543 = vmul.u32.u64.compose %v2542, 3435973837
    %v2544 = vextract.low.u32 %v2543
    %v2545 = vextract.high.u32 %v2543
    %v2546 = vshrl.u32 %v2545, 3
    %v2547 = vmul.u32 %v2546, 10
    %v2548 = vsub.s32 %v2542, %v2547
    %v2549 = vsub.s32 0, %v2548
    %v2550 = vsel %vm2540, %v2549, %v2548
    %vm2551 = vcmp.ne.s32.totalorder %v2253, 0
    %vm2552 = vcmp.ne.s32.totalorder %v2264, 0
    %vm2553 = vcmp.ne.s32.totalorder %v2275, 0
    %vm2554 = vcmp.ne.s32.totalorder %v2286, 0
    %vm2555 = vcmp.ne.s32.totalorder %v2297, 0
    %vm2556 = vcmp.ne.s32.totalorder %v2308, 0
    %vm2557 = vcmp.ne.s32.totalorder %v2319, 0
    %vm2558 = vcmp.ne.s32.totalorder %v2330, 0
    %vm2559 = vcmp.ne.s32.totalorder %v2341, 0
    %vm2560 = vcmp.ne.s32.totalorder %v2352, 0
    %vm2561 = vcmp.ne.s32.totalorder %v2363, 0
    %vm2562 = vcmp.ne.s32.totalorder %v2374, 0
    %vm2563 = vcmp.ne.s32.totalorder %v2385, 0
    %vm2564 = vcmp.ne.s32.totalorder %v2396, 0
    %vm2565 = vcmp.ne.s32.totalorder %v2407, 0
    %vm2566 = vcmp.ne.s32.totalorder %v2418, 0
    %vm2567 = vcmp.ne.s32.totalorder %v2429, 0
    %vm2568 = vcmp.ne.s32.totalorder %v2440, 0
    %vm2569 = vcmp.ne.s32.totalorder %v2451, 0
    %vm2570 = vcmp.ne.s32.totalorder %v2462, 0
    %vm2571 = vcmp.ne.s32.totalorder %v2473, 0
    %vm2572 = vcmp.ne.s32.totalorder %v2484, 0
    %vm2573 = vcmp.ne.s32.totalorder %v2495, 0
    %vm2574 = vcmp.ne.s32.totalorder %v2506, 0
    %vm2575 = vcmp.ne.s32.totalorder %v2517, 0
    %vm2576 = vcmp.ne.s32.totalorder %v2528, 0
    %vm2577 = vcmp.ne.s32.totalorder %v2539, 0
    %vm2578 = vcmp.ne.s32.totalorder %v2550, 0
    %vm2579 = vcmp.lt.s32.totalorder %v2253, 0
    %vm2580 = vcmp.lt.s32.totalorder %v2264, 0
    %vm2581 = vcmp.lt.s32.totalorder %v2275, 0
    %vm2582 = vcmp.lt.s32.totalorder %v2286, 0
    %vm2583 = vcmp.lt.s32.totalorder %v2297, 0
    %vm2584 = vcmp.lt.s32.totalorder %v2308, 0
    %vm2585 = vcmp.lt.s32.totalorder %v2319, 0
    %vm2586 = vcmp.lt.s32.totalorder %v2330, 0
    %vm2587 = vcmp.lt.s32.totalorder %v2341, 0
    %vm2588 = vcmp.lt.s32.totalorder %v2352, 0
    %vm2589 = vcmp.lt.s32.totalorder %v2363, 0
    %vm2590 = vcmp.lt.s32.totalorder %v2374, 0
    %vm2591 = vcmp.lt.s32.totalorder %v2385, 0
    %vm2592 = vcmp.lt.s32.totalorder %v2396, 0
    %vm2593 = vcmp.lt.s32.totalorder %v2407, 0
    %vm2594 = vcmp.lt.s32.totalorder %v2418, 0
    %vm2595 = vcmp.lt.s32.totalorder %v2429, 0
    %vm2596 = vcmp.lt.s32.totalorder %v2440, 0
    %vm2597 = vcmp.lt.s32.totalorder %v2451, 0
    %vm2598 = vcmp.lt.s32.totalorder %v2462, 0
    %vm2599 = vcmp.lt.s32.totalorder %v2473, 0
    %vm2600 = vcmp.lt.s32.totalorder %v2484, 0
    %vm2601 = vcmp.lt.s32.totalorder %v2495, 0
    %vm2602 = vcmp.lt.s32.totalorder %v2506, 0
    %vm2603 = vcmp.lt.s32.totalorder %v2517, 0
    %vm2604 = vcmp.lt.s32.totalorder %v2528, 0
    %vm2605 = vcmp.lt.s32.totalorder %v2539, 0
    %vm2606 = vcmp.lt.s32.totalorder %v2550, 0
    %vm2607 = vmand %vm2579, %vm2551
    %vm2608 = vmand %vm2580, %vm2552
    %vm2609 = vmand %vm2581, %vm2553
    %vm2610 = vmand %vm2582, %vm2554
    %vm2611 = vmand %vm2583, %vm2555
    %vm2612 = vmand %vm2584, %vm2556
    %vm2613 = vmand %vm2585, %vm2557
    %vm2614 = vmand %vm2586, %vm2558
    %vm2615 = vmand %vm2587, %vm2559
    %vm2616 = vmand %vm2588, %vm2560
    %vm2617 = vmand %vm2589, %vm2561
    %vm2618 = vmand %vm2590, %vm2562
    %vm2619 = vmand %vm2591, %vm2563
    %vm2620 = vmand %vm2592, %vm2564
    %vm2621 = vmand %vm2593, %vm2565
    %vm2622 = vmand %vm2594, %vm2566
    %vm2623 = vmand %vm2595, %vm2567
    %vm2624 = vmand %vm2596, %vm2568
    %vm2625 = vmand %vm2597, %vm2569
    %vm2626 = vmand %vm2598, %vm2570
    %vm2627 = vmand %vm2599, %vm2571
    %vm2628 = vmand %vm2600, %vm2572
    %vm2629 = vmand %vm2601, %vm2573
    %vm2630 = vmand %vm2602, %vm2574
    %vm2631 = vmand %vm2603, %vm2575
    %vm2632 = vmand %vm2604, %vm2576
    %vm2633 = vmand %vm2605, %vm2577
    %vm2634 = vmand %vm2606, %vm2578
    %v2635 = vadd.s32 %v2253, 10
    %v2636 = vadd.s32 %v2264, 10
    %v2637 = vadd.s32 %v2275, 10
    %v2638 = vadd.s32 %v2286, 10
    %v2639 = vadd.s32 %v2297, 10
    %v2640 = vadd.s32 %v2308, 10
    %v2641 = vadd.s32 %v2319, 10
    %v2642 = vadd.s32 %v2330, 10
    %v2643 = vadd.s32 %v2341, 10
    %v2644 = vadd.s32 %v2352, 10
    %v2645 = vadd.s32 %v2363, 10
    %v2646 = vadd.s32 %v2374, 10
    %v2647 = vadd.s32 %v2385, 10
    %v2648 = vadd.s32 %v2396, 10
    %v2649 = vadd.s32 %v2407, 10
    %v2650 = vadd.s32 %v2418, 10
    %v2651 = vadd.s32 %v2429, 10
    %v2652 = vadd.s32 %v2440, 10
    %v2653 = vadd.s32 %v2451, 10
    %v2654 = vadd.s32 %v2462, 10
    %v2655 = vadd.s32 %v2473, 10
    %v2656 = vadd.s32 %v2484, 10
    %v2657 = vadd.s32 %v2495, 10
    %v2658 = vadd.s32 %v2506, 10
    %v2659 = vadd.s32 %v2517, 10
    %v2660 = vadd.s32 %v2528, 10
    %v2661 = vadd.s32 %v2539, 10
    %v2662 = vadd.s32 %v2550, 10
    %v2663 = vsel %vm2607, %v2635, %v2253
    %v2664 = vsel %vm2608, %v2636, %v2264
    %v2665 = vsel %vm2609, %v2637, %v2275
    %v2666 = vsel %vm2610, %v2638, %v2286
    %v2667 = vsel %vm2611, %v2639, %v2297
    %v2668 = vsel %vm2612, %v2640, %v2308
    %v2669 = vsel %vm2613, %v2641, %v2319
    %v2670 = vsel %vm2614, %v2642, %v2330
    %v2671 = vsel %vm2615, %v2643, %v2341
    %v2672 = vsel %vm2616, %v2644, %v2352
    %v2673 = vsel %vm2617, %v2645, %v2363
    %v2674 = vsel %vm2618, %v2646, %v2374
    %v2675 = vsel %vm2619, %v2647, %v2385
    %v2676 = vsel %vm2620, %v2648, %v2396
    %v2677 = vsel %vm2621, %v2649, %v2407
    %v2678 = vsel %vm2622, %v2650, %v2418
    %v2679 = vsel %vm2623, %v2651, %v2429
    %v2680 = vsel %vm2624, %v2652, %v2440
    %v2681 = vsel %vm2625, %v2653, %v2451
    %v2682 = vsel %vm2626, %v2654, %v2462
    %v2683 = vsel %vm2627, %v2655, %v2473
    %v2684 = vsel %vm2628, %v2656, %v2484
    %v2685 = vsel %vm2629, %v2657, %v2495
    %v2686 = vsel %vm2630, %v2658, %v2506
    %v2687 = vsel %vm2631, %v2659, %v2517
    %v2688 = vsel %vm2632, %v2660, %v2528
    %v2689 = vsel %vm2633, %v2661, %v2539
    %v2690 = vsel %vm2634, %v2662, %v2550
    %vm2691 = vcmp.lt.s32.totalorder %v2663, 8
    %vm2692 = vcmp.lt.s32.totalorder %v2664, 8
    %vm2693 = vcmp.lt.s32.totalorder %v2665, 8
    %vm2694 = vcmp.lt.s32.totalorder %v2666, 8
    %vm2695 = vcmp.lt.s32.totalorder %v2667, 8
    %vm2696 = vcmp.lt.s32.totalorder %v2668, 8
    %vm2697 = vcmp.lt.s32.totalorder %v2669, 8
    %vm2698 = vcmp.lt.s32.totalorder %v2670, 8
    %vm2699 = vcmp.lt.s32.totalorder %v2671, 8
    %vm2700 = vcmp.lt.s32.totalorder %v2672, 8
    %vm2701 = vcmp.lt.s32.totalorder %v2673, 8
    %vm2702 = vcmp.lt.s32.totalorder %v2674, 8
    %vm2703 = vcmp.lt.s32.totalorder %v2675, 8
    %vm2704 = vcmp.lt.s32.totalorder %v2676, 8
    %vm2705 = vcmp.lt.s32.totalorder %v2677, 8
    %vm2706 = vcmp.lt.s32.totalorder %v2678, 8
    %vm2707 = vcmp.lt.s32.totalorder %v2679, 8
    %vm2708 = vcmp.lt.s32.totalorder %v2680, 8
    %vm2709 = vcmp.lt.s32.totalorder %v2681, 8
    %vm2710 = vcmp.lt.s32.totalorder %v2682, 8
    %vm2711 = vcmp.lt.s32.totalorder %v2683, 8
    %vm2712 = vcmp.lt.s32.totalorder %v2684, 8
    %vm2713 = vcmp.lt.s32.totalorder %v2685, 8
    %vm2714 = vcmp.lt.s32.totalorder %v2686, 8
    %vm2715 = vcmp.lt.s32.totalorder %v2687, 8
    %vm2716 = vcmp.lt.s32.totalorder %v2688, 8
    %vm2717 = vcmp.lt.s32.totalorder %v2689, 8
    %vm2718 = vcmp.lt.s32.totalorder %v2690, 8
    %vm2719 = vmand %vm2215, %vm2691
    %vm2720 = vmand %vm2216, %vm2692
    %vm2721 = vmand %vm2217, %vm2693
    %vm2722 = vmand %vm2218, %vm2694
    %vm2723 = vmand %vm2219, %vm2695
    %vm2724 = vmand %vm2220, %vm2696
    %vm2725 = vmand %vm2221, %vm2697
    %vm2726 = vmand %vm2222, %vm2698
    %vm2727 = vmand %vm2223, %vm2699
    %vm2728 = vmand %vm2224, %vm2700
    %vm2729 = vmand %vm2225, %vm2701
    %vm2730 = vmand %vm2226, %vm2702
    %vm2731 = vmand %vm2227, %vm2703
    %vm2732 = vmand %vm2228, %vm2704
    %vm2733 = vmand %vm2229, %vm2705
    %vm2734 = vmand %vm2230, %vm2706
    %vm2735 = vmand %vm2231, %vm2707
    %vm2736 = vmand %vm2232, %vm2708
    %vm2737 = vmand %vm2233, %vm2709
    %vm2738 = vmand %vm2234, %vm2710
    %vm2739 = vmand %vm2235, %vm2711
    %vm2740 = vmand %vm2236, %vm2712
    %vm2741 = vmand %vm2237, %vm2713
    %vm2742 = vmand %vm2238, %vm2714
    %vm2743 = vmand %vm2239, %vm2715
    %vm2744 = vmand %vm2240, %vm2716
    %vm2745 = vmand %vm2241, %vm2717
    %vm2746 = vmand %vm2242, %vm2718
    %v2747 = vsel %vm2719, 1, 0
    %v2748 = vsel %vm2720, 1, 0
    %v2749 = vsel %vm2721, 1, 0
    %v2750 = vsel %vm2722, 1, 0
    %v2751 = vsel %vm2723, 1, 0
    %v2752 = vsel %vm2724, 1, 0
    %v2753 = vsel %vm2725, 1, 0
    %v2754 = vsel %vm2726, 1, 0
    %v2755 = vsel %vm2727, 1, 0
    %v2756 = vsel %vm2728, 1, 0
    %v2757 = vsel %vm2729, 1, 0
    %v2758 = vsel %vm2730, 1, 0
    %v2759 = vsel %vm2731, 1, 0
    %v2760 = vsel %vm2732, 1, 0
    %v2761 = vsel %vm2733, 1, 0
    %v2762 = vsel %vm2734, 1, 0
    %v2763 = vsel %vm2735, 1, 0
    %v2764 = vsel %vm2736, 1, 0
    %v2765 = vsel %vm2737, 1, 0
    %v2766 = vsel %vm2738, 1, 0
    %v2767 = vsel %vm2739, 1, 0
    %v2768 = vsel %vm2740, 1, 0
    %v2769 = vsel %vm2741, 1, 0
    %v2770 = vsel %vm2742, 1, 0
    %v2771 = vsel %vm2743, 1, 0
    %v2772 = vsel %vm2744, 1, 0
    %v2773 = vsel %vm2745, 1, 0
    %v2774 = vsel %vm2746, 1, 0
    %vm2775 = vcmp.eq.s32.totalorder %v2747, 1
    %vm2776 = vcmp.eq.s32.totalorder %v2748, 1
    %vm2777 = vcmp.eq.s32.totalorder %v2749, 1
    %vm2778 = vcmp.eq.s32.totalorder %v2750, 1
    %vm2779 = vcmp.eq.s32.totalorder %v2751, 1
    %vm2780 = vcmp.eq.s32.totalorder %v2752, 1
    %vm2781 = vcmp.eq.s32.totalorder %v2753, 1
    %vm2782 = vcmp.eq.s32.totalorder %v2754, 1
    %vm2783 = vcmp.eq.s32.totalorder %v2755, 1
    %vm2784 = vcmp.eq.s32.totalorder %v2756, 1
    %vm2785 = vcmp.eq.s32.totalorder %v2757, 1
    %vm2786 = vcmp.eq.s32.totalorder %v2758, 1
    %vm2787 = vcmp.eq.s32.totalorder %v2759, 1
    %vm2788 = vcmp.eq.s32.totalorder %v2760, 1
    %vm2789 = vcmp.eq.s32.totalorder %v2761, 1
    %vm2790 = vcmp.eq.s32.totalorder %v2762, 1
    %vm2791 = vcmp.eq.s32.totalorder %v2763, 1
    %vm2792 = vcmp.eq.s32.totalorder %v2764, 1
    %vm2793 = vcmp.eq.s32.totalorder %v2765, 1
    %vm2794 = vcmp.eq.s32.totalorder %v2766, 1
    %vm2795 = vcmp.eq.s32.totalorder %v2767, 1
    %vm2796 = vcmp.eq.s32.totalorder %v2768, 1
    %vm2797 = vcmp.eq.s32.totalorder %v2769, 1
    %vm2798 = vcmp.eq.s32.totalorder %v2770, 1
    %vm2799 = vcmp.eq.s32.totalorder %v2771, 1
    %vm2800 = vcmp.eq.s32.totalorder %v2772, 1
    %vm2801 = vcmp.eq.s32.totalorder %v2773, 1
    %vm2802 = vcmp.eq.s32.totalorder %v2774, 1
    %v2803 = vsel %vm2775, %v1626, 0.0
    %v2804 = vsel %vm2776, %v1627, 0.0
    %v2805 = vsel %vm2777, %v1628, 0.0
    %v2806 = vsel %vm2778, %v1629, 0.0
    %v2807 = vsel %vm2779, %v1630, 0.0
    %v2808 = vsel %vm2780, %v1631, 0.0
    %v2809 = vsel %vm2781, %v1632, 0.0
    %v2810 = vsel %vm2782, %v1633, 0.0
    %v2811 = vsel %vm2783, %v1634, 0.0
    %v2812 = vsel %vm2784, %v1635, 0.0
    %v2813 = vsel %vm2785, %v1636, 0.0
    %v2814 = vsel %vm2786, %v1637, 0.0
    %v2815 = vsel %vm2787, %v1638, 0.0
    %v2816 = vsel %vm2788, %v1639, 0.0
    %v2817 = vsel %vm2789, %v1640, 0.0
    %v2818 = vsel %vm2790, %v1641, 0.0
    %v2819 = vsel %vm2791, %v1642, 0.0
    %v2820 = vsel %vm2792, %v1643, 0.0
    %v2821 = vsel %vm2793, %v1644, 0.0
    %v2822 = vsel %vm2794, %v1645, 0.0
    %v2823 = vsel %vm2795, %v1646, 0.0
    %v2824 = vsel %vm2796, %v1647, 0.0
    %v2825 = vsel %vm2797, %v1648, 0.0
    %v2826 = vsel %vm2798, %v1649, 0.0
    %v2827 = vsel %vm2799, %v1650, 0.0
    %v2828 = vsel %vm2800, %v1651, 0.0
    %v2829 = vsel %vm2801, %v1652, 0.0
    %v2830 = vsel %vm2802, %v1653, 0.0
    %2831 = vst.msk [vmem:[#allocation2] sm:$0xff] %vm1291, 0.0
    %2832 = vst.msk [vmem:[#allocation2 + $0x8] sm:$0xff] %vm1291, 0.0
    %2833 = vst.msk [vmem:[#allocation2 + $0x10] sm:$0xff] %vm1291, 0.0
    %2834 = vst.msk [vmem:[#allocation2 + $0x18] sm:$0xff] %vm1291, 0.0
    %2835 = vst.msk [vmem:[#allocation2 + $0x20] sm:$0xff] %vm1291, 0.0
    %2836 = vst.msk [vmem:[#allocation2 + $0x28] sm:$0xff] %vm1291, 0.0
    %2837 = vst.msk [vmem:[#allocation2 + $0x30] sm:$0xff] %vm1291, 0.0
    %2838 = vst.msk [vmem:[#allocation2 + $0x38] sm:$0xff] %vm1291, 0.0
    %2839 = vst.msk [vmem:[#allocation2 + $0x40] sm:$0xff] %vm1291, 0.0
    %2840 = vst.msk [vmem:[#allocation2 + $0x48] sm:$0xff] %vm1291, 0.0
    %2841 = vst.msk [vmem:[#allocation2 + $0x50] sm:$0xff] %vm1291, 0.0
    %2842 = vst.msk [vmem:[#allocation2 + $0x58] sm:$0xff] %vm1291, 0.0
    %2843 = vst.msk [vmem:[#allocation2 + $0x60] sm:$0xff] %vm1291, 0.0
    %2844 = vst.msk [vmem:[#allocation2 + $0x68] sm:$0xff] %vm1291, 0.0
    %2845 = vst.msk [vmem:[#allocation2 + $0x70] sm:$0xff] %vm1291, 0.0
    %2846 = vst.msk [vmem:[#allocation2 + $0x78] sm:$0xff] %vm1291, 0.0
    %2847 = vst.msk [vmem:[#allocation2 + $0x80] sm:$0xff] %vm1291, 0.0
    %2848 = vst.msk [vmem:[#allocation2 + $0x88] sm:$0xff] %vm1291, 0.0
    %2849 = vst.msk [vmem:[#allocation2 + $0x90] sm:$0xff] %vm1291, 0.0
    %2850 = vst.msk [vmem:[#allocation2 + $0x98] sm:$0xff] %vm1291, 0.0
    %2851 = vst.msk [vmem:[#allocation2 + $0xa0] sm:$0xff] %vm1291, 0.0
    %2852 = vst.msk [vmem:[#allocation2 + $0xa8] sm:$0xff] %vm1291, 0.0
    %2853 = vst.msk [vmem:[#allocation2 + $0xb0] sm:$0xff] %vm1291, 0.0
    %2854 = vst.msk [vmem:[#allocation2 + $0xb8] sm:$0xff] %vm1291, 0.0
    %2855 = vst.msk [vmem:[#allocation2 + $0xc0] sm:$0xff] %vm1291, 0.0
    %2856 = vst.msk [vmem:[#allocation2 + $0xc8] sm:$0xff] %vm1291, 0.0
    %2857 = vst.msk [vmem:[#allocation2 + $0xd0] sm:$0xff] %vm1291, 0.0
    %2858 = vst.msk [vmem:[#allocation2 + $0xd8] sm:$0xff] %vm1291, 0.0
    %2859 = vst.msk [vmem:[#allocation2 + $0xe0] sm:$0xff] %vm1291, 0.0
    %2860 = vst.msk [vmem:[#allocation2 + $0xe8] sm:$0xff] %vm1291, 0.0
    %2861 = vst.msk [vmem:[#allocation2 + $0xf0] sm:$0xff] %vm1291, 0.0
    %vm2862 = vcmask 254976
    %2863 = vst.msk [vmem:[#allocation2 + $0xf8] sm:$0x3] %vm2862, 0.0
    %2864 = vst.msk [vmem:[#allocation2 + $0xb] sm:$0xff] %vm1291, %v2803
    %2865 = vst.msk [vmem:[#allocation2 + $0x13] sm:$0xff] %vm1291, %v2804
    %2866 = vst.msk [vmem:[#allocation2 + $0x1b] sm:$0xff] %vm1291, %v2805
    %2867 = vst.msk [vmem:[#allocation2 + $0x23] sm:$0xff] %vm1291, %v2806
    %2868 = vst.msk [vmem:[#allocation2 + $0x2b] sm:$0xff] %vm1291, %v2807
    %2869 = vst.msk [vmem:[#allocation2 + $0x33] sm:$0xff] %vm1291, %v2808
    %2870 = vst.msk [vmem:[#allocation2 + $0x3b] sm:$0xff] %vm1291, %v2809
    %2871 = vst.msk [vmem:[#allocation2 + $0x43] sm:$0xff] %vm1291, %v2810
    %2872 = vst.msk [vmem:[#allocation2 + $0x4b] sm:$0xff] %vm1291, %v2811
    %2873 = vst.msk [vmem:[#allocation2 + $0x53] sm:$0xff] %vm1291, %v2812
    %2874 = vst.msk [vmem:[#allocation2 + $0x5b] sm:$0xff] %vm1291, %v2813
    %2875 = vst.msk [vmem:[#allocation2 + $0x63] sm:$0xff] %vm1291, %v2814
    %2876 = vst.msk [vmem:[#allocation2 + $0x6b] sm:$0xff] %vm1291, %v2815
    %2877 = vst.msk [vmem:[#allocation2 + $0x73] sm:$0xff] %vm1291, %v2816
    %2878 = vst.msk [vmem:[#allocation2 + $0x7b] sm:$0xff] %vm1291, %v2817
    %2879 = vst.msk [vmem:[#allocation2 + $0x83] sm:$0xff] %vm1291, %v2818
    %2880 = vst.msk [vmem:[#allocation2 + $0x8b] sm:$0xff] %vm1291, %v2819
    %2881 = vst.msk [vmem:[#allocation2 + $0x93] sm:$0xff] %vm1291, %v2820
    %2882 = vst.msk [vmem:[#allocation2 + $0x9b] sm:$0xff] %vm1291, %v2821
    %2883 = vst.msk [vmem:[#allocation2 + $0xa3] sm:$0xff] %vm1291, %v2822
    %2884 = vst.msk [vmem:[#allocation2 + $0xab] sm:$0xff] %vm1291, %v2823
    %2885 = vst.msk [vmem:[#allocation2 + $0xb3] sm:$0xff] %vm1291, %v2824
    %2886 = vst.msk [vmem:[#allocation2 + $0xbb] sm:$0xff] %vm1291, %v2825
    %2887 = vst.msk [vmem:[#allocation2 + $0xc3] sm:$0xff] %vm1291, %v2826
    %2888 = vst.msk [vmem:[#allocation2 + $0xcb] sm:$0xff] %vm1291, %v2827
    %2889 = vst.msk [vmem:[#allocation2 + $0xd3] sm:$0xff] %vm1291, %v2828
    %2890 = vst.msk [vmem:[#allocation2 + $0xdb] sm:$0xff] %vm1291, %v2829
    %vm2891 = vcmask 257024
    %2892 = vst.msk [vmem:[#allocation2 + $0xe3] sm:$0xf] %vm2891, %v2830
    %v2893 = vld [vmem:[#allocation2] sm:$0xff]
    %v2894 = vld [vmem:[#allocation2 + $0x8] sm:$0xff]
    %v2895 = vld [vmem:[#allocation2 + $0x10] sm:$0xff]
    %v2896 = vld [vmem:[#allocation2 + $0x18] sm:$0xff]
    %v2897 = vld [vmem:[#allocation2 + $0x20] sm:$0xff]
    %v2898 = vld [vmem:[#allocation2 + $0x28] sm:$0xff]
    %v2899 = vld [vmem:[#allocation2 + $0x30] sm:$0xff]
    %v2900 = vld [vmem:[#allocation2 + $0x38] sm:$0xff]
    %v2901 = vld [vmem:[#allocation2 + $0x40] sm:$0xff]
    %v2902 = vld [vmem:[#allocation2 + $0x48] sm:$0xff]
    %v2903 = vld [vmem:[#allocation2 + $0x50] sm:$0xff]
    %v2904 = vld [vmem:[#allocation2 + $0x58] sm:$0xff]
    %v2905 = vld [vmem:[#allocation2 + $0x60] sm:$0xff]
    %v2906 = vld [vmem:[#allocation2 + $0x68] sm:$0xff]
    %v2907 = vld [vmem:[#allocation2 + $0x70] sm:$0xff]
    %v2908 = vld [vmem:[#allocation2 + $0x78] sm:$0xff]
    %v2909 = vld [vmem:[#allocation2 + $0x80] sm:$0xff]
    %v2910 = vld [vmem:[#allocation2 + $0x88] sm:$0xff]
    %v2911 = vld [vmem:[#allocation2 + $0x90] sm:$0xff]
    %v2912 = vld [vmem:[#allocation2 + $0x98] sm:$0xff]
    %v2913 = vld [vmem:[#allocation2 + $0xa0] sm:$0xff]
    %v2914 = vld [vmem:[#allocation2 + $0xa8] sm:$0xff]
    %v2915 = vld [vmem:[#allocation2 + $0xb0] sm:$0xff]
    %v2916 = vld [vmem:[#allocation2 + $0xb8] sm:$0xff]
    %v2917 = vld [vmem:[#allocation2 + $0xc0] sm:$0xff]
    %v2918 = vld [vmem:[#allocation2 + $0xc8] sm:$0xff]
    %v2919 = vld [vmem:[#allocation2 + $0xd0] sm:$0xff]
    %v2920 = vld [vmem:[#allocation2 + $0xd8] sm:$0xf]
    %v2921 = vld [vmem:[#allocation2 + $0x1] sm:$0xff]
    %v2922 = vld [vmem:[#allocation2 + $0x9] sm:$0xff]
    %v2923 = vld [vmem:[#allocation2 + $0x11] sm:$0xff]
    %v2924 = vld [vmem:[#allocation2 + $0x19] sm:$0xff]
    %v2925 = vld [vmem:[#allocation2 + $0x21] sm:$0xff]
    %v2926 = vld [vmem:[#allocation2 + $0x29] sm:$0xff]
    %v2927 = vld [vmem:[#allocation2 + $0x31] sm:$0xff]
    %v2928 = vld [vmem:[#allocation2 + $0x39] sm:$0xff]
    %v2929 = vld [vmem:[#allocation2 + $0x41] sm:$0xff]
    %v2930 = vld [vmem:[#allocation2 + $0x49] sm:$0xff]
    %v2931 = vld [vmem:[#allocation2 + $0x51] sm:$0xff]
    %v2932 = vld [vmem:[#allocation2 + $0x59] sm:$0xff]
    %v2933 = vld [vmem:[#allocation2 + $0x61] sm:$0xff]
    %v2934 = vld [vmem:[#allocation2 + $0x69] sm:$0xff]
    %v2935 = vld [vmem:[#allocation2 + $0x71] sm:$0xff]
    %v2936 = vld [vmem:[#allocation2 + $0x79] sm:$0xff]
    %v2937 = vld [vmem:[#allocation2 + $0x81] sm:$0xff]
    %v2938 = vld [vmem:[#allocation2 + $0x89] sm:$0xff]
    %v2939 = vld [vmem:[#allocation2 + $0x91] sm:$0xff]
    %v2940 = vld [vmem:[#allocation2 + $0x99] sm:$0xff]
    %v2941 = vld [vmem:[#allocation2 + $0xa1] sm:$0xff]
    %v2942 = vld [vmem:[#allocation2 + $0xa9] sm:$0xff]
    %v2943 = vld [vmem:[#allocation2 + $0xb1] sm:$0xff]
    %v2944 = vld [vmem:[#allocation2 + $0xb9] sm:$0xff]
    %v2945 = vld [vmem:[#allocation2 + $0xc1] sm:$0xff]
    %v2946 = vld [vmem:[#allocation2 + $0xc9] sm:$0xff]
    %v2947 = vld [vmem:[#allocation2 + $0xd1] sm:$0xff]
    %v2948 = vld [vmem:[#allocation2 + $0xd9] sm:$0xf]
    %v2949 = vld [vmem:[#allocation2 + $0x2] sm:$0xff]
    %v2950 = vld [vmem:[#allocation2 + $0xa] sm:$0xff]
    %v2951 = vld [vmem:[#allocation2 + $0x12] sm:$0xff]
    %v2952 = vld [vmem:[#allocation2 + $0x1a] sm:$0xff]
    %v2953 = vld [vmem:[#allocation2 + $0x22] sm:$0xff]
    %v2954 = vld [vmem:[#allocation2 + $0x2a] sm:$0xff]
    %v2955 = vld [vmem:[#allocation2 + $0x32] sm:$0xff]
    %v2956 = vld [vmem:[#allocation2 + $0x3a] sm:$0xff]
    %v2957 = vld [vmem:[#allocation2 + $0x42] sm:$0xff]
    %v2958 = vld [vmem:[#allocation2 + $0x4a] sm:$0xff]
    %v2959 = vld [vmem:[#allocation2 + $0x52] sm:$0xff]
    %v2960 = vld [vmem:[#allocation2 + $0x5a] sm:$0xff]
    %v2961 = vld [vmem:[#allocation2 + $0x62] sm:$0xff]
    %v2962 = vld [vmem:[#allocation2 + $0x6a] sm:$0xff]
    %v2963 = vld [vmem:[#allocation2 + $0x72] sm:$0xff]
    %v2964 = vld [vmem:[#allocation2 + $0x7a] sm:$0xff]
    %v2965 = vld [vmem:[#allocation2 + $0x82] sm:$0xff]
    %v2966 = vld [vmem:[#allocation2 + $0x8a] sm:$0xff]
    %v2967 = vld [vmem:[#allocation2 + $0x92] sm:$0xff]
    %v2968 = vld [vmem:[#allocation2 + $0x9a] sm:$0xff]
    %v2969 = vld [vmem:[#allocation2 + $0xa2] sm:$0xff]
    %v2970 = vld [vmem:[#allocation2 + $0xaa] sm:$0xff]
    %v2971 = vld [vmem:[#allocation2 + $0xb2] sm:$0xff]
    %v2972 = vld [vmem:[#allocation2 + $0xba] sm:$0xff]
    %v2973 = vld [vmem:[#allocation2 + $0xc2] sm:$0xff]
    %v2974 = vld [vmem:[#allocation2 + $0xca] sm:$0xff]
    %v2975 = vld [vmem:[#allocation2 + $0xd2] sm:$0xff]
    %v2976 = vld [vmem:[#allocation2 + $0xda] sm:$0xf]
    %v2977 = vld [vmem:[#allocation2 + $0xda] sm:$0xff]
    %v2978 = vld [vmem:[#allocation2 + $0xe2] sm:$0xf]
    %v2979 = vld [vmem:[#allocation2 + $0xb] sm:$0xff]
    %v2980 = vld [vmem:[#allocation2 + $0x13] sm:$0xff]
    %v2981 = vld [vmem:[#allocation2 + $0x1b] sm:$0xff]
    %v2982 = vld [vmem:[#allocation2 + $0x23] sm:$0xff]
    %v2983 = vld [vmem:[#allocation2 + $0x2b] sm:$0xff]
    %v2984 = vld [vmem:[#allocation2 + $0x33] sm:$0xff]
    %v2985 = vld [vmem:[#allocation2 + $0x3b] sm:$0xff]
    %v2986 = vld [vmem:[#allocation2 + $0x43] sm:$0xff]
    %v2987 = vld [vmem:[#allocation2 + $0x4b] sm:$0xff]
    %v2988 = vld [vmem:[#allocation2 + $0x53] sm:$0xff]
    %v2989 = vld [vmem:[#allocation2 + $0x5b] sm:$0xff]
    %v2990 = vld [vmem:[#allocation2 + $0x63] sm:$0xff]
    %v2991 = vld [vmem:[#allocation2 + $0x6b] sm:$0xff]
    %v2992 = vld [vmem:[#allocation2 + $0x73] sm:$0xff]
    %v2993 = vld [vmem:[#allocation2 + $0x7b] sm:$0xff]
    %v2994 = vld [vmem:[#allocation2 + $0x83] sm:$0xff]
    %v2995 = vld [vmem:[#allocation2 + $0x8b] sm:$0xff]
    %v2996 = vld [vmem:[#allocation2 + $0x93] sm:$0xff]
    %v2997 = vld [vmem:[#allocation2 + $0x9b] sm:$0xff]
    %v2998 = vld [vmem:[#allocation2 + $0xa3] sm:$0xff]
    %v2999 = vld [vmem:[#allocation2 + $0xab] sm:$0xff]
    %v3000 = vld [vmem:[#allocation2 + $0xb3] sm:$0xff]
    %v3001 = vld [vmem:[#allocation2 + $0xbb] sm:$0xff]
    %v3002 = vld [vmem:[#allocation2 + $0xc3] sm:$0xff]
    %v3003 = vld [vmem:[#allocation2 + $0xcb] sm:$0xff]
    %v3004 = vld [vmem:[#allocation2 + $0xd3] sm:$0xff]
    %v3005 = vld [vmem:[#allocation2 + $0xdb] sm:$0xff]
    %v3006 = vld [vmem:[#allocation2 + $0xe3] sm:$0xf]
    %v3007 = vld [vmem:[#allocation2 + $0xc] sm:$0xff]
    %v3008 = vld [vmem:[#allocation2 + $0x14] sm:$0xff]
    %v3009 = vld [vmem:[#allocation2 + $0x1c] sm:$0xff]
    %v3010 = vld [vmem:[#allocation2 + $0x24] sm:$0xff]
    %v3011 = vld [vmem:[#allocation2 + $0x2c] sm:$0xff]
    %v3012 = vld [vmem:[#allocation2 + $0x34] sm:$0xff]
    %v3013 = vld [vmem:[#allocation2 + $0x3c] sm:$0xff]
    %v3014 = vld [vmem:[#allocation2 + $0x44] sm:$0xff]
    %v3015 = vld [vmem:[#allocation2 + $0x4c] sm:$0xff]
    %v3016 = vld [vmem:[#allocation2 + $0x54] sm:$0xff]
    %v3017 = vld [vmem:[#allocation2 + $0x5c] sm:$0xff]
    %v3018 = vld [vmem:[#allocation2 + $0x64] sm:$0xff]
    %v3019 = vld [vmem:[#allocation2 + $0x6c] sm:$0xff]
    %v3020 = vld [vmem:[#allocation2 + $0x74] sm:$0xff]
    %v3021 = vld [vmem:[#allocation2 + $0x7c] sm:$0xff]
    %v3022 = vld [vmem:[#allocation2 + $0x84] sm:$0xff]
    %v3023 = vld [vmem:[#allocation2 + $0x8c] sm:$0xff]
    %v3024 = vld [vmem:[#allocation2 + $0x94] sm:$0xff]
    %v3025 = vld [vmem:[#allocation2 + $0x9c] sm:$0xff]
    %v3026 = vld [vmem:[#allocation2 + $0xa4] sm:$0xff]
    %v3027 = vld [vmem:[#allocation2 + $0xac] sm:$0xff]
    %v3028 = vld [vmem:[#allocation2 + $0xb4] sm:$0xff]
    %v3029 = vld [vmem:[#allocation2 + $0xbc] sm:$0xff]
    %v3030 = vld [vmem:[#allocation2 + $0xc4] sm:$0xff]
    %v3031 = vld [vmem:[#allocation2 + $0xcc] sm:$0xff]
    %v3032 = vld [vmem:[#allocation2 + $0xd4] sm:$0xff]
    %v3033 = vld [vmem:[#allocation2 + $0xdc] sm:$0xff]
    %v3034 = vld [vmem:[#allocation2 + $0xe4] sm:$0xf]
    %v3035 = vld [vmem:[#allocation2 + $0xe4] sm:$0xff]
    %v3036 = vld [vmem:[#allocation2 + $0xec] sm:$0xf]
    %v3037 = vld [vmem:[#allocation2 + $0x15] sm:$0xff]
    %v3038 = vld [vmem:[#allocation2 + $0x1d] sm:$0xff]
    %v3039 = vld [vmem:[#allocation2 + $0x25] sm:$0xff]
    %v3040 = vld [vmem:[#allocation2 + $0x2d] sm:$0xff]
    %v3041 = vld [vmem:[#allocation2 + $0x35] sm:$0xff]
    %v3042 = vld [vmem:[#allocation2 + $0x3d] sm:$0xff]
    %v3043 = vld [vmem:[#allocation2 + $0x45] sm:$0xff]
    %v3044 = vld [vmem:[#allocation2 + $0x4d] sm:$0xff]
    %v3045 = vld [vmem:[#allocation2 + $0x55] sm:$0xff]
    %v3046 = vld [vmem:[#allocation2 + $0x5d] sm:$0xff]
    %v3047 = vld [vmem:[#allocation2 + $0x65] sm:$0xff]
    %v3048 = vld [vmem:[#allocation2 + $0x6d] sm:$0xff]
    %v3049 = vld [vmem:[#allocation2 + $0x75] sm:$0xff]
    %v3050 = vld [vmem:[#allocation2 + $0x7d] sm:$0xff]
    %v3051 = vld [vmem:[#allocation2 + $0x85] sm:$0xff]
    %v3052 = vld [vmem:[#allocation2 + $0x8d] sm:$0xff]
    %v3053 = vld [vmem:[#allocation2 + $0x95] sm:$0xff]
    %v3054 = vld [vmem:[#allocation2 + $0x9d] sm:$0xff]
    %v3055 = vld [vmem:[#allocation2 + $0xa5] sm:$0xff]
    %v3056 = vld [vmem:[#allocation2 + $0xad] sm:$0xff]
    %v3057 = vld [vmem:[#allocation2 + $0xb5] sm:$0xff]
    %v3058 = vld [vmem:[#allocation2 + $0xbd] sm:$0xff]
    %v3059 = vld [vmem:[#allocation2 + $0xc5] sm:$0xff]
    %v3060 = vld [vmem:[#allocation2 + $0xcd] sm:$0xff]
    %v3061 = vld [vmem:[#allocation2 + $0xd5] sm:$0xff]
    %v3062 = vld [vmem:[#allocation2 + $0xdd] sm:$0xff]
    %v3063 = vld [vmem:[#allocation2 + $0xe5] sm:$0xff]
    %v3064 = vld [vmem:[#allocation2 + $0xed] sm:$0xf]
    %v3065 = vld [vmem:[#allocation2 + $0x16] sm:$0xff]
    %v3066 = vld [vmem:[#allocation2 + $0x1e] sm:$0xff]
    %v3067 = vld [vmem:[#allocation2 + $0x26] sm:$0xff]
    %v3068 = vld [vmem:[#allocation2 + $0x2e] sm:$0xff]
    %v3069 = vld [vmem:[#allocation2 + $0x36] sm:$0xff]
    %v3070 = vld [vmem:[#allocation2 + $0x3e] sm:$0xff]
    %v3071 = vld [vmem:[#allocation2 + $0x46] sm:$0xff]
    %v3072 = vld [vmem:[#allocation2 + $0x4e] sm:$0xff]
    %v3073 = vld [vmem:[#allocation2 + $0x56] sm:$0xff]
    %v3074 = vld [vmem:[#allocation2 + $0x5e] sm:$0xff]
    %v3075 = vld [vmem:[#allocation2 + $0x66] sm:$0xff]
    %v3076 = vld [vmem:[#allocation2 + $0x6e] sm:$0xff]
    %v3077 = vld [vmem:[#allocation2 + $0x76] sm:$0xff]
    %v3078 = vld [vmem:[#allocation2 + $0x7e] sm:$0xff]
    %v3079 = vld [vmem:[#allocation2 + $0x86] sm:$0xff]
    %v3080 = vld [vmem:[#allocation2 + $0x8e] sm:$0xff]
    %v3081 = vld [vmem:[#allocation2 + $0x96] sm:$0xff]
    %v3082 = vld [vmem:[#allocation2 + $0x9e] sm:$0xff]
    %v3083 = vld [vmem:[#allocation2 + $0xa6] sm:$0xff]
    %v3084 = vld [vmem:[#allocation2 + $0xae] sm:$0xff]
    %v3085 = vld [vmem:[#allocation2 + $0xb6] sm:$0xff]
    %v3086 = vld [vmem:[#allocation2 + $0xbe] sm:$0xff]
    %v3087 = vld [vmem:[#allocation2 + $0xc6] sm:$0xff]
    %v3088 = vld [vmem:[#allocation2 + $0xce] sm:$0xff]
    %v3089 = vld [vmem:[#allocation2 + $0xd6] sm:$0xff]
    %v3090 = vld [vmem:[#allocation2 + $0xde] sm:$0xff]
    %v3091 = vld [vmem:[#allocation2 + $0xe6] sm:$0xff]
    %v3092 = vld [vmem:[#allocation2 + $0xee] sm:$0xf]
    %3121 = vrot.lane.b32.xlu0 %v2921, 32
    %v3122 = vpop.permute.xlu0 %3121
    %3123 = vrot.lane.b32.xlu0 %v2922, 32
    %v3124 = vpop.permute.xlu0 %3123
    %3125 = vrot.lane.b32.xlu0 %v2923, 32
    %v3126 = vpop.permute.xlu0 %3125
    %3127 = vrot.lane.b32.xlu0 %v2924, 32
    %v3128 = vpop.permute.xlu0 %3127
    %3129 = vrot.lane.b32.xlu0 %v2925, 32
    %v3130 = vpop.permute.xlu0 %3129
    %3131 = vrot.lane.b32.xlu0 %v2926, 32
    %v3132 = vpop.permute.xlu0 %3131
    %3133 = vrot.lane.b32.xlu0 %v2927, 32
    %v3134 = vpop.permute.xlu0 %3133
    %3135 = vrot.lane.b32.xlu0 %v2928, 32
    %v3136 = vpop.permute.xlu0 %3135
    %3137 = vrot.lane.b32.xlu0 %v2929, 32
    %v3138 = vpop.permute.xlu0 %3137
    %3139 = vrot.lane.b32.xlu0 %v2930, 32
    %v3140 = vpop.permute.xlu0 %3139
    %3141 = vrot.lane.b32.xlu0 %v2931, 32
    %v3142 = vpop.permute.xlu0 %3141
    %3143 = vrot.lane.b32.xlu0 %v2932, 32
    %v3144 = vpop.permute.xlu0 %3143
    %3145 = vrot.lane.b32.xlu0 %v2933, 32
    %v3146 = vpop.permute.xlu0 %3145
    %3147 = vrot.lane.b32.xlu0 %v2934, 32
    %v3148 = vpop.permute.xlu0 %3147
    %3149 = vrot.lane.b32.xlu0 %v2935, 32
    %v3150 = vpop.permute.xlu0 %3149
    %3151 = vrot.lane.b32.xlu0 %v2936, 32
    %v3152 = vpop.permute.xlu0 %3151
    %3153 = vrot.lane.b32.xlu0 %v2937, 32
    %v3154 = vpop.permute.xlu0 %3153
    %3155 = vrot.lane.b32.xlu0 %v2938, 32
    %v3156 = vpop.permute.xlu0 %3155
    %3157 = vrot.lane.b32.xlu0 %v2939, 32
    %v3158 = vpop.permute.xlu0 %3157
    %3159 = vrot.lane.b32.xlu0 %v2940, 32
    %v3160 = vpop.permute.xlu0 %3159
    %3161 = vrot.lane.b32.xlu0 %v2941, 32
    %v3162 = vpop.permute.xlu0 %3161
    %3163 = vrot.lane.b32.xlu0 %v2942, 32
    %v3164 = vpop.permute.xlu0 %3163
    %3165 = vrot.lane.b32.xlu0 %v2943, 32
    %v3166 = vpop.permute.xlu0 %3165
    %3167 = vrot.lane.b32.xlu0 %v2944, 32
    %v3168 = vpop.permute.xlu0 %3167
    %3169 = vrot.lane.b32.xlu0 %v2945, 32
    %v3170 = vpop.permute.xlu0 %3169
    %3171 = vrot.lane.b32.xlu0 %v2946, 32
    %v3172 = vpop.permute.xlu0 %3171
    %3173 = vrot.lane.b32.xlu0 %v2947, 32
    %v3174 = vpop.permute.xlu0 %3173
    %3175 = vrot.lane.b32.xlu0 %v2948, 32
    %v3176 = vpop.permute.xlu0 %3175
    %3233 = vrot.lane.b32.xlu0 %v2949, 64
    %v3234 = vpop.permute.xlu0 %3233
    %3235 = vrot.lane.b32.xlu0 %v2950, 64
    %v3236 = vpop.permute.xlu0 %3235
    %3237 = vrot.lane.b32.xlu0 %v2951, 64
    %v3238 = vpop.permute.xlu0 %3237
    %3239 = vrot.lane.b32.xlu0 %v2952, 64
    %v3240 = vpop.permute.xlu0 %3239
    %3241 = vrot.lane.b32.xlu0 %v2953, 64
    %v3242 = vpop.permute.xlu0 %3241
    %3243 = vrot.lane.b32.xlu0 %v2954, 64
    %v3244 = vpop.permute.xlu0 %3243
    %3245 = vrot.lane.b32.xlu0 %v2955, 64
    %v3246 = vpop.permute.xlu0 %3245
    %3247 = vrot.lane.b32.xlu0 %v2956, 64
    %v3248 = vpop.permute.xlu0 %3247
    %3249 = vrot.lane.b32.xlu0 %v2957, 64
    %v3250 = vpop.permute.xlu0 %3249
    %3251 = vrot.lane.b32.xlu0 %v2958, 64
    %v3252 = vpop.permute.xlu0 %3251
    %3253 = vrot.lane.b32.xlu0 %v2959, 64
    %v3254 = vpop.permute.xlu0 %3253
    %3255 = vrot.lane.b32.xlu0 %v2960, 64
    %v3256 = vpop.permute.xlu0 %3255
    %3257 = vrot.lane.b32.xlu0 %v2961, 64
    %v3258 = vpop.permute.xlu0 %3257
    %3259 = vrot.lane.b32.xlu0 %v2962, 64
    %v3260 = vpop.permute.xlu0 %3259
    %3261 = vrot.lane.b32.xlu0 %v2963, 64
    %v3262 = vpop.permute.xlu0 %3261
    %3263 = vrot.lane.b32.xlu0 %v2964, 64
    %v3264 = vpop.permute.xlu0 %3263
    %3265 = vrot.lane.b32.xlu0 %v2965, 64
    %v3266 = vpop.permute.xlu0 %3265
    %3267 = vrot.lane.b32.xlu0 %v2966, 64
    %v3268 = vpop.permute.xlu0 %3267
    %3269 = vrot.lane.b32.xlu0 %v2967, 64
    %v3270 = vpop.permute.xlu0 %3269
    %3271 = vrot.lane.b32.xlu0 %v2968, 64
    %v3272 = vpop.permute.xlu0 %3271
    %3273 = vrot.lane.b32.xlu0 %v2969, 64
    %v3274 = vpop.permute.xlu0 %3273
    %3275 = vrot.lane.b32.xlu0 %v2970, 64
    %v3276 = vpop.permute.xlu0 %3275
    %3277 = vrot.lane.b32.xlu0 %v2971, 64
    %v3278 = vpop.permute.xlu0 %3277
    %3279 = vrot.lane.b32.xlu0 %v2972, 64
    %v3280 = vpop.permute.xlu0 %3279
    %3281 = vrot.lane.b32.xlu0 %v2973, 64
    %v3282 = vpop.permute.xlu0 %3281
    %3283 = vrot.lane.b32.xlu0 %v2974, 64
    %v3284 = vpop.permute.xlu0 %3283
    %3285 = vrot.lane.b32.xlu0 %v2975, 64
    %v3286 = vpop.permute.xlu0 %3285
    %3287 = vrot.lane.b32.xlu0 %v2976, 64
    %v3288 = vpop.permute.xlu0 %3287
    %3319 = vrot.lane.b32.xlu0 %v2950, 96
    %v3320 = vpop.permute.xlu0 %3319
    %3321 = vrot.lane.b32.xlu0 %v2951, 96
    %v3322 = vpop.permute.xlu0 %3321
    %3323 = vrot.lane.b32.xlu0 %v2952, 96
    %v3324 = vpop.permute.xlu0 %3323
    %3325 = vrot.lane.b32.xlu0 %v2953, 96
    %v3326 = vpop.permute.xlu0 %3325
    %3327 = vrot.lane.b32.xlu0 %v2954, 96
    %v3328 = vpop.permute.xlu0 %3327
    %3329 = vrot.lane.b32.xlu0 %v2955, 96
    %v3330 = vpop.permute.xlu0 %3329
    %3331 = vrot.lane.b32.xlu0 %v2956, 96
    %v3332 = vpop.permute.xlu0 %3331
    %3333 = vrot.lane.b32.xlu0 %v2957, 96
    %v3334 = vpop.permute.xlu0 %3333
    %3335 = vrot.lane.b32.xlu0 %v2958, 96
    %v3336 = vpop.permute.xlu0 %3335
    %3337 = vrot.lane.b32.xlu0 %v2959, 96
    %v3338 = vpop.permute.xlu0 %3337
    %3339 = vrot.lane.b32.xlu0 %v2960, 96
    %v3340 = vpop.permute.xlu0 %3339
    %3341 = vrot.lane.b32.xlu0 %v2961, 96
    %v3342 = vpop.permute.xlu0 %3341
    %3343 = vrot.lane.b32.xlu0 %v2962, 96
    %v3344 = vpop.permute.xlu0 %3343
    %3345 = vrot.lane.b32.xlu0 %v2963, 96
    %v3346 = vpop.permute.xlu0 %3345
    %3347 = vrot.lane.b32.xlu0 %v2964, 96
    %v3348 = vpop.permute.xlu0 %3347
    %3349 = vrot.lane.b32.xlu0 %v2965, 96
    %v3350 = vpop.permute.xlu0 %3349
    %3351 = vrot.lane.b32.xlu0 %v2966, 96
    %v3352 = vpop.permute.xlu0 %3351
    %3353 = vrot.lane.b32.xlu0 %v2967, 96
    %v3354 = vpop.permute.xlu0 %3353
    %3355 = vrot.lane.b32.xlu0 %v2968, 96
    %v3356 = vpop.permute.xlu0 %3355
    %3357 = vrot.lane.b32.xlu0 %v2969, 96
    %v3358 = vpop.permute.xlu0 %3357
    %3359 = vrot.lane.b32.xlu0 %v2970, 96
    %v3360 = vpop.permute.xlu0 %3359
    %3361 = vrot.lane.b32.xlu0 %v2971, 96
    %v3362 = vpop.permute.xlu0 %3361
    %3363 = vrot.lane.b32.xlu0 %v2972, 96
    %v3364 = vpop.permute.xlu0 %3363
    %3365 = vrot.lane.b32.xlu0 %v2973, 96
    %v3366 = vpop.permute.xlu0 %3365
    %3367 = vrot.lane.b32.xlu0 %v2974, 96
    %v3368 = vpop.permute.xlu0 %3367
    %3369 = vrot.lane.b32.xlu0 %v2975, 96
    %v3370 = vpop.permute.xlu0 %3369
    %3371 = vrot.lane.b32.xlu0 %v2977, 96
    %v3372 = vpop.permute.xlu0 %3371
    %3373 = vrot.lane.b32.xlu0 %v2978, 96
    %v3374 = vpop.permute.xlu0 %3373
    %3431 = vrot.lane.b32.xlu0 %v3007, 32
    %v3432 = vpop.permute.xlu0 %3431
    %3433 = vrot.lane.b32.xlu0 %v3008, 32
    %v3434 = vpop.permute.xlu0 %3433
    %3435 = vrot.lane.b32.xlu0 %v3009, 32
    %v3436 = vpop.permute.xlu0 %3435
    %3437 = vrot.lane.b32.xlu0 %v3010, 32
    %v3438 = vpop.permute.xlu0 %3437
    %3439 = vrot.lane.b32.xlu0 %v3011, 32
    %v3440 = vpop.permute.xlu0 %3439
    %3441 = vrot.lane.b32.xlu0 %v3012, 32
    %v3442 = vpop.permute.xlu0 %3441
    %3443 = vrot.lane.b32.xlu0 %v3013, 32
    %v3444 = vpop.permute.xlu0 %3443
    %3445 = vrot.lane.b32.xlu0 %v3014, 32
    %v3446 = vpop.permute.xlu0 %3445
    %3447 = vrot.lane.b32.xlu0 %v3015, 32
    %v3448 = vpop.permute.xlu0 %3447
    %3449 = vrot.lane.b32.xlu0 %v3016, 32
    %v3450 = vpop.permute.xlu0 %3449
    %3451 = vrot.lane.b32.xlu0 %v3017, 32
    %v3452 = vpop.permute.xlu0 %3451
    %3453 = vrot.lane.b32.xlu0 %v3018, 32
    %v3454 = vpop.permute.xlu0 %3453
    %3455 = vrot.lane.b32.xlu0 %v3019, 32
    %v3456 = vpop.permute.xlu0 %3455
    %3457 = vrot.lane.b32.xlu0 %v3020, 32
    %v3458 = vpop.permute.xlu0 %3457
    %3459 = vrot.lane.b32.xlu0 %v3021, 32
    %v3460 = vpop.permute.xlu0 %3459
    %3461 = vrot.lane.b32.xlu0 %v3022, 32
    %v3462 = vpop.permute.xlu0 %3461
    %3463 = vrot.lane.b32.xlu0 %v3023, 32
    %v3464 = vpop.permute.xlu0 %3463
    %3465 = vrot.lane.b32.xlu0 %v3024, 32
    %v3466 = vpop.permute.xlu0 %3465
    %3467 = vrot.lane.b32.xlu0 %v3025, 32
    %v3468 = vpop.permute.xlu0 %3467
    %3469 = vrot.lane.b32.xlu0 %v3026, 32
    %v3470 = vpop.permute.xlu0 %3469
    %3471 = vrot.lane.b32.xlu0 %v3027, 32
    %v3472 = vpop.permute.xlu0 %3471
    %3473 = vrot.lane.b32.xlu0 %v3028, 32
    %v3474 = vpop.permute.xlu0 %3473
    %3475 = vrot.lane.b32.xlu0 %v3029, 32
    %v3476 = vpop.permute.xlu0 %3475
    %3477 = vrot.lane.b32.xlu0 %v3030, 32
    %v3478 = vpop.permute.xlu0 %3477
    %3479 = vrot.lane.b32.xlu0 %v3031, 32
    %v3480 = vpop.permute.xlu0 %3479
    %3481 = vrot.lane.b32.xlu0 %v3032, 32
    %v3482 = vpop.permute.xlu0 %3481
    %3483 = vrot.lane.b32.xlu0 %v3033, 32
    %v3484 = vpop.permute.xlu0 %3483
    %3485 = vrot.lane.b32.xlu0 %v3034, 32
    %v3486 = vpop.permute.xlu0 %3485
    %3517 = vrot.lane.b32.xlu0 %v3008, 64
    %v3518 = vpop.permute.xlu0 %3517
    %3519 = vrot.lane.b32.xlu0 %v3009, 64
    %v3520 = vpop.permute.xlu0 %3519
    %3521 = vrot.lane.b32.xlu0 %v3010, 64
    %v3522 = vpop.permute.xlu0 %3521
    %3523 = vrot.lane.b32.xlu0 %v3011, 64
    %v3524 = vpop.permute.xlu0 %3523
    %3525 = vrot.lane.b32.xlu0 %v3012, 64
    %v3526 = vpop.permute.xlu0 %3525
    %3527 = vrot.lane.b32.xlu0 %v3013, 64
    %v3528 = vpop.permute.xlu0 %3527
    %3529 = vrot.lane.b32.xlu0 %v3014, 64
    %v3530 = vpop.permute.xlu0 %3529
    %3531 = vrot.lane.b32.xlu0 %v3015, 64
    %v3532 = vpop.permute.xlu0 %3531
    %3533 = vrot.lane.b32.xlu0 %v3016, 64
    %v3534 = vpop.permute.xlu0 %3533
    %3535 = vrot.lane.b32.xlu0 %v3017, 64
    %v3536 = vpop.permute.xlu0 %3535
    %3537 = vrot.lane.b32.xlu0 %v3018, 64
    %v3538 = vpop.permute.xlu0 %3537
    %3539 = vrot.lane.b32.xlu0 %v3019, 64
    %v3540 = vpop.permute.xlu0 %3539
    %3541 = vrot.lane.b32.xlu0 %v3020, 64
    %v3542 = vpop.permute.xlu0 %3541
    %3543 = vrot.lane.b32.xlu0 %v3021, 64
    %v3544 = vpop.permute.xlu0 %3543
    %3545 = vrot.lane.b32.xlu0 %v3022, 64
    %v3546 = vpop.permute.xlu0 %3545
    %3547 = vrot.lane.b32.xlu0 %v3023, 64
    %v3548 = vpop.permute.xlu0 %3547
    %3549 = vrot.lane.b32.xlu0 %v3024, 64
    %v3550 = vpop.permute.xlu0 %3549
    %3551 = vrot.lane.b32.xlu0 %v3025, 64
    %v3552 = vpop.permute.xlu0 %3551
    %3553 = vrot.lane.b32.xlu0 %v3026, 64
    %v3554 = vpop.permute.xlu0 %3553
    %3555 = vrot.lane.b32.xlu0 %v3027, 64
    %v3556 = vpop.permute.xlu0 %3555
    %3557 = vrot.lane.b32.xlu0 %v3028, 64
    %v3558 = vpop.permute.xlu0 %3557
    %3559 = vrot.lane.b32.xlu0 %v3029, 64
    %v3560 = vpop.permute.xlu0 %3559
    %3561 = vrot.lane.b32.xlu0 %v3030, 64
    %v3562 = vpop.permute.xlu0 %3561
    %3563 = vrot.lane.b32.xlu0 %v3031, 64
    %v3564 = vpop.permute.xlu0 %3563
    %3565 = vrot.lane.b32.xlu0 %v3032, 64
    %v3566 = vpop.permute.xlu0 %3565
    %3567 = vrot.lane.b32.xlu0 %v3033, 64
    %v3568 = vpop.permute.xlu0 %3567
    %3569 = vrot.lane.b32.xlu0 %v3035, 64
    %v3570 = vpop.permute.xlu0 %3569
    %3571 = vrot.lane.b32.xlu0 %v3036, 64
    %v3572 = vpop.permute.xlu0 %3571
    %3629 = vrot.lane.b32.xlu0 %v3037, 96
    %v3630 = vpop.permute.xlu0 %3629
    %3631 = vrot.lane.b32.xlu0 %v3038, 96
    %v3632 = vpop.permute.xlu0 %3631
    %3633 = vrot.lane.b32.xlu0 %v3039, 96
    %v3634 = vpop.permute.xlu0 %3633
    %3635 = vrot.lane.b32.xlu0 %v3040, 96
    %v3636 = vpop.permute.xlu0 %3635
    %3637 = vrot.lane.b32.xlu0 %v3041, 96
    %v3638 = vpop.permute.xlu0 %3637
    %3639 = vrot.lane.b32.xlu0 %v3042, 96
    %v3640 = vpop.permute.xlu0 %3639
    %3641 = vrot.lane.b32.xlu0 %v3043, 96
    %v3642 = vpop.permute.xlu0 %3641
    %3643 = vrot.lane.b32.xlu0 %v3044, 96
    %v3644 = vpop.permute.xlu0 %3643
    %3645 = vrot.lane.b32.xlu0 %v3045, 96
    %v3646 = vpop.permute.xlu0 %3645
    %3647 = vrot.lane.b32.xlu0 %v3046, 96
    %v3648 = vpop.permute.xlu0 %3647
    %3649 = vrot.lane.b32.xlu0 %v3047, 96
    %v3650 = vpop.permute.xlu0 %3649
    %3651 = vrot.lane.b32.xlu0 %v3048, 96
    %v3652 = vpop.permute.xlu0 %3651
    %3653 = vrot.lane.b32.xlu0 %v3049, 96
    %v3654 = vpop.permute.xlu0 %3653
    %3655 = vrot.lane.b32.xlu0 %v3050, 96
    %v3656 = vpop.permute.xlu0 %3655
    %3657 = vrot.lane.b32.xlu0 %v3051, 96
    %v3658 = vpop.permute.xlu0 %3657
    %3659 = vrot.lane.b32.xlu0 %v3052, 96
    %v3660 = vpop.permute.xlu0 %3659
    %3661 = vrot.lane.b32.xlu0 %v3053, 96
    %v3662 = vpop.permute.xlu0 %3661
    %3663 = vrot.lane.b32.xlu0 %v3054, 96
    %v3664 = vpop.permute.xlu0 %3663
    %3665 = vrot.lane.b32.xlu0 %v3055, 96
    %v3666 = vpop.permute.xlu0 %3665
    %3667 = vrot.lane.b32.xlu0 %v3056, 96
    %v3668 = vpop.permute.xlu0 %3667
    %3669 = vrot.lane.b32.xlu0 %v3057, 96
    %v3670 = vpop.permute.xlu0 %3669
    %3671 = vrot.lane.b32.xlu0 %v3058, 96
    %v3672 = vpop.permute.xlu0 %3671
    %3673 = vrot.lane.b32.xlu0 %v3059, 96
    %v3674 = vpop.permute.xlu0 %3673
    %3675 = vrot.lane.b32.xlu0 %v3060, 96
    %v3676 = vpop.permute.xlu0 %3675
    %3677 = vrot.lane.b32.xlu0 %v3061, 96
    %v3678 = vpop.permute.xlu0 %3677
    %3679 = vrot.lane.b32.xlu0 %v3062, 96
    %v3680 = vpop.permute.xlu0 %3679
    %3681 = vrot.lane.b32.xlu0 %v3063, 96
    %v3682 = vpop.permute.xlu0 %3681
    %3683 = vrot.lane.b32.xlu0 %v3064, 96
    %v3684 = vpop.permute.xlu0 %3683
    %v3713 = vsel %vm1291, %v2893, %v3122
    %v3714 = vsel %vm1291, %v2894, %v3124
    %v3715 = vsel %vm1291, %v2895, %v3126
    %v3716 = vsel %vm1291, %v2896, %v3128
    %v3717 = vsel %vm1291, %v2897, %v3130
    %v3718 = vsel %vm1291, %v2898, %v3132
    %v3719 = vsel %vm1291, %v2899, %v3134
    %v3720 = vsel %vm1291, %v2900, %v3136
    %v3721 = vsel %vm1291, %v2901, %v3138
    %v3722 = vsel %vm1291, %v2902, %v3140
    %v3723 = vsel %vm1291, %v2903, %v3142
    %v3724 = vsel %vm1291, %v2904, %v3144
    %v3725 = vsel %vm1291, %v2905, %v3146
    %v3726 = vsel %vm1291, %v2906, %v3148
    %v3727 = vsel %vm1291, %v2907, %v3150
    %v3728 = vsel %vm1291, %v2908, %v3152
    %v3729 = vsel %vm1291, %v2909, %v3154
    %v3730 = vsel %vm1291, %v2910, %v3156
    %v3731 = vsel %vm1291, %v2911, %v3158
    %v3732 = vsel %vm1291, %v2912, %v3160
    %v3733 = vsel %vm1291, %v2913, %v3162
    %v3734 = vsel %vm1291, %v2914, %v3164
    %v3735 = vsel %vm1291, %v2915, %v3166
    %v3736 = vsel %vm1291, %v2916, %v3168
    %v3737 = vsel %vm1291, %v2917, %v3170
    %v3738 = vsel %vm1291, %v2918, %v3172
    %v3739 = vsel %vm1291, %v2919, %v3174
    %v3740 = vsel %vm1291, %v2920, %v3176
    %vm3741 = vcmask 523264
    %v3742 = vsel %vm3741, %v3713, %v3234
    %v3743 = vsel %vm3741, %v3714, %v3236
    %v3744 = vsel %vm3741, %v3715, %v3238
    %v3745 = vsel %vm3741, %v3716, %v3240
    %v3746 = vsel %vm3741, %v3717, %v3242
    %v3747 = vsel %vm3741, %v3718, %v3244
    %v3748 = vsel %vm3741, %v3719, %v3246
    %v3749 = vsel %vm3741, %v3720, %v3248
    %v3750 = vsel %vm3741, %v3721, %v3250
    %v3751 = vsel %vm3741, %v3722, %v3252
    %v3752 = vsel %vm3741, %v3723, %v3254
    %v3753 = vsel %vm3741, %v3724, %v3256
    %v3754 = vsel %vm3741, %v3725, %v3258
    %v3755 = vsel %vm3741, %v3726, %v3260
    %v3756 = vsel %vm3741, %v3727, %v3262
    %v3757 = vsel %vm3741, %v3728, %v3264
    %v3758 = vsel %vm3741, %v3729, %v3266
    %v3759 = vsel %vm3741, %v3730, %v3268
    %v3760 = vsel %vm3741, %v3731, %v3270
    %v3761 = vsel %vm3741, %v3732, %v3272
    %v3762 = vsel %vm3741, %v3733, %v3274
    %v3763 = vsel %vm3741, %v3734, %v3276
    %v3764 = vsel %vm3741, %v3735, %v3278
    %v3765 = vsel %vm3741, %v3736, %v3280
    %v3766 = vsel %vm3741, %v3737, %v3282
    %v3767 = vsel %vm3741, %v3738, %v3284
    %v3768 = vsel %vm3741, %v3739, %v3286
    %v3769 = vsel %vm3741, %v3740, %v3288
    %vm3770 = vcmask 785408
    %v3771 = vsel %vm3770, %v3742, %v3320
    %v3772 = vsel %vm3770, %v3743, %v3322
    %v3773 = vsel %vm3770, %v3744, %v3324
    %v3774 = vsel %vm3770, %v3745, %v3326
    %v3775 = vsel %vm3770, %v3746, %v3328
    %v3776 = vsel %vm3770, %v3747, %v3330
    %v3777 = vsel %vm3770, %v3748, %v3332
    %v3778 = vsel %vm3770, %v3749, %v3334
    %v3779 = vsel %vm3770, %v3750, %v3336
    %v3780 = vsel %vm3770, %v3751, %v3338
    %v3781 = vsel %vm3770, %v3752, %v3340
    %v3782 = vsel %vm3770, %v3753, %v3342
    %v3783 = vsel %vm3770, %v3754, %v3344
    %v3784 = vsel %vm3770, %v3755, %v3346
    %v3785 = vsel %vm3770, %v3756, %v3348
    %v3786 = vsel %vm3770, %v3757, %v3350
    %v3787 = vsel %vm3770, %v3758, %v3352
    %v3788 = vsel %vm3770, %v3759, %v3354
    %v3789 = vsel %vm3770, %v3760, %v3356
    %v3790 = vsel %vm3770, %v3761, %v3358
    %v3791 = vsel %vm3770, %v3762, %v3360
    %v3792 = vsel %vm3770, %v3763, %v3362
    %v3793 = vsel %vm3770, %v3764, %v3364
    %v3794 = vsel %vm3770, %v3765, %v3366
    %v3795 = vsel %vm3770, %v3766, %v3368
    %v3796 = vsel %vm3770, %v3767, %v3370
    %v3797 = vsel %vm3770, %v3768, %v3372
    %v3798 = vsel %vm3770, %v3769, %v3374
    %v3799 = vsel %vm1291, %v2979, %v3432
    %v3800 = vsel %vm1291, %v2980, %v3434
    %v3801 = vsel %vm1291, %v2981, %v3436
    %v3802 = vsel %vm1291, %v2982, %v3438
    %v3803 = vsel %vm1291, %v2983, %v3440
    %v3804 = vsel %vm1291, %v2984, %v3442
    %v3805 = vsel %vm1291, %v2985, %v3444
    %v3806 = vsel %vm1291, %v2986, %v3446
    %v3807 = vsel %vm1291, %v2987, %v3448
    %v3808 = vsel %vm1291, %v2988, %v3450
    %v3809 = vsel %vm1291, %v2989, %v3452
    %v3810 = vsel %vm1291, %v2990, %v3454
    %v3811 = vsel %vm1291, %v2991, %v3456
    %v3812 = vsel %vm1291, %v2992, %v3458
    %v3813 = vsel %vm1291, %v2993, %v3460
    %v3814 = vsel %vm1291, %v2994, %v3462
    %v3815 = vsel %vm1291, %v2995, %v3464
    %v3816 = vsel %vm1291, %v2996, %v3466
    %v3817 = vsel %vm1291, %v2997, %v3468
    %v3818 = vsel %vm1291, %v2998, %v3470
    %v3819 = vsel %vm1291, %v2999, %v3472
    %v3820 = vsel %vm1291, %v3000, %v3474
    %v3821 = vsel %vm1291, %v3001, %v3476
    %v3822 = vsel %vm1291, %v3002, %v3478
    %v3823 = vsel %vm1291, %v3003, %v3480
    %v3824 = vsel %vm1291, %v3004, %v3482
    %v3825 = vsel %vm1291, %v3005, %v3484
    %v3826 = vsel %vm1291, %v3006, %v3486
    %v3827 = vsel %vm3741, %v3799, %v3518
    %v3828 = vsel %vm3741, %v3800, %v3520
    %v3829 = vsel %vm3741, %v3801, %v3522
    %v3830 = vsel %vm3741, %v3802, %v3524
    %v3831 = vsel %vm3741, %v3803, %v3526
    %v3832 = vsel %vm3741, %v3804, %v3528
    %v3833 = vsel %vm3741, %v3805, %v3530
    %v3834 = vsel %vm3741, %v3806, %v3532
    %v3835 = vsel %vm3741, %v3807, %v3534
    %v3836 = vsel %vm3741, %v3808, %v3536
    %v3837 = vsel %vm3741, %v3809, %v3538
    %v3838 = vsel %vm3741, %v3810, %v3540
    %v3839 = vsel %vm3741, %v3811, %v3542
    %v3840 = vsel %vm3741, %v3812, %v3544
    %v3841 = vsel %vm3741, %v3813, %v3546
    %v3842 = vsel %vm3741, %v3814, %v3548
    %v3843 = vsel %vm3741, %v3815, %v3550
    %v3844 = vsel %vm3741, %v3816, %v3552
    %v3845 = vsel %vm3741, %v3817, %v3554
    %v3846 = vsel %vm3741, %v3818, %v3556
    %v3847 = vsel %vm3741, %v3819, %v3558
    %v3848 = vsel %vm3741, %v3820, %v3560
    %v3849 = vsel %vm3741, %v3821, %v3562
    %v3850 = vsel %vm3741, %v3822, %v3564
    %v3851 = vsel %vm3741, %v3823, %v3566
    %v3852 = vsel %vm3741, %v3824, %v3568
    %v3853 = vsel %vm3741, %v3825, %v3570
    %v3854 = vsel %vm3741, %v3826, %v3572
    %v3855 = vsel %vm3770, %v3827, %v3630
    %v3856 = vsel %vm3770, %v3828, %v3632
    %v3857 = vsel %vm3770, %v3829, %v3634
    %v3858 = vsel %vm3770, %v3830, %v3636
    %v3859 = vsel %vm3770, %v3831, %v3638
    %v3860 = vsel %vm3770, %v3832, %v3640
    %v3861 = vsel %vm3770, %v3833, %v3642
    %v3862 = vsel %vm3770, %v3834, %v3644
    %v3863 = vsel %vm3770, %v3835, %v3646
    %v3864 = vsel %vm3770, %v3836, %v3648
    %v3865 = vsel %vm3770, %v3837, %v3650
    %v3866 = vsel %vm3770, %v3838, %v3652
    %v3867 = vsel %vm3770, %v3839, %v3654
    %v3868 = vsel %vm3770, %v3840, %v3656
    %v3869 = vsel %vm3770, %v3841, %v3658
    %v3870 = vsel %vm3770, %v3842, %v3660
    %v3871 = vsel %vm3770, %v3843, %v3662
    %v3872 = vsel %vm3770, %v3844, %v3664
    %v3873 = vsel %vm3770, %v3845, %v3666
    %v3874 = vsel %vm3770, %v3846, %v3668
    %v3875 = vsel %vm3770, %v3847, %v3670
    %v3876 = vsel %vm3770, %v3848, %v3672
    %v3877 = vsel %vm3770, %v3849, %v3674
    %v3878 = vsel %vm3770, %v3850, %v3676
    %v3879 = vsel %vm3770, %v3851, %v3678
    %v3880 = vsel %vm3770, %v3852, %v3680
    %v3881 = vsel %vm3770, %v3853, %v3682
    %v3882 = vsel %vm3770, %v3854, %v3684
    %v3883 = vld [vmem:[%s3] sm:$0xff]
    %v3884 = vld [vmem:[%s3 + $0x8] sm:$0xff]
    %v3885 = vld [vmem:[%s3 + $0x10] sm:$0xff]
    %v3886 = vld [vmem:[%s3 + $0x18] sm:$0xff]
    %v3887 = vld [vmem:[%s3 + $0x20] sm:$0xff]
    %v3888 = vld [vmem:[%s3 + $0x28] sm:$0xff]
    %v3889 = vld [vmem:[%s3 + $0x30] sm:$0xff]
    %v3890 = vld [vmem:[%s3 + $0x38] sm:$0xff]
    %v3891 = vld [vmem:[%s3 + $0x40] sm:$0xff]
    %v3892 = vld [vmem:[%s3 + $0x48] sm:$0xff]
    %v3893 = vld [vmem:[%s3 + $0x50] sm:$0xff]
    %v3894 = vld [vmem:[%s3 + $0x58] sm:$0xff]
    %v3895 = vld [vmem:[%s3 + $0x60] sm:$0xff]
    %v3896 = vld [vmem:[%s3 + $0x68] sm:$0xff]
    %v3897 = vld [vmem:[%s3 + $0x70] sm:$0xff]
    %v3898 = vld [vmem:[%s3 + $0x78] sm:$0xff]
    %v3899 = vld [vmem:[%s3 + $0x80] sm:$0xff]
    %v3900 = vld [vmem:[%s3 + $0x88] sm:$0xff]
    %v3901 = vld [vmem:[%s3 + $0x90] sm:$0xff]
    %v3902 = vld [vmem:[%s3 + $0x98] sm:$0xff]
    %v3903 = vld [vmem:[%s3 + $0xa0] sm:$0xff]
    %v3904 = vld [vmem:[%s3 + $0xa8] sm:$0xff]
    %v3905 = vld [vmem:[%s3 + $0xb0] sm:$0xff]
    %v3906 = vld [vmem:[%s3 + $0xb8] sm:$0xff]
    %v3907 = vld [vmem:[%s3 + $0xc0] sm:$0xff]
    %v3908 = vld [vmem:[%s3 + $0xc8] sm:$0xff]
    %v3909 = vld [vmem:[%s3 + $0xd0] sm:$0xff]
    %v3910 = vld [vmem:[%s3 + $0xd8] sm:$0xff]
    %v3911 = vld [vmem:[%s3 + $0xe0] sm:$0xff]
    %v3912 = vld [vmem:[%s3 + $0xe8] sm:$0xff]
    %v3913 = vld [vmem:[%s3 + $0xf0] sm:$0xff]
    %v3914 = vld [vmem:[%s3 + $0xf8] sm:$0xff]
    %v3915 = vld [vmem:[%s3 + $0x100] sm:$0xff]
    %v3916 = vld [vmem:[%s3 + $0x108] sm:$0xff]
    %v3917 = vld [vmem:[%s3 + $0x110] sm:$0xff]
    %v3918 = vld [vmem:[%s3 + $0x118] sm:$0xff]
    %v3919 = vld [vmem:[#allocation5] sm:$0x1]
    %v3921 = vlaneseq
    %v3922 = vshrl.u32 %v3921, 7
    %v3923 = vsub.s32 0, %v3922
    %v3924 = vrot.slane %v3919, %v3923
    %v3927 = vsel %vm1291, %v3065, 0
    %v3930 = vsel %vm1291, %v3066, 0
    %v3933 = vsel %vm1291, %v3067, 0
    %v3936 = vsel %vm1291, %v3068, 0
    %v3939 = vsel %vm1291, %v3069, 0
    %v3942 = vsel %vm1291, %v3070, 0
    %v3945 = vsel %vm1291, %v3071, 0
    %v3948 = vsel %vm1291, %v3072, 0
    %v3951 = vsel %vm1291, %v3073, 0
    %v3954 = vsel %vm1291, %v3074, 0
    %v3957 = vsel %vm1291, %v3075, 0
    %v3960 = vsel %vm1291, %v3076, 0
    %v3963 = vsel %vm1291, %v3077, 0
    %v3966 = vsel %vm1291, %v3078, 0
    %v3969 = vsel %vm1291, %v3079, 0
    %v3972 = vsel %vm1291, %v3080, 0
    %v3975 = vsel %vm1291, %v3081, 0
    %v3978 = vsel %vm1291, %v3082, 0
    %v3981 = vsel %vm1291, %v3083, 0
    %v3984 = vsel %vm1291, %v3084, 0
    %v3987 = vsel %vm1291, %v3085, 0
    %v3990 = vsel %vm1291, %v3086, 0
    %v3993 = vsel %vm1291, %v3087, 0
    %v3996 = vsel %vm1291, %v3088, 0
    %v3999 = vsel %vm1291, %v3089, 0
    %v4002 = vsel %vm1291, %v3090, 0
    %v4005 = vsel %vm1291, %v3091, 0
    %v4008 = vsel %vm1291, %v3092, 0
    %4010 = vmatprep.subr.mxu0 0.0
    %4011 = vmatpush1.msra.mxu0 %v3883
    %4012 = vmatprep.subr.mxu0 0.0
    %4013 = vmatpush1.msra.mxu0 %v3884
    %4014 = vmatprep.subr.mxu0 0.0
    %4015 = vmatpush1.msra.mxu0 %v3885
    %4016 = vmatprep.subr.mxu0 0.0
    %4017 = vmatpush1.msra.mxu0 %v3886
    %4018 = vmatprep.subr.mxu0 0.0
    %4019 = vmatpush1.msra.mxu0 %v3887
    %4020 = vmatprep.subr.mxu0 0.0
    %4021 = vmatpush1.msra.mxu0 %v3888
    %4022 = vmatprep.subr.mxu0 0.0
    %4023 = vmatpush1.msra.mxu0 %v3889
    %4024 = vmatprep.subr.mxu0 0.0
    %4025 = vmatpush1.msra.mxu0 %v3890
    %4026 = vmatprep.subr.mxu0 0.0
    %4027 = vmatpush1.msra.mxu0 %v3891
    %4028 = vmatprep.subr.mxu0 0.0
    %4029 = vmatpush1.msra.mxu0 %v3892
    %4030 = vmatprep.subr.mxu0 0.0
    %4031 = vmatpush1.msra.mxu0 %v3893
    %4032 = vmatprep.subr.mxu0 0.0
    %4033 = vmatpush1.msra.mxu0 %v3894
    %4034 = vmatprep.subr.mxu0 0.0
    %4035 = vmatpush1.msra.mxu0 %v3895
    %4036 = vmatprep.subr.mxu0 0.0
    %4037 = vmatpush1.msra.mxu0 %v3896
    %4038 = vmatprep.subr.mxu0 0.0
    %4039 = vmatpush1.msra.mxu0 %v3897
    %4040 = vmatprep.subr.mxu0 0.0
    %4041 = vmatpush1.msra.mxu0 %v3898
    %4042 = vmatprep.subr.mxu0 0.0
    %4043 = vmatpush1.msra.mxu0 %v3899
    %4044 = vmatprep.subr.mxu0 0.0
    %4045 = vmatpush1.msra.mxu0 %v3900
    %4046 = vmatprep.subr.mxu0 0.0
    %4047 = vmatpush1.msra.mxu0 %v3901
    %4048 = vmatprep.subr.mxu0 0.0
    %4049 = vmatpush1.msra.mxu0 %v3902
    %4050 = vmatprep.subr.mxu0 0.0
    %4051 = vmatpush1.msra.mxu0 %v3903
    %4052 = vmatprep.subr.mxu0 0.0
    %4053 = vmatpush1.msra.mxu0 %v3904
    %4054 = vmatprep.subr.mxu0 0.0
    %4055 = vmatpush1.msra.mxu0 %v3905
    %4056 = vmatprep.subr.mxu0 0.0
    %4057 = vmatpush1.msra.mxu0 %v3906
    %4058 = vmatprep.subr.mxu0 0.0
    %4059 = vmatpush1.msra.mxu0 %v3907
    %4060 = vmatprep.subr.mxu0 0.0
    %4061 = vmatpush1.msra.mxu0 %v3908
    %4062 = vmatprep.subr.mxu0 0.0
    %4063 = vmatpush1.msra.mxu0 %v3909
    %4064 = vmatprep.subr.mxu0 0.0
    %4065 = vmatpush1.msra.mxu0 %v3910
    %4066 = vmatprep.subr.mxu0 0.0
    %4067 = vmatpush1.msra.mxu0 %v3911
    %4068 = vmatprep.subr.mxu0 0.0
    %4069 = vmatpush1.msra.mxu0 %v3912
    %4070 = vmatprep.subr.mxu0 0.0
    %4071 = vmatpush1.msra.mxu0 %v3913
    %4072 = vmatprep.subr.mxu0 0.0
    %4073 = vmatpush1.msra.mxu0 %v3914
    %4074 = vmatprep.mubr.f32.mxu0 %v3855
    %4075 = vmatmul.mubr.f32.gmra.mrb[0].mxu0 %v3771
    %v4076 = vpop.f32.mrb[0].mxu0
    %v4077 = vadd.f32 %v3924, %v4076
    %v4078 = vpop.f32.mrb[0].mxu0
    %4079 = vmatprep.mubr.f32.mxu0 %v3856
    %4080 = vmatmul.mubr.f32.gmra.mrb[0].mxu0 %v3772
    %v4081 = vpop.f32.mrb[0].mxu0
    %v4082 = vadd.f32 %v3924, %v4081
    %v4083 = vpop.f32.mrb[0].mxu0
    %4084 = vmatprep.mubr.f32.mxu0 %v3857
    %4085 = vmatmul.mubr.f32.gmra.mrb[0].mxu0 %v3773
    %v4086 = vpop.f32.mrb[0].mxu0
    %v4087 = vadd.f32 %v3924, %v4086
    %v4088 = vpop.f32.mrb[0].mxu0
    %4089 = vmatprep.mubr.f32.mxu0 %v3858
    %4090 = vmatmul.mubr.f32.gmra.mrb[0].mxu0 %v3774
    %v4091 = vpop.f32.mrb[0].mxu0
    %v4092 = vadd.f32 %v3924, %v4091
    %v4093 = vpop.f32.mrb[0].mxu0
    %4094 = vmatprep.mubr.f32.mxu0 %v3859
    %4095 = vmatmul.mubr.f32.gmra.mrb[0].mxu0 %v3775
    %v4096 = vpop.f32.mrb[0].mxu0
    %v4097 = vadd.f32 %v3924, %v4096
    %v4098 = vpop.f32.mrb[0].mxu0
    %4099 = vmatprep.mubr.f32.mxu0 %v3860
    %4100 = vmatmul.mubr.f32.gmra.mrb[0].mxu0 %v3776
    %v4101 = vpop.f32.mrb[0].mxu0
    %v4102 = vadd.f32 %v3924, %v4101
    %v4103 = vpop.f32.mrb[0].mxu0
    %4104 = vmatprep.mubr.f32.mxu0 %v3861
    %4105 = vmatmul.mubr.f32.gmra.mrb[0].mxu0 %v3777
    %v4106 = vpop.f32.mrb[0].mxu0
    %v4107 = vadd.f32 %v3924, %v4106
    %v4108 = vpop.f32.mrb[0].mxu0
    %4109 = vmatprep.mubr.f32.mxu0 %v3862
    %4110 = vmatmul.mubr.f32.gmra.mrb[0].mxu0 %v3778
    %v4111 = vpop.f32.mrb[0].mxu0
    %v4112 = vadd.f32 %v3924, %v4111
    %v4113 = vpop.f32.mrb[0].mxu0
    %4114 = vmatprep.mubr.f32.mxu0 %v3863
    %4115 = vmatmul.mubr.f32.gmra.mrb[0].mxu0 %v3779
    %v4116 = vpop.f32.mrb[0].mxu0
    %v4117 = vadd.f32 %v3924, %v4116
    %v4118 = vpop.f32.mrb[0].mxu0
    %4119 = vmatprep.mubr.f32.mxu0 %v3864
    %4120 = vmatmul.mubr.f32.gmra.mrb[0].mxu0 %v3780
    %v4121 = vpop.f32.mrb[0].mxu0
    %v4122 = vadd.f32 %v3924, %v4121
    %v4123 = vpop.f32.mrb[0].mxu0
    %4124 = vmatprep.mubr.f32.mxu0 %v3865
    %4125 = vmatmul.mubr.f32.gmra.mrb[0].mxu0 %v3781
    %v4126 = vpop.f32.mrb[0].mxu0
    %v4127 = vadd.f32 %v3924, %v4126
    %v4128 = vpop.f32.mrb[0].mxu0
    %4129 = vmatprep.mubr.f32.mxu0 %v3866
    %4130 = vmatmul.mubr.f32.gmra.mrb[0].mxu0 %v3782
    %v4131 = vpop.f32.mrb[0].mxu0
    %v4132 = vadd.f32 %v3924, %v4131
    %v4133 = vpop.f32.mrb[0].mxu0
    %4134 = vmatprep.mubr.f32.mxu0 %v3867
    %4135 = vmatmul.mubr.f32.gmra.mrb[0].mxu0 %v3783
    %v4136 = vpop.f32.mrb[0].mxu0
    %v4137 = vadd.f32 %v3924, %v4136
    %v4138 = vpop.f32.mrb[0].mxu0
    %4139 = vmatprep.mubr.f32.mxu0 %v3868
    %4140 = vmatmul.mubr.f32.gmra.mrb[0].mxu0 %v3784
    %v4141 = vpop.f32.mrb[0].mxu0
    %v4142 = vadd.f32 %v3924, %v4141
    %v4143 = vpop.f32.mrb[0].mxu0
    %4144 = vmatprep.mubr.f32.mxu0 %v3869
    %4145 = vmatmul.mubr.f32.gmra.mrb[0].mxu0 %v3785
    %v4146 = vpop.f32.mrb[0].mxu0
    %v4147 = vadd.f32 %v3924, %v4146
    %v4148 = vpop.f32.mrb[0].mxu0
    %4149 = vmatprep.mubr.f32.mxu0 %v3870
    %4150 = vmatmul.mubr.f32.gmra.mrb[0].mxu0 %v3786
    %v4151 = vpop.f32.mrb[0].mxu0
    %v4152 = vadd.f32 %v3924, %v4151
    %v4153 = vpop.f32.mrb[0].mxu0
    %4154 = vmatprep.mubr.f32.mxu0 %v3871
    %4155 = vmatmul.mubr.f32.gmra.mrb[0].mxu0 %v3787
    %v4156 = vpop.f32.mrb[0].mxu0
    %v4157 = vadd.f32 %v3924, %v4156
    %v4158 = vpop.f32.mrb[0].mxu0
    %4159 = vmatprep.mubr.f32.mxu0 %v3872
    %4160 = vmatmul.mubr.f32.gmra.mrb[0].mxu0 %v3788
    %v4161 = vpop.f32.mrb[0].mxu0
    %v4162 = vadd.f32 %v3924, %v4161
    %v4163 = vpop.f32.mrb[0].mxu0
    %4164 = vmatprep.mubr.f32.mxu0 %v3873
    %4165 = vmatmul.mubr.f32.gmra.mrb[0].mxu0 %v3789
    %v4166 = vpop.f32.mrb[0].mxu0
    %v4167 = vadd.f32 %v3924, %v4166
    %v4168 = vpop.f32.mrb[0].mxu0
    %4169 = vmatprep.mubr.f32.mxu0 %v3874
    %4170 = vmatmul.mubr.f32.gmra.mrb[0].mxu0 %v3790
    %v4171 = vpop.f32.mrb[0].mxu0
    %v4172 = vadd.f32 %v3924, %v4171
    %v4173 = vpop.f32.mrb[0].mxu0
    %4174 = vmatprep.mubr.f32.mxu0 %v3875
    %4175 = vmatmul.mubr.f32.gmra.mrb[0].mxu0 %v3791
    %v4176 = vpop.f32.mrb[0].mxu0
    %v4177 = vadd.f32 %v3924, %v4176
    %v4178 = vpop.f32.mrb[0].mxu0
    %4179 = vmatprep.mubr.f32.mxu0 %v3876
    %4180 = vmatmul.mubr.f32.gmra.mrb[0].mxu0 %v3792
    %v4181 = vpop.f32.mrb[0].mxu0
    %v4182 = vadd.f32 %v3924, %v4181
    %v4183 = vpop.f32.mrb[0].mxu0
    %4184 = vmatprep.mubr.f32.mxu0 %v3877
    %4185 = vmatmul.mubr.f32.gmra.mrb[0].mxu0 %v3793
    %v4186 = vpop.f32.mrb[0].mxu0
    %v4187 = vadd.f32 %v3924, %v4186
    %v4188 = vpop.f32.mrb[0].mxu0
    %4189 = vmatprep.mubr.f32.mxu0 %v3878
    %4190 = vmatmul.mubr.f32.gmra.mrb[0].mxu0 %v3794
    %v4191 = vpop.f32.mrb[0].mxu0
    %v4192 = vadd.f32 %v3924, %v4191
    %v4193 = vpop.f32.mrb[0].mxu0
    %4194 = vmatprep.mubr.f32.mxu0 %v3879
    %4195 = vmatmul.mubr.f32.gmra.mrb[0].mxu0 %v3795
    %v4196 = vpop.f32.mrb[0].mxu0
    %v4197 = vadd.f32 %v3924, %v4196
    %v4198 = vpop.f32.mrb[0].mxu0
    %4199 = vmatprep.mubr.f32.mxu0 %v3880
    %4200 = vmatmul.mubr.f32.gmra.mrb[0].mxu0 %v3796
    %v4201 = vpop.f32.mrb[0].mxu0
    %v4202 = vadd.f32 %v3924, %v4201
    %v4203 = vpop.f32.mrb[0].mxu0
    %4204 = vmatprep.mubr.f32.mxu0 %v3881
    %4205 = vmatmul.mubr.f32.gmra.mrb[0].mxu0 %v3797
    %v4206 = vpop.f32.mrb[0].mxu0
    %v4207 = vadd.f32 %v3924, %v4206
    %v4208 = vpop.f32.mrb[0].mxu0
    %4209 = vmatprep.mubr.f32.mxu0 %v3882
    %4210 = vmatmul.mubr.f32.gmra.mrb[0].mxu0 %v3798
    %v4211 = vpop.f32.mrb[0].mxu0
    %v4212 = vadd.f32 %v3924, %v4211
    %v4213 = vpop.f32.mrb[0].mxu0
    %4214 = vdwg.mxu0
    %4215 = vmatprep.subr.mxu0 0.0
    %4216 = vmatpush1.msra.mxu0 %v3915
    %4217 = vmatprep.subr.mxu0 0.0
    %4218 = vmatpush1.msra.mxu0 %v3916
    %4219 = vmatprep.subr.mxu0 0.0
    %4220 = vmatpush1.msra.mxu0 %v3917
    %4221 = vmatprep.subr.mxu0 0.0
    %4222 = vmatpush1.msra.mxu0 %v3918
    %4223 = vmatprep.subr.mxu0 0.0
    %4224 = vmatpush1.msra.mxu0 0.0
    %4225 = vmatprep.subr.mxu0 0.0
    %4226 = vmatpush1.msra.mxu0 0.0
    %4227 = vmatprep.subr.mxu0 0.0
    %4228 = vmatpush1.msra.mxu0 0.0
    %4229 = vmatprep.subr.mxu0 0.0
    %4230 = vmatpush1.msra.mxu0 0.0
    %4231 = vmatprep.subr.mxu0 0.0
    %4232 = vmatpush1.msra.mxu0 0.0
    %4233 = vmatprep.subr.mxu0 0.0
    %4234 = vmatpush1.msra.mxu0 0.0
    %4235 = vmatprep.subr.mxu0 0.0
    %4236 = vmatpush1.msra.mxu0 0.0
    %4237 = vmatprep.subr.mxu0 0.0
    %4238 = vmatpush1.msra.mxu0 0.0
    %4239 = vmatprep.subr.mxu0 0.0
    %4240 = vmatpush1.msra.mxu0 0.0
    %4241 = vmatprep.subr.mxu0 0.0
    %4242 = vmatpush1.msra.mxu0 0.0
    %4243 = vmatprep.subr.mxu0 0.0
    %4244 = vmatpush1.msra.mxu0 0.0
    %4245 = vmatprep.subr.mxu0 0.0
    %4246 = vmatpush1.msra.mxu0 0.0
    %4247 = vmatprep.subr.mxu0 0.0
    %4248 = vmatpush1.msra.mxu0 0.0
    %4249 = vmatprep.subr.mxu0 0.0
    %4250 = vmatpush1.msra.mxu0 0.0
    %4251 = vmatprep.subr.mxu0 0.0
    %4252 = vmatpush1.msra.mxu0 0.0
    %4253 = vmatprep.subr.mxu0 0.0
    %4254 = vmatpush1.msra.mxu0 0.0
    %4255 = vmatprep.subr.mxu0 0.0
    %4256 = vmatpush1.msra.mxu0 0.0
    %4257 = vmatprep.subr.mxu0 0.0
    %4258 = vmatpush1.msra.mxu0 0.0
    %4259 = vmatprep.subr.mxu0 0.0
    %4260 = vmatpush1.msra.mxu0 0.0
    %4261 = vmatprep.subr.mxu0 0.0
    %4262 = vmatpush1.msra.mxu0 0.0
    %4263 = vmatprep.subr.mxu0 0.0
    %4264 = vmatpush1.msra.mxu0 0.0
    %4265 = vmatprep.subr.mxu0 0.0
    %4266 = vmatpush1.msra.mxu0 0.0
    %4267 = vmatprep.subr.mxu0 0.0
    %4268 = vmatpush1.msra.mxu0 0.0
    %4269 = vmatprep.subr.mxu0 0.0
    %4270 = vmatpush1.msra.mxu0 0.0
    %4271 = vmatprep.subr.mxu0 0.0
    %4272 = vmatpush1.msra.mxu0 0.0
    %4273 = vmatprep.subr.mxu0 0.0
    %4274 = vmatpush1.msra.mxu0 0.0
    %4275 = vmatprep.subr.mxu0 0.0
    %4276 = vmatpush1.msra.mxu0 0.0
    %4277 = vmatprep.subr.mxu0 0.0
    %4278 = vmatpush1.msra.mxu0 0.0
    %4279 = vmatprep.mubr.f32.mxu0 0.0
    %4280 = vmatmul.mubr.f32.gmra.mrb[0].mxu0 %v3927
    %v4281 = vpop.f32.mrb[0].mxu0
    %v4282 = vadd.f32 %v4077, %v4281
    %v4283 = vpop.f32.mrb[0].mxu0
    %4284 = vmatprep.mubr.f32.mxu0 0.0
    %4285 = vmatmul.mubr.f32.gmra.mrb[0].mxu0 %v3930
    %v4286 = vpop.f32.mrb[0].mxu0
    %v4287 = vadd.f32 %v4082, %v4286
    %v4288 = vpop.f32.mrb[0].mxu0
    %4289 = vmatprep.mubr.f32.mxu0 0.0
    %4290 = vmatmul.mubr.f32.gmra.mrb[0].mxu0 %v3933
    %v4291 = vpop.f32.mrb[0].mxu0
    %v4292 = vadd.f32 %v4087, %v4291
    %v4293 = vpop.f32.mrb[0].mxu0
    %4294 = vmatprep.mubr.f32.mxu0 0.0
    %4295 = vmatmul.mubr.f32.gmra.mrb[0].mxu0 %v3936
    %v4296 = vpop.f32.mrb[0].mxu0
    %v4297 = vadd.f32 %v4092, %v4296
    %v4298 = vpop.f32.mrb[0].mxu0
    %4299 = vmatprep.mubr.f32.mxu0 0.0
    %4300 = vmatmul.mubr.f32.gmra.mrb[0].mxu0 %v3939
    %v4301 = vpop.f32.mrb[0].mxu0
    %v4302 = vadd.f32 %v4097, %v4301
    %v4303 = vpop.f32.mrb[0].mxu0
    %4304 = vmatprep.mubr.f32.mxu0 0.0
    %4305 = vmatmul.mubr.f32.gmra.mrb[0].mxu0 %v3942
    %v4306 = vpop.f32.mrb[0].mxu0
    %v4307 = vadd.f32 %v4102, %v4306
    %v4308 = vpop.f32.mrb[0].mxu0
    %4309 = vmatprep.mubr.f32.mxu0 0.0
    %4310 = vmatmul.mubr.f32.gmra.mrb[0].mxu0 %v3945
    %v4311 = vpop.f32.mrb[0].mxu0
    %v4312 = vadd.f32 %v4107, %v4311
    %v4313 = vpop.f32.mrb[0].mxu0
    %4314 = vmatprep.mubr.f32.mxu0 0.0
    %4315 = vmatmul.mubr.f32.gmra.mrb[0].mxu0 %v3948
    %v4316 = vpop.f32.mrb[0].mxu0
    %v4317 = vadd.f32 %v4112, %v4316
    %v4318 = vpop.f32.mrb[0].mxu0
    %4319 = vmatprep.mubr.f32.mxu0 0.0
    %4320 = vmatmul.mubr.f32.gmra.mrb[0].mxu0 %v3951
    %v4321 = vpop.f32.mrb[0].mxu0
    %v4322 = vadd.f32 %v4117, %v4321
    %v4323 = vpop.f32.mrb[0].mxu0
    %4324 = vmatprep.mubr.f32.mxu0 0.0
    %4325 = vmatmul.mubr.f32.gmra.mrb[0].mxu0 %v3954
    %v4326 = vpop.f32.mrb[0].mxu0
    %v4327 = vadd.f32 %v4122, %v4326
    %v4328 = vpop.f32.mrb[0].mxu0
    %4329 = vmatprep.mubr.f32.mxu0 0.0
    %4330 = vmatmul.mubr.f32.gmra.mrb[0].mxu0 %v3957
    %v4331 = vpop.f32.mrb[0].mxu0
    %v4332 = vadd.f32 %v4127, %v4331
    %v4333 = vpop.f32.mrb[0].mxu0
    %4334 = vmatprep.mubr.f32.mxu0 0.0
    %4335 = vmatmul.mubr.f32.gmra.mrb[0].mxu0 %v3960
    %v4336 = vpop.f32.mrb[0].mxu0
    %v4337 = vadd.f32 %v4132, %v4336
    %v4338 = vpop.f32.mrb[0].mxu0
    %4339 = vmatprep.mubr.f32.mxu0 0.0
    %4340 = vmatmul.mubr.f32.gmra.mrb[0].mxu0 %v3963
    %v4341 = vpop.f32.mrb[0].mxu0
    %v4342 = vadd.f32 %v4137, %v4341
    %v4343 = vpop.f32.mrb[0].mxu0
    %4344 = vmatprep.mubr.f32.mxu0 0.0
    %4345 = vmatmul.mubr.f32.gmra.mrb[0].mxu0 %v3966
    %v4346 = vpop.f32.mrb[0].mxu0
    %v4347 = vadd.f32 %v4142, %v4346
    %v4348 = vpop.f32.mrb[0].mxu0
    %4349 = vmatprep.mubr.f32.mxu0 0.0
    %4350 = vmatmul.mubr.f32.gmra.mrb[0].mxu0 %v3969
    %v4351 = vpop.f32.mrb[0].mxu0
    %v4352 = vadd.f32 %v4147, %v4351
    %v4353 = vpop.f32.mrb[0].mxu0
    %4354 = vmatprep.mubr.f32.mxu0 0.0
    %4355 = vmatmul.mubr.f32.gmra.mrb[0].mxu0 %v3972
    %v4356 = vpop.f32.mrb[0].mxu0
    %v4357 = vadd.f32 %v4152, %v4356
    %v4358 = vpop.f32.mrb[0].mxu0
    %4359 = vmatprep.mubr.f32.mxu0 0.0
    %4360 = vmatmul.mubr.f32.gmra.mrb[0].mxu0 %v3975
    %v4361 = vpop.f32.mrb[0].mxu0
    %v4362 = vadd.f32 %v4157, %v4361
    %v4363 = vpop.f32.mrb[0].mxu0
    %4364 = vmatprep.mubr.f32.mxu0 0.0
    %4365 = vmatmul.mubr.f32.gmra.mrb[0].mxu0 %v3978
    %v4366 = vpop.f32.mrb[0].mxu0
    %v4367 = vadd.f32 %v4162, %v4366
    %v4368 = vpop.f32.mrb[0].mxu0
    %4369 = vmatprep.mubr.f32.mxu0 0.0
    %4370 = vmatmul.mubr.f32.gmra.mrb[0].mxu0 %v3981
    %v4371 = vpop.f32.mrb[0].mxu0
    %v4372 = vadd.f32 %v4167, %v4371
    %v4373 = vpop.f32.mrb[0].mxu0
    %4374 = vmatprep.mubr.f32.mxu0 0.0
    %4375 = vmatmul.mubr.f32.gmra.mrb[0].mxu0 %v3984
    %v4376 = vpop.f32.mrb[0].mxu0
    %v4377 = vadd.f32 %v4172, %v4376
    %v4378 = vpop.f32.mrb[0].mxu0
    %4379 = vmatprep.mubr.f32.mxu0 0.0
    %4380 = vmatmul.mubr.f32.gmra.mrb[0].mxu0 %v3987
    %v4381 = vpop.f32.mrb[0].mxu0
    %v4382 = vadd.f32 %v4177, %v4381
    %v4383 = vpop.f32.mrb[0].mxu0
    %4384 = vmatprep.mubr.f32.mxu0 0.0
    %4385 = vmatmul.mubr.f32.gmra.mrb[0].mxu0 %v3990
    %v4386 = vpop.f32.mrb[0].mxu0
    %v4387 = vadd.f32 %v4182, %v4386
    %v4388 = vpop.f32.mrb[0].mxu0
    %4389 = vmatprep.mubr.f32.mxu0 0.0
    %4390 = vmatmul.mubr.f32.gmra.mrb[0].mxu0 %v3993
    %v4391 = vpop.f32.mrb[0].mxu0
    %v4392 = vadd.f32 %v4187, %v4391
    %v4393 = vpop.f32.mrb[0].mxu0
    %4394 = vmatprep.mubr.f32.mxu0 0.0
    %4395 = vmatmul.mubr.f32.gmra.mrb[0].mxu0 %v3996
    %v4396 = vpop.f32.mrb[0].mxu0
    %v4397 = vadd.f32 %v4192, %v4396
    %v4398 = vpop.f32.mrb[0].mxu0
    %4399 = vmatprep.mubr.f32.mxu0 0.0
    %4400 = vmatmul.mubr.f32.gmra.mrb[0].mxu0 %v3999
    %v4401 = vpop.f32.mrb[0].mxu0
    %v4402 = vadd.f32 %v4197, %v4401
    %v4403 = vpop.f32.mrb[0].mxu0
    %4404 = vmatprep.mubr.f32.mxu0 0.0
    %4405 = vmatmul.mubr.f32.gmra.mrb[0].mxu0 %v4002
    %v4406 = vpop.f32.mrb[0].mxu0
    %v4407 = vadd.f32 %v4202, %v4406
    %v4408 = vpop.f32.mrb[0].mxu0
    %4409 = vmatprep.mubr.f32.mxu0 0.0
    %4410 = vmatmul.mubr.f32.gmra.mrb[0].mxu0 %v4005
    %v4411 = vpop.f32.mrb[0].mxu0
    %v4412 = vadd.f32 %v4207, %v4411
    %v4413 = vpop.f32.mrb[0].mxu0
    %4414 = vmatprep.mubr.f32.mxu0 0.0
    %4415 = vmatmul.mubr.f32.gmra.mrb[0].mxu0 %v4008
    %v4416 = vpop.f32.mrb[0].mxu0
    %v4417 = vadd.f32 %v4212, %v4416
    %v4418 = vpop.f32.mrb[0].mxu0
    %4419 = vdwg.mxu0
    %v4420 = vmax.f32 %v4282, 0.0
    %v4421 = vmax.f32 %v4287, 0.0
    %v4422 = vmax.f32 %v4292, 0.0
    %v4423 = vmax.f32 %v4297, 0.0
    %v4424 = vmax.f32 %v4302, 0.0
    %v4425 = vmax.f32 %v4307, 0.0
    %v4426 = vmax.f32 %v4312, 0.0
    %v4427 = vmax.f32 %v4317, 0.0
    %v4428 = vmax.f32 %v4322, 0.0
    %v4429 = vmax.f32 %v4327, 0.0
    %v4430 = vmax.f32 %v4332, 0.0
    %v4431 = vmax.f32 %v4337, 0.0
    %v4432 = vmax.f32 %v4342, 0.0
    %v4433 = vmax.f32 %v4347, 0.0
    %v4434 = vmax.f32 %v4352, 0.0
    %v4435 = vmax.f32 %v4357, 0.0
    %v4436 = vmax.f32 %v4362, 0.0
    %v4437 = vmax.f32 %v4367, 0.0
    %v4438 = vmax.f32 %v4372, 0.0
    %v4439 = vmax.f32 %v4377, 0.0
    %v4440 = vmax.f32 %v4382, 0.0
    %v4441 = vmax.f32 %v4387, 0.0
    %v4442 = vmax.f32 %v4392, 0.0
    %v4443 = vmax.f32 %v4397, 0.0
    %v4444 = vmax.f32 %v4402, 0.0
    %v4445 = vmax.f32 %v4407, 0.0
    %v4446 = vmax.f32 %v4412, 0.0
    %v4447 = vmax.f32 %v4417, 0.0
    %4448 = vst.msk [vmem:[%s5] sm:$0xff] %vm3741, %v4420
    %4449 = vst.msk [vmem:[%s5 + $0x8] sm:$0xff] %vm3741, %v4421
    %4450 = vst.msk [vmem:[%s5 + $0x10] sm:$0xff] %vm3741, %v4422
    %4451 = vst.msk [vmem:[%s5 + $0x18] sm:$0xff] %vm3741, %v4423
    %4452 = vst.msk [vmem:[%s5 + $0x20] sm:$0xff] %vm3741, %v4424
    %4453 = vst.msk [vmem:[%s5 + $0x28] sm:$0xff] %vm3741, %v4425
    %4454 = vst.msk [vmem:[%s5 + $0x30] sm:$0xff] %vm3741, %v4426
    %4455 = vst.msk [vmem:[%s5 + $0x38] sm:$0xff] %vm3741, %v4427
    %4456 = vst.msk [vmem:[%s5 + $0x40] sm:$0xff] %vm3741, %v4428
    %4457 = vst.msk [vmem:[%s5 + $0x48] sm:$0xff] %vm3741, %v4429
    %4458 = vst.msk [vmem:[%s5 + $0x50] sm:$0xff] %vm3741, %v4430
    %4459 = vst.msk [vmem:[%s5 + $0x58] sm:$0xff] %vm3741, %v4431
    %4460 = vst.msk [vmem:[%s5 + $0x60] sm:$0xff] %vm3741, %v4432
    %4461 = vst.msk [vmem:[%s5 + $0x68] sm:$0xff] %vm3741, %v4433
    %4462 = vst.msk [vmem:[%s5 + $0x70] sm:$0xff] %vm3741, %v4434
    %4463 = vst.msk [vmem:[%s5 + $0x78] sm:$0xff] %vm3741, %v4435
    %4464 = vst.msk [vmem:[%s5 + $0x80] sm:$0xff] %vm3741, %v4436
    %4465 = vst.msk [vmem:[%s5 + $0x88] sm:$0xff] %vm3741, %v4437
    %4466 = vst.msk [vmem:[%s5 + $0x90] sm:$0xff] %vm3741, %v4438
    %4467 = vst.msk [vmem:[%s5 + $0x98] sm:$0xff] %vm3741, %v4439
    %4468 = vst.msk [vmem:[%s5 + $0xa0] sm:$0xff] %vm3741, %v4440
    %4469 = vst.msk [vmem:[%s5 + $0xa8] sm:$0xff] %vm3741, %v4441
    %4470 = vst.msk [vmem:[%s5 + $0xb0] sm:$0xff] %vm3741, %v4442
    %4471 = vst.msk [vmem:[%s5 + $0xb8] sm:$0xff] %vm3741, %v4443
    %4472 = vst.msk [vmem:[%s5 + $0xc0] sm:$0xff] %vm3741, %v4444
    %4473 = vst.msk [vmem:[%s5 + $0xc8] sm:$0xff] %vm3741, %v4445
    %4474 = vst.msk [vmem:[%s5 + $0xd0] sm:$0xff] %vm3741, %v4446
    %vm4475 = vcmask 519168
    %4476 = vst.msk [vmem:[%s5 + $0xd8] sm:$0xf] %vm4475, %v4447
    // Predicated region
    $region30: #{dqn_forward.2} parent=1 // pred_check
      _
    $region31: #{dqn_forward.2} parent=1 // pred_check_branch
      %4478 = sbr.rel (0) target = $region33
    $region32: #{dqn_forward.2} parent=1 // pred_region
      _
    $region33: #{dqn_forward.2} parent=1 // pred_fallthru
      _
    // Predicated region
    $region34: #{dqn_forward.2} parent=1 // pred_check
      _
    $region35: #{dqn_forward.2} parent=1 // pred_check_branch
      %4480 = sbr.rel (0) target = $region37
    $region36: #{dqn_forward.2} parent=1 // pred_region
      _
    $region37: #{dqn_forward.2} parent=1 // pred_fallthru
      _
    %4481 = vsyncpa [#allocation4], 1
    %4482 = vsyncpa [#allocation6], 1

</llo_original>
